<compile_context>
chip_gen: v7x
topology: tpu7x:2x2x1
jax: 0.10.0
libtpu: 0.0.40
codegen_flags: <defaults>
</compile_context>

<pallas_src>
import jax
import jax.numpy as jnp
from jax import lax
from jax.experimental import pallas as pl
from jax.experimental.pallas import tpu as pltpu


# Geometry fixed by the PyTorch module (fc = Linear(32*7*7, 128) => 28x28 input).
H1 = W1 = 28      # conv1 spatial
C1 = 16
H2 = W2 = 14      # conv2 spatial (after pool1)
C2 = 32
HP = WP = 7       # spatial after pool2
F_OUT = 128


# ----------------------------------------------------------------------------
# Fused kernel: conv1 -> pool1 -> conv2 -> pool2 -> fc for ONE image per step.
# Activation layout inside the kernel: 2-D (H, W*C), col = w*C + c.
# ----------------------------------------------------------------------------
def _fused_cnn_kernel(x_ref, r1_ref, a1_ref, b1_ref, s1_ref, p1s_ref,
                      r2_ref, a2_ref, b2_ref, s2_ref, p2s_ref,
                      e7_ref, wf_ref, bf_ref, o_ref):
    f32 = jnp.float32

    x = x_ref[0]                                                   # (28, 28)

    # ---- conv1 (3x3, stride 1, pad 1) + bias + ReLU -> (28, 28*16) ----------
    acc1 = jnp.zeros((H1, W1 * C1), f32)
    for kh in range(3):
        xs = jnp.dot(r1_ref[kh], x, preferred_element_type=f32)   # row shift
        acc1 = acc1 + jnp.dot(xs, a1_ref[kh], preferred_element_type=f32)
    h1 = jnp.maximum(acc1 + b1_ref[...], 0.0)                      # (28, 448)

    # ---- max-pool 2x2 -> (14, 14*16) -----------------------------------------
    r1p = jnp.maximum(jnp.dot(s1_ref[0], h1, preferred_element_type=f32),
                      jnp.dot(s1_ref[1], h1, preferred_element_type=f32))
    p1 = jnp.maximum(jnp.dot(r1p, p1s_ref[0], preferred_element_type=f32),
                     jnp.dot(r1p, p1s_ref[1], preferred_element_type=f32))

    # ---- conv2 (3x3, stride 1, pad 1) + bias + ReLU -> (14, 14*32) -----------
    acc2 = jnp.zeros((H2, W2 * C2), f32)
    for kh in range(3):
        ps = jnp.dot(r2_ref[kh], p1, preferred_element_type=f32)
        acc2 = acc2 + jnp.dot(ps, a2_ref[kh], preferred_element_type=f32)
    h2 = jnp.maximum(acc2 + b2_ref[...], 0.0)                      # (14, 448)

    # ---- max-pool 2x2 -> (7, 7*32) --------------------------------------------
    r2p = jnp.maximum(jnp.dot(s2_ref[0], h2, preferred_element_type=f32),
                      jnp.dot(s2_ref[1], h2, preferred_element_type=f32))
    p2 = jnp.maximum(jnp.dot(r2p, p2s_ref[0], preferred_element_type=f32),
                     jnp.dot(r2p, p2s_ref[1], preferred_element_type=f32))

    # ---- fc (1568 -> 128) + ReLU ----------------------------------------------
    # fc weight was pre-permuted to (7, 224, 128) so we accumulate per-row.
    acc_fc = bf_ref[...]                                           # (1, 128)
    for h in range(HP):
        row = jnp.dot(e7_ref[h], p2, preferred_element_type=f32)   # (1, 224)
        acc_fc = acc_fc + jnp.dot(row, wf_ref[h], preferred_element_type=f32)
    o_ref[0] = jnp.maximum(acc_fc, 0.0)


# ----------------------------------------------------------------------------
# One-time parameter preparation (PyTorch-format params -> kernel constants).
# ----------------------------------------------------------------------------
def prepare_params(params):
    f32 = jnp.float32
    w1, b1 = params["w1"].astype(f32), params["b1"].astype(f32)
    w2, b2 = params["w2"].astype(f32), params["b2"].astype(f32)
    wf, bf = params["wf"].astype(f32), params["bf"].astype(f32)

    def shift_mats(h_n):
        # R[kh, h_out, h_in] = 1 iff h_in == h_out + kh - 1  (zero rows = pad)
        h_out = jnp.arange(h_n)[:, None]
        h_in = jnp.arange(h_n)[None, :]
        return jnp.stack(
            [(h_in == h_out + kh - 1).astype(f32) for kh in range(3)], axis=0)

    def band_mats(w, w_in_n, w_out_n, ci_n, co_n):
        # A[kh, w_in*Ci + ci, w_out*Co + co] = w[co, ci, kh, w_in - w_out + 1]
        # (zero outside the band = width padding).
        kw = jnp.arange(w_in_n)[:, None] - jnp.arange(w_out_n)[None, :] + 1
        valid = (kw >= 0) & (kw <= 2)
        kw_c = jnp.clip(kw, 0, 2)
        mats = []
        for kh in range(3):
            wk = w[:, :, kh, :]                        # (Co, Ci, 3)
            g = wk[:, :, kw_c]                         # (Co, Ci, Wi, Wo)
            g = jnp.where(valid[None, None], g, 0.0)
            g = jnp.transpose(g, (2, 1, 3, 0)).reshape(w_in_n * ci_n,
                                                       w_out_n * co_n)
            mats.append(g)
        return jnp.stack(mats, axis=0)

    def row_pool_mats(h_out_n):
        # S[p, ho, h] = 1 iff h == 2*ho + p
        ho = jnp.arange(h_out_n)[:, None]
        h = jnp.arange(2 * h_out_n)[None, :]
        return jnp.stack([(h == 2 * ho).astype(f32),
                          (h == 2 * ho + 1).astype(f32)], axis=0)

    def col_pool_mats(w_out_n, c_n):
        # P[p, w*C + c, wo*C + c2] = 1 iff (w == 2*wo + p and c == c2)
        w_in_n = 2 * w_out_n
        row_w = jnp.repeat(jnp.arange(w_in_n), c_n)
        row_c = jnp.tile(jnp.arange(c_n), w_in_n)
        col_w = jnp.repeat(jnp.arange(w_out_n), c_n)
        col_c = jnp.tile(jnp.arange(c_n), w_out_n)
        mats = []
        for p in range(2):
            m = ((row_w[:, None] == 2 * col_w[None, :] + p) &
                 (row_c[:, None] == col_c[None, :])).astype(f32)
            mats.append(m)
        return jnp.stack(mats, axis=0)

    # fc weight: PyTorch flattens NCHW (c*49 + h*7 + w); our activation layout
    # is (h, w*32 + c) -> permute columns once here.
    wf3 = jnp.transpose(wf.reshape(F_OUT, C2, HP, WP), (2, 3, 1, 0))
    wf3 = wf3.reshape(HP, WP * C2, F_OUT)

    return {
        "R1": shift_mats(H1),                             # (3, 28, 28)
        "A1": band_mats(w1, W1, W1, 1, C1),               # (3, 28, 448)
        "B1": jnp.tile(b1, W1).reshape(1, W1 * C1),       # (1, 448)
        "S1": row_pool_mats(H2),                          # (2, 14, 28)
        "P1": col_pool_mats(W2, C1),                      # (2, 448, 224)
        "R2": shift_mats(H2),                             # (3, 14, 14)
        "A2": band_mats(w2, W2, W2, C1, C2),              # (3, 224, 448)
        "B2": jnp.tile(b2, W2).reshape(1, W2 * C2),       # (1, 448)
        "S2": row_pool_mats(HP),                          # (2, 7, 14)
        "P2": col_pool_mats(WP, C2),                      # (2, 448, 224)
        "E7": jnp.eye(HP, dtype=f32).reshape(HP, 1, HP),  # (7, 1, 7)
        "WF": wf3,                                        # (7, 224, 128)
        "BF": bf.reshape(1, F_OUT),                       # (1, 128)
    }


# ----------------------------------------------------------------------------
# Forward pass (single fused pallas_call gridded over the batch)
# ----------------------------------------------------------------------------
def cnn_feature_extractor(x_nchw, prep):
    N = x_nchw.shape[0]
    x2d = x_nchw.reshape(N, H1, W1).astype(jnp.float32)

    const_names = ["R1", "A1", "B1", "S1", "P1",
                   "R2", "A2", "B2", "S2", "P2", "E7", "WF", "BF"]
    consts = [prep[k] for k in const_names]

    def const_spec(arr):
        nd = arr.ndim
        return pl.BlockSpec(arr.shape, lambda n, _nd=nd: (0,) * _nd)

    out = pl.pallas_call(
        _fused_cnn_kernel,
        out_shape=jax.ShapeDtypeStruct((N, 1, F_OUT), jnp.float32),
        grid=(N,),
        in_specs=[pl.BlockSpec((1, H1, W1), lambda n: (n, 0, 0))]
                 + [const_spec(c) for c in consts],
        out_specs=pl.BlockSpec((1, 1, F_OUT), lambda n: (n, 0, 0)),
        compiler_params=pltpu.CompilerParams(
            dimension_semantics=("parallel",),
            vmem_limit_bytes=32 * 1024 * 1024,
        ),
    )(x2d, *consts)
    return out.reshape(N, F_OUT)


# ----------------------------------------------------------------------------
# Deterministic parameter init (PyTorch-style uniform bounds, synthetic)
# ----------------------------------------------------------------------------
def init_params(key):
    ks = jax.random.split(key, 6)

    def u(k, shape, fan_in):
        bound = 1.0 / jnp.sqrt(fan_in)
        return jax.random.uniform(k, shape, jnp.float32, -bound, bound)

    return {
        "w1": u(ks[0], (16, 1, 3, 3), 1 * 9),
        "b1": u(ks[1], (16,), 1 * 9),
        "w2": u(ks[2], (32, 16, 3, 3), 16 * 9),
        "b2": u(ks[3], (32,), 16 * 9),
        "wf": u(ks[4], (128, 32 * 7 * 7), 32 * 7 * 7),
        "bf": u(ks[5], (128,), 32 * 7 * 7),
    }


# ----------------------------------------------------------------------------
# Pure-JAX reference (sanity check for the fused Pallas kernel)
# ----------------------------------------------------------------------------
def reference_forward(x_nchw, params):
    dn = lax.conv_dimension_numbers(x_nchw.shape, params["w1"].shape,
                                    ("NCHW", "OIHW", "NCHW"))
    h = lax.conv_general_dilated(x_nchw, params["w1"], (1, 1),
                                 ((1, 1), (1, 1)), dimension_numbers=dn)
    h = jax.nn.relu(h + params["b1"][None, :, None, None])
    h = lax.reduce_window(h, -jnp.inf, lax.max, (1, 1, 2, 2), (1, 1, 2, 2),
                          "VALID")
    dn2 = lax.conv_dimension_numbers(h.shape, params["w2"].shape,
                                     ("NCHW", "OIHW", "NCHW"))
    h = lax.conv_general_dilated(h, params["w2"], (1, 1),
                                 ((1, 1), (1, 1)), dimension_numbers=dn2)
    h = jax.nn.relu(h + params["b2"][None, :, None, None])
    h = lax.reduce_window(h, -jnp.inf, lax.max, (1, 1, 2, 2), (1, 1, 2, 2),
                          "VALID")
    flat = h.reshape(h.shape[0], -1)
    return jax.nn.relu(flat @ params["wf"].T + params["bf"])


if __name__ == "__main__":
    key = jax.random.PRNGKey(0)
    k_x, k_p = jax.random.split(key)
    # batch=2, 1 channel, 28x28 (the fc layer's 32*7*7 implies 28x28 input)
    x = jax.random.normal(k_x, (2, 1, 28, 28), dtype=jnp.float32)
    params = init_params(k_p)
    prep = prepare_params(params)          # one-time weight preprocessing

    fwd = jax.jit(cnn_feature_extractor)
    out = jax.block_until_ready(fwd(x, prep))
    assert out.shape == (2, 128), out.shape

    ref = reference_forward(x, params)
    if not jnp.allclose(out, ref, atol=1e-2, rtol=1e-2):
        max_err = float(jnp.max(jnp.abs(out - ref)))
        raise AssertionError(f"Pallas output mismatch vs reference "
                             f"(max abs err = {max_err})")

    print("KERNEL_OK")
</pallas_src>

<mosaic_0001>
module attributes {stable_mosaic.version = 11 : i64} {
  func.func @_fused_cnn_kernel(%arg0: i32, %arg1: memref<1x28x28xf32, #tpu.memory_space<vmem>>, %arg2: memref<3x28x28xf32, #tpu.memory_space<vmem>>, %arg3: memref<3x28x448xf32, #tpu.memory_space<vmem>>, %arg4: memref<1x448xf32, #tpu.memory_space<vmem>>, %arg5: memref<2x14x28xf32, #tpu.memory_space<vmem>>, %arg6: memref<2x448x224xf32, #tpu.memory_space<vmem>>, %arg7: memref<3x14x14xf32, #tpu.memory_space<vmem>>, %arg8: memref<3x224x448xf32, #tpu.memory_space<vmem>>, %arg9: memref<1x448xf32, #tpu.memory_space<vmem>>, %arg10: memref<2x7x14xf32, #tpu.memory_space<vmem>>, %arg11: memref<2x448x224xf32, #tpu.memory_space<vmem>>, %arg12: memref<7x1x7xf32, #tpu.memory_space<vmem>>, %arg13: memref<7x224x128xf32, #tpu.memory_space<vmem>>, %arg14: memref<1x128xf32, #tpu.memory_space<vmem>>, %arg15: memref<1x1x128xf32, #tpu.memory_space<vmem>>) attributes {dimension_semantics = [#tpu.dimension_semantics<parallel>], iteration_bounds = array<i64: 2>, scalar_prefetch = 0 : i64, scratch_operands = 0 : i64, tpu.core_type = #tpu.core_type<tc>, window_params = [{transform_indices = @transform_0, window_bounds = array<i64: 1, 28, 28>}, {pipeline_mode = #tpu.pipeline_mode<synchronous>, transform_indices = @transform_1, window_bounds = array<i64: 3, 28, 28>}, {pipeline_mode = #tpu.pipeline_mode<synchronous>, transform_indices = @transform_2, window_bounds = array<i64: 3, 28, 448>}, {pipeline_mode = #tpu.pipeline_mode<synchronous>, transform_indices = @transform_3, window_bounds = array<i64: 1, 448>}, {pipeline_mode = #tpu.pipeline_mode<synchronous>, transform_indices = @transform_4, window_bounds = array<i64: 2, 14, 28>}, {pipeline_mode = #tpu.pipeline_mode<synchronous>, transform_indices = @transform_5, window_bounds = array<i64: 2, 448, 224>}, {pipeline_mode = #tpu.pipeline_mode<synchronous>, transform_indices = @transform_6, window_bounds = array<i64: 3, 14, 14>}, {pipeline_mode = #tpu.pipeline_mode<synchronous>, transform_indices = @transform_7, window_bounds = array<i64: 3, 224, 448>}, {pipeline_mode = #tpu.pipeline_mode<synchronous>, transform_indices = @transform_8, window_bounds = array<i64: 1, 448>}, {pipeline_mode = #tpu.pipeline_mode<synchronous>, transform_indices = @transform_9, window_bounds = array<i64: 2, 7, 14>}, {pipeline_mode = #tpu.pipeline_mode<synchronous>, transform_indices = @transform_10, window_bounds = array<i64: 2, 448, 224>}, {pipeline_mode = #tpu.pipeline_mode<synchronous>, transform_indices = @transform_11, window_bounds = array<i64: 7, 1, 7>}, {pipeline_mode = #tpu.pipeline_mode<synchronous>, transform_indices = @transform_12, window_bounds = array<i64: 7, 224, 128>}, {pipeline_mode = #tpu.pipeline_mode<synchronous>, transform_indices = @transform_13, window_bounds = array<i64: 1, 128>}, {transform_indices = @transform_14, window_bounds = array<i64: 1, 1, 128>}]} {
    %c0 = arith.constant 0 : index
    %c0_0 = arith.constant 0 : index
    %c0_1 = arith.constant 0 : index
    %0 = vector.load %arg1[%c0, %c0_0, %c0_1] : memref<1x28x28xf32, #tpu.memory_space<vmem>>, vector<1x28x28xf32>
    %1 = vector.shape_cast %0 : vector<1x28x28xf32> to vector<28x28xf32>
    %cst = arith.constant 0.000000e+00 : f32
    %2 = vector.broadcast %cst : f32 to vector<28x448xf32>
    %c0_2 = arith.constant 0 : index
    %c0_3 = arith.constant 0 : index
    %c0_4 = arith.constant 0 : index
    %3 = vector.load %arg2[%c0_2, %c0_3, %c0_4] : memref<3x28x28xf32, #tpu.memory_space<vmem>>, vector<1x28x28xf32>
    %4 = vector.shape_cast %3 : vector<1x28x28xf32> to vector<28x28xf32>
    %cst_5 = arith.constant dense<0.000000e+00> : vector<28x28xf32>
    %5 = tpu.matmul %4, %1, %cst_5 {dimension_numbers = #tpu.dot_dimension_numbers<[1], [0], [0], [1], [0, 0, 1, 1], [], []>} : vector<28x28xf32>, vector<28x28xf32>, vector<28x28xf32> -> vector<28x28xf32>
    %c0_6 = arith.constant 0 : index
    %c0_7 = arith.constant 0 : index
    %c0_8 = arith.constant 0 : index
    %6 = vector.load %arg3[%c0_6, %c0_7, %c0_8] : memref<3x28x448xf32, #tpu.memory_space<vmem>>, vector<1x28x448xf32>
    %7 = vector.shape_cast %6 : vector<1x28x448xf32> to vector<28x448xf32>
    %cst_9 = arith.constant dense<0.000000e+00> : vector<28x448xf32>
    %8 = tpu.matmul %5, %7, %cst_9 {dimension_numbers = #tpu.dot_dimension_numbers<[1], [0], [0], [1], [0, 0, 1, 1], [], []>} : vector<28x28xf32>, vector<28x448xf32>, vector<28x448xf32> -> vector<28x448xf32>
    %9 = arith.addf %2, %8 : vector<28x448xf32>
    %c1 = arith.constant 1 : index
    %c0_10 = arith.constant 0 : index
    %c0_11 = arith.constant 0 : index
    %10 = vector.load %arg2[%c1, %c0_10, %c0_11] : memref<3x28x28xf32, #tpu.memory_space<vmem>>, vector<1x28x28xf32>
    %11 = vector.shape_cast %10 : vector<1x28x28xf32> to vector<28x28xf32>
    %cst_12 = arith.constant dense<0.000000e+00> : vector<28x28xf32>
    %12 = tpu.matmul %11, %1, %cst_12 {dimension_numbers = #tpu.dot_dimension_numbers<[1], [0], [0], [1], [0, 0, 1, 1], [], []>} : vector<28x28xf32>, vector<28x28xf32>, vector<28x28xf32> -> vector<28x28xf32>
    %c1_13 = arith.constant 1 : index
    %c0_14 = arith.constant 0 : index
    %c0_15 = arith.constant 0 : index
    %13 = vector.load %arg3[%c1_13, %c0_14, %c0_15] : memref<3x28x448xf32, #tpu.memory_space<vmem>>, vector<1x28x448xf32>
    %14 = vector.shape_cast %13 : vector<1x28x448xf32> to vector<28x448xf32>
    %cst_16 = arith.constant dense<0.000000e+00> : vector<28x448xf32>
    %15 = tpu.matmul %12, %14, %cst_16 {dimension_numbers = #tpu.dot_dimension_numbers<[1], [0], [0], [1], [0, 0, 1, 1], [], []>} : vector<28x28xf32>, vector<28x448xf32>, vector<28x448xf32> -> vector<28x448xf32>
    %16 = arith.addf %9, %15 : vector<28x448xf32>
    %c2 = arith.constant 2 : index
    %c0_17 = arith.constant 0 : index
    %c0_18 = arith.constant 0 : index
    %17 = vector.load %arg2[%c2, %c0_17, %c0_18] : memref<3x28x28xf32, #tpu.memory_space<vmem>>, vector<1x28x28xf32>
    %18 = vector.shape_cast %17 : vector<1x28x28xf32> to vector<28x28xf32>
    %cst_19 = arith.constant dense<0.000000e+00> : vector<28x28xf32>
    %19 = tpu.matmul %18, %1, %cst_19 {dimension_numbers = #tpu.dot_dimension_numbers<[1], [0], [0], [1], [0, 0, 1, 1], [], []>} : vector<28x28xf32>, vector<28x28xf32>, vector<28x28xf32> -> vector<28x28xf32>
    %c2_20 = arith.constant 2 : index
    %c0_21 = arith.constant 0 : index
    %c0_22 = arith.constant 0 : index
    %20 = vector.load %arg3[%c2_20, %c0_21, %c0_22] : memref<3x28x448xf32, #tpu.memory_space<vmem>>, vector<1x28x448xf32>
    %21 = vector.shape_cast %20 : vector<1x28x448xf32> to vector<28x448xf32>
    %cst_23 = arith.constant dense<0.000000e+00> : vector<28x448xf32>
    %22 = tpu.matmul %19, %21, %cst_23 {dimension_numbers = #tpu.dot_dimension_numbers<[1], [0], [0], [1], [0, 0, 1, 1], [], []>} : vector<28x28xf32>, vector<28x448xf32>, vector<28x448xf32> -> vector<28x448xf32>
    %23 = arith.addf %16, %22 : vector<28x448xf32>
    %c0_24 = arith.constant 0 : index
    %c0_25 = arith.constant 0 : index
    %24 = vector.load %arg4[%c0_24, %c0_25] : memref<1x448xf32, #tpu.memory_space<vmem>>, vector<1x448xf32>
    %25 = vector.broadcast %24 : vector<1x448xf32> to vector<28x448xf32>
    %26 = arith.addf %23, %25 : vector<28x448xf32>
    %cst_26 = arith.constant 0.000000e+00 : f32
    %27 = vector.broadcast %cst_26 : f32 to vector<28x448xf32>
    %28 = arith.maximumf %26, %27 : vector<28x448xf32>
    %c0_27 = arith.constant 0 : index
    %c0_28 = arith.constant 0 : index
    %c0_29 = arith.constant 0 : index
    %29 = vector.load %arg5[%c0_27, %c0_28, %c0_29] : memref<2x14x28xf32, #tpu.memory_space<vmem>>, vector<1x14x28xf32>
    %30 = vector.shape_cast %29 : vector<1x14x28xf32> to vector<14x28xf32>
    %cst_30 = arith.constant dense<0.000000e+00> : vector<14x448xf32>
    %31 = tpu.matmul %30, %28, %cst_30 {dimension_numbers = #tpu.dot_dimension_numbers<[1], [0], [0], [1], [0, 0, 1, 1], [], []>} : vector<14x28xf32>, vector<28x448xf32>, vector<14x448xf32> -> vector<14x448xf32>
    %c1_31 = arith.constant 1 : index
    %c0_32 = arith.constant 0 : index
    %c0_33 = arith.constant 0 : index
    %32 = vector.load %arg5[%c1_31, %c0_32, %c0_33] : memref<2x14x28xf32, #tpu.memory_space<vmem>>, vector<1x14x28xf32>
    %33 = vector.shape_cast %32 : vector<1x14x28xf32> to vector<14x28xf32>
    %cst_34 = arith.constant dense<0.000000e+00> : vector<14x448xf32>
    %34 = tpu.matmul %33, %28, %cst_34 {dimension_numbers = #tpu.dot_dimension_numbers<[1], [0], [0], [1], [0, 0, 1, 1], [], []>} : vector<14x28xf32>, vector<28x448xf32>, vector<14x448xf32> -> vector<14x448xf32>
    %35 = arith.maximumf %31, %34 : vector<14x448xf32>
    %c0_35 = arith.constant 0 : index
    %c0_36 = arith.constant 0 : index
    %c0_37 = arith.constant 0 : index
    %36 = vector.load %arg6[%c0_35, %c0_36, %c0_37] : memref<2x448x224xf32, #tpu.memory_space<vmem>>, vector<1x448x224xf32>
    %37 = vector.shape_cast %36 : vector<1x448x224xf32> to vector<448x224xf32>
    %cst_38 = arith.constant dense<0.000000e+00> : vector<14x224xf32>
    %38 = tpu.matmul %35, %37, %cst_38 {dimension_numbers = #tpu.dot_dimension_numbers<[1], [0], [0], [1], [0, 0, 1, 1], [], []>} : vector<14x448xf32>, vector<448x224xf32>, vector<14x224xf32> -> vector<14x224xf32>
    %c1_39 = arith.constant 1 : index
    %c0_40 = arith.constant 0 : index
    %c0_41 = arith.constant 0 : index
    %39 = vector.load %arg6[%c1_39, %c0_40, %c0_41] : memref<2x448x224xf32, #tpu.memory_space<vmem>>, vector<1x448x224xf32>
    %40 = vector.shape_cast %39 : vector<1x448x224xf32> to vector<448x224xf32>
    %cst_42 = arith.constant dense<0.000000e+00> : vector<14x224xf32>
    %41 = tpu.matmul %35, %40, %cst_42 {dimension_numbers = #tpu.dot_dimension_numbers<[1], [0], [0], [1], [0, 0, 1, 1], [], []>} : vector<14x448xf32>, vector<448x224xf32>, vector<14x224xf32> -> vector<14x224xf32>
    %42 = arith.maximumf %38, %41 : vector<14x224xf32>
    %cst_43 = arith.constant 0.000000e+00 : f32
    %43 = vector.broadcast %cst_43 : f32 to vector<14x448xf32>
    %c0_44 = arith.constant 0 : index
    %c0_45 = arith.constant 0 : index
    %c0_46 = arith.constant 0 : index
    %44 = vector.load %arg7[%c0_44, %c0_45, %c0_46] : memref<3x14x14xf32, #tpu.memory_space<vmem>>, vector<1x14x14xf32>
    %45 = vector.shape_cast %44 : vector<1x14x14xf32> to vector<14x14xf32>
    %cst_47 = arith.constant dense<0.000000e+00> : vector<14x224xf32>
    %46 = tpu.matmul %45, %42, %cst_47 {dimension_numbers = #tpu.dot_dimension_numbers<[1], [0], [0], [1], [0, 0, 1, 1], [], []>} : vector<14x14xf32>, vector<14x224xf32>, vector<14x224xf32> -> vector<14x224xf32>
    %c0_48 = arith.constant 0 : index
    %c0_49 = arith.constant 0 : index
    %c0_50 = arith.constant 0 : index
    %47 = vector.load %arg8[%c0_48, %c0_49, %c0_50] : memref<3x224x448xf32, #tpu.memory_space<vmem>>, vector<1x224x448xf32>
    %48 = vector.shape_cast %47 : vector<1x224x448xf32> to vector<224x448xf32>
    %cst_51 = arith.constant dense<0.000000e+00> : vector<14x448xf32>
    %49 = tpu.matmul %46, %48, %cst_51 {dimension_numbers = #tpu.dot_dimension_numbers<[1], [0], [0], [1], [0, 0, 1, 1], [], []>} : vector<14x224xf32>, vector<224x448xf32>, vector<14x448xf32> -> vector<14x448xf32>
    %50 = arith.addf %43, %49 : vector<14x448xf32>
    %c1_52 = arith.constant 1 : index
    %c0_53 = arith.constant 0 : index
    %c0_54 = arith.constant 0 : index
    %51 = vector.load %arg7[%c1_52, %c0_53, %c0_54] : memref<3x14x14xf32, #tpu.memory_space<vmem>>, vector<1x14x14xf32>
    %52 = vector.shape_cast %51 : vector<1x14x14xf32> to vector<14x14xf32>
    %cst_55 = arith.constant dense<0.000000e+00> : vector<14x224xf32>
    %53 = tpu.matmul %52, %42, %cst_55 {dimension_numbers = #tpu.dot_dimension_numbers<[1], [0], [0], [1], [0, 0, 1, 1], [], []>} : vector<14x14xf32>, vector<14x224xf32>, vector<14x224xf32> -> vector<14x224xf32>
    %c1_56 = arith.constant 1 : index
    %c0_57 = arith.constant 0 : index
    %c0_58 = arith.constant 0 : index
    %54 = vector.load %arg8[%c1_56, %c0_57, %c0_58] : memref<3x224x448xf32, #tpu.memory_space<vmem>>, vector<1x224x448xf32>
    %55 = vector.shape_cast %54 : vector<1x224x448xf32> to vector<224x448xf32>
    %cst_59 = arith.constant dense<0.000000e+00> : vector<14x448xf32>
    %56 = tpu.matmul %53, %55, %cst_59 {dimension_numbers = #tpu.dot_dimension_numbers<[1], [0], [0], [1], [0, 0, 1, 1], [], []>} : vector<14x224xf32>, vector<224x448xf32>, vector<14x448xf32> -> vector<14x448xf32>
    %57 = arith.addf %50, %56 : vector<14x448xf32>
    %c2_60 = arith.constant 2 : index
    %c0_61 = arith.constant 0 : index
    %c0_62 = arith.constant 0 : index
    %58 = vector.load %arg7[%c2_60, %c0_61, %c0_62] : memref<3x14x14xf32, #tpu.memory_space<vmem>>, vector<1x14x14xf32>
    %59 = vector.shape_cast %58 : vector<1x14x14xf32> to vector<14x14xf32>
    %cst_63 = arith.constant dense<0.000000e+00> : vector<14x224xf32>
    %60 = tpu.matmul %59, %42, %cst_63 {dimension_numbers = #tpu.dot_dimension_numbers<[1], [0], [0], [1], [0, 0, 1, 1], [], []>} : vector<14x14xf32>, vector<14x224xf32>, vector<14x224xf32> -> vector<14x224xf32>
    %c2_64 = arith.constant 2 : index
    %c0_65 = arith.constant 0 : index
    %c0_66 = arith.constant 0 : index
    %61 = vector.load %arg8[%c2_64, %c0_65, %c0_66] : memref<3x224x448xf32, #tpu.memory_space<vmem>>, vector<1x224x448xf32>
    %62 = vector.shape_cast %61 : vector<1x224x448xf32> to vector<224x448xf32>
    %cst_67 = arith.constant dense<0.000000e+00> : vector<14x448xf32>
    %63 = tpu.matmul %60, %62, %cst_67 {dimension_numbers = #tpu.dot_dimension_numbers<[1], [0], [0], [1], [0, 0, 1, 1], [], []>} : vector<14x224xf32>, vector<224x448xf32>, vector<14x448xf32> -> vector<14x448xf32>
    %64 = arith.addf %57, %63 : vector<14x448xf32>
    %c0_68 = arith.constant 0 : index
    %c0_69 = arith.constant 0 : index
    %65 = vector.load %arg9[%c0_68, %c0_69] : memref<1x448xf32, #tpu.memory_space<vmem>>, vector<1x448xf32>
    %66 = vector.broadcast %65 : vector<1x448xf32> to vector<14x448xf32>
    %67 = arith.addf %64, %66 : vector<14x448xf32>
    %cst_70 = arith.constant 0.000000e+00 : f32
    %68 = vector.broadcast %cst_70 : f32 to vector<14x448xf32>
    %69 = arith.maximumf %67, %68 : vector<14x448xf32>
    %c0_71 = arith.constant 0 : index
    %c0_72 = arith.constant 0 : index
    %c0_73 = arith.constant 0 : index
    %70 = vector.load %arg10[%c0_71, %c0_72, %c0_73] : memref<2x7x14xf32, #tpu.memory_space<vmem>>, vector<1x7x14xf32>
    %71 = vector.shape_cast %70 : vector<1x7x14xf32> to vector<7x14xf32>
    %cst_74 = arith.constant dense<0.000000e+00> : vector<7x448xf32>
    %72 = tpu.matmul %71, %69, %cst_74 {dimension_numbers = #tpu.dot_dimension_numbers<[1], [0], [0], [1], [0, 0, 1, 1], [], []>} : vector<7x14xf32>, vector<14x448xf32>, vector<7x448xf32> -> vector<7x448xf32>
    %c1_75 = arith.constant 1 : index
    %c0_76 = arith.constant 0 : index
    %c0_77 = arith.constant 0 : index
    %73 = vector.load %arg10[%c1_75, %c0_76, %c0_77] : memref<2x7x14xf32, #tpu.memory_space<vmem>>, vector<1x7x14xf32>
    %74 = vector.shape_cast %73 : vector<1x7x14xf32> to vector<7x14xf32>
    %cst_78 = arith.constant dense<0.000000e+00> : vector<7x448xf32>
    %75 = tpu.matmul %74, %69, %cst_78 {dimension_numbers = #tpu.dot_dimension_numbers<[1], [0], [0], [1], [0, 0, 1, 1], [], []>} : vector<7x14xf32>, vector<14x448xf32>, vector<7x448xf32> -> vector<7x448xf32>
    %76 = arith.maximumf %72, %75 : vector<7x448xf32>
    %c0_79 = arith.constant 0 : index
    %c0_80 = arith.constant 0 : index
    %c0_81 = arith.constant 0 : index
    %77 = vector.load %arg11[%c0_79, %c0_80, %c0_81] : memref<2x448x224xf32, #tpu.memory_space<vmem>>, vector<1x448x224xf32>
    %78 = vector.shape_cast %77 : vector<1x448x224xf32> to vector<448x224xf32>
    %cst_82 = arith.constant dense<0.000000e+00> : vector<7x224xf32>
    %79 = tpu.matmul %76, %78, %cst_82 {dimension_numbers = #tpu.dot_dimension_numbers<[1], [0], [0], [1], [0, 0, 1, 1], [], []>} : vector<7x448xf32>, vector<448x224xf32>, vector<7x224xf32> -> vector<7x224xf32>
    %c1_83 = arith.constant 1 : index
    %c0_84 = arith.constant 0 : index
    %c0_85 = arith.constant 0 : index
    %80 = vector.load %arg11[%c1_83, %c0_84, %c0_85] : memref<2x448x224xf32, #tpu.memory_space<vmem>>, vector<1x448x224xf32>
    %81 = vector.shape_cast %80 : vector<1x448x224xf32> to vector<448x224xf32>
    %cst_86 = arith.constant dense<0.000000e+00> : vector<7x224xf32>
    %82 = tpu.matmul %76, %81, %cst_86 {dimension_numbers = #tpu.dot_dimension_numbers<[1], [0], [0], [1], [0, 0, 1, 1], [], []>} : vector<7x448xf32>, vector<448x224xf32>, vector<7x224xf32> -> vector<7x224xf32>
    %83 = arith.maximumf %79, %82 : vector<7x224xf32>
    %c0_87 = arith.constant 0 : index
    %c0_88 = arith.constant 0 : index
    %84 = vector.load %arg14[%c0_87, %c0_88] : memref<1x128xf32, #tpu.memory_space<vmem>>, vector<1x128xf32>
    %c0_89 = arith.constant 0 : index
    %c0_90 = arith.constant 0 : index
    %c0_91 = arith.constant 0 : index
    %85 = vector.load %arg12[%c0_89, %c0_90, %c0_91] : memref<7x1x7xf32, #tpu.memory_space<vmem>>, vector<1x1x7xf32>
    %86 = vector.shape_cast %85 : vector<1x1x7xf32> to vector<1x7xf32>
    %cst_92 = arith.constant dense<0.000000e+00> : vector<1x224xf32>
    %87 = tpu.matmul %86, %83, %cst_92 {dimension_numbers = #tpu.dot_dimension_numbers<[1], [0], [0], [1], [0, 0, 1, 1], [], []>} : vector<1x7xf32>, vector<7x224xf32>, vector<1x224xf32> -> vector<1x224xf32>
    %c0_93 = arith.constant 0 : index
    %c0_94 = arith.constant 0 : index
    %c0_95 = arith.constant 0 : index
    %88 = vector.load %arg13[%c0_93, %c0_94, %c0_95] : memref<7x224x128xf32, #tpu.memory_space<vmem>>, vector<1x224x128xf32>
    %89 = vector.shape_cast %88 : vector<1x224x128xf32> to vector<224x128xf32>
    %cst_96 = arith.constant dense<0.000000e+00> : vector<1x128xf32>
    %90 = tpu.matmul %87, %89, %cst_96 {dimension_numbers = #tpu.dot_dimension_numbers<[1], [0], [0], [1], [0, 0, 1, 1], [], []>} : vector<1x224xf32>, vector<224x128xf32>, vector<1x128xf32> -> vector<1x128xf32>
    %91 = arith.addf %84, %90 : vector<1x128xf32>
    %c1_97 = arith.constant 1 : index
    %c0_98 = arith.constant 0 : index
    %c0_99 = arith.constant 0 : index
    %92 = vector.load %arg12[%c1_97, %c0_98, %c0_99] : memref<7x1x7xf32, #tpu.memory_space<vmem>>, vector<1x1x7xf32>
    %93 = vector.shape_cast %92 : vector<1x1x7xf32> to vector<1x7xf32>
    %cst_100 = arith.constant dense<0.000000e+00> : vector<1x224xf32>
    %94 = tpu.matmul %93, %83, %cst_100 {dimension_numbers = #tpu.dot_dimension_numbers<[1], [0], [0], [1], [0, 0, 1, 1], [], []>} : vector<1x7xf32>, vector<7x224xf32>, vector<1x224xf32> -> vector<1x224xf32>
    %c1_101 = arith.constant 1 : index
    %c0_102 = arith.constant 0 : index
    %c0_103 = arith.constant 0 : index
    %95 = vector.load %arg13[%c1_101, %c0_102, %c0_103] : memref<7x224x128xf32, #tpu.memory_space<vmem>>, vector<1x224x128xf32>
    %96 = vector.shape_cast %95 : vector<1x224x128xf32> to vector<224x128xf32>
    %cst_104 = arith.constant dense<0.000000e+00> : vector<1x128xf32>
    %97 = tpu.matmul %94, %96, %cst_104 {dimension_numbers = #tpu.dot_dimension_numbers<[1], [0], [0], [1], [0, 0, 1, 1], [], []>} : vector<1x224xf32>, vector<224x128xf32>, vector<1x128xf32> -> vector<1x128xf32>
    %98 = arith.addf %91, %97 : vector<1x128xf32>
    %c2_105 = arith.constant 2 : index
    %c0_106 = arith.constant 0 : index
    %c0_107 = arith.constant 0 : index
    %99 = vector.load %arg12[%c2_105, %c0_106, %c0_107] : memref<7x1x7xf32, #tpu.memory_space<vmem>>, vector<1x1x7xf32>
    %100 = vector.shape_cast %99 : vector<1x1x7xf32> to vector<1x7xf32>
    %cst_108 = arith.constant dense<0.000000e+00> : vector<1x224xf32>
    %101 = tpu.matmul %100, %83, %cst_108 {dimension_numbers = #tpu.dot_dimension_numbers<[1], [0], [0], [1], [0, 0, 1, 1], [], []>} : vector<1x7xf32>, vector<7x224xf32>, vector<1x224xf32> -> vector<1x224xf32>
    %c2_109 = arith.constant 2 : index
    %c0_110 = arith.constant 0 : index
    %c0_111 = arith.constant 0 : index
    %102 = vector.load %arg13[%c2_109, %c0_110, %c0_111] : memref<7x224x128xf32, #tpu.memory_space<vmem>>, vector<1x224x128xf32>
    %103 = vector.shape_cast %102 : vector<1x224x128xf32> to vector<224x128xf32>
    %cst_112 = arith.constant dense<0.000000e+00> : vector<1x128xf32>
    %104 = tpu.matmul %101, %103, %cst_112 {dimension_numbers = #tpu.dot_dimension_numbers<[1], [0], [0], [1], [0, 0, 1, 1], [], []>} : vector<1x224xf32>, vector<224x128xf32>, vector<1x128xf32> -> vector<1x128xf32>
    %105 = arith.addf %98, %104 : vector<1x128xf32>
    %c3 = arith.constant 3 : index
    %c0_113 = arith.constant 0 : index
    %c0_114 = arith.constant 0 : index
    %106 = vector.load %arg12[%c3, %c0_113, %c0_114] : memref<7x1x7xf32, #tpu.memory_space<vmem>>, vector<1x1x7xf32>
    %107 = vector.shape_cast %106 : vector<1x1x7xf32> to vector<1x7xf32>
    %cst_115 = arith.constant dense<0.000000e+00> : vector<1x224xf32>
    %108 = tpu.matmul %107, %83, %cst_115 {dimension_numbers = #tpu.dot_dimension_numbers<[1], [0], [0], [1], [0, 0, 1, 1], [], []>} : vector<1x7xf32>, vector<7x224xf32>, vector<1x224xf32> -> vector<1x224xf32>
    %c3_116 = arith.constant 3 : index
    %c0_117 = arith.constant 0 : index
    %c0_118 = arith.constant 0 : index
    %109 = vector.load %arg13[%c3_116, %c0_117, %c0_118] : memref<7x224x128xf32, #tpu.memory_space<vmem>>, vector<1x224x128xf32>
    %110 = vector.shape_cast %109 : vector<1x224x128xf32> to vector<224x128xf32>
    %cst_119 = arith.constant dense<0.000000e+00> : vector<1x128xf32>
    %111 = tpu.matmul %108, %110, %cst_119 {dimension_numbers = #tpu.dot_dimension_numbers<[1], [0], [0], [1], [0, 0, 1, 1], [], []>} : vector<1x224xf32>, vector<224x128xf32>, vector<1x128xf32> -> vector<1x128xf32>
    %112 = arith.addf %105, %111 : vector<1x128xf32>
    %c4 = arith.constant 4 : index
    %c0_120 = arith.constant 0 : index
    %c0_121 = arith.constant 0 : index
    %113 = vector.load %arg12[%c4, %c0_120, %c0_121] : memref<7x1x7xf32, #tpu.memory_space<vmem>>, vector<1x1x7xf32>
    %114 = vector.shape_cast %113 : vector<1x1x7xf32> to vector<1x7xf32>
    %cst_122 = arith.constant dense<0.000000e+00> : vector<1x224xf32>
    %115 = tpu.matmul %114, %83, %cst_122 {dimension_numbers = #tpu.dot_dimension_numbers<[1], [0], [0], [1], [0, 0, 1, 1], [], []>} : vector<1x7xf32>, vector<7x224xf32>, vector<1x224xf32> -> vector<1x224xf32>
    %c4_123 = arith.constant 4 : index
    %c0_124 = arith.constant 0 : index
    %c0_125 = arith.constant 0 : index
    %116 = vector.load %arg13[%c4_123, %c0_124, %c0_125] : memref<7x224x128xf32, #tpu.memory_space<vmem>>, vector<1x224x128xf32>
    %117 = vector.shape_cast %116 : vector<1x224x128xf32> to vector<224x128xf32>
    %cst_126 = arith.constant dense<0.000000e+00> : vector<1x128xf32>
    %118 = tpu.matmul %115, %117, %cst_126 {dimension_numbers = #tpu.dot_dimension_numbers<[1], [0], [0], [1], [0, 0, 1, 1], [], []>} : vector<1x224xf32>, vector<224x128xf32>, vector<1x128xf32> -> vector<1x128xf32>
    %119 = arith.addf %112, %118 : vector<1x128xf32>
    %c5 = arith.constant 5 : index
    %c0_127 = arith.constant 0 : index
    %c0_128 = arith.constant 0 : index
    %120 = vector.load %arg12[%c5, %c0_127, %c0_128] : memref<7x1x7xf32, #tpu.memory_space<vmem>>, vector<1x1x7xf32>
    %121 = vector.shape_cast %120 : vector<1x1x7xf32> to vector<1x7xf32>
    %cst_129 = arith.constant dense<0.000000e+00> : vector<1x224xf32>
    %122 = tpu.matmul %121, %83, %cst_129 {dimension_numbers = #tpu.dot_dimension_numbers<[1], [0], [0], [1], [0, 0, 1, 1], [], []>} : vector<1x7xf32>, vector<7x224xf32>, vector<1x224xf32> -> vector<1x224xf32>
    %c5_130 = arith.constant 5 : index
    %c0_131 = arith.constant 0 : index
    %c0_132 = arith.constant 0 : index
    %123 = vector.load %arg13[%c5_130, %c0_131, %c0_132] : memref<7x224x128xf32, #tpu.memory_space<vmem>>, vector<1x224x128xf32>
    %124 = vector.shape_cast %123 : vector<1x224x128xf32> to vector<224x128xf32>
    %cst_133 = arith.constant dense<0.000000e+00> : vector<1x128xf32>
    %125 = tpu.matmul %122, %124, %cst_133 {dimension_numbers = #tpu.dot_dimension_numbers<[1], [0], [0], [1], [0, 0, 1, 1], [], []>} : vector<1x224xf32>, vector<224x128xf32>, vector<1x128xf32> -> vector<1x128xf32>
    %126 = arith.addf %119, %125 : vector<1x128xf32>
    %c6 = arith.constant 6 : index
    %c0_134 = arith.constant 0 : index
    %c0_135 = arith.constant 0 : index
    %127 = vector.load %arg12[%c6, %c0_134, %c0_135] : memref<7x1x7xf32, #tpu.memory_space<vmem>>, vector<1x1x7xf32>
    %128 = vector.shape_cast %127 : vector<1x1x7xf32> to vector<1x7xf32>
    %cst_136 = arith.constant dense<0.000000e+00> : vector<1x224xf32>
    %129 = tpu.matmul %128, %83, %cst_136 {dimension_numbers = #tpu.dot_dimension_numbers<[1], [0], [0], [1], [0, 0, 1, 1], [], []>} : vector<1x7xf32>, vector<7x224xf32>, vector<1x224xf32> -> vector<1x224xf32>
    %c6_137 = arith.constant 6 : index
    %c0_138 = arith.constant 0 : index
    %c0_139 = arith.constant 0 : index
    %130 = vector.load %arg13[%c6_137, %c0_138, %c0_139] : memref<7x224x128xf32, #tpu.memory_space<vmem>>, vector<1x224x128xf32>
    %131 = vector.shape_cast %130 : vector<1x224x128xf32> to vector<224x128xf32>
    %cst_140 = arith.constant dense<0.000000e+00> : vector<1x128xf32>
    %132 = tpu.matmul %129, %131, %cst_140 {dimension_numbers = #tpu.dot_dimension_numbers<[1], [0], [0], [1], [0, 0, 1, 1], [], []>} : vector<1x224xf32>, vector<224x128xf32>, vector<1x128xf32> -> vector<1x128xf32>
    %133 = arith.addf %126, %132 : vector<1x128xf32>
    %cst_141 = arith.constant 0.000000e+00 : f32
    %134 = vector.broadcast %cst_141 : f32 to vector<1x128xf32>
    %135 = arith.maximumf %133, %134 : vector<1x128xf32>
    %c0_142 = arith.constant 0 : index
    %c0_143 = arith.constant 0 : index
    %c0_144 = arith.constant 0 : index
    %136 = vector.load %arg15[%c0_142, %c0_143, %c0_144] : memref<1x1x128xf32, #tpu.memory_space<vmem>>, vector<1x1x128xf32>
    %137 = vector.shape_cast %136 : vector<1x1x128xf32> to vector<1x128xf32>
    %138 = vector.shape_cast %135 : vector<1x128xf32> to vector<1x1x128xf32>
    tpu.vector_store %arg15[%c0_142, %c0_143, %c0_144], %138 {strides = array<i32>} : memref<1x1x128xf32, #tpu.memory_space<vmem>>, vector<1x1x128xf32>,
    return
  }
  func.func @transform_0(%arg0: i32) -> (i32, i32, i32) {
    %c0_i32 = arith.constant 0 : i32
    %c0_i32_0 = arith.constant 0 : i32
    %c0_i32_1 = arith.constant 0 : i32
    return %arg0, %c0_i32, %c0_i32_0 : i32, i32, i32
  }
  func.func @transform_1(%arg0: i32) -> (i32, i32, i32) {
    %c0_i32 = arith.constant 0 : i32
    %c0_i32_0 = arith.constant 0 : i32
    %c0_i32_1 = arith.constant 0 : i32
    %c0_i32_2 = arith.constant 0 : i32
    return %c0_i32, %c0_i32_0, %c0_i32_1 : i32, i32, i32
  }
  func.func @transform_2(%arg0: i32) -> (i32, i32, i32) {
    %c0_i32 = arith.constant 0 : i32
    %c0_i32_0 = arith.constant 0 : i32
    %c0_i32_1 = arith.constant 0 : i32
    %c0_i32_2 = arith.constant 0 : i32
    return %c0_i32, %c0_i32_0, %c0_i32_1 : i32, i32, i32
  }
  func.func @transform_3(%arg0: i32) -> (i32, i32) {
    %c0_i32 = arith.constant 0 : i32
    %c0_i32_0 = arith.constant 0 : i32
    %c0_i32_1 = arith.constant 0 : i32
    return %c0_i32, %c0_i32_0 : i32, i32
  }
  func.func @transform_4(%arg0: i32) -> (i32, i32, i32) {
    %c0_i32 = arith.constant 0 : i32
    %c0_i32_0 = arith.constant 0 : i32
    %c0_i32_1 = arith.constant 0 : i32
    %c0_i32_2 = arith.constant 0 : i32
    return %c0_i32, %c0_i32_0, %c0_i32_1 : i32, i32, i32
  }
  func.func @transform_5(%arg0: i32) -> (i32, i32, i32) {
    %c0_i32 = arith.constant 0 : i32
    %c0_i32_0 = arith.constant 0 : i32
    %c0_i32_1 = arith.constant 0 : i32
    %c0_i32_2 = arith.constant 0 : i32
    return %c0_i32, %c0_i32_0, %c0_i32_1 : i32, i32, i32
  }
  func.func @transform_6(%arg0: i32) -> (i32, i32, i32) {
    %c0_i32 = arith.constant 0 : i32
    %c0_i32_0 = arith.constant 0 : i32
    %c0_i32_1 = arith.constant 0 : i32
    %c0_i32_2 = arith.constant 0 : i32
    return %c0_i32, %c0_i32_0, %c0_i32_1 : i32, i32, i32
  }
  func.func @transform_7(%arg0: i32) -> (i32, i32, i32) {
    %c0_i32 = arith.constant 0 : i32
    %c0_i32_0 = arith.constant 0 : i32
    %c0_i32_1 = arith.constant 0 : i32
    %c0_i32_2 = arith.constant 0 : i32
    return %c0_i32, %c0_i32_0, %c0_i32_1 : i32, i32, i32
  }
  func.func @transform_8(%arg0: i32) -> (i32, i32) {
    %c0_i32 = arith.constant 0 : i32
    %c0_i32_0 = arith.constant 0 : i32
    %c0_i32_1 = arith.constant 0 : i32
    return %c0_i32, %c0_i32_0 : i32, i32
  }
  func.func @transform_9(%arg0: i32) -> (i32, i32, i32) {
    %c0_i32 = arith.constant 0 : i32
    %c0_i32_0 = arith.constant 0 : i32
    %c0_i32_1 = arith.constant 0 : i32
    %c0_i32_2 = arith.constant 0 : i32
    return %c0_i32, %c0_i32_0, %c0_i32_1 : i32, i32, i32
  }
  func.func @transform_10(%arg0: i32) -> (i32, i32, i32) {
    %c0_i32 = arith.constant 0 : i32
    %c0_i32_0 = arith.constant 0 : i32
    %c0_i32_1 = arith.constant 0 : i32
    %c0_i32_2 = arith.constant 0 : i32
    return %c0_i32, %c0_i32_0, %c0_i32_1 : i32, i32, i32
  }
  func.func @transform_11(%arg0: i32) -> (i32, i32, i32) {
    %c0_i32 = arith.constant 0 : i32
    %c0_i32_0 = arith.constant 0 : i32
    %c0_i32_1 = arith.constant 0 : i32
    %c0_i32_2 = arith.constant 0 : i32
    return %c0_i32, %c0_i32_0, %c0_i32_1 : i32, i32, i32
  }
  func.func @transform_12(%arg0: i32) -> (i32, i32, i32) {
    %c0_i32 = arith.constant 0 : i32
    %c0_i32_0 = arith.constant 0 : i32
    %c0_i32_1 = arith.constant 0 : i32
    %c0_i32_2 = arith.constant 0 : i32
    return %c0_i32, %c0_i32_0, %c0_i32_1 : i32, i32, i32
  }
  func.func @transform_13(%arg0: i32) -> (i32, i32) {
    %c0_i32 = arith.constant 0 : i32
    %c0_i32_0 = arith.constant 0 : i32
    %c0_i32_1 = arith.constant 0 : i32
    return %c0_i32, %c0_i32_0 : i32, i32
  }
  func.func @transform_14(%arg0: i32) -> (i32, i32, i32) {
    %c0_i32 = arith.constant 0 : i32
    %c0_i32_0 = arith.constant 0 : i32
    %c0_i32_1 = arith.constant 0 : i32
    return %arg0, %c0_i32, %c0_i32_0 : i32, i32, i32
  }
}

</mosaic_0001>

<llo_original>
// kernel: cnn_feature_extractor.1
$region0: #{cnn_feature_extractor.1}
  #allocation0 [shape = 'u32[]', space=smem, size = 0x4, offset = 0x4, fixed_abs, tag = 'smem constant byte address 0x4 - core index']
  #allocation1 [shape = 'u32[144,128]{1,0:T(1,128)}', space=vmem, size = 0x12000, scoped, tag = 'internal scratch']
  %s0 = inlined_call_operand.vmem [shape: f32[2,28,28], index: 0, kind: input, shape index: {}]
  %s1 = inlined_call_operand.hbm [shape: f32[3,28,28], index: 1, kind: input, shape index: {}]
  %s2 = inlined_call_operand.hbm [shape: f32[3,28,448], index: 2, kind: input, shape index: {}]
  %s3 = inlined_call_operand.hbm [shape: f32[1,448], index: 3, kind: input, shape index: {}]
  %s4 = inlined_call_operand.vmem [shape: f32[2,14,28], index: 4, kind: input, shape index: {}]
  %s5 = inlined_call_operand.hbm [shape: f32[2,448,224], index: 5, kind: input, shape index: {}]
  %s6 = inlined_call_operand.hbm [shape: f32[3,14,14], index: 6, kind: input, shape index: {}]
  %s7 = inlined_call_operand.hbm [shape: f32[3,224,448], index: 7, kind: input, shape index: {}]
  %s8 = inlined_call_operand.hbm [shape: f32[1,448], index: 8, kind: input, shape index: {}]
  %s9 = inlined_call_operand.vmem [shape: f32[2,7,14], index: 9, kind: input, shape index: {}]
  %s10 = inlined_call_operand.hbm [shape: f32[2,448,224], index: 10, kind: input, shape index: {}]
  %s11 = inlined_call_operand.hbm [shape: f32[7,1,7], index: 11, kind: input, shape index: {}]
  %s12 = inlined_call_operand.hbm [shape: f32[7,224,128], index: 12, kind: input, shape index: {}]
  %s13 = inlined_call_operand.hbm [shape: f32[1,128], index: 13, kind: input, shape index: {}]
  %s14 = inlined_call_operand.hbm [shape: f32[2,1,128], index: 14, kind: output, shape index: {}]
  %s15 = sld [smem:[#allocation0]]
  $region133: #{cnn_feature_extractor.1} parent=0
    _
  %s17 = ssub.s32 1, %s15
  %s18 = scalar_select 0, %s17, %s15
  $region1: #{cnn_feature_extractor.1} parent=0
    #allocation2 [shape = 'u8[49152]{0}', space=vmem, size = 0xc000, scoped, tag = 'input window, operand 1, single buffered']
    #allocation3 [shape = 's32[2]{0}', space=sflag, size = 0x8, scoped, tag = 'scoped memory for cnn_feature_extractor.1']
    #allocation4 [shape = 's32[2]{0}', space=sflag, size = 0x8, scoped, tag = 'scoped memory for cnn_feature_extractor.1']
    #allocation5 [shape = 'u8[196608]{0}', space=vmem, size = 0x30000, scoped, tag = 'input window, operand 2, single buffered']
    #allocation6 [shape = 's32[1]{0}', space=sflag, size = 0x4, scoped, tag = 'scoped memory for cnn_feature_extractor.1']
    #allocation7 [shape = 'u8[2048]{0}', space=vmem, size = 0x800, scoped, tag = 'input window, operand 3, single buffered']
    #allocation8 [shape = 'u8[917504]{0}', space=vmem, size = 0xe0000, scoped, tag = 'input window, operand 5, single buffered']
    #allocation9 [shape = 's32[1]{0}', space=sflag, size = 0x4, scoped, tag = 'scoped memory for cnn_feature_extractor.1']
    #allocation10 [shape = 'u8[24576]{0}', space=vmem, size = 0x6000, scoped, tag = 'input window, operand 6, single buffered']
    #allocation11 [shape = 'u8[1376256]{0}', space=vmem, size = 0x150000, scoped, tag = 'input window, operand 7, single buffered']
    #allocation12 [shape = 's32[1]{0}', space=sflag, size = 0x4, scoped, tag = 'scoped memory for cnn_feature_extractor.1']
    #allocation13 [shape = 'u8[2048]{0}', space=vmem, size = 0x800, scoped, tag = 'input window, operand 8, single buffered']
    #allocation14 [shape = 'u8[917504]{0}', space=vmem, size = 0xe0000, scoped, tag = 'input window, operand 10, single buffered']
    #allocation15 [shape = 's32[1]{0}', space=sflag, size = 0x4, scoped, tag = 'scoped memory for cnn_feature_extractor.1']
    #allocation16 [shape = 'u8[3584]{0}', space=vmem, size = 0x1000, scoped, tag = 'input window, operand 11, single buffered']
    #allocation17 [shape = 'u8[802816]{0}', space=vmem, size = 0xc4000, scoped, tag = 'input window, operand 12, single buffered']
    #allocation18 [shape = 's32[1]{0}', space=sflag, size = 0x4, scoped, tag = 'scoped memory for cnn_feature_extractor.1']
    #allocation19 [shape = 'u8[512]{0}', space=vmem, size = 0x400, scoped, tag = 'input window, operand 13, single buffered']
    #allocation20 [shape = 'u8[1024]{0}', space=vmem, size = 0x400, scoped, tag = 'output window, operand 0']
    %19 = vsyncpa [#allocation3], 0
    %20 = vsyncpa [#allocation6], 0
    %21 = vsyncpa [#allocation9], 0
    %22 = vsyncpa [#allocation12], 0
    %23 = vsyncpa [#allocation15], 0
    %24 = vsyncpa [#allocation18], 0
    %25 = vsyncpa [#allocation4], 0
    %s26 = scalar_lea.sflag [#allocation4], 1
    %27 = vsyncpa %s26, 0
    loop: start=0, step=1, limit=4
    $region2: #{cnn_feature_extractor.1} parent=1 // loop_pre_header
      _
    $region3: #{cnn_feature_extractor.1} parent=1 // loop_header
      %s29 = sphi 0, %s33
      %p30 = scmp.ge.s32.totalorder %s29, 4
      %s39 = sphi 0, %s41
      %s42 = sphi 0, %s39
      %s43 = sphi 0, %s42
      %s59 = sphi 0, %s43
      %s63 = sphi 0, %s63
      %s65 = sphi 0, %s63
      %s66 = sphi 0, %s65
      %s80 = sphi 0, %s66
      %s84 = sphi 0, %s84
      %s86 = sphi 0, %s84
      %s87 = sphi 0, %s86
      %s101 = sphi 0, %s87
      %s105 = sphi 0, %s105
      %s107 = sphi 0, %s105
      %s108 = sphi 0, %s107
      %s122 = sphi 0, %s108
      %s126 = sphi 0, %s126
      %s128 = sphi 0, %s126
      %s129 = sphi 0, %s128
      %s143 = sphi 0, %s129
      %s147 = sphi 0, %s147
      %s149 = sphi 0, %s147
      %s150 = sphi 0, %s149
      %s164 = sphi 0, %s150
      %s168 = sphi 0, %s168
      %s170 = sphi 0, %s168
      %s171 = sphi 0, %s170
      %s185 = sphi 0, %s171
      %s189 = sphi 0, %s189
      %s191 = sphi 0, %s189
      %s192 = sphi 0, %s191
      %s206 = sphi 0, %s192
      %s210 = sphi 0, %s210
      %s212 = sphi 0, %s210
      %s213 = sphi 0, %s212
      %s227 = sphi 0, %s213
      %s231 = sphi 0, %s231
      %s233 = sphi 0, %s231
      %s234 = sphi 0, %s233
      %s248 = sphi 0, %s234
      %s252 = sphi 0, %s252
      %s254 = sphi 0, %s252
      %s255 = sphi 0, %s254
      %s269 = sphi 0, %s255
      %s273 = sphi 0, %s273
      %s275 = sphi 0, %s273
      %s276 = sphi 0, %s275
      %s290 = sphi 0, %s276
      %s294 = sphi 0, %s294
      %s296 = sphi 0, %s294
      %s297 = sphi 0, %s296
      %s311 = sphi 0, %s297
      %s315 = sphi 0, %s315
      %s317 = sphi 0, %s315
      %s318 = sphi 0, %s317
      %s332 = sphi 0, %s318
      %s338 = sphi 0, %s340
      %s341 = sphi 0, %s338
      %s342 = sphi 0, %s341
      %s358 = sphi 0, %s342
    $region4: #{cnn_feature_extractor.1} parent=1 // loop_header_branch
      %32 = sbr.rel (%p30) target = $region8
    $region5: #{cnn_feature_extractor.1} parent=1 // loop_body
      %s34 = ssub.s32 %s29, 1
      %s35 = ssub.s32 %s29, 2
      %s36 = sadd.s32 %s29, 1
      %s37 = ssub.s32 %s29, %s36
      %p38 = scmp.eq.s32.totalorder %s37, 0
      %s40 = sadd.s32 %s39, 1
      %s41 = scalar_select %p38, %s39, %s40
      %p44 = pneg %p38
      %p45 = scmp.eq.s32.totalorder %s29, 1
      %p46 = por %p44, %p45
      %p47 = scmp.ne.s32.totalorder %s39, %s42
      %p48 = scmp.eq.s32.totalorder %s29, 0
      %p49 = por %p47, %p48
      %p50 = scmp.ne.s32.totalorder %s39, %s42
      %p51 = scmp.eq.s32.totalorder %s34, 1
      %p52 = por %p50, %p51
      %p53 = scmp.ne.s32.totalorder %s42, %s43
      %p54 = scmp.eq.s32.totalorder %s34, 0
      %p55 = por %p53, %p54
      %p56 = scmp.ne.s32.totalorder %s42, %s43
      %p57 = scmp.eq.s32.totalorder %s35, 1
      %p58 = por %p56, %p57
      %p60 = scmp.ne.s32.totalorder %s43, %s59
      %p61 = scmp.eq.s32.totalorder %s35, 0
      %p62 = por %p60, %p61
      %s64 = sadd.s32 %s63, 1
      %p67 = scmp.eq.s32.totalorder %s29, 1
      %p68 = scmp.ne.s32.totalorder %s63, %s65
      %p69 = scmp.eq.s32.totalorder %s29, 0
      %p70 = por %p68, %p69
      %p71 = scmp.ne.s32.totalorder %s63, %s65
      %p72 = scmp.eq.s32.totalorder %s34, 1
      %p73 = por %p71, %p72
      %p74 = scmp.ne.s32.totalorder %s65, %s66
      %p75 = scmp.eq.s32.totalorder %s34, 0
      %p76 = por %p74, %p75
      %p77 = scmp.ne.s32.totalorder %s65, %s66
      %p78 = scmp.eq.s32.totalorder %s35, 1
      %p79 = por %p77, %p78
      %p81 = scmp.ne.s32.totalorder %s66, %s80
      %p82 = scmp.eq.s32.totalorder %s35, 0
      %p83 = por %p81, %p82
      %s85 = sadd.s32 %s84, 1
      %p88 = scmp.eq.s32.totalorder %s29, 1
      %p89 = scmp.ne.s32.totalorder %s84, %s86
      %p90 = scmp.eq.s32.totalorder %s29, 0
      %p91 = por %p89, %p90
      %p92 = scmp.ne.s32.totalorder %s84, %s86
      %p93 = scmp.eq.s32.totalorder %s34, 1
      %p94 = por %p92, %p93
      %p95 = scmp.ne.s32.totalorder %s86, %s87
      %p96 = scmp.eq.s32.totalorder %s34, 0
      %p97 = por %p95, %p96
      %p98 = scmp.ne.s32.totalorder %s86, %s87
      %p99 = scmp.eq.s32.totalorder %s35, 1
      %p100 = por %p98, %p99
      %p102 = scmp.ne.s32.totalorder %s87, %s101
      %p103 = scmp.eq.s32.totalorder %s35, 0
      %p104 = por %p102, %p103
      %s106 = sadd.s32 %s105, 1
      %p109 = scmp.eq.s32.totalorder %s29, 1
      %p110 = scmp.ne.s32.totalorder %s105, %s107
      %p111 = scmp.eq.s32.totalorder %s29, 0
      %p112 = por %p110, %p111
      %p113 = scmp.ne.s32.totalorder %s105, %s107
      %p114 = scmp.eq.s32.totalorder %s34, 1
      %p115 = por %p113, %p114
      %p116 = scmp.ne.s32.totalorder %s107, %s108
      %p117 = scmp.eq.s32.totalorder %s34, 0
      %p118 = por %p116, %p117
      %p119 = scmp.ne.s32.totalorder %s107, %s108
      %p120 = scmp.eq.s32.totalorder %s35, 1
      %p121 = por %p119, %p120
      %p123 = scmp.ne.s32.totalorder %s108, %s122
      %p124 = scmp.eq.s32.totalorder %s35, 0
      %p125 = por %p123, %p124
      %s127 = sadd.s32 %s126, 1
      %p130 = scmp.eq.s32.totalorder %s29, 1
      %p131 = scmp.ne.s32.totalorder %s126, %s128
      %p132 = scmp.eq.s32.totalorder %s29, 0
      %p133 = por %p131, %p132
      %p134 = scmp.ne.s32.totalorder %s126, %s128
      %p135 = scmp.eq.s32.totalorder %s34, 1
      %p136 = por %p134, %p135
      %p137 = scmp.ne.s32.totalorder %s128, %s129
      %p138 = scmp.eq.s32.totalorder %s34, 0
      %p139 = por %p137, %p138
      %p140 = scmp.ne.s32.totalorder %s128, %s129
      %p141 = scmp.eq.s32.totalorder %s35, 1
      %p142 = por %p140, %p141
      %p144 = scmp.ne.s32.totalorder %s129, %s143
      %p145 = scmp.eq.s32.totalorder %s35, 0
      %p146 = por %p144, %p145
      %s148 = sadd.s32 %s147, 1
      %p151 = scmp.eq.s32.totalorder %s29, 1
      %p152 = scmp.ne.s32.totalorder %s147, %s149
      %p153 = scmp.eq.s32.totalorder %s29, 0
      %p154 = por %p152, %p153
      %p155 = scmp.ne.s32.totalorder %s147, %s149
      %p156 = scmp.eq.s32.totalorder %s34, 1
      %p157 = por %p155, %p156
      %p158 = scmp.ne.s32.totalorder %s149, %s150
      %p159 = scmp.eq.s32.totalorder %s34, 0
      %p160 = por %p158, %p159
      %p161 = scmp.ne.s32.totalorder %s149, %s150
      %p162 = scmp.eq.s32.totalorder %s35, 1
      %p163 = por %p161, %p162
      %p165 = scmp.ne.s32.totalorder %s150, %s164
      %p166 = scmp.eq.s32.totalorder %s35, 0
      %p167 = por %p165, %p166
      %s169 = sadd.s32 %s168, 1
      %p172 = scmp.eq.s32.totalorder %s29, 1
      %p173 = scmp.ne.s32.totalorder %s168, %s170
      %p174 = scmp.eq.s32.totalorder %s29, 0
      %p175 = por %p173, %p174
      %p176 = scmp.ne.s32.totalorder %s168, %s170
      %p177 = scmp.eq.s32.totalorder %s34, 1
      %p178 = por %p176, %p177
      %p179 = scmp.ne.s32.totalorder %s170, %s171
      %p180 = scmp.eq.s32.totalorder %s34, 0
      %p181 = por %p179, %p180
      %p182 = scmp.ne.s32.totalorder %s170, %s171
      %p183 = scmp.eq.s32.totalorder %s35, 1
      %p184 = por %p182, %p183
      %p186 = scmp.ne.s32.totalorder %s171, %s185
      %p187 = scmp.eq.s32.totalorder %s35, 0
      %p188 = por %p186, %p187
      %s190 = sadd.s32 %s189, 1
      %p193 = scmp.eq.s32.totalorder %s29, 1
      %p194 = scmp.ne.s32.totalorder %s189, %s191
      %p195 = scmp.eq.s32.totalorder %s29, 0
      %p196 = por %p194, %p195
      %p197 = scmp.ne.s32.totalorder %s189, %s191
      %p198 = scmp.eq.s32.totalorder %s34, 1
      %p199 = por %p197, %p198
      %p200 = scmp.ne.s32.totalorder %s191, %s192
      %p201 = scmp.eq.s32.totalorder %s34, 0
      %p202 = por %p200, %p201
      %p203 = scmp.ne.s32.totalorder %s191, %s192
      %p204 = scmp.eq.s32.totalorder %s35, 1
      %p205 = por %p203, %p204
      %p207 = scmp.ne.s32.totalorder %s192, %s206
      %p208 = scmp.eq.s32.totalorder %s35, 0
      %p209 = por %p207, %p208
      %s211 = sadd.s32 %s210, 1
      %p214 = scmp.eq.s32.totalorder %s29, 1
      %p215 = scmp.ne.s32.totalorder %s210, %s212
      %p216 = scmp.eq.s32.totalorder %s29, 0
      %p217 = por %p215, %p216
      %p218 = scmp.ne.s32.totalorder %s210, %s212
      %p219 = scmp.eq.s32.totalorder %s34, 1
      %p220 = por %p218, %p219
      %p221 = scmp.ne.s32.totalorder %s212, %s213
      %p222 = scmp.eq.s32.totalorder %s34, 0
      %p223 = por %p221, %p222
      %p224 = scmp.ne.s32.totalorder %s212, %s213
      %p225 = scmp.eq.s32.totalorder %s35, 1
      %p226 = por %p224, %p225
      %p228 = scmp.ne.s32.totalorder %s213, %s227
      %p229 = scmp.eq.s32.totalorder %s35, 0
      %p230 = por %p228, %p229
      %s232 = sadd.s32 %s231, 1
      %p235 = scmp.eq.s32.totalorder %s29, 1
      %p236 = scmp.ne.s32.totalorder %s231, %s233
      %p237 = scmp.eq.s32.totalorder %s29, 0
      %p238 = por %p236, %p237
      %p239 = scmp.ne.s32.totalorder %s231, %s233
      %p240 = scmp.eq.s32.totalorder %s34, 1
      %p241 = por %p239, %p240
      %p242 = scmp.ne.s32.totalorder %s233, %s234
      %p243 = scmp.eq.s32.totalorder %s34, 0
      %p244 = por %p242, %p243
      %p245 = scmp.ne.s32.totalorder %s233, %s234
      %p246 = scmp.eq.s32.totalorder %s35, 1
      %p247 = por %p245, %p246
      %p249 = scmp.ne.s32.totalorder %s234, %s248
      %p250 = scmp.eq.s32.totalorder %s35, 0
      %p251 = por %p249, %p250
      %s253 = sadd.s32 %s252, 1
      %p256 = scmp.eq.s32.totalorder %s29, 1
      %p257 = scmp.ne.s32.totalorder %s252, %s254
      %p258 = scmp.eq.s32.totalorder %s29, 0
      %p259 = por %p257, %p258
      %p260 = scmp.ne.s32.totalorder %s252, %s254
      %p261 = scmp.eq.s32.totalorder %s34, 1
      %p262 = por %p260, %p261
      %p263 = scmp.ne.s32.totalorder %s254, %s255
      %p264 = scmp.eq.s32.totalorder %s34, 0
      %p265 = por %p263, %p264
      %p266 = scmp.ne.s32.totalorder %s254, %s255
      %p267 = scmp.eq.s32.totalorder %s35, 1
      %p268 = por %p266, %p267
      %p270 = scmp.ne.s32.totalorder %s255, %s269
      %p271 = scmp.eq.s32.totalorder %s35, 0
      %p272 = por %p270, %p271
      %s274 = sadd.s32 %s273, 1
      %p277 = scmp.eq.s32.totalorder %s29, 1
      %p278 = scmp.ne.s32.totalorder %s273, %s275
      %p279 = scmp.eq.s32.totalorder %s29, 0
      %p280 = por %p278, %p279
      %p281 = scmp.ne.s32.totalorder %s273, %s275
      %p282 = scmp.eq.s32.totalorder %s34, 1
      %p283 = por %p281, %p282
      %p284 = scmp.ne.s32.totalorder %s275, %s276
      %p285 = scmp.eq.s32.totalorder %s34, 0
      %p286 = por %p284, %p285
      %p287 = scmp.ne.s32.totalorder %s275, %s276
      %p288 = scmp.eq.s32.totalorder %s35, 1
      %p289 = por %p287, %p288
      %p291 = scmp.ne.s32.totalorder %s276, %s290
      %p292 = scmp.eq.s32.totalorder %s35, 0
      %p293 = por %p291, %p292
      %s295 = sadd.s32 %s294, 1
      %p298 = scmp.eq.s32.totalorder %s29, 1
      %p299 = scmp.ne.s32.totalorder %s294, %s296
      %p300 = scmp.eq.s32.totalorder %s29, 0
      %p301 = por %p299, %p300
      %p302 = scmp.ne.s32.totalorder %s294, %s296
      %p303 = scmp.eq.s32.totalorder %s34, 1
      %p304 = por %p302, %p303
      %p305 = scmp.ne.s32.totalorder %s296, %s297
      %p306 = scmp.eq.s32.totalorder %s34, 0
      %p307 = por %p305, %p306
      %p308 = scmp.ne.s32.totalorder %s296, %s297
      %p309 = scmp.eq.s32.totalorder %s35, 1
      %p310 = por %p308, %p309
      %p312 = scmp.ne.s32.totalorder %s297, %s311
      %p313 = scmp.eq.s32.totalorder %s35, 0
      %p314 = por %p312, %p313
      %s316 = sadd.s32 %s315, 1
      %p319 = scmp.eq.s32.totalorder %s29, 1
      %p320 = scmp.ne.s32.totalorder %s315, %s317
      %p321 = scmp.eq.s32.totalorder %s29, 0
      %p322 = por %p320, %p321
      %p323 = scmp.ne.s32.totalorder %s315, %s317
      %p324 = scmp.eq.s32.totalorder %s34, 1
      %p325 = por %p323, %p324
      %p326 = scmp.ne.s32.totalorder %s317, %s318
      %p327 = scmp.eq.s32.totalorder %s34, 0
      %p328 = por %p326, %p327
      %p329 = scmp.ne.s32.totalorder %s317, %s318
      %p330 = scmp.eq.s32.totalorder %s35, 1
      %p331 = por %p329, %p330
      %p333 = scmp.ne.s32.totalorder %s318, %s332
      %p334 = scmp.eq.s32.totalorder %s35, 0
      %p335 = por %p333, %p334
      %s336 = ssub.s32 %s29, %s36
      %p337 = scmp.eq.s32.totalorder %s336, 0
      %s339 = sadd.s32 %s338, 1
      %s340 = scalar_select %p337, %s338, %s339
      %p343 = pneg %p337
      %p344 = scmp.eq.s32.totalorder %s29, 1
      %p345 = por %p343, %p344
      %p346 = scmp.ne.s32.totalorder %s338, %s341
      %p347 = scmp.eq.s32.totalorder %s29, 0
      %p348 = por %p346, %p347
      %p349 = scmp.ne.s32.totalorder %s338, %s341
      %p350 = scmp.eq.s32.totalorder %s34, 1
      %p351 = por %p349, %p350
      %p352 = scmp.ne.s32.totalorder %s341, %s342
      %p353 = scmp.eq.s32.totalorder %s34, 0
      %p354 = por %p352, %p353
      %p355 = scmp.ne.s32.totalorder %s341, %s342
      %p356 = scmp.eq.s32.totalorder %s35, 1
      %p357 = por %p355, %p356
      %p359 = scmp.ne.s32.totalorder %s342, %s358
      %p360 = scmp.eq.s32.totalorder %s35, 0
      %p361 = por %p359, %p360
      %p362 = scmp.le.s32.totalorder 1, %s29
      %p363 = scmp.lt.s32.totalorder %s29, 3
      %p364 = pnand %p362, %p363
      %p365 = pneg %p364
      // Predicated region
      $region9: #{cnn_feature_extractor.1} parent=5 // pred_check
        _
      $region10: #{cnn_feature_extractor.1} parent=5 // pred_check_branch
        %367 = sbr.rel (%p364) target = $region12
      $region11: #{cnn_feature_extractor.1} parent=5 // pred_region
        %s368 = ssub.s32 %s29, 1
        // Predicated region
        $region13: #{cnn_feature_extractor.1} parent=11 // pred_check
          %p369 = pneg %p76
        $region14: #{cnn_feature_extractor.1} parent=11 // pred_check_branch
          %371 = sbr.rel (%p369) target = $region16
        $region15: #{cnn_feature_extractor.1} parent=11 // pred_region
          %s373 = ssub.s32 1536, 1536
          %374 = vsyncadd [#allocation3], %s373
          %s375 = sshll.u32 [#allocation2], 4
          %s376 = int_to_ptr.vmem [resolvable:$true] %s375
          %381 = dma.hbm_to_vmem [thread:$0]  %s1, 1536, %s376, [#allocation3], 128, 128, 8
        $region16: #{cnn_feature_extractor.1} parent=11 // pred_fallthru
          _
        // Predicated region
        $region17: #{cnn_feature_extractor.1} parent=11 // pred_check
          %p382 = pneg %p97
        $region18: #{cnn_feature_extractor.1} parent=11 // pred_check_branch
          %384 = sbr.rel (%p382) target = $region20
        $region19: #{cnn_feature_extractor.1} parent=11 // pred_region
          %s386 = ssub.s32 6144, 6144
          %387 = vsyncadd [#allocation6], %s386
          %s388 = sshll.u32 [#allocation5], 4
          %s389 = int_to_ptr.vmem [resolvable:$true] %s388
          %394 = dma.hbm_to_vmem [thread:$0]  %s2, 6144, %s389, [#allocation6], 512, 512, 32
        $region20: #{cnn_feature_extractor.1} parent=11 // pred_fallthru
          _
        // Predicated region
        $region21: #{cnn_feature_extractor.1} parent=11 // pred_check
          %p395 = pneg %p118
        $region22: #{cnn_feature_extractor.1} parent=11 // pred_check_branch
          %397 = sbr.rel (%p395) target = $region24
        $region23: #{cnn_feature_extractor.1} parent=11 // pred_region
          %s399 = ssub.s32 64, 64
          %400 = vsyncadd [#allocation6], %s399
          %s402 = sshll.u32 [#allocation7], 4
          %s403 = int_to_ptr.vmem [resolvable:$true] %s402
          %405 = dma.hbm_to_vmem [thread:$0]  %s3, 64, %s403, [#allocation6]
        $region24: #{cnn_feature_extractor.1} parent=11 // pred_fallthru
          _
        // Predicated region
        $region25: #{cnn_feature_extractor.1} parent=11 // pred_check
          %p406 = pneg %p139
        $region26: #{cnn_feature_extractor.1} parent=11 // pred_check_branch
          %408 = sbr.rel (%p406) target = $region28
        $region27: #{cnn_feature_extractor.1} parent=11 // pred_region
          _
        $region28: #{cnn_feature_extractor.1} parent=11 // pred_fallthru
          _
        // Predicated region
        $region29: #{cnn_feature_extractor.1} parent=11 // pred_check
          %p409 = pneg %p160
        $region30: #{cnn_feature_extractor.1} parent=11 // pred_check_branch
          %411 = sbr.rel (%p409) target = $region32
        $region31: #{cnn_feature_extractor.1} parent=11 // pred_region
          %s413 = ssub.s32 28672, 28672
          %414 = vsyncadd [#allocation9], %s413
          %s415 = sshll.u32 [#allocation8], 4
          %s416 = int_to_ptr.vmem [resolvable:$true] %s415
          %421 = dma.hbm_to_vmem [thread:$0]  %s5, 28672, %s416, [#allocation9], 256, 256, 16
        $region32: #{cnn_feature_extractor.1} parent=11 // pred_fallthru
          _
        // Predicated region
        $region33: #{cnn_feature_extractor.1} parent=11 // pred_check
          %p422 = pneg %p181
        $region34: #{cnn_feature_extractor.1} parent=11 // pred_check_branch
          %424 = sbr.rel (%p422) target = $region36
        $region35: #{cnn_feature_extractor.1} parent=11 // pred_region
          %s426 = ssub.s32 768, 768
          %427 = vsyncadd [#allocation9], %s426
          %s428 = sshll.u32 [#allocation10], 4
          %s429 = int_to_ptr.vmem [resolvable:$true] %s428
          %434 = dma.hbm_to_vmem [thread:$0]  %s6, 768, %s429, [#allocation9], 128, 128, 8
        $region36: #{cnn_feature_extractor.1} parent=11 // pred_fallthru
          _
        // Predicated region
        $region37: #{cnn_feature_extractor.1} parent=11 // pred_check
          %p435 = pneg %p202
        $region38: #{cnn_feature_extractor.1} parent=11 // pred_check_branch
          %437 = sbr.rel (%p435) target = $region40
        $region39: #{cnn_feature_extractor.1} parent=11 // pred_region
          %s439 = ssub.s32 43008, 43008
          %440 = vsyncadd [#allocation12], %s439
          %s441 = sshll.u32 [#allocation11], 4
          %s442 = int_to_ptr.vmem [resolvable:$true] %s441
          %447 = dma.hbm_to_vmem [thread:$0]  %s7, 43008, %s442, [#allocation12], 512, 512, 32
        $region40: #{cnn_feature_extractor.1} parent=11 // pred_fallthru
          _
        // Predicated region
        $region41: #{cnn_feature_extractor.1} parent=11 // pred_check
          %p448 = pneg %p223
        $region42: #{cnn_feature_extractor.1} parent=11 // pred_check_branch
          %450 = sbr.rel (%p448) target = $region44
        $region43: #{cnn_feature_extractor.1} parent=11 // pred_region
          %s452 = ssub.s32 64, 64
          %453 = vsyncadd [#allocation12], %s452
          %s455 = sshll.u32 [#allocation13], 4
          %s456 = int_to_ptr.vmem [resolvable:$true] %s455
          %458 = dma.hbm_to_vmem [thread:$0]  %s8, 64, %s456, [#allocation12]
        $region44: #{cnn_feature_extractor.1} parent=11 // pred_fallthru
          _
        // Predicated region
        $region45: #{cnn_feature_extractor.1} parent=11 // pred_check
          %p459 = pneg %p244
        $region46: #{cnn_feature_extractor.1} parent=11 // pred_check_branch
          %461 = sbr.rel (%p459) target = $region48
        $region47: #{cnn_feature_extractor.1} parent=11 // pred_region
          _
        $region48: #{cnn_feature_extractor.1} parent=11 // pred_fallthru
          _
        // Predicated region
        $region49: #{cnn_feature_extractor.1} parent=11 // pred_check
          %p462 = pneg %p265
        $region50: #{cnn_feature_extractor.1} parent=11 // pred_check_branch
          %464 = sbr.rel (%p462) target = $region52
        $region51: #{cnn_feature_extractor.1} parent=11 // pred_region
          %s466 = ssub.s32 28672, 28672
          %467 = vsyncadd [#allocation15], %s466
          %s468 = sshll.u32 [#allocation14], 4
          %s469 = int_to_ptr.vmem [resolvable:$true] %s468
          %474 = dma.hbm_to_vmem [thread:$0]  %s10, 28672, %s469, [#allocation15], 256, 256, 16
        $region52: #{cnn_feature_extractor.1} parent=11 // pred_fallthru
          _
        // Predicated region
        $region53: #{cnn_feature_extractor.1} parent=11 // pred_check
          %p475 = pneg %p286
        $region54: #{cnn_feature_extractor.1} parent=11 // pred_check_branch
          %477 = sbr.rel (%p475) target = $region56
        $region55: #{cnn_feature_extractor.1} parent=11 // pred_region
          %s479 = ssub.s32 112, 112
          %480 = vsyncadd [#allocation15], %s479
          %s481 = sshll.u32 [#allocation16], 4
          %s482 = int_to_ptr.vmem [resolvable:$true] %s481
          %487 = dma.hbm_to_vmem [thread:$0]  %s11, 112, %s482, [#allocation15], 16, 16, 1
        $region56: #{cnn_feature_extractor.1} parent=11 // pred_fallthru
          _
        // Predicated region
        $region57: #{cnn_feature_extractor.1} parent=11 // pred_check
          %p488 = pneg %p307
        $region58: #{cnn_feature_extractor.1} parent=11 // pred_check_branch
          %490 = sbr.rel (%p488) target = $region60
        $region59: #{cnn_feature_extractor.1} parent=11 // pred_region
          %s492 = ssub.s32 25088, 25088
          %493 = vsyncadd [#allocation18], %s492
          %s494 = sshll.u32 [#allocation17], 4
          %s495 = int_to_ptr.vmem [resolvable:$true] %s494
          %500 = dma.hbm_to_vmem [thread:$0]  %s12, 25088, %s495, [#allocation18], 128, 128, 8
        $region60: #{cnn_feature_extractor.1} parent=11 // pred_fallthru
          _
        // Predicated region
        $region61: #{cnn_feature_extractor.1} parent=11 // pred_check
          %p501 = pneg %p328
        $region62: #{cnn_feature_extractor.1} parent=11 // pred_check_branch
          %503 = sbr.rel (%p501) target = $region64
        $region63: #{cnn_feature_extractor.1} parent=11 // pred_region
          %s505 = ssub.s32 16, 16
          %506 = vsyncadd [#allocation18], %s505
          %s508 = sshll.u32 [#allocation19], 4
          %s509 = int_to_ptr.vmem [resolvable:$true] %s508
          %511 = dma.hbm_to_vmem [thread:$0]  %s13, 16, %s509, [#allocation18]
        $region64: #{cnn_feature_extractor.1} parent=11 // pred_fallthru
          _
      $region12: #{cnn_feature_extractor.1} parent=5 // pred_fallthru
        _
      %p512 = scmp.lt.s32.totalorder %s29, 2
      // Predicated region
      $region65: #{cnn_feature_extractor.1} parent=5 // pred_check
        %p513 = pneg %p512
      $region66: #{cnn_feature_extractor.1} parent=5 // pred_check_branch
        %515 = sbr.rel (%p513) target = $region68
      $region67: #{cnn_feature_extractor.1} parent=5 // pred_region
        // Predicated region
        $region69: #{cnn_feature_extractor.1} parent=67 // pred_check
          %p516 = pneg %p49
        $region70: #{cnn_feature_extractor.1} parent=67 // pred_check_branch
          %518 = sbr.rel (%p516) target = $region72
        $region71: #{cnn_feature_extractor.1} parent=67 // pred_region
          %p519 = scmp.lt.s32.totalorder %s29, 1
          %s520 = scalar_select %p519, %s29, 1
          %s521 = smul.addr %s520, 4
          %s522 = smul.addr %s521, 8
          %s523 = scalar_lea.vmem %s0, %s522
        $region72: #{cnn_feature_extractor.1} parent=67 // pred_fallthru
          _
      $region68: #{cnn_feature_extractor.1} parent=5 // pred_fallthru
        _
      %p524 = scmp.le.s32.totalorder 1, %s29
      %p525 = scmp.lt.s32.totalorder %s29, 3
      %p526 = pnand %p524, %p525
      %p527 = pneg %p526
      // Predicated region
      $region73: #{cnn_feature_extractor.1} parent=5 // pred_check
        _
      $region74: #{cnn_feature_extractor.1} parent=5 // pred_check_branch
        %529 = sbr.rel (%p526) target = $region76
      $region75: #{cnn_feature_extractor.1} parent=5 // pred_region
        %s530 = ssub.s32 %s29, 1
        // Predicated region
        $region77: #{cnn_feature_extractor.1} parent=75 // pred_check
          %p531 = pneg %p76
        $region78: #{cnn_feature_extractor.1} parent=75 // pred_check_branch
          %533 = sbr.rel (%p531) target = $region80
        $region79: #{cnn_feature_extractor.1} parent=75 // pred_region
          %534 = dma.done [#allocation3], 1536
        $region80: #{cnn_feature_extractor.1} parent=75 // pred_fallthru
          _
        // Predicated region
        $region81: #{cnn_feature_extractor.1} parent=75 // pred_check
          %p535 = pneg %p97
        $region82: #{cnn_feature_extractor.1} parent=75 // pred_check_branch
          %537 = sbr.rel (%p535) target = $region84
        $region83: #{cnn_feature_extractor.1} parent=75 // pred_region
          %538 = dma.done [#allocation6], 6144
        $region84: #{cnn_feature_extractor.1} parent=75 // pred_fallthru
          _
        // Predicated region
        $region85: #{cnn_feature_extractor.1} parent=75 // pred_check
          %p539 = pneg %p118
        $region86: #{cnn_feature_extractor.1} parent=75 // pred_check_branch
          %541 = sbr.rel (%p539) target = $region88
        $region87: #{cnn_feature_extractor.1} parent=75 // pred_region
          %542 = dma.done [#allocation6], 64
        $region88: #{cnn_feature_extractor.1} parent=75 // pred_fallthru
          _
        // Predicated region
        $region89: #{cnn_feature_extractor.1} parent=75 // pred_check
          %p543 = pneg %p160
        $region90: #{cnn_feature_extractor.1} parent=75 // pred_check_branch
          %545 = sbr.rel (%p543) target = $region92
        $region91: #{cnn_feature_extractor.1} parent=75 // pred_region
          %546 = dma.done [#allocation9], 28672
        $region92: #{cnn_feature_extractor.1} parent=75 // pred_fallthru
          _
        // Predicated region
        $region93: #{cnn_feature_extractor.1} parent=75 // pred_check
          %p547 = pneg %p181
        $region94: #{cnn_feature_extractor.1} parent=75 // pred_check_branch
          %549 = sbr.rel (%p547) target = $region96
        $region95: #{cnn_feature_extractor.1} parent=75 // pred_region
          %550 = dma.done [#allocation9], 768
        $region96: #{cnn_feature_extractor.1} parent=75 // pred_fallthru
          _
        // Predicated region
        $region97: #{cnn_feature_extractor.1} parent=75 // pred_check
          %p551 = pneg %p202
        $region98: #{cnn_feature_extractor.1} parent=75 // pred_check_branch
          %553 = sbr.rel (%p551) target = $region100
        $region99: #{cnn_feature_extractor.1} parent=75 // pred_region
          %554 = dma.done [#allocation12], 43008
        $region100: #{cnn_feature_extractor.1} parent=75 // pred_fallthru
          _
        // Predicated region
        $region101: #{cnn_feature_extractor.1} parent=75 // pred_check
          %p555 = pneg %p223
        $region102: #{cnn_feature_extractor.1} parent=75 // pred_check_branch
          %557 = sbr.rel (%p555) target = $region104
        $region103: #{cnn_feature_extractor.1} parent=75 // pred_region
          %558 = dma.done [#allocation12], 64
        $region104: #{cnn_feature_extractor.1} parent=75 // pred_fallthru
          _
        // Predicated region
        $region105: #{cnn_feature_extractor.1} parent=75 // pred_check
          %p559 = pneg %p265
        $region106: #{cnn_feature_extractor.1} parent=75 // pred_check_branch
          %561 = sbr.rel (%p559) target = $region108
        $region107: #{cnn_feature_extractor.1} parent=75 // pred_region
          %562 = dma.done [#allocation15], 28672
        $region108: #{cnn_feature_extractor.1} parent=75 // pred_fallthru
          _
        // Predicated region
        $region109: #{cnn_feature_extractor.1} parent=75 // pred_check
          %p563 = pneg %p286
        $region110: #{cnn_feature_extractor.1} parent=75 // pred_check_branch
          %565 = sbr.rel (%p563) target = $region112
        $region111: #{cnn_feature_extractor.1} parent=75 // pred_region
          %566 = dma.done [#allocation15], 112
        $region112: #{cnn_feature_extractor.1} parent=75 // pred_fallthru
          _
        // Predicated region
        $region113: #{cnn_feature_extractor.1} parent=75 // pred_check
          %p567 = pneg %p307
        $region114: #{cnn_feature_extractor.1} parent=75 // pred_check_branch
          %569 = sbr.rel (%p567) target = $region116
        $region115: #{cnn_feature_extractor.1} parent=75 // pred_region
          %570 = dma.done [#allocation18], 25088
        $region116: #{cnn_feature_extractor.1} parent=75 // pred_fallthru
          _
        // Predicated region
        $region117: #{cnn_feature_extractor.1} parent=75 // pred_check
          %p571 = pneg %p328
        $region118: #{cnn_feature_extractor.1} parent=75 // pred_check_branch
          %573 = sbr.rel (%p571) target = $region120
        $region119: #{cnn_feature_extractor.1} parent=75 // pred_region
          %574 = dma.done [#allocation18], 16
        $region120: #{cnn_feature_extractor.1} parent=75 // pred_fallthru
          _
        %p575 = scmp.lt.s32.totalorder %s34, 1
        %s576 = scalar_select %p575, %s34, 1
        %s577 = smul.addr %s576, 4
        %s578 = smul.addr %s577, 8
        %s579 = scalar_lea.vmem %s0, %s578
        %p580 = pneg %p55
        %p581 = pneg %p52
        %p582 = pneg %p76
        %p583 = pneg %p73
        %p584 = pneg %p97
        %p585 = pneg %p94
        %p586 = pneg %p118
        %p587 = pneg %p115
        %p588 = pneg %p139
        %p589 = pneg %p136
        %p590 = pneg %p160
        %p591 = pneg %p157
        %p592 = pneg %p181
        %p593 = pneg %p178
        %p594 = pneg %p202
        %p595 = pneg %p199
        %p596 = pneg %p223
        %p597 = pneg %p220
        %p598 = pneg %p244
        %p599 = pneg %p241
        %p600 = pneg %p265
        %p601 = pneg %p262
        %p602 = pneg %p286
        %p603 = pneg %p283
        %p604 = pneg %p307
        %p605 = pneg %p304
        %p606 = pneg %p328
        %p607 = pneg %p325
        %p608 = pneg %p354
        %p609 = pneg %p351
        %s610 = sand.u32 %s341, 1
        %s611 = scalar_lea.sflag [#allocation4], %s610
        %s612 = sand.u32 %s341, 1
        %s613 = scalar_lea.vmem [#allocation20], %s612
        %p614 = scmp.lt.s32.totalorder %s34, 1
        %s615 = scalar_select %p614, %s34, 1
        %s616 = smul.addr %s615, 4
        %s617 = smul.addr %s616, 8
        %s618 = scalar_lea.vmem %s0, %s617
        %v619 = vld [vmem:[%s618] sm:$0xff]
        %v620 = vld [vmem:[%s618 + $0x8] sm:$0xff]
        %v621 = vld [vmem:[%s618 + $0x10] sm:$0xff]
        %v622 = vld [vmem:[%s618 + $0x18] sm:$0xf]
        %v623 = vld [vmem:[#allocation2] sm:$0xff]
        %v624 = vld [vmem:[#allocation2 + $0x8] sm:$0xff]
        %v625 = vld [vmem:[#allocation2 + $0x10] sm:$0xff]
        %v626 = vld [vmem:[#allocation2 + $0x18] sm:$0xf]
        %vm627 = vcmask 228352
        %v629 = vsel %vm627, %v623, 0
        %v632 = vsel %vm627, %v624, 0
        %v635 = vsel %vm627, %v625, 0
        %v638 = vsel %vm627, %v626, 0
        %vm640 = vcmask 1043456
        %v642 = vsel %vm640, %v622, 0
        %644 = vmatprep.subr.mxu0 0.0
        %645 = vmatpush1.msra.mxu0 %v619
        %646 = vmatprep.subr.mxu0 0.0
        %647 = vmatpush1.msra.mxu0 %v620
        %648 = vmatprep.subr.mxu0 0.0
        %649 = vmatpush1.msra.mxu0 %v621
        %650 = vmatprep.subr.mxu0 0.0
        %651 = vmatpush1.msra.mxu0 %v642
        %652 = vmatprep.subr.mxu0 0.0
        %653 = vmatpush1.msra.mxu0 0.0
        %654 = vmatprep.subr.mxu0 0.0
        %655 = vmatpush1.msra.mxu0 0.0
        %656 = vmatprep.subr.mxu0 0.0
        %657 = vmatpush1.msra.mxu0 0.0
        %658 = vmatprep.subr.mxu0 0.0
        %659 = vmatpush1.msra.mxu0 0.0
        %660 = vmatprep.subr.mxu0 0.0
        %661 = vmatpush1.msra.mxu0 0.0
        %662 = vmatprep.subr.mxu0 0.0
        %663 = vmatpush1.msra.mxu0 0.0
        %664 = vmatprep.subr.mxu0 0.0
        %665 = vmatpush1.msra.mxu0 0.0
        %666 = vmatprep.subr.mxu0 0.0
        %667 = vmatpush1.msra.mxu0 0.0
        %668 = vmatprep.subr.mxu0 0.0
        %669 = vmatpush1.msra.mxu0 0.0
        %670 = vmatprep.subr.mxu0 0.0
        %671 = vmatpush1.msra.mxu0 0.0
        %672 = vmatprep.subr.mxu0 0.0
        %673 = vmatpush1.msra.mxu0 0.0
        %674 = vmatprep.subr.mxu0 0.0
        %675 = vmatpush1.msra.mxu0 0.0
        %676 = vmatprep.subr.mxu0 0.0
        %677 = vmatpush1.msra.mxu0 0.0
        %678 = vmatprep.subr.mxu0 0.0
        %679 = vmatpush1.msra.mxu0 0.0
        %680 = vmatprep.subr.mxu0 0.0
        %681 = vmatpush1.msra.mxu0 0.0
        %682 = vmatprep.subr.mxu0 0.0
        %683 = vmatpush1.msra.mxu0 0.0
        %684 = vmatprep.subr.mxu0 0.0
        %685 = vmatpush1.msra.mxu0 0.0
        %686 = vmatprep.subr.mxu0 0.0
        %687 = vmatpush1.msra.mxu0 0.0
        %688 = vmatprep.subr.mxu0 0.0
        %689 = vmatpush1.msra.mxu0 0.0
        %690 = vmatprep.subr.mxu0 0.0
        %691 = vmatpush1.msra.mxu0 0.0
        %692 = vmatprep.subr.mxu0 0.0
        %693 = vmatpush1.msra.mxu0 0.0
        %694 = vmatprep.subr.mxu0 0.0
        %695 = vmatpush1.msra.mxu0 0.0
        %696 = vmatprep.subr.mxu0 0.0
        %697 = vmatpush1.msra.mxu0 0.0
        %698 = vmatprep.subr.mxu0 0.0
        %699 = vmatpush1.msra.mxu0 0.0
        %700 = vmatprep.subr.mxu0 0.0
        %701 = vmatpush1.msra.mxu0 0.0
        %702 = vmatprep.subr.mxu0 0.0
        %703 = vmatpush1.msra.mxu0 0.0
        %704 = vmatprep.subr.mxu0 0.0
        %705 = vmatpush1.msra.mxu0 0.0
        %706 = vmatprep.subr.mxu0 0.0
        %707 = vmatpush1.msra.mxu0 0.0
        %708 = vmatprep.mubr.f32.mxu0 0.0
        %709 = vmatmul.mubr.f32.gmra.mrb[0].mxu0 %v629
        %v710 = vpop.f32.mrb[0].mxu0
        %v711 = vadd.f32 0.0, %v710
        %v712 = vpop.f32.mrb[0].mxu0
        %713 = vmatprep.mubr.f32.mxu0 0.0
        %714 = vmatmul.mubr.f32.gmra.mrb[0].mxu0 %v632
        %v715 = vpop.f32.mrb[0].mxu0
        %v716 = vadd.f32 0.0, %v715
        %v717 = vpop.f32.mrb[0].mxu0
        %718 = vmatprep.mubr.f32.mxu0 0.0
        %719 = vmatmul.mubr.f32.gmra.mrb[0].mxu0 %v635
        %v720 = vpop.f32.mrb[0].mxu0
        %v721 = vadd.f32 0.0, %v720
        %v722 = vpop.f32.mrb[0].mxu0
        %723 = vmatprep.mubr.f32.mxu0 0.0
        %724 = vmatmul.mubr.f32.gmra.mrb[0].mxu0 %v638
        %v725 = vpop.f32.mrb[0].mxu0
        %v726 = vadd.f32 0.0, %v725
        %v727 = vpop.f32.mrb[0].mxu0
        %728 = vdwg.mxu0
        %v729 = vld [vmem:[#allocation5] sm:$0xff]
        %v730 = vld [vmem:[#allocation5 + $0x8] sm:$0xff]
        %v731 = vld [vmem:[#allocation5 + $0x10] sm:$0xff]
        %v732 = vld [vmem:[#allocation5 + $0x18] sm:$0xff]
        %v733 = vld [vmem:[#allocation5 + $0x20] sm:$0xff]
        %v734 = vld [vmem:[#allocation5 + $0x28] sm:$0xff]
        %v735 = vld [vmem:[#allocation5 + $0x30] sm:$0xff]
        %v736 = vld [vmem:[#allocation5 + $0x38] sm:$0xff]
        %v737 = vld [vmem:[#allocation5 + $0x40] sm:$0xff]
        %v738 = vld [vmem:[#allocation5 + $0x48] sm:$0xff]
        %v739 = vld [vmem:[#allocation5 + $0x50] sm:$0xff]
        %v740 = vld [vmem:[#allocation5 + $0x58] sm:$0xff]
        %v741 = vld [vmem:[#allocation5 + $0x60] sm:$0xf]
        %v742 = vld [vmem:[#allocation5 + $0x68] sm:$0xf]
        %v743 = vld [vmem:[#allocation5 + $0x70] sm:$0xf]
        %v744 = vld [vmem:[#allocation5 + $0x78] sm:$0xf]
        %s745 = scalar_lea.vmem [#allocation2], 32
        %v746 = vld [vmem:[%s745] sm:$0xff]
        %v747 = vld [vmem:[%s745 + $0x8] sm:$0xff]
        %v748 = vld [vmem:[%s745 + $0x10] sm:$0xff]
        %v749 = vld [vmem:[%s745 + $0x18] sm:$0xf]
        %v751 = vsel %vm627, %v746, 0
        %v754 = vsel %vm627, %v747, 0
        %v757 = vsel %vm627, %v748, 0
        %v760 = vsel %vm627, %v749, 0
        %762 = vmatprep.subr.mxu0 0.0
        %763 = vmatpush1.msra.mxu0 %v619
        %764 = vmatprep.subr.mxu0 0.0
        %765 = vmatpush1.msra.mxu0 %v620
        %766 = vmatprep.subr.mxu0 0.0
        %767 = vmatpush1.msra.mxu0 %v621
        %768 = vmatprep.subr.mxu0 0.0
        %769 = vmatpush1.msra.mxu0 %v642
        %770 = vmatprep.subr.mxu0 0.0
        %771 = vmatpush1.msra.mxu0 0.0
        %772 = vmatprep.subr.mxu0 0.0
        %773 = vmatpush1.msra.mxu0 0.0
        %774 = vmatprep.subr.mxu0 0.0
        %775 = vmatpush1.msra.mxu0 0.0
        %776 = vmatprep.subr.mxu0 0.0
        %777 = vmatpush1.msra.mxu0 0.0
        %778 = vmatprep.subr.mxu0 0.0
        %779 = vmatpush1.msra.mxu0 0.0
        %780 = vmatprep.subr.mxu0 0.0
        %781 = vmatpush1.msra.mxu0 0.0
        %782 = vmatprep.subr.mxu0 0.0
        %783 = vmatpush1.msra.mxu0 0.0
        %784 = vmatprep.subr.mxu0 0.0
        %785 = vmatpush1.msra.mxu0 0.0
        %786 = vmatprep.subr.mxu0 0.0
        %787 = vmatpush1.msra.mxu0 0.0
        %788 = vmatprep.subr.mxu0 0.0
        %789 = vmatpush1.msra.mxu0 0.0
        %790 = vmatprep.subr.mxu0 0.0
        %791 = vmatpush1.msra.mxu0 0.0
        %792 = vmatprep.subr.mxu0 0.0
        %793 = vmatpush1.msra.mxu0 0.0
        %794 = vmatprep.subr.mxu0 0.0
        %795 = vmatpush1.msra.mxu0 0.0
        %796 = vmatprep.subr.mxu0 0.0
        %797 = vmatpush1.msra.mxu0 0.0
        %798 = vmatprep.subr.mxu0 0.0
        %799 = vmatpush1.msra.mxu0 0.0
        %800 = vmatprep.subr.mxu0 0.0
        %801 = vmatpush1.msra.mxu0 0.0
        %802 = vmatprep.subr.mxu0 0.0
        %803 = vmatpush1.msra.mxu0 0.0
        %804 = vmatprep.subr.mxu0 0.0
        %805 = vmatpush1.msra.mxu0 0.0
        %806 = vmatprep.subr.mxu0 0.0
        %807 = vmatpush1.msra.mxu0 0.0
        %808 = vmatprep.subr.mxu0 0.0
        %809 = vmatpush1.msra.mxu0 0.0
        %810 = vmatprep.subr.mxu0 0.0
        %811 = vmatpush1.msra.mxu0 0.0
        %812 = vmatprep.subr.mxu0 0.0
        %813 = vmatpush1.msra.mxu0 0.0
        %814 = vmatprep.subr.mxu0 0.0
        %815 = vmatpush1.msra.mxu0 0.0
        %816 = vmatprep.subr.mxu0 0.0
        %817 = vmatpush1.msra.mxu0 0.0
        %818 = vmatprep.subr.mxu0 0.0
        %819 = vmatpush1.msra.mxu0 0.0
        %820 = vmatprep.subr.mxu0 0.0
        %821 = vmatpush1.msra.mxu0 0.0
        %822 = vmatprep.subr.mxu0 0.0
        %823 = vmatpush1.msra.mxu0 0.0
        %824 = vmatprep.subr.mxu0 0.0
        %825 = vmatpush1.msra.mxu0 0.0
        %826 = vmatprep.mubr.f32.mxu0 0.0
        %827 = vmatmul.mubr.f32.gmra.mrb[0].mxu0 %v751
        %v828 = vpop.f32.mrb[0].mxu0
        %v829 = vadd.f32 0.0, %v828
        %v830 = vpop.f32.mrb[0].mxu0
        %831 = vmatprep.mubr.f32.mxu0 0.0
        %832 = vmatmul.mubr.f32.gmra.mrb[0].mxu0 %v754
        %v833 = vpop.f32.mrb[0].mxu0
        %v834 = vadd.f32 0.0, %v833
        %v835 = vpop.f32.mrb[0].mxu0
        %836 = vmatprep.mubr.f32.mxu0 0.0
        %837 = vmatmul.mubr.f32.gmra.mrb[0].mxu0 %v757
        %v838 = vpop.f32.mrb[0].mxu0
        %v839 = vadd.f32 0.0, %v838
        %v840 = vpop.f32.mrb[0].mxu0
        %841 = vmatprep.mubr.f32.mxu0 0.0
        %842 = vmatmul.mubr.f32.gmra.mrb[0].mxu0 %v760
        %v843 = vpop.f32.mrb[0].mxu0
        %v844 = vadd.f32 0.0, %v843
        %v845 = vpop.f32.mrb[0].mxu0
        %846 = vdwg.mxu0
        %s847 = scalar_lea.vmem [#allocation5], 128
        %v848 = vld [vmem:[%s847] sm:$0xff]
        %v849 = vld [vmem:[%s847 + $0x8] sm:$0xff]
        %v850 = vld [vmem:[%s847 + $0x10] sm:$0xff]
        %v851 = vld [vmem:[%s847 + $0x18] sm:$0xff]
        %v852 = vld [vmem:[%s847 + $0x20] sm:$0xff]
        %v853 = vld [vmem:[%s847 + $0x28] sm:$0xff]
        %v854 = vld [vmem:[%s847 + $0x30] sm:$0xff]
        %v855 = vld [vmem:[%s847 + $0x38] sm:$0xff]
        %v856 = vld [vmem:[%s847 + $0x40] sm:$0xff]
        %v857 = vld [vmem:[%s847 + $0x48] sm:$0xff]
        %v858 = vld [vmem:[%s847 + $0x50] sm:$0xff]
        %v859 = vld [vmem:[%s847 + $0x58] sm:$0xff]
        %v860 = vld [vmem:[%s847 + $0x60] sm:$0xf]
        %v861 = vld [vmem:[%s847 + $0x68] sm:$0xf]
        %v862 = vld [vmem:[%s847 + $0x70] sm:$0xf]
        %v863 = vld [vmem:[%s847 + $0x78] sm:$0xf]
        %v865 = vsel %vm627, %v829, 0
        %v868 = vsel %vm627, %v834, 0
        %v871 = vsel %vm627, %v839, 0
        %v874 = vsel %vm627, %v844, 0
        %v877 = vsel %vm640, %v860, 0
        %v880 = vsel %vm640, %v861, 0
        %v883 = vsel %vm640, %v862, 0
        %v886 = vsel %vm640, %v863, 0
        %888 = vmatprep.subr.mxu0 %v849
        %889 = vmatpush1.msra.mxu0 %v848
        %890 = vmatprep.subr.mxu0 %v853
        %891 = vmatpush1.msra.mxu0 %v852
        %892 = vmatprep.subr.mxu0 %v857
        %893 = vmatpush1.msra.mxu0 %v856
        %894 = vmatprep.subr.mxu0 %v880
        %895 = vmatpush1.msra.mxu0 %v877
        %896 = vmatprep.subr.mxu0 0.0
        %897 = vmatpush1.msra.mxu0 0.0
        %898 = vmatprep.subr.mxu0 0.0
        %899 = vmatpush1.msra.mxu0 0.0
        %900 = vmatprep.subr.mxu0 0.0
        %901 = vmatpush1.msra.mxu0 0.0
        %902 = vmatprep.subr.mxu0 0.0
        %903 = vmatpush1.msra.mxu0 0.0
        %904 = vmatprep.subr.mxu0 0.0
        %905 = vmatpush1.msra.mxu0 0.0
        %906 = vmatprep.subr.mxu0 0.0
        %907 = vmatpush1.msra.mxu0 0.0
        %908 = vmatprep.subr.mxu0 0.0
        %909 = vmatpush1.msra.mxu0 0.0
        %910 = vmatprep.subr.mxu0 0.0
        %911 = vmatpush1.msra.mxu0 0.0
        %912 = vmatprep.subr.mxu0 0.0
        %913 = vmatpush1.msra.mxu0 0.0
        %914 = vmatprep.subr.mxu0 0.0
        %915 = vmatpush1.msra.mxu0 0.0
        %916 = vmatprep.subr.mxu0 0.0
        %917 = vmatpush1.msra.mxu0 0.0
        %918 = vmatprep.subr.mxu0 0.0
        %919 = vmatpush1.msra.mxu0 0.0
        %920 = vmatprep.subr.mxu0 0.0
        %921 = vmatpush1.msra.mxu0 0.0
        %922 = vmatprep.subr.mxu0 0.0
        %923 = vmatpush1.msra.mxu0 0.0
        %924 = vmatprep.subr.mxu0 0.0
        %925 = vmatpush1.msra.mxu0 0.0
        %926 = vmatprep.subr.mxu0 0.0
        %927 = vmatpush1.msra.mxu0 0.0
        %928 = vmatprep.subr.mxu0 0.0
        %929 = vmatpush1.msra.mxu0 0.0
        %930 = vmatprep.subr.mxu0 0.0
        %931 = vmatpush1.msra.mxu0 0.0
        %932 = vmatprep.subr.mxu0 0.0
        %933 = vmatpush1.msra.mxu0 0.0
        %934 = vmatprep.subr.mxu0 0.0
        %935 = vmatpush1.msra.mxu0 0.0
        %936 = vmatprep.subr.mxu0 0.0
        %937 = vmatpush1.msra.mxu0 0.0
        %938 = vmatprep.subr.mxu0 0.0
        %939 = vmatpush1.msra.mxu0 0.0
        %940 = vmatprep.subr.mxu0 0.0
        %941 = vmatpush1.msra.mxu0 0.0
        %942 = vmatprep.subr.mxu0 0.0
        %943 = vmatpush1.msra.mxu0 0.0
        %944 = vmatprep.subr.mxu0 0.0
        %945 = vmatpush1.msra.mxu0 0.0
        %946 = vmatprep.subr.mxu0 0.0
        %947 = vmatpush1.msra.mxu0 0.0
        %948 = vmatprep.subr.mxu0 0.0
        %949 = vmatpush1.msra.mxu0 0.0
        %950 = vmatprep.subr.mxu0 0.0
        %951 = vmatpush1.msra.mxu0 0.0
        %952 = vmatprep.mubr.f32.mxu0 0.0
        %953 = vmatmul.mubr.f32.gmra.mrb[0].mxu0 %v865
        %v954 = vpop.f32.mrb[0].mxu0
        %v955 = vadd.f32 0.0, %v954
        %v956 = vpop.f32.mrb[0].mxu0
        %v957 = vadd.f32 0.0, %v956
        %958 = vmatprep.mubr.f32.mxu0 0.0
        %959 = vmatmul.mubr.f32.gmra.mrb[0].mxu0 %v868
        %v960 = vpop.f32.mrb[0].mxu0
        %v961 = vadd.f32 0.0, %v960
        %v962 = vpop.f32.mrb[0].mxu0
        %v963 = vadd.f32 0.0, %v962
        %964 = vmatprep.mubr.f32.mxu0 0.0
        %965 = vmatmul.mubr.f32.gmra.mrb[0].mxu0 %v871
        %v966 = vpop.f32.mrb[0].mxu0
        %v967 = vadd.f32 0.0, %v966
        %v968 = vpop.f32.mrb[0].mxu0
        %v969 = vadd.f32 0.0, %v968
        %970 = vmatprep.mubr.f32.mxu0 0.0
        %971 = vmatmul.mubr.f32.gmra.mrb[0].mxu0 %v874
        %v972 = vpop.f32.mrb[0].mxu0
        %v973 = vadd.f32 0.0, %v972
        %v974 = vpop.f32.mrb[0].mxu0
        %v975 = vadd.f32 0.0, %v974
        %976 = vdwg.mxu0
        %977 = vmatprep.subr.mxu0 %v851
        %978 = vmatpush1.msra.mxu0 %v850
        %979 = vmatprep.subr.mxu0 %v855
        %980 = vmatpush1.msra.mxu0 %v854
        %981 = vmatprep.subr.mxu0 %v859
        %982 = vmatpush1.msra.mxu0 %v858
        %983 = vmatprep.subr.mxu0 %v886
        %984 = vmatpush1.msra.mxu0 %v883
        %985 = vmatprep.subr.mxu0 0.0
        %986 = vmatpush1.msra.mxu0 0.0
        %987 = vmatprep.subr.mxu0 0.0
        %988 = vmatpush1.msra.mxu0 0.0
        %989 = vmatprep.subr.mxu0 0.0
        %990 = vmatpush1.msra.mxu0 0.0
        %991 = vmatprep.subr.mxu0 0.0
        %992 = vmatpush1.msra.mxu0 0.0
        %993 = vmatprep.subr.mxu0 0.0
        %994 = vmatpush1.msra.mxu0 0.0
        %995 = vmatprep.subr.mxu0 0.0
        %996 = vmatpush1.msra.mxu0 0.0
        %997 = vmatprep.subr.mxu0 0.0
        %998 = vmatpush1.msra.mxu0 0.0
        %999 = vmatprep.subr.mxu0 0.0
        %1000 = vmatpush1.msra.mxu0 0.0
        %1001 = vmatprep.subr.mxu0 0.0
        %1002 = vmatpush1.msra.mxu0 0.0
        %1003 = vmatprep.subr.mxu0 0.0
        %1004 = vmatpush1.msra.mxu0 0.0
        %1005 = vmatprep.subr.mxu0 0.0
        %1006 = vmatpush1.msra.mxu0 0.0
        %1007 = vmatprep.subr.mxu0 0.0
        %1008 = vmatpush1.msra.mxu0 0.0
        %1009 = vmatprep.subr.mxu0 0.0
        %1010 = vmatpush1.msra.mxu0 0.0
        %1011 = vmatprep.subr.mxu0 0.0
        %1012 = vmatpush1.msra.mxu0 0.0
        %1013 = vmatprep.subr.mxu0 0.0
        %1014 = vmatpush1.msra.mxu0 0.0
        %1015 = vmatprep.subr.mxu0 0.0
        %1016 = vmatpush1.msra.mxu0 0.0
        %1017 = vmatprep.subr.mxu0 0.0
        %1018 = vmatpush1.msra.mxu0 0.0
        %1019 = vmatprep.subr.mxu0 0.0
        %1020 = vmatpush1.msra.mxu0 0.0
        %1021 = vmatprep.subr.mxu0 0.0
        %1022 = vmatpush1.msra.mxu0 0.0
        %1023 = vmatprep.subr.mxu0 0.0
        %1024 = vmatpush1.msra.mxu0 0.0
        %1025 = vmatprep.subr.mxu0 0.0
        %1026 = vmatpush1.msra.mxu0 0.0
        %1027 = vmatprep.subr.mxu0 0.0
        %1028 = vmatpush1.msra.mxu0 0.0
        %1029 = vmatprep.subr.mxu0 0.0
        %1030 = vmatpush1.msra.mxu0 0.0
        %1031 = vmatprep.subr.mxu0 0.0
        %1032 = vmatpush1.msra.mxu0 0.0
        %1033 = vmatprep.subr.mxu0 0.0
        %1034 = vmatpush1.msra.mxu0 0.0
        %1035 = vmatprep.subr.mxu0 0.0
        %1036 = vmatpush1.msra.mxu0 0.0
        %1037 = vmatprep.subr.mxu0 0.0
        %1038 = vmatpush1.msra.mxu0 0.0
        %1039 = vmatprep.subr.mxu0 0.0
        %1040 = vmatpush1.msra.mxu0 0.0
        %1041 = vmatprep.mubr.f32.mxu0 0.0
        %1042 = vmatmul.mubr.f32.gmra.mrb[0].mxu0 %v865
        %v1043 = vpop.f32.mrb[0].mxu0
        %v1044 = vadd.f32 0.0, %v1043
        %v1045 = vpop.f32.mrb[0].mxu0
        %v1046 = vadd.f32 0.0, %v1045
        %1047 = vmatprep.mubr.f32.mxu0 0.0
        %1048 = vmatmul.mubr.f32.gmra.mrb[0].mxu0 %v868
        %v1049 = vpop.f32.mrb[0].mxu0
        %v1050 = vadd.f32 0.0, %v1049
        %v1051 = vpop.f32.mrb[0].mxu0
        %v1052 = vadd.f32 0.0, %v1051
        %1053 = vmatprep.mubr.f32.mxu0 0.0
        %1054 = vmatmul.mubr.f32.gmra.mrb[0].mxu0 %v871
        %v1055 = vpop.f32.mrb[0].mxu0
        %v1056 = vadd.f32 0.0, %v1055
        %v1057 = vpop.f32.mrb[0].mxu0
        %v1058 = vadd.f32 0.0, %v1057
        %1059 = vmatprep.mubr.f32.mxu0 0.0
        %1060 = vmatmul.mubr.f32.gmra.mrb[0].mxu0 %v874
        %v1061 = vpop.f32.mrb[0].mxu0
        %v1062 = vadd.f32 0.0, %v1061
        %v1063 = vpop.f32.mrb[0].mxu0
        %v1064 = vadd.f32 0.0, %v1063
        %1065 = vdwg.mxu0
        %v1067 = vsel %vm627, %v711, 0
        %v1070 = vsel %vm627, %v716, 0
        %v1073 = vsel %vm627, %v721, 0
        %v1076 = vsel %vm627, %v726, 0
        %v1079 = vsel %vm640, %v741, 0
        %v1082 = vsel %vm640, %v742, 0
        %v1085 = vsel %vm640, %v743, 0
        %v1088 = vsel %vm640, %v744, 0
        %1090 = vmatprep.subr.mxu0 %v730
        %1091 = vmatpush1.msra.mxu0 %v729
        %1092 = vmatprep.subr.mxu0 %v734
        %1093 = vmatpush1.msra.mxu0 %v733
        %1094 = vmatprep.subr.mxu0 %v738
        %1095 = vmatpush1.msra.mxu0 %v737
        %1096 = vmatprep.subr.mxu0 %v1082
        %1097 = vmatpush1.msra.mxu0 %v1079
        %1098 = vmatprep.subr.mxu0 0.0
        %1099 = vmatpush1.msra.mxu0 0.0
        %1100 = vmatprep.subr.mxu0 0.0
        %1101 = vmatpush1.msra.mxu0 0.0
        %1102 = vmatprep.subr.mxu0 0.0
        %1103 = vmatpush1.msra.mxu0 0.0
        %1104 = vmatprep.subr.mxu0 0.0
        %1105 = vmatpush1.msra.mxu0 0.0
        %1106 = vmatprep.subr.mxu0 0.0
        %1107 = vmatpush1.msra.mxu0 0.0
        %1108 = vmatprep.subr.mxu0 0.0
        %1109 = vmatpush1.msra.mxu0 0.0
        %1110 = vmatprep.subr.mxu0 0.0
        %1111 = vmatpush1.msra.mxu0 0.0
        %1112 = vmatprep.subr.mxu0 0.0
        %1113 = vmatpush1.msra.mxu0 0.0
        %1114 = vmatprep.subr.mxu0 0.0
        %1115 = vmatpush1.msra.mxu0 0.0
        %1116 = vmatprep.subr.mxu0 0.0
        %1117 = vmatpush1.msra.mxu0 0.0
        %1118 = vmatprep.subr.mxu0 0.0
        %1119 = vmatpush1.msra.mxu0 0.0
        %1120 = vmatprep.subr.mxu0 0.0
        %1121 = vmatpush1.msra.mxu0 0.0
        %1122 = vmatprep.subr.mxu0 0.0
        %1123 = vmatpush1.msra.mxu0 0.0
        %1124 = vmatprep.subr.mxu0 0.0
        %1125 = vmatpush1.msra.mxu0 0.0
        %1126 = vmatprep.subr.mxu0 0.0
        %1127 = vmatpush1.msra.mxu0 0.0
        %1128 = vmatprep.subr.mxu0 0.0
        %1129 = vmatpush1.msra.mxu0 0.0
        %1130 = vmatprep.subr.mxu0 0.0
        %1131 = vmatpush1.msra.mxu0 0.0
        %1132 = vmatprep.subr.mxu0 0.0
        %1133 = vmatpush1.msra.mxu0 0.0
        %1134 = vmatprep.subr.mxu0 0.0
        %1135 = vmatpush1.msra.mxu0 0.0
        %1136 = vmatprep.subr.mxu0 0.0
        %1137 = vmatpush1.msra.mxu0 0.0
        %1138 = vmatprep.subr.mxu0 0.0
        %1139 = vmatpush1.msra.mxu0 0.0
        %1140 = vmatprep.subr.mxu0 0.0
        %1141 = vmatpush1.msra.mxu0 0.0
        %1142 = vmatprep.subr.mxu0 0.0
        %1143 = vmatpush1.msra.mxu0 0.0
        %1144 = vmatprep.subr.mxu0 0.0
        %1145 = vmatpush1.msra.mxu0 0.0
        %1146 = vmatprep.subr.mxu0 0.0
        %1147 = vmatpush1.msra.mxu0 0.0
        %1148 = vmatprep.subr.mxu0 0.0
        %1149 = vmatpush1.msra.mxu0 0.0
        %1150 = vmatprep.subr.mxu0 0.0
        %1151 = vmatpush1.msra.mxu0 0.0
        %1152 = vmatprep.subr.mxu0 0.0
        %1153 = vmatpush1.msra.mxu0 0.0
        %1154 = vmatprep.mubr.f32.mxu0 0.0
        %1155 = vmatmul.mubr.f32.gmra.mrb[0].mxu0 %v1067
        %v1156 = vpop.f32.mrb[0].mxu0
        %v1157 = vadd.f32 %v955, %v1156
        %v1158 = vpop.f32.mrb[0].mxu0
        %v1159 = vadd.f32 %v957, %v1158
        %1160 = vmatprep.mubr.f32.mxu0 0.0
        %1161 = vmatmul.mubr.f32.gmra.mrb[0].mxu0 %v1070
        %v1162 = vpop.f32.mrb[0].mxu0
        %v1163 = vadd.f32 %v961, %v1162
        %v1164 = vpop.f32.mrb[0].mxu0
        %v1165 = vadd.f32 %v963, %v1164
        %1166 = vmatprep.mubr.f32.mxu0 0.0
        %1167 = vmatmul.mubr.f32.gmra.mrb[0].mxu0 %v1073
        %v1168 = vpop.f32.mrb[0].mxu0
        %v1169 = vadd.f32 %v967, %v1168
        %v1170 = vpop.f32.mrb[0].mxu0
        %v1171 = vadd.f32 %v969, %v1170
        %1172 = vmatprep.mubr.f32.mxu0 0.0
        %1173 = vmatmul.mubr.f32.gmra.mrb[0].mxu0 %v1076
        %v1174 = vpop.f32.mrb[0].mxu0
        %v1175 = vadd.f32 %v973, %v1174
        %v1176 = vpop.f32.mrb[0].mxu0
        %v1177 = vadd.f32 %v975, %v1176
        %1178 = vdwg.mxu0
        %1179 = vmatprep.subr.mxu0 %v732
        %1180 = vmatpush1.msra.mxu0 %v731
        %1181 = vmatprep.subr.mxu0 %v736
        %1182 = vmatpush1.msra.mxu0 %v735
        %1183 = vmatprep.subr.mxu0 %v740
        %1184 = vmatpush1.msra.mxu0 %v739
        %1185 = vmatprep.subr.mxu0 %v1088
        %1186 = vmatpush1.msra.mxu0 %v1085
        %1187 = vmatprep.subr.mxu0 0.0
        %1188 = vmatpush1.msra.mxu0 0.0
        %1189 = vmatprep.subr.mxu0 0.0
        %1190 = vmatpush1.msra.mxu0 0.0
        %1191 = vmatprep.subr.mxu0 0.0
        %1192 = vmatpush1.msra.mxu0 0.0
        %1193 = vmatprep.subr.mxu0 0.0
        %1194 = vmatpush1.msra.mxu0 0.0
        %1195 = vmatprep.subr.mxu0 0.0
        %1196 = vmatpush1.msra.mxu0 0.0
        %1197 = vmatprep.subr.mxu0 0.0
        %1198 = vmatpush1.msra.mxu0 0.0
        %1199 = vmatprep.subr.mxu0 0.0
        %1200 = vmatpush1.msra.mxu0 0.0
        %1201 = vmatprep.subr.mxu0 0.0
        %1202 = vmatpush1.msra.mxu0 0.0
        %1203 = vmatprep.subr.mxu0 0.0
        %1204 = vmatpush1.msra.mxu0 0.0
        %1205 = vmatprep.subr.mxu0 0.0
        %1206 = vmatpush1.msra.mxu0 0.0
        %1207 = vmatprep.subr.mxu0 0.0
        %1208 = vmatpush1.msra.mxu0 0.0
        %1209 = vmatprep.subr.mxu0 0.0
        %1210 = vmatpush1.msra.mxu0 0.0
        %1211 = vmatprep.subr.mxu0 0.0
        %1212 = vmatpush1.msra.mxu0 0.0
        %1213 = vmatprep.subr.mxu0 0.0
        %1214 = vmatpush1.msra.mxu0 0.0
        %1215 = vmatprep.subr.mxu0 0.0
        %1216 = vmatpush1.msra.mxu0 0.0
        %1217 = vmatprep.subr.mxu0 0.0
        %1218 = vmatpush1.msra.mxu0 0.0
        %1219 = vmatprep.subr.mxu0 0.0
        %1220 = vmatpush1.msra.mxu0 0.0
        %1221 = vmatprep.subr.mxu0 0.0
        %1222 = vmatpush1.msra.mxu0 0.0
        %1223 = vmatprep.subr.mxu0 0.0
        %1224 = vmatpush1.msra.mxu0 0.0
        %1225 = vmatprep.subr.mxu0 0.0
        %1226 = vmatpush1.msra.mxu0 0.0
        %1227 = vmatprep.subr.mxu0 0.0
        %1228 = vmatpush1.msra.mxu0 0.0
        %1229 = vmatprep.subr.mxu0 0.0
        %1230 = vmatpush1.msra.mxu0 0.0
        %1231 = vmatprep.subr.mxu0 0.0
        %1232 = vmatpush1.msra.mxu0 0.0
        %1233 = vmatprep.subr.mxu0 0.0
        %1234 = vmatpush1.msra.mxu0 0.0
        %1235 = vmatprep.subr.mxu0 0.0
        %1236 = vmatpush1.msra.mxu0 0.0
        %1237 = vmatprep.subr.mxu0 0.0
        %1238 = vmatpush1.msra.mxu0 0.0
        %1239 = vmatprep.subr.mxu0 0.0
        %1240 = vmatpush1.msra.mxu0 0.0
        %1241 = vmatprep.subr.mxu0 0.0
        %1242 = vmatpush1.msra.mxu0 0.0
        %1243 = vmatprep.mubr.f32.mxu0 0.0
        %1244 = vmatmul.mubr.f32.gmra.mrb[0].mxu0 %v1067
        %v1245 = vpop.f32.mrb[0].mxu0
        %v1246 = vadd.f32 %v1044, %v1245
        %v1247 = vpop.f32.mrb[0].mxu0
        %v1248 = vadd.f32 %v1046, %v1247
        %1249 = vmatprep.mubr.f32.mxu0 0.0
        %1250 = vmatmul.mubr.f32.gmra.mrb[0].mxu0 %v1070
        %v1251 = vpop.f32.mrb[0].mxu0
        %v1252 = vadd.f32 %v1050, %v1251
        %v1253 = vpop.f32.mrb[0].mxu0
        %v1254 = vadd.f32 %v1052, %v1253
        %1255 = vmatprep.mubr.f32.mxu0 0.0
        %1256 = vmatmul.mubr.f32.gmra.mrb[0].mxu0 %v1073
        %v1257 = vpop.f32.mrb[0].mxu0
        %v1258 = vadd.f32 %v1056, %v1257
        %v1259 = vpop.f32.mrb[0].mxu0
        %v1260 = vadd.f32 %v1058, %v1259
        %1261 = vmatprep.mubr.f32.mxu0 0.0
        %1262 = vmatmul.mubr.f32.gmra.mrb[0].mxu0 %v1076
        %v1263 = vpop.f32.mrb[0].mxu0
        %v1264 = vadd.f32 %v1062, %v1263
        %v1265 = vpop.f32.mrb[0].mxu0
        %v1266 = vadd.f32 %v1064, %v1265
        %1267 = vdwg.mxu0
        %s1268 = scalar_lea.vmem [#allocation2], 64
        %v1269 = vld [vmem:[%s1268] sm:$0xff]
        %v1270 = vld [vmem:[%s1268 + $0x8] sm:$0xff]
        %v1271 = vld [vmem:[%s1268 + $0x10] sm:$0xff]
        %v1272 = vld [vmem:[%s1268 + $0x18] sm:$0xf]
        %v1274 = vsel %vm627, %v1269, 0
        %v1277 = vsel %vm627, %v1270, 0
        %v1280 = vsel %vm627, %v1271, 0
        %v1283 = vsel %vm627, %v1272, 0
        %1285 = vmatprep.subr.mxu0 0.0
        %1286 = vmatpush1.msra.mxu0 %v619
        %1287 = vmatprep.subr.mxu0 0.0
        %1288 = vmatpush1.msra.mxu0 %v620
        %1289 = vmatprep.subr.mxu0 0.0
        %1290 = vmatpush1.msra.mxu0 %v621
        %1291 = vmatprep.subr.mxu0 0.0
        %1292 = vmatpush1.msra.mxu0 %v642
        %1293 = vmatprep.subr.mxu0 0.0
        %1294 = vmatpush1.msra.mxu0 0.0
        %1295 = vmatprep.subr.mxu0 0.0
        %1296 = vmatpush1.msra.mxu0 0.0
        %1297 = vmatprep.subr.mxu0 0.0
        %1298 = vmatpush1.msra.mxu0 0.0
        %1299 = vmatprep.subr.mxu0 0.0
        %1300 = vmatpush1.msra.mxu0 0.0
        %1301 = vmatprep.subr.mxu0 0.0
        %1302 = vmatpush1.msra.mxu0 0.0
        %1303 = vmatprep.subr.mxu0 0.0
        %1304 = vmatpush1.msra.mxu0 0.0
        %1305 = vmatprep.subr.mxu0 0.0
        %1306 = vmatpush1.msra.mxu0 0.0
        %1307 = vmatprep.subr.mxu0 0.0
        %1308 = vmatpush1.msra.mxu0 0.0
        %1309 = vmatprep.subr.mxu0 0.0
        %1310 = vmatpush1.msra.mxu0 0.0
        %1311 = vmatprep.subr.mxu0 0.0
        %1312 = vmatpush1.msra.mxu0 0.0
        %1313 = vmatprep.subr.mxu0 0.0
        %1314 = vmatpush1.msra.mxu0 0.0
        %1315 = vmatprep.subr.mxu0 0.0
        %1316 = vmatpush1.msra.mxu0 0.0
        %1317 = vmatprep.subr.mxu0 0.0
        %1318 = vmatpush1.msra.mxu0 0.0
        %1319 = vmatprep.subr.mxu0 0.0
        %1320 = vmatpush1.msra.mxu0 0.0
        %1321 = vmatprep.subr.mxu0 0.0
        %1322 = vmatpush1.msra.mxu0 0.0
        %1323 = vmatprep.subr.mxu0 0.0
        %1324 = vmatpush1.msra.mxu0 0.0
        %1325 = vmatprep.subr.mxu0 0.0
        %1326 = vmatpush1.msra.mxu0 0.0
        %1327 = vmatprep.subr.mxu0 0.0
        %1328 = vmatpush1.msra.mxu0 0.0
        %1329 = vmatprep.subr.mxu0 0.0
        %1330 = vmatpush1.msra.mxu0 0.0
        %1331 = vmatprep.subr.mxu0 0.0
        %1332 = vmatpush1.msra.mxu0 0.0
        %1333 = vmatprep.subr.mxu0 0.0
        %1334 = vmatpush1.msra.mxu0 0.0
        %1335 = vmatprep.subr.mxu0 0.0
        %1336 = vmatpush1.msra.mxu0 0.0
        %1337 = vmatprep.subr.mxu0 0.0
        %1338 = vmatpush1.msra.mxu0 0.0
        %1339 = vmatprep.subr.mxu0 0.0
        %1340 = vmatpush1.msra.mxu0 0.0
        %1341 = vmatprep.subr.mxu0 0.0
        %1342 = vmatpush1.msra.mxu0 0.0
        %1343 = vmatprep.subr.mxu0 0.0
        %1344 = vmatpush1.msra.mxu0 0.0
        %1345 = vmatprep.subr.mxu0 0.0
        %1346 = vmatpush1.msra.mxu0 0.0
        %1347 = vmatprep.subr.mxu0 0.0
        %1348 = vmatpush1.msra.mxu0 0.0
        %1349 = vmatprep.mubr.f32.mxu0 0.0
        %1350 = vmatmul.mubr.f32.gmra.mrb[0].mxu0 %v1274
        %v1351 = vpop.f32.mrb[0].mxu0
        %v1352 = vadd.f32 0.0, %v1351
        %v1353 = vpop.f32.mrb[0].mxu0
        %1354 = vmatprep.mubr.f32.mxu0 0.0
        %1355 = vmatmul.mubr.f32.gmra.mrb[0].mxu0 %v1277
        %v1356 = vpop.f32.mrb[0].mxu0
        %v1357 = vadd.f32 0.0, %v1356
        %v1358 = vpop.f32.mrb[0].mxu0
        %1359 = vmatprep.mubr.f32.mxu0 0.0
        %1360 = vmatmul.mubr.f32.gmra.mrb[0].mxu0 %v1280
        %v1361 = vpop.f32.mrb[0].mxu0
        %v1362 = vadd.f32 0.0, %v1361
        %v1363 = vpop.f32.mrb[0].mxu0
        %1364 = vmatprep.mubr.f32.mxu0 0.0
        %1365 = vmatmul.mubr.f32.gmra.mrb[0].mxu0 %v1283
        %v1366 = vpop.f32.mrb[0].mxu0
        %v1367 = vadd.f32 0.0, %v1366
        %v1368 = vpop.f32.mrb[0].mxu0
        %1369 = vdwg.mxu0
        %s1370 = scalar_lea.vmem [#allocation5], 256
        %v1371 = vld [vmem:[%s1370] sm:$0xff]
        %v1372 = vld [vmem:[%s1370 + $0x8] sm:$0xff]
        %v1373 = vld [vmem:[%s1370 + $0x10] sm:$0xff]
        %v1374 = vld [vmem:[%s1370 + $0x18] sm:$0xff]
        %v1375 = vld [vmem:[%s1370 + $0x20] sm:$0xff]
        %v1376 = vld [vmem:[%s1370 + $0x28] sm:$0xff]
        %v1377 = vld [vmem:[%s1370 + $0x30] sm:$0xff]
        %v1378 = vld [vmem:[%s1370 + $0x38] sm:$0xff]
        %v1379 = vld [vmem:[%s1370 + $0x40] sm:$0xff]
        %v1380 = vld [vmem:[%s1370 + $0x48] sm:$0xff]
        %v1381 = vld [vmem:[%s1370 + $0x50] sm:$0xff]
        %v1382 = vld [vmem:[%s1370 + $0x58] sm:$0xff]
        %v1383 = vld [vmem:[%s1370 + $0x60] sm:$0xf]
        %v1384 = vld [vmem:[%s1370 + $0x68] sm:$0xf]
        %v1385 = vld [vmem:[%s1370 + $0x70] sm:$0xf]
        %v1386 = vld [vmem:[%s1370 + $0x78] sm:$0xf]
        %v1388 = vsel %vm627, %v1352, 0
        %v1391 = vsel %vm627, %v1357, 0
        %v1394 = vsel %vm627, %v1362, 0
        %v1397 = vsel %vm627, %v1367, 0
        %v1400 = vsel %vm640, %v1383, 0
        %v1403 = vsel %vm640, %v1384, 0
        %v1406 = vsel %vm640, %v1385, 0
        %v1409 = vsel %vm640, %v1386, 0
        %1411 = vmatprep.subr.mxu0 %v1372
        %1412 = vmatpush1.msra.mxu0 %v1371
        %1413 = vmatprep.subr.mxu0 %v1376
        %1414 = vmatpush1.msra.mxu0 %v1375
        %1415 = vmatprep.subr.mxu0 %v1380
        %1416 = vmatpush1.msra.mxu0 %v1379
        %1417 = vmatprep.subr.mxu0 %v1403
        %1418 = vmatpush1.msra.mxu0 %v1400
        %1419 = vmatprep.subr.mxu0 0.0
        %1420 = vmatpush1.msra.mxu0 0.0
        %1421 = vmatprep.subr.mxu0 0.0
        %1422 = vmatpush1.msra.mxu0 0.0
        %1423 = vmatprep.subr.mxu0 0.0
        %1424 = vmatpush1.msra.mxu0 0.0
        %1425 = vmatprep.subr.mxu0 0.0
        %1426 = vmatpush1.msra.mxu0 0.0
        %1427 = vmatprep.subr.mxu0 0.0
        %1428 = vmatpush1.msra.mxu0 0.0
        %1429 = vmatprep.subr.mxu0 0.0
        %1430 = vmatpush1.msra.mxu0 0.0
        %1431 = vmatprep.subr.mxu0 0.0
        %1432 = vmatpush1.msra.mxu0 0.0
        %1433 = vmatprep.subr.mxu0 0.0
        %1434 = vmatpush1.msra.mxu0 0.0
        %1435 = vmatprep.subr.mxu0 0.0
        %1436 = vmatpush1.msra.mxu0 0.0
        %1437 = vmatprep.subr.mxu0 0.0
        %1438 = vmatpush1.msra.mxu0 0.0
        %1439 = vmatprep.subr.mxu0 0.0
        %1440 = vmatpush1.msra.mxu0 0.0
        %1441 = vmatprep.subr.mxu0 0.0
        %1442 = vmatpush1.msra.mxu0 0.0
        %1443 = vmatprep.subr.mxu0 0.0
        %1444 = vmatpush1.msra.mxu0 0.0
        %1445 = vmatprep.subr.mxu0 0.0
        %1446 = vmatpush1.msra.mxu0 0.0
        %1447 = vmatprep.subr.mxu0 0.0
        %1448 = vmatpush1.msra.mxu0 0.0
        %1449 = vmatprep.subr.mxu0 0.0
        %1450 = vmatpush1.msra.mxu0 0.0
        %1451 = vmatprep.subr.mxu0 0.0
        %1452 = vmatpush1.msra.mxu0 0.0
        %1453 = vmatprep.subr.mxu0 0.0
        %1454 = vmatpush1.msra.mxu0 0.0
        %1455 = vmatprep.subr.mxu0 0.0
        %1456 = vmatpush1.msra.mxu0 0.0
        %1457 = vmatprep.subr.mxu0 0.0
        %1458 = vmatpush1.msra.mxu0 0.0
        %1459 = vmatprep.subr.mxu0 0.0
        %1460 = vmatpush1.msra.mxu0 0.0
        %1461 = vmatprep.subr.mxu0 0.0
        %1462 = vmatpush1.msra.mxu0 0.0
        %1463 = vmatprep.subr.mxu0 0.0
        %1464 = vmatpush1.msra.mxu0 0.0
        %1465 = vmatprep.subr.mxu0 0.0
        %1466 = vmatpush1.msra.mxu0 0.0
        %1467 = vmatprep.subr.mxu0 0.0
        %1468 = vmatpush1.msra.mxu0 0.0
        %1469 = vmatprep.subr.mxu0 0.0
        %1470 = vmatpush1.msra.mxu0 0.0
        %1471 = vmatprep.subr.mxu0 0.0
        %1472 = vmatpush1.msra.mxu0 0.0
        %1473 = vmatprep.subr.mxu0 0.0
        %1474 = vmatpush1.msra.mxu0 0.0
        %1475 = vmatprep.mubr.f32.mxu0 0.0
        %1476 = vmatmul.mubr.f32.gmra.mrb[0].mxu0 %v1388
        %v1477 = vpop.f32.mrb[0].mxu0
        %v1478 = vadd.f32 0.0, %v1477
        %v1479 = vpop.f32.mrb[0].mxu0
        %v1480 = vadd.f32 0.0, %v1479
        %1481 = vmatprep.mubr.f32.mxu0 0.0
        %1482 = vmatmul.mubr.f32.gmra.mrb[0].mxu0 %v1391
        %v1483 = vpop.f32.mrb[0].mxu0
        %v1484 = vadd.f32 0.0, %v1483
        %v1485 = vpop.f32.mrb[0].mxu0
        %v1486 = vadd.f32 0.0, %v1485
        %1487 = vmatprep.mubr.f32.mxu0 0.0
        %1488 = vmatmul.mubr.f32.gmra.mrb[0].mxu0 %v1394
        %v1489 = vpop.f32.mrb[0].mxu0
        %v1490 = vadd.f32 0.0, %v1489
        %v1491 = vpop.f32.mrb[0].mxu0
        %v1492 = vadd.f32 0.0, %v1491
        %1493 = vmatprep.mubr.f32.mxu0 0.0
        %1494 = vmatmul.mubr.f32.gmra.mrb[0].mxu0 %v1397
        %v1495 = vpop.f32.mrb[0].mxu0
        %v1496 = vadd.f32 0.0, %v1495
        %v1497 = vpop.f32.mrb[0].mxu0
        %v1498 = vadd.f32 0.0, %v1497
        %1499 = vdwg.mxu0
        %1500 = vmatprep.subr.mxu0 %v1374
        %1501 = vmatpush1.msra.mxu0 %v1373
        %1502 = vmatprep.subr.mxu0 %v1378
        %1503 = vmatpush1.msra.mxu0 %v1377
        %1504 = vmatprep.subr.mxu0 %v1382
        %1505 = vmatpush1.msra.mxu0 %v1381
        %1506 = vmatprep.subr.mxu0 %v1409
        %1507 = vmatpush1.msra.mxu0 %v1406
        %1508 = vmatprep.subr.mxu0 0.0
        %1509 = vmatpush1.msra.mxu0 0.0
        %1510 = vmatprep.subr.mxu0 0.0
        %1511 = vmatpush1.msra.mxu0 0.0
        %1512 = vmatprep.subr.mxu0 0.0
        %1513 = vmatpush1.msra.mxu0 0.0
        %1514 = vmatprep.subr.mxu0 0.0
        %1515 = vmatpush1.msra.mxu0 0.0
        %1516 = vmatprep.subr.mxu0 0.0
        %1517 = vmatpush1.msra.mxu0 0.0
        %1518 = vmatprep.subr.mxu0 0.0
        %1519 = vmatpush1.msra.mxu0 0.0
        %1520 = vmatprep.subr.mxu0 0.0
        %1521 = vmatpush1.msra.mxu0 0.0
        %1522 = vmatprep.subr.mxu0 0.0
        %1523 = vmatpush1.msra.mxu0 0.0
        %1524 = vmatprep.subr.mxu0 0.0
        %1525 = vmatpush1.msra.mxu0 0.0
        %1526 = vmatprep.subr.mxu0 0.0
        %1527 = vmatpush1.msra.mxu0 0.0
        %1528 = vmatprep.subr.mxu0 0.0
        %1529 = vmatpush1.msra.mxu0 0.0
        %1530 = vmatprep.subr.mxu0 0.0
        %1531 = vmatpush1.msra.mxu0 0.0
        %1532 = vmatprep.subr.mxu0 0.0
        %1533 = vmatpush1.msra.mxu0 0.0
        %1534 = vmatprep.subr.mxu0 0.0
        %1535 = vmatpush1.msra.mxu0 0.0
        %1536 = vmatprep.subr.mxu0 0.0
        %1537 = vmatpush1.msra.mxu0 0.0
        %1538 = vmatprep.subr.mxu0 0.0
        %1539 = vmatpush1.msra.mxu0 0.0
        %1540 = vmatprep.subr.mxu0 0.0
        %1541 = vmatpush1.msra.mxu0 0.0
        %1542 = vmatprep.subr.mxu0 0.0
        %1543 = vmatpush1.msra.mxu0 0.0
        %1544 = vmatprep.subr.mxu0 0.0
        %1545 = vmatpush1.msra.mxu0 0.0
        %1546 = vmatprep.subr.mxu0 0.0
        %1547 = vmatpush1.msra.mxu0 0.0
        %1548 = vmatprep.subr.mxu0 0.0
        %1549 = vmatpush1.msra.mxu0 0.0
        %1550 = vmatprep.subr.mxu0 0.0
        %1551 = vmatpush1.msra.mxu0 0.0
        %1552 = vmatprep.subr.mxu0 0.0
        %1553 = vmatpush1.msra.mxu0 0.0
        %1554 = vmatprep.subr.mxu0 0.0
        %1555 = vmatpush1.msra.mxu0 0.0
        %1556 = vmatprep.subr.mxu0 0.0
        %1557 = vmatpush1.msra.mxu0 0.0
        %1558 = vmatprep.subr.mxu0 0.0
        %1559 = vmatpush1.msra.mxu0 0.0
        %1560 = vmatprep.subr.mxu0 0.0
        %1561 = vmatpush1.msra.mxu0 0.0
        %1562 = vmatprep.subr.mxu0 0.0
        %1563 = vmatpush1.msra.mxu0 0.0
        %1564 = vmatprep.mubr.f32.mxu0 0.0
        %1565 = vmatmul.mubr.f32.gmra.mrb[0].mxu0 %v1388
        %v1566 = vpop.f32.mrb[0].mxu0
        %v1567 = vadd.f32 0.0, %v1566
        %v1568 = vpop.f32.mrb[0].mxu0
        %v1569 = vadd.f32 0.0, %v1568
        %1570 = vmatprep.mubr.f32.mxu0 0.0
        %1571 = vmatmul.mubr.f32.gmra.mrb[0].mxu0 %v1391
        %v1572 = vpop.f32.mrb[0].mxu0
        %v1573 = vadd.f32 0.0, %v1572
        %v1574 = vpop.f32.mrb[0].mxu0
        %v1575 = vadd.f32 0.0, %v1574
        %1576 = vmatprep.mubr.f32.mxu0 0.0
        %1577 = vmatmul.mubr.f32.gmra.mrb[0].mxu0 %v1394
        %v1578 = vpop.f32.mrb[0].mxu0
        %v1579 = vadd.f32 0.0, %v1578
        %v1580 = vpop.f32.mrb[0].mxu0
        %v1581 = vadd.f32 0.0, %v1580
        %1582 = vmatprep.mubr.f32.mxu0 0.0
        %1583 = vmatmul.mubr.f32.gmra.mrb[0].mxu0 %v1397
        %v1584 = vpop.f32.mrb[0].mxu0
        %v1585 = vadd.f32 0.0, %v1584
        %v1586 = vpop.f32.mrb[0].mxu0
        %v1587 = vadd.f32 0.0, %v1586
        %1588 = vdwg.mxu0
        %v1589 = vadd.f32 %v1157, %v1478
        %v1590 = vadd.f32 %v1159, %v1480
        %v1591 = vadd.f32 %v1246, %v1567
        %v1592 = vadd.f32 %v1248, %v1569
        %v1593 = vadd.f32 %v1163, %v1484
        %v1594 = vadd.f32 %v1165, %v1486
        %v1595 = vadd.f32 %v1252, %v1573
        %v1596 = vadd.f32 %v1254, %v1575
        %v1597 = vadd.f32 %v1169, %v1490
        %v1598 = vadd.f32 %v1171, %v1492
        %v1599 = vadd.f32 %v1258, %v1579
        %v1600 = vadd.f32 %v1260, %v1581
        %v1601 = vadd.f32 %v1175, %v1496
        %v1602 = vadd.f32 %v1177, %v1498
        %v1603 = vadd.f32 %v1264, %v1585
        %v1604 = vadd.f32 %v1266, %v1587
        %v1605 = vld [vmem:[#allocation7] sm:$0xf]
        %v1607 = vlaneseq
        %v1608 = vshrl.u32 %v1607, 7
        %v1609 = vsub.s32 0, %v1608
        %v1610 = vrot.slane %v1605, %v1609
        %v1611 = vlaneseq
        %v1612 = vshrl.u32 %v1611, 7
        %v1613 = vsub.s32 1, %v1612
        %v1614 = vrot.slane %v1605, %v1613
        %v1615 = vlaneseq
        %v1616 = vshrl.u32 %v1615, 7
        %v1617 = vsub.s32 2, %v1616
        %v1618 = vrot.slane %v1605, %v1617
        %v1619 = vlaneseq
        %v1620 = vshrl.u32 %v1619, 7
        %v1621 = vsub.s32 3, %v1620
        %v1622 = vrot.slane %v1605, %v1621
        %v1627 = vadd.f32 %v1589, %v1610
        %v1628 = vadd.f32 %v1590, %v1614
        %v1629 = vadd.f32 %v1591, %v1618
        %v1630 = vadd.f32 %v1592, %v1622
        %v1631 = vadd.f32 %v1593, %v1610
        %v1632 = vadd.f32 %v1594, %v1614
        %v1633 = vadd.f32 %v1595, %v1618
        %v1634 = vadd.f32 %v1596, %v1622
        %v1635 = vadd.f32 %v1597, %v1610
        %v1636 = vadd.f32 %v1598, %v1614
        %v1637 = vadd.f32 %v1599, %v1618
        %v1638 = vadd.f32 %v1600, %v1622
        %v1639 = vadd.f32 %v1601, %v1610
        %v1640 = vadd.f32 %v1602, %v1614
        %v1641 = vadd.f32 %v1603, %v1618
        %v1642 = vadd.f32 %v1604, %v1622
        %v1643 = vmax.f32 %v1627, 0.0
        %v1644 = vmax.f32 %v1628, 0.0
        %v1645 = vmax.f32 %v1629, 0.0
        %v1646 = vmax.f32 %v1630, 0.0
        %v1647 = vmax.f32 %v1631, 0.0
        %v1648 = vmax.f32 %v1632, 0.0
        %v1649 = vmax.f32 %v1633, 0.0
        %v1650 = vmax.f32 %v1634, 0.0
        %v1651 = vmax.f32 %v1635, 0.0
        %v1652 = vmax.f32 %v1636, 0.0
        %v1653 = vmax.f32 %v1637, 0.0
        %v1654 = vmax.f32 %v1638, 0.0
        %v1655 = vmax.f32 %v1639, 0.0
        %v1656 = vmax.f32 %v1640, 0.0
        %v1657 = vmax.f32 %v1641, 0.0
        %v1658 = vmax.f32 %v1642, 0.0
        %v1659 = vld [vmem:[%s4] sm:$0xff]
        %v1660 = vld [vmem:[%s4 + $0x8] sm:$0x3f]
        %v1662 = vsel %vm627, %v1659, 0
        %v1665 = vsel %vm627, %v1660, 0
        %v1668 = vsel %vm640, %v1655, 0
        %v1671 = vsel %vm640, %v1656, 0
        %v1674 = vsel %vm640, %v1657, 0
        %v1677 = vsel %vm640, %v1658, 0
        %1679 = vmatprep.subr.mxu0 %v1644
        %1680 = vmatpush1.msra.mxu0 %v1643
        %1681 = vmatprep.subr.mxu0 %v1648
        %1682 = vmatpush1.msra.mxu0 %v1647
        %1683 = vmatprep.subr.mxu0 %v1652
        %1684 = vmatpush1.msra.mxu0 %v1651
        %1685 = vmatprep.subr.mxu0 %v1671
        %1686 = vmatpush1.msra.mxu0 %v1668
        %1687 = vmatprep.subr.mxu0 0.0
        %1688 = vmatpush1.msra.mxu0 0.0
        %1689 = vmatprep.subr.mxu0 0.0
        %1690 = vmatpush1.msra.mxu0 0.0
        %1691 = vmatprep.subr.mxu0 0.0
        %1692 = vmatpush1.msra.mxu0 0.0
        %1693 = vmatprep.subr.mxu0 0.0
        %1694 = vmatpush1.msra.mxu0 0.0
        %1695 = vmatprep.subr.mxu0 0.0
        %1696 = vmatpush1.msra.mxu0 0.0
        %1697 = vmatprep.subr.mxu0 0.0
        %1698 = vmatpush1.msra.mxu0 0.0
        %1699 = vmatprep.subr.mxu0 0.0
        %1700 = vmatpush1.msra.mxu0 0.0
        %1701 = vmatprep.subr.mxu0 0.0
        %1702 = vmatpush1.msra.mxu0 0.0
        %1703 = vmatprep.subr.mxu0 0.0
        %1704 = vmatpush1.msra.mxu0 0.0
        %1705 = vmatprep.subr.mxu0 0.0
        %1706 = vmatpush1.msra.mxu0 0.0
        %1707 = vmatprep.subr.mxu0 0.0
        %1708 = vmatpush1.msra.mxu0 0.0
        %1709 = vmatprep.subr.mxu0 0.0
        %1710 = vmatpush1.msra.mxu0 0.0
        %1711 = vmatprep.subr.mxu0 0.0
        %1712 = vmatpush1.msra.mxu0 0.0
        %1713 = vmatprep.subr.mxu0 0.0
        %1714 = vmatpush1.msra.mxu0 0.0
        %1715 = vmatprep.subr.mxu0 0.0
        %1716 = vmatpush1.msra.mxu0 0.0
        %1717 = vmatprep.subr.mxu0 0.0
        %1718 = vmatpush1.msra.mxu0 0.0
        %1719 = vmatprep.subr.mxu0 0.0
        %1720 = vmatpush1.msra.mxu0 0.0
        %1721 = vmatprep.subr.mxu0 0.0
        %1722 = vmatpush1.msra.mxu0 0.0
        %1723 = vmatprep.subr.mxu0 0.0
        %1724 = vmatpush1.msra.mxu0 0.0
        %1725 = vmatprep.subr.mxu0 0.0
        %1726 = vmatpush1.msra.mxu0 0.0
        %1727 = vmatprep.subr.mxu0 0.0
        %1728 = vmatpush1.msra.mxu0 0.0
        %1729 = vmatprep.subr.mxu0 0.0
        %1730 = vmatpush1.msra.mxu0 0.0
        %1731 = vmatprep.subr.mxu0 0.0
        %1732 = vmatpush1.msra.mxu0 0.0
        %1733 = vmatprep.subr.mxu0 0.0
        %1734 = vmatpush1.msra.mxu0 0.0
        %1735 = vmatprep.subr.mxu0 0.0
        %1736 = vmatpush1.msra.mxu0 0.0
        %1737 = vmatprep.subr.mxu0 0.0
        %1738 = vmatpush1.msra.mxu0 0.0
        %1739 = vmatprep.subr.mxu0 0.0
        %1740 = vmatpush1.msra.mxu0 0.0
        %1741 = vmatprep.subr.mxu0 0.0
        %1742 = vmatpush1.msra.mxu0 0.0
        %1743 = vmatprep.mubr.f32.mxu0 0.0
        %1744 = vmatmul.mubr.f32.gmra.mrb[0].mxu0 %v1662
        %v1745 = vpop.f32.mrb[0].mxu0
        %v1746 = vadd.f32 0.0, %v1745
        %v1747 = vpop.f32.mrb[0].mxu0
        %v1748 = vadd.f32 0.0, %v1747
        %1749 = vmatprep.mubr.f32.mxu0 0.0
        %1750 = vmatmul.mubr.f32.gmra.mrb[0].mxu0 %v1665
        %v1751 = vpop.f32.mrb[0].mxu0
        %v1752 = vadd.f32 0.0, %v1751
        %v1753 = vpop.f32.mrb[0].mxu0
        %v1754 = vadd.f32 0.0, %v1753
        %1755 = vdwg.mxu0
        %1756 = vmatprep.subr.mxu0 %v1646
        %1757 = vmatpush1.msra.mxu0 %v1645
        %1758 = vmatprep.subr.mxu0 %v1650
        %1759 = vmatpush1.msra.mxu0 %v1649
        %1760 = vmatprep.subr.mxu0 %v1654
        %1761 = vmatpush1.msra.mxu0 %v1653
        %1762 = vmatprep.subr.mxu0 %v1677
        %1763 = vmatpush1.msra.mxu0 %v1674
        %1764 = vmatprep.subr.mxu0 0.0
        %1765 = vmatpush1.msra.mxu0 0.0
        %1766 = vmatprep.subr.mxu0 0.0
        %1767 = vmatpush1.msra.mxu0 0.0
        %1768 = vmatprep.subr.mxu0 0.0
        %1769 = vmatpush1.msra.mxu0 0.0
        %1770 = vmatprep.subr.mxu0 0.0
        %1771 = vmatpush1.msra.mxu0 0.0
        %1772 = vmatprep.subr.mxu0 0.0
        %1773 = vmatpush1.msra.mxu0 0.0
        %1774 = vmatprep.subr.mxu0 0.0
        %1775 = vmatpush1.msra.mxu0 0.0
        %1776 = vmatprep.subr.mxu0 0.0
        %1777 = vmatpush1.msra.mxu0 0.0
        %1778 = vmatprep.subr.mxu0 0.0
        %1779 = vmatpush1.msra.mxu0 0.0
        %1780 = vmatprep.subr.mxu0 0.0
        %1781 = vmatpush1.msra.mxu0 0.0
        %1782 = vmatprep.subr.mxu0 0.0
        %1783 = vmatpush1.msra.mxu0 0.0
        %1784 = vmatprep.subr.mxu0 0.0
        %1785 = vmatpush1.msra.mxu0 0.0
        %1786 = vmatprep.subr.mxu0 0.0
        %1787 = vmatpush1.msra.mxu0 0.0
        %1788 = vmatprep.subr.mxu0 0.0
        %1789 = vmatpush1.msra.mxu0 0.0
        %1790 = vmatprep.subr.mxu0 0.0
        %1791 = vmatpush1.msra.mxu0 0.0
        %1792 = vmatprep.subr.mxu0 0.0
        %1793 = vmatpush1.msra.mxu0 0.0
        %1794 = vmatprep.subr.mxu0 0.0
        %1795 = vmatpush1.msra.mxu0 0.0
        %1796 = vmatprep.subr.mxu0 0.0
        %1797 = vmatpush1.msra.mxu0 0.0
        %1798 = vmatprep.subr.mxu0 0.0
        %1799 = vmatpush1.msra.mxu0 0.0
        %1800 = vmatprep.subr.mxu0 0.0
        %1801 = vmatpush1.msra.mxu0 0.0
        %1802 = vmatprep.subr.mxu0 0.0
        %1803 = vmatpush1.msra.mxu0 0.0
        %1804 = vmatprep.subr.mxu0 0.0
        %1805 = vmatpush1.msra.mxu0 0.0
        %1806 = vmatprep.subr.mxu0 0.0
        %1807 = vmatpush1.msra.mxu0 0.0
        %1808 = vmatprep.subr.mxu0 0.0
        %1809 = vmatpush1.msra.mxu0 0.0
        %1810 = vmatprep.subr.mxu0 0.0
        %1811 = vmatpush1.msra.mxu0 0.0
        %1812 = vmatprep.subr.mxu0 0.0
        %1813 = vmatpush1.msra.mxu0 0.0
        %1814 = vmatprep.subr.mxu0 0.0
        %1815 = vmatpush1.msra.mxu0 0.0
        %1816 = vmatprep.subr.mxu0 0.0
        %1817 = vmatpush1.msra.mxu0 0.0
        %1818 = vmatprep.subr.mxu0 0.0
        %1819 = vmatpush1.msra.mxu0 0.0
        %1820 = vmatprep.mubr.f32.mxu0 0.0
        %1821 = vmatmul.mubr.f32.gmra.mrb[0].mxu0 %v1662
        %v1822 = vpop.f32.mrb[0].mxu0
        %v1823 = vadd.f32 0.0, %v1822
        %v1824 = vpop.f32.mrb[0].mxu0
        %v1825 = vadd.f32 0.0, %v1824
        %1826 = vmatprep.mubr.f32.mxu0 0.0
        %1827 = vmatmul.mubr.f32.gmra.mrb[0].mxu0 %v1665
        %v1828 = vpop.f32.mrb[0].mxu0
        %v1829 = vadd.f32 0.0, %v1828
        %v1830 = vpop.f32.mrb[0].mxu0
        %v1831 = vadd.f32 0.0, %v1830
        %1832 = vdwg.mxu0
        %s1833 = scalar_lea.vmem %s4, 16
        %v1834 = vld [vmem:[%s1833] sm:$0xff]
        %v1835 = vld [vmem:[%s1833 + $0x8] sm:$0x3f]
        %v1837 = vsel %vm627, %v1834, 0
        %v1840 = vsel %vm627, %v1835, 0
        %1842 = vmatprep.subr.mxu0 %v1644
        %1843 = vmatpush1.msra.mxu0 %v1643
        %1844 = vmatprep.subr.mxu0 %v1648
        %1845 = vmatpush1.msra.mxu0 %v1647
        %1846 = vmatprep.subr.mxu0 %v1652
        %1847 = vmatpush1.msra.mxu0 %v1651
        %1848 = vmatprep.subr.mxu0 %v1671
        %1849 = vmatpush1.msra.mxu0 %v1668
        %1850 = vmatprep.subr.mxu0 0.0
        %1851 = vmatpush1.msra.mxu0 0.0
        %1852 = vmatprep.subr.mxu0 0.0
        %1853 = vmatpush1.msra.mxu0 0.0
        %1854 = vmatprep.subr.mxu0 0.0
        %1855 = vmatpush1.msra.mxu0 0.0
        %1856 = vmatprep.subr.mxu0 0.0
        %1857 = vmatpush1.msra.mxu0 0.0
        %1858 = vmatprep.subr.mxu0 0.0
        %1859 = vmatpush1.msra.mxu0 0.0
        %1860 = vmatprep.subr.mxu0 0.0
        %1861 = vmatpush1.msra.mxu0 0.0
        %1862 = vmatprep.subr.mxu0 0.0
        %1863 = vmatpush1.msra.mxu0 0.0
        %1864 = vmatprep.subr.mxu0 0.0
        %1865 = vmatpush1.msra.mxu0 0.0
        %1866 = vmatprep.subr.mxu0 0.0
        %1867 = vmatpush1.msra.mxu0 0.0
        %1868 = vmatprep.subr.mxu0 0.0
        %1869 = vmatpush1.msra.mxu0 0.0
        %1870 = vmatprep.subr.mxu0 0.0
        %1871 = vmatpush1.msra.mxu0 0.0
        %1872 = vmatprep.subr.mxu0 0.0
        %1873 = vmatpush1.msra.mxu0 0.0
        %1874 = vmatprep.subr.mxu0 0.0
        %1875 = vmatpush1.msra.mxu0 0.0
        %1876 = vmatprep.subr.mxu0 0.0
        %1877 = vmatpush1.msra.mxu0 0.0
        %1878 = vmatprep.subr.mxu0 0.0
        %1879 = vmatpush1.msra.mxu0 0.0
        %1880 = vmatprep.subr.mxu0 0.0
        %1881 = vmatpush1.msra.mxu0 0.0
        %1882 = vmatprep.subr.mxu0 0.0
        %1883 = vmatpush1.msra.mxu0 0.0
        %1884 = vmatprep.subr.mxu0 0.0
        %1885 = vmatpush1.msra.mxu0 0.0
        %1886 = vmatprep.subr.mxu0 0.0
        %1887 = vmatpush1.msra.mxu0 0.0
        %1888 = vmatprep.subr.mxu0 0.0
        %1889 = vmatpush1.msra.mxu0 0.0
        %1890 = vmatprep.subr.mxu0 0.0
        %1891 = vmatpush1.msra.mxu0 0.0
        %1892 = vmatprep.subr.mxu0 0.0
        %1893 = vmatpush1.msra.mxu0 0.0
        %1894 = vmatprep.subr.mxu0 0.0
        %1895 = vmatpush1.msra.mxu0 0.0
        %1896 = vmatprep.subr.mxu0 0.0
        %1897 = vmatpush1.msra.mxu0 0.0
        %1898 = vmatprep.subr.mxu0 0.0
        %1899 = vmatpush1.msra.mxu0 0.0
        %1900 = vmatprep.subr.mxu0 0.0
        %1901 = vmatpush1.msra.mxu0 0.0
        %1902 = vmatprep.subr.mxu0 0.0
        %1903 = vmatpush1.msra.mxu0 0.0
        %1904 = vmatprep.subr.mxu0 0.0
        %1905 = vmatpush1.msra.mxu0 0.0
        %1906 = vmatprep.mubr.f32.mxu0 0.0
        %1907 = vmatmul.mubr.f32.gmra.mrb[0].mxu0 %v1837
        %v1908 = vpop.f32.mrb[0].mxu0
        %v1909 = vadd.f32 0.0, %v1908
        %v1910 = vpop.f32.mrb[0].mxu0
        %v1911 = vadd.f32 0.0, %v1910
        %1912 = vmatprep.mubr.f32.mxu0 0.0
        %1913 = vmatmul.mubr.f32.gmra.mrb[0].mxu0 %v1840
        %v1914 = vpop.f32.mrb[0].mxu0
        %v1915 = vadd.f32 0.0, %v1914
        %v1916 = vpop.f32.mrb[0].mxu0
        %v1917 = vadd.f32 0.0, %v1916
        %1918 = vdwg.mxu0
        %1919 = vmatprep.subr.mxu0 %v1646
        %1920 = vmatpush1.msra.mxu0 %v1645
        %1921 = vmatprep.subr.mxu0 %v1650
        %1922 = vmatpush1.msra.mxu0 %v1649
        %1923 = vmatprep.subr.mxu0 %v1654
        %1924 = vmatpush1.msra.mxu0 %v1653
        %1925 = vmatprep.subr.mxu0 %v1677
        %1926 = vmatpush1.msra.mxu0 %v1674
        %1927 = vmatprep.subr.mxu0 0.0
        %1928 = vmatpush1.msra.mxu0 0.0
        %1929 = vmatprep.subr.mxu0 0.0
        %1930 = vmatpush1.msra.mxu0 0.0
        %1931 = vmatprep.subr.mxu0 0.0
        %1932 = vmatpush1.msra.mxu0 0.0
        %1933 = vmatprep.subr.mxu0 0.0
        %1934 = vmatpush1.msra.mxu0 0.0
        %1935 = vmatprep.subr.mxu0 0.0
        %1936 = vmatpush1.msra.mxu0 0.0
        %1937 = vmatprep.subr.mxu0 0.0
        %1938 = vmatpush1.msra.mxu0 0.0
        %1939 = vmatprep.subr.mxu0 0.0
        %1940 = vmatpush1.msra.mxu0 0.0
        %1941 = vmatprep.subr.mxu0 0.0
        %1942 = vmatpush1.msra.mxu0 0.0
        %1943 = vmatprep.subr.mxu0 0.0
        %1944 = vmatpush1.msra.mxu0 0.0
        %1945 = vmatprep.subr.mxu0 0.0
        %1946 = vmatpush1.msra.mxu0 0.0
        %1947 = vmatprep.subr.mxu0 0.0
        %1948 = vmatpush1.msra.mxu0 0.0
        %1949 = vmatprep.subr.mxu0 0.0
        %1950 = vmatpush1.msra.mxu0 0.0
        %1951 = vmatprep.subr.mxu0 0.0
        %1952 = vmatpush1.msra.mxu0 0.0
        %1953 = vmatprep.subr.mxu0 0.0
        %1954 = vmatpush1.msra.mxu0 0.0
        %1955 = vmatprep.subr.mxu0 0.0
        %1956 = vmatpush1.msra.mxu0 0.0
        %1957 = vmatprep.subr.mxu0 0.0
        %1958 = vmatpush1.msra.mxu0 0.0
        %1959 = vmatprep.subr.mxu0 0.0
        %1960 = vmatpush1.msra.mxu0 0.0
        %1961 = vmatprep.subr.mxu0 0.0
        %1962 = vmatpush1.msra.mxu0 0.0
        %1963 = vmatprep.subr.mxu0 0.0
        %1964 = vmatpush1.msra.mxu0 0.0
        %1965 = vmatprep.subr.mxu0 0.0
        %1966 = vmatpush1.msra.mxu0 0.0
        %1967 = vmatprep.subr.mxu0 0.0
        %1968 = vmatpush1.msra.mxu0 0.0
        %1969 = vmatprep.subr.mxu0 0.0
        %1970 = vmatpush1.msra.mxu0 0.0
        %1971 = vmatprep.subr.mxu0 0.0
        %1972 = vmatpush1.msra.mxu0 0.0
        %1973 = vmatprep.subr.mxu0 0.0
        %1974 = vmatpush1.msra.mxu0 0.0
        %1975 = vmatprep.subr.mxu0 0.0
        %1976 = vmatpush1.msra.mxu0 0.0
        %1977 = vmatprep.subr.mxu0 0.0
        %1978 = vmatpush1.msra.mxu0 0.0
        %1979 = vmatprep.subr.mxu0 0.0
        %1980 = vmatpush1.msra.mxu0 0.0
        %1981 = vmatprep.subr.mxu0 0.0
        %1982 = vmatpush1.msra.mxu0 0.0
        %1983 = vmatprep.mubr.f32.mxu0 0.0
        %1984 = vmatmul.mubr.f32.gmra.mrb[0].mxu0 %v1837
        %v1985 = vpop.f32.mrb[0].mxu0
        %v1986 = vadd.f32 0.0, %v1985
        %v1987 = vpop.f32.mrb[0].mxu0
        %v1988 = vadd.f32 0.0, %v1987
        %1989 = vmatprep.mubr.f32.mxu0 0.0
        %1990 = vmatmul.mubr.f32.gmra.mrb[0].mxu0 %v1840
        %v1991 = vpop.f32.mrb[0].mxu0
        %v1992 = vadd.f32 0.0, %v1991
        %v1993 = vpop.f32.mrb[0].mxu0
        %v1994 = vadd.f32 0.0, %v1993
        %1995 = vdwg.mxu0
        %v1996 = vmax.f32 %v1746, %v1909
        %v1997 = vmax.f32 %v1748, %v1911
        %v1998 = vmax.f32 %v1823, %v1986
        %v1999 = vmax.f32 %v1825, %v1988
        %v2000 = vmax.f32 %v1752, %v1915
        %v2001 = vmax.f32 %v1754, %v1917
        %v2002 = vmax.f32 %v1829, %v1992
        %v2003 = vmax.f32 %v1831, %v1994
        %v2004 = vld [vmem:[#allocation8] sm:$0xff]
        %v2005 = vld [vmem:[#allocation8 + $0x8] sm:$0xff]
        %v2006 = vld [vmem:[#allocation8 + $0x10] sm:$0xff]
        %v2007 = vld [vmem:[#allocation8 + $0x18] sm:$0xff]
        %v2008 = vld [vmem:[#allocation8 + $0x20] sm:$0xff]
        %v2009 = vld [vmem:[#allocation8 + $0x28] sm:$0xff]
        %v2010 = vld [vmem:[#allocation8 + $0x30] sm:$0xff]
        %v2011 = vld [vmem:[#allocation8 + $0x38] sm:$0xff]
        %v2012 = vld [vmem:[#allocation8 + $0x40] sm:$0xff]
        %v2013 = vld [vmem:[#allocation8 + $0x48] sm:$0xff]
        %v2014 = vld [vmem:[#allocation8 + $0x50] sm:$0xff]
        %v2015 = vld [vmem:[#allocation8 + $0x58] sm:$0xff]
        %v2016 = vld [vmem:[#allocation8 + $0x60] sm:$0xff]
        %v2017 = vld [vmem:[#allocation8 + $0x68] sm:$0xff]
        %v2018 = vld [vmem:[#allocation8 + $0x70] sm:$0xff]
        %v2019 = vld [vmem:[#allocation8 + $0x78] sm:$0xff]
        %v2020 = vld [vmem:[#allocation8 + $0x80] sm:$0xff]
        %v2021 = vld [vmem:[#allocation8 + $0x88] sm:$0xff]
        %v2022 = vld [vmem:[#allocation8 + $0x90] sm:$0xff]
        %v2023 = vld [vmem:[#allocation8 + $0x98] sm:$0xff]
        %v2024 = vld [vmem:[#allocation8 + $0xa0] sm:$0xff]
        %v2025 = vld [vmem:[#allocation8 + $0xa8] sm:$0xff]
        %v2026 = vld [vmem:[#allocation8 + $0xb0] sm:$0xff]
        %v2027 = vld [vmem:[#allocation8 + $0xb8] sm:$0xff]
        %v2028 = vld [vmem:[#allocation8 + $0xc0] sm:$0xff]
        %v2029 = vld [vmem:[#allocation8 + $0xc8] sm:$0xff]
        %v2030 = vld [vmem:[#allocation8 + $0xd0] sm:$0xff]
        %v2031 = vld [vmem:[#allocation8 + $0xd8] sm:$0xff]
        %v2032 = vld [vmem:[#allocation8 + $0xe0] sm:$0xff]
        %v2033 = vld [vmem:[#allocation8 + $0xe8] sm:$0xff]
        %v2034 = vld [vmem:[#allocation8 + $0xf0] sm:$0xff]
        %v2035 = vld [vmem:[#allocation8 + $0xf8] sm:$0xff]
        %v2036 = vld [vmem:[#allocation8 + $0x100] sm:$0xff]
        %v2037 = vld [vmem:[#allocation8 + $0x108] sm:$0xff]
        %v2038 = vld [vmem:[#allocation8 + $0x110] sm:$0xff]
        %v2039 = vld [vmem:[#allocation8 + $0x118] sm:$0xff]
        %v2040 = vld [vmem:[#allocation8 + $0x120] sm:$0xff]
        %v2041 = vld [vmem:[#allocation8 + $0x128] sm:$0xff]
        %v2042 = vld [vmem:[#allocation8 + $0x130] sm:$0xff]
        %v2043 = vld [vmem:[#allocation8 + $0x138] sm:$0xff]
        %v2044 = vld [vmem:[#allocation8 + $0x140] sm:$0xff]
        %v2045 = vld [vmem:[#allocation8 + $0x148] sm:$0xff]
        %v2046 = vld [vmem:[#allocation8 + $0x150] sm:$0xff]
        %v2047 = vld [vmem:[#allocation8 + $0x158] sm:$0xff]
        %v2048 = vld [vmem:[#allocation8 + $0x160] sm:$0xff]
        %v2049 = vld [vmem:[#allocation8 + $0x168] sm:$0xff]
        %v2050 = vld [vmem:[#allocation8 + $0x170] sm:$0xff]
        %v2051 = vld [vmem:[#allocation8 + $0x178] sm:$0xff]
        %v2052 = vld [vmem:[#allocation8 + $0x180] sm:$0xff]
        %v2053 = vld [vmem:[#allocation8 + $0x188] sm:$0xff]
        %v2054 = vld [vmem:[#allocation8 + $0x190] sm:$0xff]
        %v2055 = vld [vmem:[#allocation8 + $0x198] sm:$0xff]
        %v2056 = vld [vmem:[#allocation8 + $0x1a0] sm:$0xff]
        %v2057 = vld [vmem:[#allocation8 + $0x1a8] sm:$0xff]
        %v2058 = vld [vmem:[#allocation8 + $0x1b0] sm:$0xff]
        %v2059 = vld [vmem:[#allocation8 + $0x1b8] sm:$0xff]
        %v2060 = vld [vmem:[#allocation8 + $0x1c0] sm:$0xff]
        %v2061 = vld [vmem:[#allocation8 + $0x1c8] sm:$0xff]
        %v2062 = vld [vmem:[#allocation8 + $0x1d0] sm:$0xff]
        %v2063 = vld [vmem:[#allocation8 + $0x1d8] sm:$0xff]
        %v2064 = vld [vmem:[#allocation8 + $0x1e0] sm:$0xff]
        %v2065 = vld [vmem:[#allocation8 + $0x1e8] sm:$0xff]
        %v2066 = vld [vmem:[#allocation8 + $0x1f0] sm:$0xff]
        %v2067 = vld [vmem:[#allocation8 + $0x1f8] sm:$0xff]
        %v2068 = vld [vmem:[#allocation8 + $0x200] sm:$0xff]
        %v2069 = vld [vmem:[#allocation8 + $0x208] sm:$0xff]
        %v2070 = vld [vmem:[#allocation8 + $0x210] sm:$0xff]
        %v2071 = vld [vmem:[#allocation8 + $0x218] sm:$0xff]
        %v2072 = vld [vmem:[#allocation8 + $0x220] sm:$0xff]
        %v2073 = vld [vmem:[#allocation8 + $0x228] sm:$0xff]
        %v2074 = vld [vmem:[#allocation8 + $0x230] sm:$0xff]
        %v2075 = vld [vmem:[#allocation8 + $0x238] sm:$0xff]
        %v2076 = vld [vmem:[#allocation8 + $0x240] sm:$0xff]
        %v2077 = vld [vmem:[#allocation8 + $0x248] sm:$0xff]
        %v2078 = vld [vmem:[#allocation8 + $0x250] sm:$0xff]
        %v2079 = vld [vmem:[#allocation8 + $0x258] sm:$0xff]
        %v2080 = vld [vmem:[#allocation8 + $0x260] sm:$0xff]
        %v2081 = vld [vmem:[#allocation8 + $0x268] sm:$0xff]
        %v2082 = vld [vmem:[#allocation8 + $0x270] sm:$0xff]
        %v2083 = vld [vmem:[#allocation8 + $0x278] sm:$0xff]
        %v2084 = vld [vmem:[#allocation8 + $0x280] sm:$0xff]
        %v2085 = vld [vmem:[#allocation8 + $0x288] sm:$0xff]
        %v2086 = vld [vmem:[#allocation8 + $0x290] sm:$0xff]
        %v2087 = vld [vmem:[#allocation8 + $0x298] sm:$0xff]
        %v2088 = vld [vmem:[#allocation8 + $0x2a0] sm:$0xff]
        %v2089 = vld [vmem:[#allocation8 + $0x2a8] sm:$0xff]
        %v2090 = vld [vmem:[#allocation8 + $0x2b0] sm:$0xff]
        %v2091 = vld [vmem:[#allocation8 + $0x2b8] sm:$0xff]
        %v2092 = vld [vmem:[#allocation8 + $0x2c0] sm:$0xff]
        %v2093 = vld [vmem:[#allocation8 + $0x2c8] sm:$0xff]
        %v2094 = vld [vmem:[#allocation8 + $0x2d0] sm:$0xff]
        %v2095 = vld [vmem:[#allocation8 + $0x2d8] sm:$0xff]
        %v2096 = vld [vmem:[#allocation8 + $0x2e0] sm:$0xff]
        %v2097 = vld [vmem:[#allocation8 + $0x2e8] sm:$0xff]
        %v2098 = vld [vmem:[#allocation8 + $0x2f0] sm:$0xff]
        %v2099 = vld [vmem:[#allocation8 + $0x2f8] sm:$0xff]
        %v2100 = vld [vmem:[#allocation8 + $0x300] sm:$0xff]
        %v2101 = vld [vmem:[#allocation8 + $0x308] sm:$0xff]
        %v2102 = vld [vmem:[#allocation8 + $0x310] sm:$0xff]
        %v2103 = vld [vmem:[#allocation8 + $0x318] sm:$0xff]
        %v2104 = vld [vmem:[#allocation8 + $0x320] sm:$0xff]
        %v2105 = vld [vmem:[#allocation8 + $0x328] sm:$0xff]
        %v2106 = vld [vmem:[#allocation8 + $0x330] sm:$0xff]
        %v2107 = vld [vmem:[#allocation8 + $0x338] sm:$0xff]
        %v2108 = vld [vmem:[#allocation8 + $0x340] sm:$0xff]
        %v2109 = vld [vmem:[#allocation8 + $0x348] sm:$0xff]
        %v2110 = vld [vmem:[#allocation8 + $0x350] sm:$0xff]
        %v2111 = vld [vmem:[#allocation8 + $0x358] sm:$0xff]
        %v2112 = vld [vmem:[#allocation8 + $0x360] sm:$0xff]
        %v2113 = vld [vmem:[#allocation8 + $0x368] sm:$0xff]
        %v2114 = vld [vmem:[#allocation8 + $0x370] sm:$0xff]
        %v2115 = vld [vmem:[#allocation8 + $0x378] sm:$0xff]
        %vm2116 = vcmask 523264
        %v2118 = vsel %vm2116, %v1999, 0
        %v2121 = vsel %vm2116, %v2003, 0
        %2123 = vmatprep.subr.mxu0 %v2005
        %2124 = vmatpush1.msra.mxu0 %v2004
        %2125 = vmatprep.subr.mxu0 %v2007
        %2126 = vmatpush1.msra.mxu0 %v2006
        %2127 = vmatprep.subr.mxu0 %v2009
        %2128 = vmatpush1.msra.mxu0 %v2008
        %2129 = vmatprep.subr.mxu0 %v2011
        %2130 = vmatpush1.msra.mxu0 %v2010
        %2131 = vmatprep.subr.mxu0 %v2013
        %2132 = vmatpush1.msra.mxu0 %v2012
        %2133 = vmatprep.subr.mxu0 %v2015
        %2134 = vmatpush1.msra.mxu0 %v2014
        %2135 = vmatprep.subr.mxu0 %v2017
        %2136 = vmatpush1.msra.mxu0 %v2016
        %2137 = vmatprep.subr.mxu0 %v2019
        %2138 = vmatpush1.msra.mxu0 %v2018
        %2139 = vmatprep.subr.mxu0 %v2021
        %2140 = vmatpush1.msra.mxu0 %v2020
        %2141 = vmatprep.subr.mxu0 %v2023
        %2142 = vmatpush1.msra.mxu0 %v2022
        %2143 = vmatprep.subr.mxu0 %v2025
        %2144 = vmatpush1.msra.mxu0 %v2024
        %2145 = vmatprep.subr.mxu0 %v2027
        %2146 = vmatpush1.msra.mxu0 %v2026
        %2147 = vmatprep.subr.mxu0 %v2029
        %2148 = vmatpush1.msra.mxu0 %v2028
        %2149 = vmatprep.subr.mxu0 %v2031
        %2150 = vmatpush1.msra.mxu0 %v2030
        %2151 = vmatprep.subr.mxu0 %v2033
        %2152 = vmatpush1.msra.mxu0 %v2032
        %2153 = vmatprep.subr.mxu0 %v2035
        %2154 = vmatpush1.msra.mxu0 %v2034
        %2155 = vmatprep.subr.mxu0 %v2037
        %2156 = vmatpush1.msra.mxu0 %v2036
        %2157 = vmatprep.subr.mxu0 %v2039
        %2158 = vmatpush1.msra.mxu0 %v2038
        %2159 = vmatprep.subr.mxu0 %v2041
        %2160 = vmatpush1.msra.mxu0 %v2040
        %2161 = vmatprep.subr.mxu0 %v2043
        %2162 = vmatpush1.msra.mxu0 %v2042
        %2163 = vmatprep.subr.mxu0 %v2045
        %2164 = vmatpush1.msra.mxu0 %v2044
        %2165 = vmatprep.subr.mxu0 %v2047
        %2166 = vmatpush1.msra.mxu0 %v2046
        %2167 = vmatprep.subr.mxu0 %v2049
        %2168 = vmatpush1.msra.mxu0 %v2048
        %2169 = vmatprep.subr.mxu0 %v2051
        %2170 = vmatpush1.msra.mxu0 %v2050
        %2171 = vmatprep.subr.mxu0 %v2053
        %2172 = vmatpush1.msra.mxu0 %v2052
        %2173 = vmatprep.subr.mxu0 %v2055
        %2174 = vmatpush1.msra.mxu0 %v2054
        %2175 = vmatprep.subr.mxu0 %v2057
        %2176 = vmatpush1.msra.mxu0 %v2056
        %2177 = vmatprep.subr.mxu0 %v2059
        %2178 = vmatpush1.msra.mxu0 %v2058
        %2179 = vmatprep.subr.mxu0 %v2061
        %2180 = vmatpush1.msra.mxu0 %v2060
        %2181 = vmatprep.subr.mxu0 %v2063
        %2182 = vmatpush1.msra.mxu0 %v2062
        %2183 = vmatprep.subr.mxu0 %v2065
        %2184 = vmatpush1.msra.mxu0 %v2064
        %2185 = vmatprep.subr.mxu0 %v2067
        %2186 = vmatpush1.msra.mxu0 %v2066
        %2187 = vmatprep.mubr.f32.mxu0 %v1997
        %2188 = vmatmul.mubr.f32.gmra.mrb[0].mxu0 %v1996
        %v2189 = vpop.f32.mrb[0].mxu0
        %v2190 = vadd.f32 0.0, %v2189
        %v2191 = vpop.f32.mrb[0].mxu0
        %v2192 = vadd.f32 0.0, %v2191
        %2193 = vmatprep.mubr.f32.mxu0 %v2001
        %2194 = vmatmul.mubr.f32.gmra.mrb[0].mxu0 %v2000
        %v2195 = vpop.f32.mrb[0].mxu0
        %v2196 = vadd.f32 0.0, %v2195
        %v2197 = vpop.f32.mrb[0].mxu0
        %v2198 = vadd.f32 0.0, %v2197
        %2199 = vdwg.mxu0
        %2200 = vmatprep.subr.mxu0 %v2069
        %2201 = vmatpush1.msra.mxu0 %v2068
        %2202 = vmatprep.subr.mxu0 %v2071
        %2203 = vmatpush1.msra.mxu0 %v2070
        %2204 = vmatprep.subr.mxu0 %v2073
        %2205 = vmatpush1.msra.mxu0 %v2072
        %2206 = vmatprep.subr.mxu0 %v2075
        %2207 = vmatpush1.msra.mxu0 %v2074
        %2208 = vmatprep.subr.mxu0 %v2077
        %2209 = vmatpush1.msra.mxu0 %v2076
        %2210 = vmatprep.subr.mxu0 %v2079
        %2211 = vmatpush1.msra.mxu0 %v2078
        %2212 = vmatprep.subr.mxu0 %v2081
        %2213 = vmatpush1.msra.mxu0 %v2080
        %2214 = vmatprep.subr.mxu0 %v2083
        %2215 = vmatpush1.msra.mxu0 %v2082
        %2216 = vmatprep.subr.mxu0 %v2085
        %2217 = vmatpush1.msra.mxu0 %v2084
        %2218 = vmatprep.subr.mxu0 %v2087
        %2219 = vmatpush1.msra.mxu0 %v2086
        %2220 = vmatprep.subr.mxu0 %v2089
        %2221 = vmatpush1.msra.mxu0 %v2088
        %2222 = vmatprep.subr.mxu0 %v2091
        %2223 = vmatpush1.msra.mxu0 %v2090
        %2224 = vmatprep.subr.mxu0 %v2093
        %2225 = vmatpush1.msra.mxu0 %v2092
        %2226 = vmatprep.subr.mxu0 %v2095
        %2227 = vmatpush1.msra.mxu0 %v2094
        %2228 = vmatprep.subr.mxu0 %v2097
        %2229 = vmatpush1.msra.mxu0 %v2096
        %2230 = vmatprep.subr.mxu0 %v2099
        %2231 = vmatpush1.msra.mxu0 %v2098
        %2232 = vmatprep.subr.mxu0 %v2101
        %2233 = vmatpush1.msra.mxu0 %v2100
        %2234 = vmatprep.subr.mxu0 %v2103
        %2235 = vmatpush1.msra.mxu0 %v2102
        %2236 = vmatprep.subr.mxu0 %v2105
        %2237 = vmatpush1.msra.mxu0 %v2104
        %2238 = vmatprep.subr.mxu0 %v2107
        %2239 = vmatpush1.msra.mxu0 %v2106
        %2240 = vmatprep.subr.mxu0 %v2109
        %2241 = vmatpush1.msra.mxu0 %v2108
        %2242 = vmatprep.subr.mxu0 %v2111
        %2243 = vmatpush1.msra.mxu0 %v2110
        %2244 = vmatprep.subr.mxu0 %v2113
        %2245 = vmatpush1.msra.mxu0 %v2112
        %2246 = vmatprep.subr.mxu0 %v2115
        %2247 = vmatpush1.msra.mxu0 %v2114
        %2248 = vmatprep.subr.mxu0 0.0
        %2249 = vmatpush1.msra.mxu0 0.0
        %2250 = vmatprep.subr.mxu0 0.0
        %2251 = vmatpush1.msra.mxu0 0.0
        %2252 = vmatprep.subr.mxu0 0.0
        %2253 = vmatpush1.msra.mxu0 0.0
        %2254 = vmatprep.subr.mxu0 0.0
        %2255 = vmatpush1.msra.mxu0 0.0
        %2256 = vmatprep.subr.mxu0 0.0
        %2257 = vmatpush1.msra.mxu0 0.0
        %2258 = vmatprep.subr.mxu0 0.0
        %2259 = vmatpush1.msra.mxu0 0.0
        %2260 = vmatprep.subr.mxu0 0.0
        %2261 = vmatpush1.msra.mxu0 0.0
        %2262 = vmatprep.subr.mxu0 0.0
        %2263 = vmatpush1.msra.mxu0 0.0
        %2264 = vmatprep.mubr.f32.mxu0 %v2118
        %2265 = vmatmul.mubr.f32.gmra.mrb[0].mxu0 %v1998
        %v2266 = vpop.f32.mrb[0].mxu0
        %v2267 = vadd.f32 %v2190, %v2266
        %v2268 = vpop.f32.mrb[0].mxu0
        %v2269 = vadd.f32 %v2192, %v2268
        %2270 = vmatprep.mubr.f32.mxu0 %v2121
        %2271 = vmatmul.mubr.f32.gmra.mrb[0].mxu0 %v2002
        %v2272 = vpop.f32.mrb[0].mxu0
        %v2273 = vadd.f32 %v2196, %v2272
        %v2274 = vpop.f32.mrb[0].mxu0
        %v2275 = vadd.f32 %v2198, %v2274
        %2276 = vdwg.mxu0
        %s2277 = scalar_lea.vmem [#allocation8], 896
        %v2278 = vld [vmem:[%s2277] sm:$0xff]
        %v2279 = vld [vmem:[%s2277 + $0x8] sm:$0xff]
        %v2280 = vld [vmem:[%s2277 + $0x10] sm:$0xff]
        %v2281 = vld [vmem:[%s2277 + $0x18] sm:$0xff]
        %v2282 = vld [vmem:[%s2277 + $0x20] sm:$0xff]
        %v2283 = vld [vmem:[%s2277 + $0x28] sm:$0xff]
        %v2284 = vld [vmem:[%s2277 + $0x30] sm:$0xff]
        %v2285 = vld [vmem:[%s2277 + $0x38] sm:$0xff]
        %v2286 = vld [vmem:[%s2277 + $0x40] sm:$0xff]
        %v2287 = vld [vmem:[%s2277 + $0x48] sm:$0xff]
        %v2288 = vld [vmem:[%s2277 + $0x50] sm:$0xff]
        %v2289 = vld [vmem:[%s2277 + $0x58] sm:$0xff]
        %v2290 = vld [vmem:[%s2277 + $0x60] sm:$0xff]
        %v2291 = vld [vmem:[%s2277 + $0x68] sm:$0xff]
        %v2292 = vld [vmem:[%s2277 + $0x70] sm:$0xff]
        %v2293 = vld [vmem:[%s2277 + $0x78] sm:$0xff]
        %v2294 = vld [vmem:[%s2277 + $0x80] sm:$0xff]
        %v2295 = vld [vmem:[%s2277 + $0x88] sm:$0xff]
        %v2296 = vld [vmem:[%s2277 + $0x90] sm:$0xff]
        %v2297 = vld [vmem:[%s2277 + $0x98] sm:$0xff]
        %v2298 = vld [vmem:[%s2277 + $0xa0] sm:$0xff]
        %v2299 = vld [vmem:[%s2277 + $0xa8] sm:$0xff]
        %v2300 = vld [vmem:[%s2277 + $0xb0] sm:$0xff]
        %v2301 = vld [vmem:[%s2277 + $0xb8] sm:$0xff]
        %v2302 = vld [vmem:[%s2277 + $0xc0] sm:$0xff]
        %v2303 = vld [vmem:[%s2277 + $0xc8] sm:$0xff]
        %v2304 = vld [vmem:[%s2277 + $0xd0] sm:$0xff]
        %v2305 = vld [vmem:[%s2277 + $0xd8] sm:$0xff]
        %v2306 = vld [vmem:[%s2277 + $0xe0] sm:$0xff]
        %v2307 = vld [vmem:[%s2277 + $0xe8] sm:$0xff]
        %v2308 = vld [vmem:[%s2277 + $0xf0] sm:$0xff]
        %v2309 = vld [vmem:[%s2277 + $0xf8] sm:$0xff]
        %v2310 = vld [vmem:[%s2277 + $0x100] sm:$0xff]
        %v2311 = vld [vmem:[%s2277 + $0x108] sm:$0xff]
        %v2312 = vld [vmem:[%s2277 + $0x110] sm:$0xff]
        %v2313 = vld [vmem:[%s2277 + $0x118] sm:$0xff]
        %v2314 = vld [vmem:[%s2277 + $0x120] sm:$0xff]
        %v2315 = vld [vmem:[%s2277 + $0x128] sm:$0xff]
        %v2316 = vld [vmem:[%s2277 + $0x130] sm:$0xff]
        %v2317 = vld [vmem:[%s2277 + $0x138] sm:$0xff]
        %v2318 = vld [vmem:[%s2277 + $0x140] sm:$0xff]
        %v2319 = vld [vmem:[%s2277 + $0x148] sm:$0xff]
        %v2320 = vld [vmem:[%s2277 + $0x150] sm:$0xff]
        %v2321 = vld [vmem:[%s2277 + $0x158] sm:$0xff]
        %v2322 = vld [vmem:[%s2277 + $0x160] sm:$0xff]
        %v2323 = vld [vmem:[%s2277 + $0x168] sm:$0xff]
        %v2324 = vld [vmem:[%s2277 + $0x170] sm:$0xff]
        %v2325 = vld [vmem:[%s2277 + $0x178] sm:$0xff]
        %v2326 = vld [vmem:[%s2277 + $0x180] sm:$0xff]
        %v2327 = vld [vmem:[%s2277 + $0x188] sm:$0xff]
        %v2328 = vld [vmem:[%s2277 + $0x190] sm:$0xff]
        %v2329 = vld [vmem:[%s2277 + $0x198] sm:$0xff]
        %v2330 = vld [vmem:[%s2277 + $0x1a0] sm:$0xff]
        %v2331 = vld [vmem:[%s2277 + $0x1a8] sm:$0xff]
        %v2332 = vld [vmem:[%s2277 + $0x1b0] sm:$0xff]
        %v2333 = vld [vmem:[%s2277 + $0x1b8] sm:$0xff]
        %v2334 = vld [vmem:[%s2277 + $0x1c0] sm:$0xff]
        %v2335 = vld [vmem:[%s2277 + $0x1c8] sm:$0xff]
        %v2336 = vld [vmem:[%s2277 + $0x1d0] sm:$0xff]
        %v2337 = vld [vmem:[%s2277 + $0x1d8] sm:$0xff]
        %v2338 = vld [vmem:[%s2277 + $0x1e0] sm:$0xff]
        %v2339 = vld [vmem:[%s2277 + $0x1e8] sm:$0xff]
        %v2340 = vld [vmem:[%s2277 + $0x1f0] sm:$0xff]
        %v2341 = vld [vmem:[%s2277 + $0x1f8] sm:$0xff]
        %v2342 = vld [vmem:[%s2277 + $0x200] sm:$0xff]
        %v2343 = vld [vmem:[%s2277 + $0x208] sm:$0xff]
        %v2344 = vld [vmem:[%s2277 + $0x210] sm:$0xff]
        %v2345 = vld [vmem:[%s2277 + $0x218] sm:$0xff]
        %v2346 = vld [vmem:[%s2277 + $0x220] sm:$0xff]
        %v2347 = vld [vmem:[%s2277 + $0x228] sm:$0xff]
        %v2348 = vld [vmem:[%s2277 + $0x230] sm:$0xff]
        %v2349 = vld [vmem:[%s2277 + $0x238] sm:$0xff]
        %v2350 = vld [vmem:[%s2277 + $0x240] sm:$0xff]
        %v2351 = vld [vmem:[%s2277 + $0x248] sm:$0xff]
        %v2352 = vld [vmem:[%s2277 + $0x250] sm:$0xff]
        %v2353 = vld [vmem:[%s2277 + $0x258] sm:$0xff]
        %v2354 = vld [vmem:[%s2277 + $0x260] sm:$0xff]
        %v2355 = vld [vmem:[%s2277 + $0x268] sm:$0xff]
        %v2356 = vld [vmem:[%s2277 + $0x270] sm:$0xff]
        %v2357 = vld [vmem:[%s2277 + $0x278] sm:$0xff]
        %v2358 = vld [vmem:[%s2277 + $0x280] sm:$0xff]
        %v2359 = vld [vmem:[%s2277 + $0x288] sm:$0xff]
        %v2360 = vld [vmem:[%s2277 + $0x290] sm:$0xff]
        %v2361 = vld [vmem:[%s2277 + $0x298] sm:$0xff]
        %v2362 = vld [vmem:[%s2277 + $0x2a0] sm:$0xff]
        %v2363 = vld [vmem:[%s2277 + $0x2a8] sm:$0xff]
        %v2364 = vld [vmem:[%s2277 + $0x2b0] sm:$0xff]
        %v2365 = vld [vmem:[%s2277 + $0x2b8] sm:$0xff]
        %v2366 = vld [vmem:[%s2277 + $0x2c0] sm:$0xff]
        %v2367 = vld [vmem:[%s2277 + $0x2c8] sm:$0xff]
        %v2368 = vld [vmem:[%s2277 + $0x2d0] sm:$0xff]
        %v2369 = vld [vmem:[%s2277 + $0x2d8] sm:$0xff]
        %v2370 = vld [vmem:[%s2277 + $0x2e0] sm:$0xff]
        %v2371 = vld [vmem:[%s2277 + $0x2e8] sm:$0xff]
        %v2372 = vld [vmem:[%s2277 + $0x2f0] sm:$0xff]
        %v2373 = vld [vmem:[%s2277 + $0x2f8] sm:$0xff]
        %v2374 = vld [vmem:[%s2277 + $0x300] sm:$0xff]
        %v2375 = vld [vmem:[%s2277 + $0x308] sm:$0xff]
        %v2376 = vld [vmem:[%s2277 + $0x310] sm:$0xff]
        %v2377 = vld [vmem:[%s2277 + $0x318] sm:$0xff]
        %v2378 = vld [vmem:[%s2277 + $0x320] sm:$0xff]
        %v2379 = vld [vmem:[%s2277 + $0x328] sm:$0xff]
        %v2380 = vld [vmem:[%s2277 + $0x330] sm:$0xff]
        %v2381 = vld [vmem:[%s2277 + $0x338] sm:$0xff]
        %v2382 = vld [vmem:[%s2277 + $0x340] sm:$0xff]
        %v2383 = vld [vmem:[%s2277 + $0x348] sm:$0xff]
        %v2384 = vld [vmem:[%s2277 + $0x350] sm:$0xff]
        %v2385 = vld [vmem:[%s2277 + $0x358] sm:$0xff]
        %v2386 = vld [vmem:[%s2277 + $0x360] sm:$0xff]
        %v2387 = vld [vmem:[%s2277 + $0x368] sm:$0xff]
        %v2388 = vld [vmem:[%s2277 + $0x370] sm:$0xff]
        %v2389 = vld [vmem:[%s2277 + $0x378] sm:$0xff]
        %2390 = vmatprep.subr.mxu0 %v2279
        %2391 = vmatpush1.msra.mxu0 %v2278
        %2392 = vmatprep.subr.mxu0 %v2281
        %2393 = vmatpush1.msra.mxu0 %v2280
        %2394 = vmatprep.subr.mxu0 %v2283
        %2395 = vmatpush1.msra.mxu0 %v2282
        %2396 = vmatprep.subr.mxu0 %v2285
        %2397 = vmatpush1.msra.mxu0 %v2284
        %2398 = vmatprep.subr.mxu0 %v2287
        %2399 = vmatpush1.msra.mxu0 %v2286
        %2400 = vmatprep.subr.mxu0 %v2289
        %2401 = vmatpush1.msra.mxu0 %v2288
        %2402 = vmatprep.subr.mxu0 %v2291
        %2403 = vmatpush1.msra.mxu0 %v2290
        %2404 = vmatprep.subr.mxu0 %v2293
        %2405 = vmatpush1.msra.mxu0 %v2292
        %2406 = vmatprep.subr.mxu0 %v2295
        %2407 = vmatpush1.msra.mxu0 %v2294
        %2408 = vmatprep.subr.mxu0 %v2297
        %2409 = vmatpush1.msra.mxu0 %v2296
        %2410 = vmatprep.subr.mxu0 %v2299
        %2411 = vmatpush1.msra.mxu0 %v2298
        %2412 = vmatprep.subr.mxu0 %v2301
        %2413 = vmatpush1.msra.mxu0 %v2300
        %2414 = vmatprep.subr.mxu0 %v2303
        %2415 = vmatpush1.msra.mxu0 %v2302
        %2416 = vmatprep.subr.mxu0 %v2305
        %2417 = vmatpush1.msra.mxu0 %v2304
        %2418 = vmatprep.subr.mxu0 %v2307
        %2419 = vmatpush1.msra.mxu0 %v2306
        %2420 = vmatprep.subr.mxu0 %v2309
        %2421 = vmatpush1.msra.mxu0 %v2308
        %2422 = vmatprep.subr.mxu0 %v2311
        %2423 = vmatpush1.msra.mxu0 %v2310
        %2424 = vmatprep.subr.mxu0 %v2313
        %2425 = vmatpush1.msra.mxu0 %v2312
        %2426 = vmatprep.subr.mxu0 %v2315
        %2427 = vmatpush1.msra.mxu0 %v2314
        %2428 = vmatprep.subr.mxu0 %v2317
        %2429 = vmatpush1.msra.mxu0 %v2316
        %2430 = vmatprep.subr.mxu0 %v2319
        %2431 = vmatpush1.msra.mxu0 %v2318
        %2432 = vmatprep.subr.mxu0 %v2321
        %2433 = vmatpush1.msra.mxu0 %v2320
        %2434 = vmatprep.subr.mxu0 %v2323
        %2435 = vmatpush1.msra.mxu0 %v2322
        %2436 = vmatprep.subr.mxu0 %v2325
        %2437 = vmatpush1.msra.mxu0 %v2324
        %2438 = vmatprep.subr.mxu0 %v2327
        %2439 = vmatpush1.msra.mxu0 %v2326
        %2440 = vmatprep.subr.mxu0 %v2329
        %2441 = vmatpush1.msra.mxu0 %v2328
        %2442 = vmatprep.subr.mxu0 %v2331
        %2443 = vmatpush1.msra.mxu0 %v2330
        %2444 = vmatprep.subr.mxu0 %v2333
        %2445 = vmatpush1.msra.mxu0 %v2332
        %2446 = vmatprep.subr.mxu0 %v2335
        %2447 = vmatpush1.msra.mxu0 %v2334
        %2448 = vmatprep.subr.mxu0 %v2337
        %2449 = vmatpush1.msra.mxu0 %v2336
        %2450 = vmatprep.subr.mxu0 %v2339
        %2451 = vmatpush1.msra.mxu0 %v2338
        %2452 = vmatprep.subr.mxu0 %v2341
        %2453 = vmatpush1.msra.mxu0 %v2340
        %2454 = vmatprep.mubr.f32.mxu0 %v1997
        %2455 = vmatmul.mubr.f32.gmra.mrb[0].mxu0 %v1996
        %v2456 = vpop.f32.mrb[0].mxu0
        %v2457 = vadd.f32 0.0, %v2456
        %v2458 = vpop.f32.mrb[0].mxu0
        %v2459 = vadd.f32 0.0, %v2458
        %2460 = vmatprep.mubr.f32.mxu0 %v2001
        %2461 = vmatmul.mubr.f32.gmra.mrb[0].mxu0 %v2000
        %v2462 = vpop.f32.mrb[0].mxu0
        %v2463 = vadd.f32 0.0, %v2462
        %v2464 = vpop.f32.mrb[0].mxu0
        %v2465 = vadd.f32 0.0, %v2464
        %2466 = vdwg.mxu0
        %2467 = vmatprep.subr.mxu0 %v2343
        %2468 = vmatpush1.msra.mxu0 %v2342
        %2469 = vmatprep.subr.mxu0 %v2345
        %2470 = vmatpush1.msra.mxu0 %v2344
        %2471 = vmatprep.subr.mxu0 %v2347
        %2472 = vmatpush1.msra.mxu0 %v2346
        %2473 = vmatprep.subr.mxu0 %v2349
        %2474 = vmatpush1.msra.mxu0 %v2348
        %2475 = vmatprep.subr.mxu0 %v2351
        %2476 = vmatpush1.msra.mxu0 %v2350
        %2477 = vmatprep.subr.mxu0 %v2353
        %2478 = vmatpush1.msra.mxu0 %v2352
        %2479 = vmatprep.subr.mxu0 %v2355
        %2480 = vmatpush1.msra.mxu0 %v2354
        %2481 = vmatprep.subr.mxu0 %v2357
        %2482 = vmatpush1.msra.mxu0 %v2356
        %2483 = vmatprep.subr.mxu0 %v2359
        %2484 = vmatpush1.msra.mxu0 %v2358
        %2485 = vmatprep.subr.mxu0 %v2361
        %2486 = vmatpush1.msra.mxu0 %v2360
        %2487 = vmatprep.subr.mxu0 %v2363
        %2488 = vmatpush1.msra.mxu0 %v2362
        %2489 = vmatprep.subr.mxu0 %v2365
        %2490 = vmatpush1.msra.mxu0 %v2364
        %2491 = vmatprep.subr.mxu0 %v2367
        %2492 = vmatpush1.msra.mxu0 %v2366
        %2493 = vmatprep.subr.mxu0 %v2369
        %2494 = vmatpush1.msra.mxu0 %v2368
        %2495 = vmatprep.subr.mxu0 %v2371
        %2496 = vmatpush1.msra.mxu0 %v2370
        %2497 = vmatprep.subr.mxu0 %v2373
        %2498 = vmatpush1.msra.mxu0 %v2372
        %2499 = vmatprep.subr.mxu0 %v2375
        %2500 = vmatpush1.msra.mxu0 %v2374
        %2501 = vmatprep.subr.mxu0 %v2377
        %2502 = vmatpush1.msra.mxu0 %v2376
        %2503 = vmatprep.subr.mxu0 %v2379
        %2504 = vmatpush1.msra.mxu0 %v2378
        %2505 = vmatprep.subr.mxu0 %v2381
        %2506 = vmatpush1.msra.mxu0 %v2380
        %2507 = vmatprep.subr.mxu0 %v2383
        %2508 = vmatpush1.msra.mxu0 %v2382
        %2509 = vmatprep.subr.mxu0 %v2385
        %2510 = vmatpush1.msra.mxu0 %v2384
        %2511 = vmatprep.subr.mxu0 %v2387
        %2512 = vmatpush1.msra.mxu0 %v2386
        %2513 = vmatprep.subr.mxu0 %v2389
        %2514 = vmatpush1.msra.mxu0 %v2388
        %2515 = vmatprep.subr.mxu0 0.0
        %2516 = vmatpush1.msra.mxu0 0.0
        %2517 = vmatprep.subr.mxu0 0.0
        %2518 = vmatpush1.msra.mxu0 0.0
        %2519 = vmatprep.subr.mxu0 0.0
        %2520 = vmatpush1.msra.mxu0 0.0
        %2521 = vmatprep.subr.mxu0 0.0
        %2522 = vmatpush1.msra.mxu0 0.0
        %2523 = vmatprep.subr.mxu0 0.0
        %2524 = vmatpush1.msra.mxu0 0.0
        %2525 = vmatprep.subr.mxu0 0.0
        %2526 = vmatpush1.msra.mxu0 0.0
        %2527 = vmatprep.subr.mxu0 0.0
        %2528 = vmatpush1.msra.mxu0 0.0
        %2529 = vmatprep.subr.mxu0 0.0
        %2530 = vmatpush1.msra.mxu0 0.0
        %2531 = vmatprep.mubr.f32.mxu0 %v2118
        %2532 = vmatmul.mubr.f32.gmra.mrb[0].mxu0 %v1998
        %v2533 = vpop.f32.mrb[0].mxu0
        %v2534 = vadd.f32 %v2457, %v2533
        %v2535 = vpop.f32.mrb[0].mxu0
        %v2536 = vadd.f32 %v2459, %v2535
        %2537 = vmatprep.mubr.f32.mxu0 %v2121
        %2538 = vmatmul.mubr.f32.gmra.mrb[0].mxu0 %v2002
        %v2539 = vpop.f32.mrb[0].mxu0
        %v2540 = vadd.f32 %v2463, %v2539
        %v2541 = vpop.f32.mrb[0].mxu0
        %v2542 = vadd.f32 %v2465, %v2541
        %2543 = vdwg.mxu0
        %v2544 = vmax.f32 %v2267, %v2534
        %v2545 = vmax.f32 %v2269, %v2536
        %v2546 = vmax.f32 %v2273, %v2540
        %v2547 = vmax.f32 %v2275, %v2542
        %v2548 = vld [vmem:[#allocation10] sm:$0xff]
        %v2549 = vld [vmem:[#allocation10 + $0x8] sm:$0x3f]
        %vm2550 = vcmask 113664
        %v2552 = vsel %vm2550, %v2548, 0
        %v2555 = vsel %vm2550, %v2549, 0
        %vm2557 = vcmask 1045504
        %v2559 = vsel %vm2557, %v2546, 0
        %v2562 = vsel %vm2557, %v2547, 0
        %2564 = vmatprep.subr.mxu0 %v2545
        %2565 = vmatpush1.msra.mxu0 %v2544
        %2566 = vmatprep.subr.mxu0 %v2562
        %2567 = vmatpush1.msra.mxu0 %v2559
        %2568 = vmatprep.subr.mxu0 0.0
        %2569 = vmatpush1.msra.mxu0 0.0
        %2570 = vmatprep.subr.mxu0 0.0
        %2571 = vmatpush1.msra.mxu0 0.0
        %2572 = vmatprep.subr.mxu0 0.0
        %2573 = vmatpush1.msra.mxu0 0.0
        %2574 = vmatprep.subr.mxu0 0.0
        %2575 = vmatpush1.msra.mxu0 0.0
        %2576 = vmatprep.subr.mxu0 0.0
        %2577 = vmatpush1.msra.mxu0 0.0
        %2578 = vmatprep.subr.mxu0 0.0
        %2579 = vmatpush1.msra.mxu0 0.0
        %2580 = vmatprep.subr.mxu0 0.0
        %2581 = vmatpush1.msra.mxu0 0.0
        %2582 = vmatprep.subr.mxu0 0.0
        %2583 = vmatpush1.msra.mxu0 0.0
        %2584 = vmatprep.subr.mxu0 0.0
        %2585 = vmatpush1.msra.mxu0 0.0
        %2586 = vmatprep.subr.mxu0 0.0
        %2587 = vmatpush1.msra.mxu0 0.0
        %2588 = vmatprep.subr.mxu0 0.0
        %2589 = vmatpush1.msra.mxu0 0.0
        %2590 = vmatprep.subr.mxu0 0.0
        %2591 = vmatpush1.msra.mxu0 0.0
        %2592 = vmatprep.subr.mxu0 0.0
        %2593 = vmatpush1.msra.mxu0 0.0
        %2594 = vmatprep.subr.mxu0 0.0
        %2595 = vmatpush1.msra.mxu0 0.0
        %2596 = vmatprep.subr.mxu0 0.0
        %2597 = vmatpush1.msra.mxu0 0.0
        %2598 = vmatprep.subr.mxu0 0.0
        %2599 = vmatpush1.msra.mxu0 0.0
        %2600 = vmatprep.subr.mxu0 0.0
        %2601 = vmatpush1.msra.mxu0 0.0
        %2602 = vmatprep.subr.mxu0 0.0
        %2603 = vmatpush1.msra.mxu0 0.0
        %2604 = vmatprep.subr.mxu0 0.0
        %2605 = vmatpush1.msra.mxu0 0.0
        %2606 = vmatprep.subr.mxu0 0.0
        %2607 = vmatpush1.msra.mxu0 0.0
        %2608 = vmatprep.subr.mxu0 0.0
        %2609 = vmatpush1.msra.mxu0 0.0
        %2610 = vmatprep.subr.mxu0 0.0
        %2611 = vmatpush1.msra.mxu0 0.0
        %2612 = vmatprep.subr.mxu0 0.0
        %2613 = vmatpush1.msra.mxu0 0.0
        %2614 = vmatprep.subr.mxu0 0.0
        %2615 = vmatpush1.msra.mxu0 0.0
        %2616 = vmatprep.subr.mxu0 0.0
        %2617 = vmatpush1.msra.mxu0 0.0
        %2618 = vmatprep.subr.mxu0 0.0
        %2619 = vmatpush1.msra.mxu0 0.0
        %2620 = vmatprep.subr.mxu0 0.0
        %2621 = vmatpush1.msra.mxu0 0.0
        %2622 = vmatprep.subr.mxu0 0.0
        %2623 = vmatpush1.msra.mxu0 0.0
        %2624 = vmatprep.subr.mxu0 0.0
        %2625 = vmatpush1.msra.mxu0 0.0
        %2626 = vmatprep.subr.mxu0 0.0
        %2627 = vmatpush1.msra.mxu0 0.0
        %2628 = vmatprep.mubr.f32.mxu0 0.0
        %2629 = vmatmul.mubr.f32.gmra.mrb[0].mxu0 %v2552
        %v2630 = vpop.f32.mrb[0].mxu0
        %v2631 = vadd.f32 0.0, %v2630
        %v2632 = vpop.f32.mrb[0].mxu0
        %v2633 = vadd.f32 0.0, %v2632
        %2634 = vmatprep.mubr.f32.mxu0 0.0
        %2635 = vmatmul.mubr.f32.gmra.mrb[0].mxu0 %v2555
        %v2636 = vpop.f32.mrb[0].mxu0
        %v2637 = vadd.f32 0.0, %v2636
        %v2638 = vpop.f32.mrb[0].mxu0
        %v2639 = vadd.f32 0.0, %v2638
        %2640 = vdwg.mxu0
        %v2641 = vld [vmem:[#allocation11] sm:$0xff]
        %v2642 = vld [vmem:[#allocation11 + $0x8] sm:$0xff]
        %v2643 = vld [vmem:[#allocation11 + $0x10] sm:$0xff]
        %v2644 = vld [vmem:[#allocation11 + $0x18] sm:$0xff]
        %v2645 = vld [vmem:[#allocation11 + $0x20] sm:$0xff]
        %v2646 = vld [vmem:[#allocation11 + $0x28] sm:$0xff]
        %v2647 = vld [vmem:[#allocation11 + $0x30] sm:$0xff]
        %v2648 = vld [vmem:[#allocation11 + $0x38] sm:$0xff]
        %v2649 = vld [vmem:[#allocation11 + $0x40] sm:$0xff]
        %v2650 = vld [vmem:[#allocation11 + $0x48] sm:$0xff]
        %v2651 = vld [vmem:[#allocation11 + $0x50] sm:$0xff]
        %v2652 = vld [vmem:[#allocation11 + $0x58] sm:$0xff]
        %v2653 = vld [vmem:[#allocation11 + $0x60] sm:$0xff]
        %v2654 = vld [vmem:[#allocation11 + $0x68] sm:$0xff]
        %v2655 = vld [vmem:[#allocation11 + $0x70] sm:$0xff]
        %v2656 = vld [vmem:[#allocation11 + $0x78] sm:$0xff]
        %v2657 = vld [vmem:[#allocation11 + $0x80] sm:$0xff]
        %v2658 = vld [vmem:[#allocation11 + $0x88] sm:$0xff]
        %v2659 = vld [vmem:[#allocation11 + $0x90] sm:$0xff]
        %v2660 = vld [vmem:[#allocation11 + $0x98] sm:$0xff]
        %v2661 = vld [vmem:[#allocation11 + $0xa0] sm:$0xff]
        %v2662 = vld [vmem:[#allocation11 + $0xa8] sm:$0xff]
        %v2663 = vld [vmem:[#allocation11 + $0xb0] sm:$0xff]
        %v2664 = vld [vmem:[#allocation11 + $0xb8] sm:$0xff]
        %v2665 = vld [vmem:[#allocation11 + $0xc0] sm:$0xff]
        %v2666 = vld [vmem:[#allocation11 + $0xc8] sm:$0xff]
        %v2667 = vld [vmem:[#allocation11 + $0xd0] sm:$0xff]
        %v2668 = vld [vmem:[#allocation11 + $0xd8] sm:$0xff]
        %v2669 = vld [vmem:[#allocation11 + $0xe0] sm:$0xff]
        %v2670 = vld [vmem:[#allocation11 + $0xe8] sm:$0xff]
        %v2671 = vld [vmem:[#allocation11 + $0xf0] sm:$0xff]
        %v2672 = vld [vmem:[#allocation11 + $0xf8] sm:$0xff]
        %v2673 = vld [vmem:[#allocation11 + $0x100] sm:$0xff]
        %v2674 = vld [vmem:[#allocation11 + $0x108] sm:$0xff]
        %v2675 = vld [vmem:[#allocation11 + $0x110] sm:$0xff]
        %v2676 = vld [vmem:[#allocation11 + $0x118] sm:$0xff]
        %v2677 = vld [vmem:[#allocation11 + $0x120] sm:$0xff]
        %v2678 = vld [vmem:[#allocation11 + $0x128] sm:$0xff]
        %v2679 = vld [vmem:[#allocation11 + $0x130] sm:$0xff]
        %v2680 = vld [vmem:[#allocation11 + $0x138] sm:$0xff]
        %v2681 = vld [vmem:[#allocation11 + $0x140] sm:$0xff]
        %v2682 = vld [vmem:[#allocation11 + $0x148] sm:$0xff]
        %v2683 = vld [vmem:[#allocation11 + $0x150] sm:$0xff]
        %v2684 = vld [vmem:[#allocation11 + $0x158] sm:$0xff]
        %v2685 = vld [vmem:[#allocation11 + $0x160] sm:$0xff]
        %v2686 = vld [vmem:[#allocation11 + $0x168] sm:$0xff]
        %v2687 = vld [vmem:[#allocation11 + $0x170] sm:$0xff]
        %v2688 = vld [vmem:[#allocation11 + $0x178] sm:$0xff]
        %v2689 = vld [vmem:[#allocation11 + $0x180] sm:$0xff]
        %v2690 = vld [vmem:[#allocation11 + $0x188] sm:$0xff]
        %v2691 = vld [vmem:[#allocation11 + $0x190] sm:$0xff]
        %v2692 = vld [vmem:[#allocation11 + $0x198] sm:$0xff]
        %v2693 = vld [vmem:[#allocation11 + $0x1a0] sm:$0xff]
        %v2694 = vld [vmem:[#allocation11 + $0x1a8] sm:$0xff]
        %v2695 = vld [vmem:[#allocation11 + $0x1b0] sm:$0xff]
        %v2696 = vld [vmem:[#allocation11 + $0x1b8] sm:$0xff]
        %v2697 = vld [vmem:[#allocation11 + $0x1c0] sm:$0xff]
        %v2698 = vld [vmem:[#allocation11 + $0x1c8] sm:$0xff]
        %v2699 = vld [vmem:[#allocation11 + $0x1d0] sm:$0xff]
        %v2700 = vld [vmem:[#allocation11 + $0x1d8] sm:$0xff]
        %v2701 = vld [vmem:[#allocation11 + $0x1e0] sm:$0xff]
        %v2702 = vld [vmem:[#allocation11 + $0x1e8] sm:$0xff]
        %v2703 = vld [vmem:[#allocation11 + $0x1f0] sm:$0xff]
        %v2704 = vld [vmem:[#allocation11 + $0x1f8] sm:$0xff]
        %v2705 = vld [vmem:[#allocation11 + $0x200] sm:$0xff]
        %v2706 = vld [vmem:[#allocation11 + $0x208] sm:$0xff]
        %v2707 = vld [vmem:[#allocation11 + $0x210] sm:$0xff]
        %v2708 = vld [vmem:[#allocation11 + $0x218] sm:$0xff]
        %v2709 = vld [vmem:[#allocation11 + $0x220] sm:$0xff]
        %v2710 = vld [vmem:[#allocation11 + $0x228] sm:$0xff]
        %v2711 = vld [vmem:[#allocation11 + $0x230] sm:$0xff]
        %v2712 = vld [vmem:[#allocation11 + $0x238] sm:$0xff]
        %v2713 = vld [vmem:[#allocation11 + $0x240] sm:$0xff]
        %v2714 = vld [vmem:[#allocation11 + $0x248] sm:$0xff]
        %v2715 = vld [vmem:[#allocation11 + $0x250] sm:$0xff]
        %v2716 = vld [vmem:[#allocation11 + $0x258] sm:$0xff]
        %v2717 = vld [vmem:[#allocation11 + $0x260] sm:$0xff]
        %v2718 = vld [vmem:[#allocation11 + $0x268] sm:$0xff]
        %v2719 = vld [vmem:[#allocation11 + $0x270] sm:$0xff]
        %v2720 = vld [vmem:[#allocation11 + $0x278] sm:$0xff]
        %v2721 = vld [vmem:[#allocation11 + $0x280] sm:$0xff]
        %v2722 = vld [vmem:[#allocation11 + $0x288] sm:$0xff]
        %v2723 = vld [vmem:[#allocation11 + $0x290] sm:$0xff]
        %v2724 = vld [vmem:[#allocation11 + $0x298] sm:$0xff]
        %v2725 = vld [vmem:[#allocation11 + $0x2a0] sm:$0xff]
        %v2726 = vld [vmem:[#allocation11 + $0x2a8] sm:$0xff]
        %v2727 = vld [vmem:[#allocation11 + $0x2b0] sm:$0xff]
        %v2728 = vld [vmem:[#allocation11 + $0x2b8] sm:$0xff]
        %v2729 = vld [vmem:[#allocation11 + $0x2c0] sm:$0xff]
        %v2730 = vld [vmem:[#allocation11 + $0x2c8] sm:$0xff]
        %v2731 = vld [vmem:[#allocation11 + $0x2d0] sm:$0xff]
        %v2732 = vld [vmem:[#allocation11 + $0x2d8] sm:$0xff]
        %v2733 = vld [vmem:[#allocation11 + $0x2e0] sm:$0xff]
        %v2734 = vld [vmem:[#allocation11 + $0x2e8] sm:$0xff]
        %v2735 = vld [vmem:[#allocation11 + $0x2f0] sm:$0xff]
        %v2736 = vld [vmem:[#allocation11 + $0x2f8] sm:$0xff]
        %v2737 = vld [vmem:[#allocation11 + $0x300] sm:$0xff]
        %v2738 = vld [vmem:[#allocation11 + $0x308] sm:$0xff]
        %v2739 = vld [vmem:[#allocation11 + $0x310] sm:$0xff]
        %v2740 = vld [vmem:[#allocation11 + $0x318] sm:$0xff]
        %v2741 = vld [vmem:[#allocation11 + $0x320] sm:$0xff]
        %v2742 = vld [vmem:[#allocation11 + $0x328] sm:$0xff]
        %v2743 = vld [vmem:[#allocation11 + $0x330] sm:$0xff]
        %v2744 = vld [vmem:[#allocation11 + $0x338] sm:$0xff]
        %v2745 = vld [vmem:[#allocation11 + $0x340] sm:$0xff]
        %v2746 = vld [vmem:[#allocation11 + $0x348] sm:$0xff]
        %v2747 = vld [vmem:[#allocation11 + $0x350] sm:$0xff]
        %v2748 = vld [vmem:[#allocation11 + $0x358] sm:$0xff]
        %v2749 = vld [vmem:[#allocation11 + $0x360] sm:$0xff]
        %v2750 = vld [vmem:[#allocation11 + $0x368] sm:$0xff]
        %v2751 = vld [vmem:[#allocation11 + $0x370] sm:$0xff]
        %v2752 = vld [vmem:[#allocation11 + $0x378] sm:$0xff]
        %s2753 = scalar_lea.vmem [#allocation10], 16
        %v2754 = vld [vmem:[%s2753] sm:$0xff]
        %v2755 = vld [vmem:[%s2753 + $0x8] sm:$0x3f]
        %v2757 = vsel %vm2550, %v2754, 0
        %v2760 = vsel %vm2550, %v2755, 0
        %2762 = vmatprep.subr.mxu0 %v2545
        %2763 = vmatpush1.msra.mxu0 %v2544
        %2764 = vmatprep.subr.mxu0 %v2562
        %2765 = vmatpush1.msra.mxu0 %v2559
        %2766 = vmatprep.subr.mxu0 0.0
        %2767 = vmatpush1.msra.mxu0 0.0
        %2768 = vmatprep.subr.mxu0 0.0
        %2769 = vmatpush1.msra.mxu0 0.0
        %2770 = vmatprep.subr.mxu0 0.0
        %2771 = vmatpush1.msra.mxu0 0.0
        %2772 = vmatprep.subr.mxu0 0.0
        %2773 = vmatpush1.msra.mxu0 0.0
        %2774 = vmatprep.subr.mxu0 0.0
        %2775 = vmatpush1.msra.mxu0 0.0
        %2776 = vmatprep.subr.mxu0 0.0
        %2777 = vmatpush1.msra.mxu0 0.0
        %2778 = vmatprep.subr.mxu0 0.0
        %2779 = vmatpush1.msra.mxu0 0.0
        %2780 = vmatprep.subr.mxu0 0.0
        %2781 = vmatpush1.msra.mxu0 0.0
        %2782 = vmatprep.subr.mxu0 0.0
        %2783 = vmatpush1.msra.mxu0 0.0
        %2784 = vmatprep.subr.mxu0 0.0
        %2785 = vmatpush1.msra.mxu0 0.0
        %2786 = vmatprep.subr.mxu0 0.0
        %2787 = vmatpush1.msra.mxu0 0.0
        %2788 = vmatprep.subr.mxu0 0.0
        %2789 = vmatpush1.msra.mxu0 0.0
        %2790 = vmatprep.subr.mxu0 0.0
        %2791 = vmatpush1.msra.mxu0 0.0
        %2792 = vmatprep.subr.mxu0 0.0
        %2793 = vmatpush1.msra.mxu0 0.0
        %2794 = vmatprep.subr.mxu0 0.0
        %2795 = vmatpush1.msra.mxu0 0.0
        %2796 = vmatprep.subr.mxu0 0.0
        %2797 = vmatpush1.msra.mxu0 0.0
        %2798 = vmatprep.subr.mxu0 0.0
        %2799 = vmatpush1.msra.mxu0 0.0
        %2800 = vmatprep.subr.mxu0 0.0
        %2801 = vmatpush1.msra.mxu0 0.0
        %2802 = vmatprep.subr.mxu0 0.0
        %2803 = vmatpush1.msra.mxu0 0.0
        %2804 = vmatprep.subr.mxu0 0.0
        %2805 = vmatpush1.msra.mxu0 0.0
        %2806 = vmatprep.subr.mxu0 0.0
        %2807 = vmatpush1.msra.mxu0 0.0
        %2808 = vmatprep.subr.mxu0 0.0
        %2809 = vmatpush1.msra.mxu0 0.0
        %2810 = vmatprep.subr.mxu0 0.0
        %2811 = vmatpush1.msra.mxu0 0.0
        %2812 = vmatprep.subr.mxu0 0.0
        %2813 = vmatpush1.msra.mxu0 0.0
        %2814 = vmatprep.subr.mxu0 0.0
        %2815 = vmatpush1.msra.mxu0 0.0
        %2816 = vmatprep.subr.mxu0 0.0
        %2817 = vmatpush1.msra.mxu0 0.0
        %2818 = vmatprep.subr.mxu0 0.0
        %2819 = vmatpush1.msra.mxu0 0.0
        %2820 = vmatprep.subr.mxu0 0.0
        %2821 = vmatpush1.msra.mxu0 0.0
        %2822 = vmatprep.subr.mxu0 0.0
        %2823 = vmatpush1.msra.mxu0 0.0
        %2824 = vmatprep.subr.mxu0 0.0
        %2825 = vmatpush1.msra.mxu0 0.0
        %2826 = vmatprep.mubr.f32.mxu0 0.0
        %2827 = vmatmul.mubr.f32.gmra.mrb[0].mxu0 %v2757
        %v2828 = vpop.f32.mrb[0].mxu0
        %v2829 = vadd.f32 0.0, %v2828
        %v2830 = vpop.f32.mrb[0].mxu0
        %v2831 = vadd.f32 0.0, %v2830
        %2832 = vmatprep.mubr.f32.mxu0 0.0
        %2833 = vmatmul.mubr.f32.gmra.mrb[0].mxu0 %v2760
        %v2834 = vpop.f32.mrb[0].mxu0
        %v2835 = vadd.f32 0.0, %v2834
        %v2836 = vpop.f32.mrb[0].mxu0
        %v2837 = vadd.f32 0.0, %v2836
        %2838 = vdwg.mxu0
        %s2839 = scalar_lea.vmem [#allocation11], 896
        %v2840 = vld [vmem:[%s2839] sm:$0xff]
        %v2841 = vld [vmem:[%s2839 + $0x8] sm:$0xff]
        %v2842 = vld [vmem:[%s2839 + $0x10] sm:$0xff]
        %v2843 = vld [vmem:[%s2839 + $0x18] sm:$0xff]
        %v2844 = vld [vmem:[%s2839 + $0x20] sm:$0xff]
        %v2845 = vld [vmem:[%s2839 + $0x28] sm:$0xff]
        %v2846 = vld [vmem:[%s2839 + $0x30] sm:$0xff]
        %v2847 = vld [vmem:[%s2839 + $0x38] sm:$0xff]
        %v2848 = vld [vmem:[%s2839 + $0x40] sm:$0xff]
        %v2849 = vld [vmem:[%s2839 + $0x48] sm:$0xff]
        %v2850 = vld [vmem:[%s2839 + $0x50] sm:$0xff]
        %v2851 = vld [vmem:[%s2839 + $0x58] sm:$0xff]
        %v2852 = vld [vmem:[%s2839 + $0x60] sm:$0xff]
        %v2853 = vld [vmem:[%s2839 + $0x68] sm:$0xff]
        %v2854 = vld [vmem:[%s2839 + $0x70] sm:$0xff]
        %v2855 = vld [vmem:[%s2839 + $0x78] sm:$0xff]
        %v2856 = vld [vmem:[%s2839 + $0x80] sm:$0xff]
        %v2857 = vld [vmem:[%s2839 + $0x88] sm:$0xff]
        %v2858 = vld [vmem:[%s2839 + $0x90] sm:$0xff]
        %v2859 = vld [vmem:[%s2839 + $0x98] sm:$0xff]
        %v2860 = vld [vmem:[%s2839 + $0xa0] sm:$0xff]
        %v2861 = vld [vmem:[%s2839 + $0xa8] sm:$0xff]
        %v2862 = vld [vmem:[%s2839 + $0xb0] sm:$0xff]
        %v2863 = vld [vmem:[%s2839 + $0xb8] sm:$0xff]
        %v2864 = vld [vmem:[%s2839 + $0xc0] sm:$0xff]
        %v2865 = vld [vmem:[%s2839 + $0xc8] sm:$0xff]
        %v2866 = vld [vmem:[%s2839 + $0xd0] sm:$0xff]
        %v2867 = vld [vmem:[%s2839 + $0xd8] sm:$0xff]
        %v2868 = vld [vmem:[%s2839 + $0xe0] sm:$0xff]
        %v2869 = vld [vmem:[%s2839 + $0xe8] sm:$0xff]
        %v2870 = vld [vmem:[%s2839 + $0xf0] sm:$0xff]
        %v2871 = vld [vmem:[%s2839 + $0xf8] sm:$0xff]
        %v2872 = vld [vmem:[%s2839 + $0x100] sm:$0xff]
        %v2873 = vld [vmem:[%s2839 + $0x108] sm:$0xff]
        %v2874 = vld [vmem:[%s2839 + $0x110] sm:$0xff]
        %v2875 = vld [vmem:[%s2839 + $0x118] sm:$0xff]
        %v2876 = vld [vmem:[%s2839 + $0x120] sm:$0xff]
        %v2877 = vld [vmem:[%s2839 + $0x128] sm:$0xff]
        %v2878 = vld [vmem:[%s2839 + $0x130] sm:$0xff]
        %v2879 = vld [vmem:[%s2839 + $0x138] sm:$0xff]
        %v2880 = vld [vmem:[%s2839 + $0x140] sm:$0xff]
        %v2881 = vld [vmem:[%s2839 + $0x148] sm:$0xff]
        %v2882 = vld [vmem:[%s2839 + $0x150] sm:$0xff]
        %v2883 = vld [vmem:[%s2839 + $0x158] sm:$0xff]
        %v2884 = vld [vmem:[%s2839 + $0x160] sm:$0xff]
        %v2885 = vld [vmem:[%s2839 + $0x168] sm:$0xff]
        %v2886 = vld [vmem:[%s2839 + $0x170] sm:$0xff]
        %v2887 = vld [vmem:[%s2839 + $0x178] sm:$0xff]
        %v2888 = vld [vmem:[%s2839 + $0x180] sm:$0xff]
        %v2889 = vld [vmem:[%s2839 + $0x188] sm:$0xff]
        %v2890 = vld [vmem:[%s2839 + $0x190] sm:$0xff]
        %v2891 = vld [vmem:[%s2839 + $0x198] sm:$0xff]
        %v2892 = vld [vmem:[%s2839 + $0x1a0] sm:$0xff]
        %v2893 = vld [vmem:[%s2839 + $0x1a8] sm:$0xff]
        %v2894 = vld [vmem:[%s2839 + $0x1b0] sm:$0xff]
        %v2895 = vld [vmem:[%s2839 + $0x1b8] sm:$0xff]
        %v2896 = vld [vmem:[%s2839 + $0x1c0] sm:$0xff]
        %v2897 = vld [vmem:[%s2839 + $0x1c8] sm:$0xff]
        %v2898 = vld [vmem:[%s2839 + $0x1d0] sm:$0xff]
        %v2899 = vld [vmem:[%s2839 + $0x1d8] sm:$0xff]
        %v2900 = vld [vmem:[%s2839 + $0x1e0] sm:$0xff]
        %v2901 = vld [vmem:[%s2839 + $0x1e8] sm:$0xff]
        %v2902 = vld [vmem:[%s2839 + $0x1f0] sm:$0xff]
        %v2903 = vld [vmem:[%s2839 + $0x1f8] sm:$0xff]
        %v2904 = vld [vmem:[%s2839 + $0x200] sm:$0xff]
        %v2905 = vld [vmem:[%s2839 + $0x208] sm:$0xff]
        %v2906 = vld [vmem:[%s2839 + $0x210] sm:$0xff]
        %v2907 = vld [vmem:[%s2839 + $0x218] sm:$0xff]
        %v2908 = vld [vmem:[%s2839 + $0x220] sm:$0xff]
        %v2909 = vld [vmem:[%s2839 + $0x228] sm:$0xff]
        %v2910 = vld [vmem:[%s2839 + $0x230] sm:$0xff]
        %v2911 = vld [vmem:[%s2839 + $0x238] sm:$0xff]
        %v2912 = vld [vmem:[%s2839 + $0x240] sm:$0xff]
        %v2913 = vld [vmem:[%s2839 + $0x248] sm:$0xff]
        %v2914 = vld [vmem:[%s2839 + $0x250] sm:$0xff]
        %v2915 = vld [vmem:[%s2839 + $0x258] sm:$0xff]
        %v2916 = vld [vmem:[%s2839 + $0x260] sm:$0xff]
        %v2917 = vld [vmem:[%s2839 + $0x268] sm:$0xff]
        %v2918 = vld [vmem:[%s2839 + $0x270] sm:$0xff]
        %v2919 = vld [vmem:[%s2839 + $0x278] sm:$0xff]
        %v2920 = vld [vmem:[%s2839 + $0x280] sm:$0xff]
        %v2921 = vld [vmem:[%s2839 + $0x288] sm:$0xff]
        %v2922 = vld [vmem:[%s2839 + $0x290] sm:$0xff]
        %v2923 = vld [vmem:[%s2839 + $0x298] sm:$0xff]
        %v2924 = vld [vmem:[%s2839 + $0x2a0] sm:$0xff]
        %v2925 = vld [vmem:[%s2839 + $0x2a8] sm:$0xff]
        %v2926 = vld [vmem:[%s2839 + $0x2b0] sm:$0xff]
        %v2927 = vld [vmem:[%s2839 + $0x2b8] sm:$0xff]
        %v2928 = vld [vmem:[%s2839 + $0x2c0] sm:$0xff]
        %v2929 = vld [vmem:[%s2839 + $0x2c8] sm:$0xff]
        %v2930 = vld [vmem:[%s2839 + $0x2d0] sm:$0xff]
        %v2931 = vld [vmem:[%s2839 + $0x2d8] sm:$0xff]
        %v2932 = vld [vmem:[%s2839 + $0x2e0] sm:$0xff]
        %v2933 = vld [vmem:[%s2839 + $0x2e8] sm:$0xff]
        %v2934 = vld [vmem:[%s2839 + $0x2f0] sm:$0xff]
        %v2935 = vld [vmem:[%s2839 + $0x2f8] sm:$0xff]
        %v2936 = vld [vmem:[%s2839 + $0x300] sm:$0xff]
        %v2937 = vld [vmem:[%s2839 + $0x308] sm:$0xff]
        %v2938 = vld [vmem:[%s2839 + $0x310] sm:$0xff]
        %v2939 = vld [vmem:[%s2839 + $0x318] sm:$0xff]
        %v2940 = vld [vmem:[%s2839 + $0x320] sm:$0xff]
        %v2941 = vld [vmem:[%s2839 + $0x328] sm:$0xff]
        %v2942 = vld [vmem:[%s2839 + $0x330] sm:$0xff]
        %v2943 = vld [vmem:[%s2839 + $0x338] sm:$0xff]
        %v2944 = vld [vmem:[%s2839 + $0x340] sm:$0xff]
        %v2945 = vld [vmem:[%s2839 + $0x348] sm:$0xff]
        %v2946 = vld [vmem:[%s2839 + $0x350] sm:$0xff]
        %v2947 = vld [vmem:[%s2839 + $0x358] sm:$0xff]
        %v2948 = vld [vmem:[%s2839 + $0x360] sm:$0xff]
        %v2949 = vld [vmem:[%s2839 + $0x368] sm:$0xff]
        %v2950 = vld [vmem:[%s2839 + $0x370] sm:$0xff]
        %v2951 = vld [vmem:[%s2839 + $0x378] sm:$0xff]
        %vm2952 = vcmask 785408
        %v2954 = vsel %vm2952, %v2831, 0
        %v2957 = vsel %vm2952, %v2837, 0
        %2959 = vmatprep.subr.mxu0 %v2841
        %2960 = vmatpush1.msra.mxu0 %v2840
        %2961 = vmatprep.subr.mxu0 %v2845
        %2962 = vmatpush1.msra.mxu0 %v2844
        %2963 = vmatprep.subr.mxu0 %v2849
        %2964 = vmatpush1.msra.mxu0 %v2848
        %2965 = vmatprep.subr.mxu0 %v2853
        %2966 = vmatpush1.msra.mxu0 %v2852
        %2967 = vmatprep.subr.mxu0 %v2857
        %2968 = vmatpush1.msra.mxu0 %v2856
        %2969 = vmatprep.subr.mxu0 %v2861
        %2970 = vmatpush1.msra.mxu0 %v2860
        %2971 = vmatprep.subr.mxu0 %v2865
        %2972 = vmatpush1.msra.mxu0 %v2864
        %2973 = vmatprep.subr.mxu0 %v2869
        %2974 = vmatpush1.msra.mxu0 %v2868
        %2975 = vmatprep.subr.mxu0 %v2873
        %2976 = vmatpush1.msra.mxu0 %v2872
        %2977 = vmatprep.subr.mxu0 %v2877
        %2978 = vmatpush1.msra.mxu0 %v2876
        %2979 = vmatprep.subr.mxu0 %v2881
        %2980 = vmatpush1.msra.mxu0 %v2880
        %2981 = vmatprep.subr.mxu0 %v2885
        %2982 = vmatpush1.msra.mxu0 %v2884
        %2983 = vmatprep.subr.mxu0 %v2889
        %2984 = vmatpush1.msra.mxu0 %v2888
        %2985 = vmatprep.subr.mxu0 %v2893
        %2986 = vmatpush1.msra.mxu0 %v2892
        %2987 = vmatprep.subr.mxu0 %v2897
        %2988 = vmatpush1.msra.mxu0 %v2896
        %2989 = vmatprep.subr.mxu0 %v2901
        %2990 = vmatpush1.msra.mxu0 %v2900
        %2991 = vmatprep.subr.mxu0 %v2905
        %2992 = vmatpush1.msra.mxu0 %v2904
        %2993 = vmatprep.subr.mxu0 %v2909
        %2994 = vmatpush1.msra.mxu0 %v2908
        %2995 = vmatprep.subr.mxu0 %v2913
        %2996 = vmatpush1.msra.mxu0 %v2912
        %2997 = vmatprep.subr.mxu0 %v2917
        %2998 = vmatpush1.msra.mxu0 %v2916
        %2999 = vmatprep.subr.mxu0 %v2921
        %3000 = vmatpush1.msra.mxu0 %v2920
        %3001 = vmatprep.subr.mxu0 %v2925
        %3002 = vmatpush1.msra.mxu0 %v2924
        %3003 = vmatprep.subr.mxu0 %v2929
        %3004 = vmatpush1.msra.mxu0 %v2928
        %3005 = vmatprep.subr.mxu0 %v2933
        %3006 = vmatpush1.msra.mxu0 %v2932
        %3007 = vmatprep.subr.mxu0 %v2937
        %3008 = vmatpush1.msra.mxu0 %v2936
        %3009 = vmatprep.subr.mxu0 %v2941
        %3010 = vmatpush1.msra.mxu0 %v2940
        %3011 = vmatprep.subr.mxu0 %v2945
        %3012 = vmatpush1.msra.mxu0 %v2944
        %3013 = vmatprep.subr.mxu0 %v2949
        %3014 = vmatpush1.msra.mxu0 %v2948
        %3015 = vmatprep.subr.mxu0 0.0
        %3016 = vmatpush1.msra.mxu0 0.0
        %3017 = vmatprep.subr.mxu0 0.0
        %3018 = vmatpush1.msra.mxu0 0.0
        %3019 = vmatprep.subr.mxu0 0.0
        %3020 = vmatpush1.msra.mxu0 0.0
        %3021 = vmatprep.subr.mxu0 0.0
        %3022 = vmatpush1.msra.mxu0 0.0
        %3023 = vmatprep.mubr.f32.mxu0 %v2954
        %3024 = vmatmul.mubr.f32.gmra.mrb[0].mxu0 %v2829
        %v3025 = vpop.f32.mrb[0].mxu0
        %v3026 = vadd.f32 0.0, %v3025
        %v3027 = vpop.f32.mrb[0].mxu0
        %v3028 = vadd.f32 0.0, %v3027
        %3029 = vmatprep.mubr.f32.mxu0 %v2957
        %3030 = vmatmul.mubr.f32.gmra.mrb[0].mxu0 %v2835
        %v3031 = vpop.f32.mrb[0].mxu0
        %v3032 = vadd.f32 0.0, %v3031
        %v3033 = vpop.f32.mrb[0].mxu0
        %v3034 = vadd.f32 0.0, %v3033
        %3035 = vdwg.mxu0
        %3036 = vmatprep.subr.mxu0 %v2843
        %3037 = vmatpush1.msra.mxu0 %v2842
        %3038 = vmatprep.subr.mxu0 %v2847
        %3039 = vmatpush1.msra.mxu0 %v2846
        %3040 = vmatprep.subr.mxu0 %v2851
        %3041 = vmatpush1.msra.mxu0 %v2850
        %3042 = vmatprep.subr.mxu0 %v2855
        %3043 = vmatpush1.msra.mxu0 %v2854
        %3044 = vmatprep.subr.mxu0 %v2859
        %3045 = vmatpush1.msra.mxu0 %v2858
        %3046 = vmatprep.subr.mxu0 %v2863
        %3047 = vmatpush1.msra.mxu0 %v2862
        %3048 = vmatprep.subr.mxu0 %v2867
        %3049 = vmatpush1.msra.mxu0 %v2866
        %3050 = vmatprep.subr.mxu0 %v2871
        %3051 = vmatpush1.msra.mxu0 %v2870
        %3052 = vmatprep.subr.mxu0 %v2875
        %3053 = vmatpush1.msra.mxu0 %v2874
        %3054 = vmatprep.subr.mxu0 %v2879
        %3055 = vmatpush1.msra.mxu0 %v2878
        %3056 = vmatprep.subr.mxu0 %v2883
        %3057 = vmatpush1.msra.mxu0 %v2882
        %3058 = vmatprep.subr.mxu0 %v2887
        %3059 = vmatpush1.msra.mxu0 %v2886
        %3060 = vmatprep.subr.mxu0 %v2891
        %3061 = vmatpush1.msra.mxu0 %v2890
        %3062 = vmatprep.subr.mxu0 %v2895
        %3063 = vmatpush1.msra.mxu0 %v2894
        %3064 = vmatprep.subr.mxu0 %v2899
        %3065 = vmatpush1.msra.mxu0 %v2898
        %3066 = vmatprep.subr.mxu0 %v2903
        %3067 = vmatpush1.msra.mxu0 %v2902
        %3068 = vmatprep.subr.mxu0 %v2907
        %3069 = vmatpush1.msra.mxu0 %v2906
        %3070 = vmatprep.subr.mxu0 %v2911
        %3071 = vmatpush1.msra.mxu0 %v2910
        %3072 = vmatprep.subr.mxu0 %v2915
        %3073 = vmatpush1.msra.mxu0 %v2914
        %3074 = vmatprep.subr.mxu0 %v2919
        %3075 = vmatpush1.msra.mxu0 %v2918
        %3076 = vmatprep.subr.mxu0 %v2923
        %3077 = vmatpush1.msra.mxu0 %v2922
        %3078 = vmatprep.subr.mxu0 %v2927
        %3079 = vmatpush1.msra.mxu0 %v2926
        %3080 = vmatprep.subr.mxu0 %v2931
        %3081 = vmatpush1.msra.mxu0 %v2930
        %3082 = vmatprep.subr.mxu0 %v2935
        %3083 = vmatpush1.msra.mxu0 %v2934
        %3084 = vmatprep.subr.mxu0 %v2939
        %3085 = vmatpush1.msra.mxu0 %v2938
        %3086 = vmatprep.subr.mxu0 %v2943
        %3087 = vmatpush1.msra.mxu0 %v2942
        %3088 = vmatprep.subr.mxu0 %v2947
        %3089 = vmatpush1.msra.mxu0 %v2946
        %3090 = vmatprep.subr.mxu0 %v2951
        %3091 = vmatpush1.msra.mxu0 %v2950
        %3092 = vmatprep.subr.mxu0 0.0
        %3093 = vmatpush1.msra.mxu0 0.0
        %3094 = vmatprep.subr.mxu0 0.0
        %3095 = vmatpush1.msra.mxu0 0.0
        %3096 = vmatprep.subr.mxu0 0.0
        %3097 = vmatpush1.msra.mxu0 0.0
        %3098 = vmatprep.subr.mxu0 0.0
        %3099 = vmatpush1.msra.mxu0 0.0
        %3100 = vmatprep.mubr.f32.mxu0 %v2954
        %3101 = vmatmul.mubr.f32.gmra.mrb[0].mxu0 %v2829
        %v3102 = vpop.f32.mrb[0].mxu0
        %v3103 = vadd.f32 0.0, %v3102
        %v3104 = vpop.f32.mrb[0].mxu0
        %v3105 = vadd.f32 0.0, %v3104
        %3106 = vmatprep.mubr.f32.mxu0 %v2957
        %3107 = vmatmul.mubr.f32.gmra.mrb[0].mxu0 %v2835
        %v3108 = vpop.f32.mrb[0].mxu0
        %v3109 = vadd.f32 0.0, %v3108
        %v3110 = vpop.f32.mrb[0].mxu0
        %v3111 = vadd.f32 0.0, %v3110
        %3112 = vdwg.mxu0
        %v3114 = vsel %vm2952, %v2633, 0
        %v3117 = vsel %vm2952, %v2639, 0
        %3119 = vmatprep.subr.mxu0 %v2642
        %3120 = vmatpush1.msra.mxu0 %v2641
        %3121 = vmatprep.subr.mxu0 %v2646
        %3122 = vmatpush1.msra.mxu0 %v2645
        %3123 = vmatprep.subr.mxu0 %v2650
        %3124 = vmatpush1.msra.mxu0 %v2649
        %3125 = vmatprep.subr.mxu0 %v2654
        %3126 = vmatpush1.msra.mxu0 %v2653
        %3127 = vmatprep.subr.mxu0 %v2658
        %3128 = vmatpush1.msra.mxu0 %v2657
        %3129 = vmatprep.subr.mxu0 %v2662
        %3130 = vmatpush1.msra.mxu0 %v2661
        %3131 = vmatprep.subr.mxu0 %v2666
        %3132 = vmatpush1.msra.mxu0 %v2665
        %3133 = vmatprep.subr.mxu0 %v2670
        %3134 = vmatpush1.msra.mxu0 %v2669
        %3135 = vmatprep.subr.mxu0 %v2674
        %3136 = vmatpush1.msra.mxu0 %v2673
        %3137 = vmatprep.subr.mxu0 %v2678
        %3138 = vmatpush1.msra.mxu0 %v2677
        %3139 = vmatprep.subr.mxu0 %v2682
        %3140 = vmatpush1.msra.mxu0 %v2681
        %3141 = vmatprep.subr.mxu0 %v2686
        %3142 = vmatpush1.msra.mxu0 %v2685
        %3143 = vmatprep.subr.mxu0 %v2690
        %3144 = vmatpush1.msra.mxu0 %v2689
        %3145 = vmatprep.subr.mxu0 %v2694
        %3146 = vmatpush1.msra.mxu0 %v2693
        %3147 = vmatprep.subr.mxu0 %v2698
        %3148 = vmatpush1.msra.mxu0 %v2697
        %3149 = vmatprep.subr.mxu0 %v2702
        %3150 = vmatpush1.msra.mxu0 %v2701
        %3151 = vmatprep.subr.mxu0 %v2706
        %3152 = vmatpush1.msra.mxu0 %v2705
        %3153 = vmatprep.subr.mxu0 %v2710
        %3154 = vmatpush1.msra.mxu0 %v2709
        %3155 = vmatprep.subr.mxu0 %v2714
        %3156 = vmatpush1.msra.mxu0 %v2713
        %3157 = vmatprep.subr.mxu0 %v2718
        %3158 = vmatpush1.msra.mxu0 %v2717
        %3159 = vmatprep.subr.mxu0 %v2722
        %3160 = vmatpush1.msra.mxu0 %v2721
        %3161 = vmatprep.subr.mxu0 %v2726
        %3162 = vmatpush1.msra.mxu0 %v2725
        %3163 = vmatprep.subr.mxu0 %v2730
        %3164 = vmatpush1.msra.mxu0 %v2729
        %3165 = vmatprep.subr.mxu0 %v2734
        %3166 = vmatpush1.msra.mxu0 %v2733
        %3167 = vmatprep.subr.mxu0 %v2738
        %3168 = vmatpush1.msra.mxu0 %v2737
        %3169 = vmatprep.subr.mxu0 %v2742
        %3170 = vmatpush1.msra.mxu0 %v2741
        %3171 = vmatprep.subr.mxu0 %v2746
        %3172 = vmatpush1.msra.mxu0 %v2745
        %3173 = vmatprep.subr.mxu0 %v2750
        %3174 = vmatpush1.msra.mxu0 %v2749
        %3175 = vmatprep.subr.mxu0 0.0
        %3176 = vmatpush1.msra.mxu0 0.0
        %3177 = vmatprep.subr.mxu0 0.0
        %3178 = vmatpush1.msra.mxu0 0.0
        %3179 = vmatprep.subr.mxu0 0.0
        %3180 = vmatpush1.msra.mxu0 0.0
        %3181 = vmatprep.subr.mxu0 0.0
        %3182 = vmatpush1.msra.mxu0 0.0
        %3183 = vmatprep.mubr.f32.mxu0 %v3114
        %3184 = vmatmul.mubr.f32.gmra.mrb[0].mxu0 %v2631
        %v3185 = vpop.f32.mrb[0].mxu0
        %v3186 = vadd.f32 %v3026, %v3185
        %v3187 = vpop.f32.mrb[0].mxu0
        %v3188 = vadd.f32 %v3028, %v3187
        %3189 = vmatprep.mubr.f32.mxu0 %v3117
        %3190 = vmatmul.mubr.f32.gmra.mrb[0].mxu0 %v2637
        %v3191 = vpop.f32.mrb[0].mxu0
        %v3192 = vadd.f32 %v3032, %v3191
        %v3193 = vpop.f32.mrb[0].mxu0
        %v3194 = vadd.f32 %v3034, %v3193
        %3195 = vdwg.mxu0
        %3196 = vmatprep.subr.mxu0 %v2644
        %3197 = vmatpush1.msra.mxu0 %v2643
        %3198 = vmatprep.subr.mxu0 %v2648
        %3199 = vmatpush1.msra.mxu0 %v2647
        %3200 = vmatprep.subr.mxu0 %v2652
        %3201 = vmatpush1.msra.mxu0 %v2651
        %3202 = vmatprep.subr.mxu0 %v2656
        %3203 = vmatpush1.msra.mxu0 %v2655
        %3204 = vmatprep.subr.mxu0 %v2660
        %3205 = vmatpush1.msra.mxu0 %v2659
        %3206 = vmatprep.subr.mxu0 %v2664
        %3207 = vmatpush1.msra.mxu0 %v2663
        %3208 = vmatprep.subr.mxu0 %v2668
        %3209 = vmatpush1.msra.mxu0 %v2667
        %3210 = vmatprep.subr.mxu0 %v2672
        %3211 = vmatpush1.msra.mxu0 %v2671
        %3212 = vmatprep.subr.mxu0 %v2676
        %3213 = vmatpush1.msra.mxu0 %v2675
        %3214 = vmatprep.subr.mxu0 %v2680
        %3215 = vmatpush1.msra.mxu0 %v2679
        %3216 = vmatprep.subr.mxu0 %v2684
        %3217 = vmatpush1.msra.mxu0 %v2683
        %3218 = vmatprep.subr.mxu0 %v2688
        %3219 = vmatpush1.msra.mxu0 %v2687
        %3220 = vmatprep.subr.mxu0 %v2692
        %3221 = vmatpush1.msra.mxu0 %v2691
        %3222 = vmatprep.subr.mxu0 %v2696
        %3223 = vmatpush1.msra.mxu0 %v2695
        %3224 = vmatprep.subr.mxu0 %v2700
        %3225 = vmatpush1.msra.mxu0 %v2699
        %3226 = vmatprep.subr.mxu0 %v2704
        %3227 = vmatpush1.msra.mxu0 %v2703
        %3228 = vmatprep.subr.mxu0 %v2708
        %3229 = vmatpush1.msra.mxu0 %v2707
        %3230 = vmatprep.subr.mxu0 %v2712
        %3231 = vmatpush1.msra.mxu0 %v2711
        %3232 = vmatprep.subr.mxu0 %v2716
        %3233 = vmatpush1.msra.mxu0 %v2715
        %3234 = vmatprep.subr.mxu0 %v2720
        %3235 = vmatpush1.msra.mxu0 %v2719
        %3236 = vmatprep.subr.mxu0 %v2724
        %3237 = vmatpush1.msra.mxu0 %v2723
        %3238 = vmatprep.subr.mxu0 %v2728
        %3239 = vmatpush1.msra.mxu0 %v2727
        %3240 = vmatprep.subr.mxu0 %v2732
        %3241 = vmatpush1.msra.mxu0 %v2731
        %3242 = vmatprep.subr.mxu0 %v2736
        %3243 = vmatpush1.msra.mxu0 %v2735
        %3244 = vmatprep.subr.mxu0 %v2740
        %3245 = vmatpush1.msra.mxu0 %v2739
        %3246 = vmatprep.subr.mxu0 %v2744
        %3247 = vmatpush1.msra.mxu0 %v2743
        %3248 = vmatprep.subr.mxu0 %v2748
        %3249 = vmatpush1.msra.mxu0 %v2747
        %3250 = vmatprep.subr.mxu0 %v2752
        %3251 = vmatpush1.msra.mxu0 %v2751
        %3252 = vmatprep.subr.mxu0 0.0
        %3253 = vmatpush1.msra.mxu0 0.0
        %3254 = vmatprep.subr.mxu0 0.0
        %3255 = vmatpush1.msra.mxu0 0.0
        %3256 = vmatprep.subr.mxu0 0.0
        %3257 = vmatpush1.msra.mxu0 0.0
        %3258 = vmatprep.subr.mxu0 0.0
        %3259 = vmatpush1.msra.mxu0 0.0
        %3260 = vmatprep.mubr.f32.mxu0 %v3114
        %3261 = vmatmul.mubr.f32.gmra.mrb[0].mxu0 %v2631
        %v3262 = vpop.f32.mrb[0].mxu0
        %v3263 = vadd.f32 %v3103, %v3262
        %v3264 = vpop.f32.mrb[0].mxu0
        %v3265 = vadd.f32 %v3105, %v3264
        %3266 = vmatprep.mubr.f32.mxu0 %v3117
        %3267 = vmatmul.mubr.f32.gmra.mrb[0].mxu0 %v2637
        %v3268 = vpop.f32.mrb[0].mxu0
        %v3269 = vadd.f32 %v3109, %v3268
        %v3270 = vpop.f32.mrb[0].mxu0
        %v3271 = vadd.f32 %v3111, %v3270
        %3272 = vdwg.mxu0
        %s3273 = scalar_lea.vmem [#allocation10], 32
        %v3274 = vld [vmem:[%s3273] sm:$0xff]
        %v3275 = vld [vmem:[%s3273 + $0x8] sm:$0x3f]
        %v3277 = vsel %vm2550, %v3274, 0
        %v3280 = vsel %vm2550, %v3275, 0
        %3282 = vmatprep.subr.mxu0 %v2545
        %3283 = vmatpush1.msra.mxu0 %v2544
        %3284 = vmatprep.subr.mxu0 %v2562
        %3285 = vmatpush1.msra.mxu0 %v2559
        %3286 = vmatprep.subr.mxu0 0.0
        %3287 = vmatpush1.msra.mxu0 0.0
        %3288 = vmatprep.subr.mxu0 0.0
        %3289 = vmatpush1.msra.mxu0 0.0
        %3290 = vmatprep.subr.mxu0 0.0
        %3291 = vmatpush1.msra.mxu0 0.0
        %3292 = vmatprep.subr.mxu0 0.0
        %3293 = vmatpush1.msra.mxu0 0.0
        %3294 = vmatprep.subr.mxu0 0.0
        %3295 = vmatpush1.msra.mxu0 0.0
        %3296 = vmatprep.subr.mxu0 0.0
        %3297 = vmatpush1.msra.mxu0 0.0
        %3298 = vmatprep.subr.mxu0 0.0
        %3299 = vmatpush1.msra.mxu0 0.0
        %3300 = vmatprep.subr.mxu0 0.0
        %3301 = vmatpush1.msra.mxu0 0.0
        %3302 = vmatprep.subr.mxu0 0.0
        %3303 = vmatpush1.msra.mxu0 0.0
        %3304 = vmatprep.subr.mxu0 0.0
        %3305 = vmatpush1.msra.mxu0 0.0
        %3306 = vmatprep.subr.mxu0 0.0
        %3307 = vmatpush1.msra.mxu0 0.0
        %3308 = vmatprep.subr.mxu0 0.0
        %3309 = vmatpush1.msra.mxu0 0.0
        %3310 = vmatprep.subr.mxu0 0.0
        %3311 = vmatpush1.msra.mxu0 0.0
        %3312 = vmatprep.subr.mxu0 0.0
        %3313 = vmatpush1.msra.mxu0 0.0
        %3314 = vmatprep.subr.mxu0 0.0
        %3315 = vmatpush1.msra.mxu0 0.0
        %3316 = vmatprep.subr.mxu0 0.0
        %3317 = vmatpush1.msra.mxu0 0.0
        %3318 = vmatprep.subr.mxu0 0.0
        %3319 = vmatpush1.msra.mxu0 0.0
        %3320 = vmatprep.subr.mxu0 0.0
        %3321 = vmatpush1.msra.mxu0 0.0
        %3322 = vmatprep.subr.mxu0 0.0
        %3323 = vmatpush1.msra.mxu0 0.0
        %3324 = vmatprep.subr.mxu0 0.0
        %3325 = vmatpush1.msra.mxu0 0.0
        %3326 = vmatprep.subr.mxu0 0.0
        %3327 = vmatpush1.msra.mxu0 0.0
        %3328 = vmatprep.subr.mxu0 0.0
        %3329 = vmatpush1.msra.mxu0 0.0
        %3330 = vmatprep.subr.mxu0 0.0
        %3331 = vmatpush1.msra.mxu0 0.0
        %3332 = vmatprep.subr.mxu0 0.0
        %3333 = vmatpush1.msra.mxu0 0.0
        %3334 = vmatprep.subr.mxu0 0.0
        %3335 = vmatpush1.msra.mxu0 0.0
        %3336 = vmatprep.subr.mxu0 0.0
        %3337 = vmatpush1.msra.mxu0 0.0
        %3338 = vmatprep.subr.mxu0 0.0
        %3339 = vmatpush1.msra.mxu0 0.0
        %3340 = vmatprep.subr.mxu0 0.0
        %3341 = vmatpush1.msra.mxu0 0.0
        %3342 = vmatprep.subr.mxu0 0.0
        %3343 = vmatpush1.msra.mxu0 0.0
        %3344 = vmatprep.subr.mxu0 0.0
        %3345 = vmatpush1.msra.mxu0 0.0
        %3346 = vmatprep.mubr.f32.mxu0 0.0
        %3347 = vmatmul.mubr.f32.gmra.mrb[0].mxu0 %v3277
        %v3348 = vpop.f32.mrb[0].mxu0
        %v3349 = vadd.f32 0.0, %v3348
        %v3350 = vpop.f32.mrb[0].mxu0
        %v3351 = vadd.f32 0.0, %v3350
        %3352 = vmatprep.mubr.f32.mxu0 0.0
        %3353 = vmatmul.mubr.f32.gmra.mrb[0].mxu0 %v3280
        %v3354 = vpop.f32.mrb[0].mxu0
        %v3355 = vadd.f32 0.0, %v3354
        %v3356 = vpop.f32.mrb[0].mxu0
        %v3357 = vadd.f32 0.0, %v3356
        %3358 = vdwg.mxu0
        %s3359 = scalar_lea.vmem [#allocation11], 1792
        %v3360 = vld [vmem:[%s3359] sm:$0xff]
        %v3361 = vld [vmem:[%s3359 + $0x8] sm:$0xff]
        %v3362 = vld [vmem:[%s3359 + $0x10] sm:$0xff]
        %v3363 = vld [vmem:[%s3359 + $0x18] sm:$0xff]
        %v3364 = vld [vmem:[%s3359 + $0x20] sm:$0xff]
        %v3365 = vld [vmem:[%s3359 + $0x28] sm:$0xff]
        %v3366 = vld [vmem:[%s3359 + $0x30] sm:$0xff]
        %v3367 = vld [vmem:[%s3359 + $0x38] sm:$0xff]
        %v3368 = vld [vmem:[%s3359 + $0x40] sm:$0xff]
        %v3369 = vld [vmem:[%s3359 + $0x48] sm:$0xff]
        %v3370 = vld [vmem:[%s3359 + $0x50] sm:$0xff]
        %v3371 = vld [vmem:[%s3359 + $0x58] sm:$0xff]
        %v3372 = vld [vmem:[%s3359 + $0x60] sm:$0xff]
        %v3373 = vld [vmem:[%s3359 + $0x68] sm:$0xff]
        %v3374 = vld [vmem:[%s3359 + $0x70] sm:$0xff]
        %v3375 = vld [vmem:[%s3359 + $0x78] sm:$0xff]
        %v3376 = vld [vmem:[%s3359 + $0x80] sm:$0xff]
        %v3377 = vld [vmem:[%s3359 + $0x88] sm:$0xff]
        %v3378 = vld [vmem:[%s3359 + $0x90] sm:$0xff]
        %v3379 = vld [vmem:[%s3359 + $0x98] sm:$0xff]
        %v3380 = vld [vmem:[%s3359 + $0xa0] sm:$0xff]
        %v3381 = vld [vmem:[%s3359 + $0xa8] sm:$0xff]
        %v3382 = vld [vmem:[%s3359 + $0xb0] sm:$0xff]
        %v3383 = vld [vmem:[%s3359 + $0xb8] sm:$0xff]
        %v3384 = vld [vmem:[%s3359 + $0xc0] sm:$0xff]
        %v3385 = vld [vmem:[%s3359 + $0xc8] sm:$0xff]
        %v3386 = vld [vmem:[%s3359 + $0xd0] sm:$0xff]
        %v3387 = vld [vmem:[%s3359 + $0xd8] sm:$0xff]
        %v3388 = vld [vmem:[%s3359 + $0xe0] sm:$0xff]
        %v3389 = vld [vmem:[%s3359 + $0xe8] sm:$0xff]
        %v3390 = vld [vmem:[%s3359 + $0xf0] sm:$0xff]
        %v3391 = vld [vmem:[%s3359 + $0xf8] sm:$0xff]
        %v3392 = vld [vmem:[%s3359 + $0x100] sm:$0xff]
        %v3393 = vld [vmem:[%s3359 + $0x108] sm:$0xff]
        %v3394 = vld [vmem:[%s3359 + $0x110] sm:$0xff]
        %v3395 = vld [vmem:[%s3359 + $0x118] sm:$0xff]
        %v3396 = vld [vmem:[%s3359 + $0x120] sm:$0xff]
        %v3397 = vld [vmem:[%s3359 + $0x128] sm:$0xff]
        %v3398 = vld [vmem:[%s3359 + $0x130] sm:$0xff]
        %v3399 = vld [vmem:[%s3359 + $0x138] sm:$0xff]
        %v3400 = vld [vmem:[%s3359 + $0x140] sm:$0xff]
        %v3401 = vld [vmem:[%s3359 + $0x148] sm:$0xff]
        %v3402 = vld [vmem:[%s3359 + $0x150] sm:$0xff]
        %v3403 = vld [vmem:[%s3359 + $0x158] sm:$0xff]
        %v3404 = vld [vmem:[%s3359 + $0x160] sm:$0xff]
        %v3405 = vld [vmem:[%s3359 + $0x168] sm:$0xff]
        %v3406 = vld [vmem:[%s3359 + $0x170] sm:$0xff]
        %v3407 = vld [vmem:[%s3359 + $0x178] sm:$0xff]
        %v3408 = vld [vmem:[%s3359 + $0x180] sm:$0xff]
        %v3409 = vld [vmem:[%s3359 + $0x188] sm:$0xff]
        %v3410 = vld [vmem:[%s3359 + $0x190] sm:$0xff]
        %v3411 = vld [vmem:[%s3359 + $0x198] sm:$0xff]
        %v3412 = vld [vmem:[%s3359 + $0x1a0] sm:$0xff]
        %v3413 = vld [vmem:[%s3359 + $0x1a8] sm:$0xff]
        %v3414 = vld [vmem:[%s3359 + $0x1b0] sm:$0xff]
        %v3415 = vld [vmem:[%s3359 + $0x1b8] sm:$0xff]
        %v3416 = vld [vmem:[%s3359 + $0x1c0] sm:$0xff]
        %v3417 = vld [vmem:[%s3359 + $0x1c8] sm:$0xff]
        %v3418 = vld [vmem:[%s3359 + $0x1d0] sm:$0xff]
        %v3419 = vld [vmem:[%s3359 + $0x1d8] sm:$0xff]
        %v3420 = vld [vmem:[%s3359 + $0x1e0] sm:$0xff]
        %v3421 = vld [vmem:[%s3359 + $0x1e8] sm:$0xff]
        %v3422 = vld [vmem:[%s3359 + $0x1f0] sm:$0xff]
        %v3423 = vld [vmem:[%s3359 + $0x1f8] sm:$0xff]
        %v3424 = vld [vmem:[%s3359 + $0x200] sm:$0xff]
        %v3425 = vld [vmem:[%s3359 + $0x208] sm:$0xff]
        %v3426 = vld [vmem:[%s3359 + $0x210] sm:$0xff]
        %v3427 = vld [vmem:[%s3359 + $0x218] sm:$0xff]
        %v3428 = vld [vmem:[%s3359 + $0x220] sm:$0xff]
        %v3429 = vld [vmem:[%s3359 + $0x228] sm:$0xff]
        %v3430 = vld [vmem:[%s3359 + $0x230] sm:$0xff]
        %v3431 = vld [vmem:[%s3359 + $0x238] sm:$0xff]
        %v3432 = vld [vmem:[%s3359 + $0x240] sm:$0xff]
        %v3433 = vld [vmem:[%s3359 + $0x248] sm:$0xff]
        %v3434 = vld [vmem:[%s3359 + $0x250] sm:$0xff]
        %v3435 = vld [vmem:[%s3359 + $0x258] sm:$0xff]
        %v3436 = vld [vmem:[%s3359 + $0x260] sm:$0xff]
        %v3437 = vld [vmem:[%s3359 + $0x268] sm:$0xff]
        %v3438 = vld [vmem:[%s3359 + $0x270] sm:$0xff]
        %v3439 = vld [vmem:[%s3359 + $0x278] sm:$0xff]
        %v3440 = vld [vmem:[%s3359 + $0x280] sm:$0xff]
        %v3441 = vld [vmem:[%s3359 + $0x288] sm:$0xff]
        %v3442 = vld [vmem:[%s3359 + $0x290] sm:$0xff]
        %v3443 = vld [vmem:[%s3359 + $0x298] sm:$0xff]
        %v3444 = vld [vmem:[%s3359 + $0x2a0] sm:$0xff]
        %v3445 = vld [vmem:[%s3359 + $0x2a8] sm:$0xff]
        %v3446 = vld [vmem:[%s3359 + $0x2b0] sm:$0xff]
        %v3447 = vld [vmem:[%s3359 + $0x2b8] sm:$0xff]
        %v3448 = vld [vmem:[%s3359 + $0x2c0] sm:$0xff]
        %v3449 = vld [vmem:[%s3359 + $0x2c8] sm:$0xff]
        %v3450 = vld [vmem:[%s3359 + $0x2d0] sm:$0xff]
        %v3451 = vld [vmem:[%s3359 + $0x2d8] sm:$0xff]
        %v3452 = vld [vmem:[%s3359 + $0x2e0] sm:$0xff]
        %v3453 = vld [vmem:[%s3359 + $0x2e8] sm:$0xff]
        %v3454 = vld [vmem:[%s3359 + $0x2f0] sm:$0xff]
        %v3455 = vld [vmem:[%s3359 + $0x2f8] sm:$0xff]
        %v3456 = vld [vmem:[%s3359 + $0x300] sm:$0xff]
        %v3457 = vld [vmem:[%s3359 + $0x308] sm:$0xff]
        %v3458 = vld [vmem:[%s3359 + $0x310] sm:$0xff]
        %v3459 = vld [vmem:[%s3359 + $0x318] sm:$0xff]
        %v3460 = vld [vmem:[%s3359 + $0x320] sm:$0xff]
        %v3461 = vld [vmem:[%s3359 + $0x328] sm:$0xff]
        %v3462 = vld [vmem:[%s3359 + $0x330] sm:$0xff]
        %v3463 = vld [vmem:[%s3359 + $0x338] sm:$0xff]
        %v3464 = vld [vmem:[%s3359 + $0x340] sm:$0xff]
        %v3465 = vld [vmem:[%s3359 + $0x348] sm:$0xff]
        %v3466 = vld [vmem:[%s3359 + $0x350] sm:$0xff]
        %v3467 = vld [vmem:[%s3359 + $0x358] sm:$0xff]
        %v3468 = vld [vmem:[%s3359 + $0x360] sm:$0xff]
        %v3469 = vld [vmem:[%s3359 + $0x368] sm:$0xff]
        %v3470 = vld [vmem:[%s3359 + $0x370] sm:$0xff]
        %v3471 = vld [vmem:[%s3359 + $0x378] sm:$0xff]
        %v3473 = vsel %vm2952, %v3351, 0
        %v3476 = vsel %vm2952, %v3357, 0
        %3478 = vmatprep.subr.mxu0 %v3361
        %3479 = vmatpush1.msra.mxu0 %v3360
        %3480 = vmatprep.subr.mxu0 %v3365
        %3481 = vmatpush1.msra.mxu0 %v3364
        %3482 = vmatprep.subr.mxu0 %v3369
        %3483 = vmatpush1.msra.mxu0 %v3368
        %3484 = vmatprep.subr.mxu0 %v3373
        %3485 = vmatpush1.msra.mxu0 %v3372
        %3486 = vmatprep.subr.mxu0 %v3377
        %3487 = vmatpush1.msra.mxu0 %v3376
        %3488 = vmatprep.subr.mxu0 %v3381
        %3489 = vmatpush1.msra.mxu0 %v3380
        %3490 = vmatprep.subr.mxu0 %v3385
        %3491 = vmatpush1.msra.mxu0 %v3384
        %3492 = vmatprep.subr.mxu0 %v3389
        %3493 = vmatpush1.msra.mxu0 %v3388
        %3494 = vmatprep.subr.mxu0 %v3393
        %3495 = vmatpush1.msra.mxu0 %v3392
        %3496 = vmatprep.subr.mxu0 %v3397
        %3497 = vmatpush1.msra.mxu0 %v3396
        %3498 = vmatprep.subr.mxu0 %v3401
        %3499 = vmatpush1.msra.mxu0 %v3400
        %3500 = vmatprep.subr.mxu0 %v3405
        %3501 = vmatpush1.msra.mxu0 %v3404
        %3502 = vmatprep.subr.mxu0 %v3409
        %3503 = vmatpush1.msra.mxu0 %v3408
        %3504 = vmatprep.subr.mxu0 %v3413
        %3505 = vmatpush1.msra.mxu0 %v3412
        %3506 = vmatprep.subr.mxu0 %v3417
        %3507 = vmatpush1.msra.mxu0 %v3416
        %3508 = vmatprep.subr.mxu0 %v3421
        %3509 = vmatpush1.msra.mxu0 %v3420
        %3510 = vmatprep.subr.mxu0 %v3425
        %3511 = vmatpush1.msra.mxu0 %v3424
        %3512 = vmatprep.subr.mxu0 %v3429
        %3513 = vmatpush1.msra.mxu0 %v3428
        %3514 = vmatprep.subr.mxu0 %v3433
        %3515 = vmatpush1.msra.mxu0 %v3432
        %3516 = vmatprep.subr.mxu0 %v3437
        %3517 = vmatpush1.msra.mxu0 %v3436
        %3518 = vmatprep.subr.mxu0 %v3441
        %3519 = vmatpush1.msra.mxu0 %v3440
        %3520 = vmatprep.subr.mxu0 %v3445
        %3521 = vmatpush1.msra.mxu0 %v3444
        %3522 = vmatprep.subr.mxu0 %v3449
        %3523 = vmatpush1.msra.mxu0 %v3448
        %3524 = vmatprep.subr.mxu0 %v3453
        %3525 = vmatpush1.msra.mxu0 %v3452
        %3526 = vmatprep.subr.mxu0 %v3457
        %3527 = vmatpush1.msra.mxu0 %v3456
        %3528 = vmatprep.subr.mxu0 %v3461
        %3529 = vmatpush1.msra.mxu0 %v3460
        %3530 = vmatprep.subr.mxu0 %v3465
        %3531 = vmatpush1.msra.mxu0 %v3464
        %3532 = vmatprep.subr.mxu0 %v3469
        %3533 = vmatpush1.msra.mxu0 %v3468
        %3534 = vmatprep.subr.mxu0 0.0
        %3535 = vmatpush1.msra.mxu0 0.0
        %3536 = vmatprep.subr.mxu0 0.0
        %3537 = vmatpush1.msra.mxu0 0.0
        %3538 = vmatprep.subr.mxu0 0.0
        %3539 = vmatpush1.msra.mxu0 0.0
        %3540 = vmatprep.subr.mxu0 0.0
        %3541 = vmatpush1.msra.mxu0 0.0
        %3542 = vmatprep.mubr.f32.mxu0 %v3473
        %3543 = vmatmul.mubr.f32.gmra.mrb[0].mxu0 %v3349
        %v3544 = vpop.f32.mrb[0].mxu0
        %v3545 = vadd.f32 0.0, %v3544
        %v3546 = vpop.f32.mrb[0].mxu0
        %v3547 = vadd.f32 0.0, %v3546
        %3548 = vmatprep.mubr.f32.mxu0 %v3476
        %3549 = vmatmul.mubr.f32.gmra.mrb[0].mxu0 %v3355
        %v3550 = vpop.f32.mrb[0].mxu0
        %v3551 = vadd.f32 0.0, %v3550
        %v3552 = vpop.f32.mrb[0].mxu0
        %v3553 = vadd.f32 0.0, %v3552
        %3554 = vdwg.mxu0
        %3555 = vmatprep.subr.mxu0 %v3363
        %3556 = vmatpush1.msra.mxu0 %v3362
        %3557 = vmatprep.subr.mxu0 %v3367
        %3558 = vmatpush1.msra.mxu0 %v3366
        %3559 = vmatprep.subr.mxu0 %v3371
        %3560 = vmatpush1.msra.mxu0 %v3370
        %3561 = vmatprep.subr.mxu0 %v3375
        %3562 = vmatpush1.msra.mxu0 %v3374
        %3563 = vmatprep.subr.mxu0 %v3379
        %3564 = vmatpush1.msra.mxu0 %v3378
        %3565 = vmatprep.subr.mxu0 %v3383
        %3566 = vmatpush1.msra.mxu0 %v3382
        %3567 = vmatprep.subr.mxu0 %v3387
        %3568 = vmatpush1.msra.mxu0 %v3386
        %3569 = vmatprep.subr.mxu0 %v3391
        %3570 = vmatpush1.msra.mxu0 %v3390
        %3571 = vmatprep.subr.mxu0 %v3395
        %3572 = vmatpush1.msra.mxu0 %v3394
        %3573 = vmatprep.subr.mxu0 %v3399
        %3574 = vmatpush1.msra.mxu0 %v3398
        %3575 = vmatprep.subr.mxu0 %v3403
        %3576 = vmatpush1.msra.mxu0 %v3402
        %3577 = vmatprep.subr.mxu0 %v3407
        %3578 = vmatpush1.msra.mxu0 %v3406
        %3579 = vmatprep.subr.mxu0 %v3411
        %3580 = vmatpush1.msra.mxu0 %v3410
        %3581 = vmatprep.subr.mxu0 %v3415
        %3582 = vmatpush1.msra.mxu0 %v3414
        %3583 = vmatprep.subr.mxu0 %v3419
        %3584 = vmatpush1.msra.mxu0 %v3418
        %3585 = vmatprep.subr.mxu0 %v3423
        %3586 = vmatpush1.msra.mxu0 %v3422
        %3587 = vmatprep.subr.mxu0 %v3427
        %3588 = vmatpush1.msra.mxu0 %v3426
        %3589 = vmatprep.subr.mxu0 %v3431
        %3590 = vmatpush1.msra.mxu0 %v3430
        %3591 = vmatprep.subr.mxu0 %v3435
        %3592 = vmatpush1.msra.mxu0 %v3434
        %3593 = vmatprep.subr.mxu0 %v3439
        %3594 = vmatpush1.msra.mxu0 %v3438
        %3595 = vmatprep.subr.mxu0 %v3443
        %3596 = vmatpush1.msra.mxu0 %v3442
        %3597 = vmatprep.subr.mxu0 %v3447
        %3598 = vmatpush1.msra.mxu0 %v3446
        %3599 = vmatprep.subr.mxu0 %v3451
        %3600 = vmatpush1.msra.mxu0 %v3450
        %3601 = vmatprep.subr.mxu0 %v3455
        %3602 = vmatpush1.msra.mxu0 %v3454
        %3603 = vmatprep.subr.mxu0 %v3459
        %3604 = vmatpush1.msra.mxu0 %v3458
        %3605 = vmatprep.subr.mxu0 %v3463
        %3606 = vmatpush1.msra.mxu0 %v3462
        %3607 = vmatprep.subr.mxu0 %v3467
        %3608 = vmatpush1.msra.mxu0 %v3466
        %3609 = vmatprep.subr.mxu0 %v3471
        %3610 = vmatpush1.msra.mxu0 %v3470
        %3611 = vmatprep.subr.mxu0 0.0
        %3612 = vmatpush1.msra.mxu0 0.0
        %3613 = vmatprep.subr.mxu0 0.0
        %3614 = vmatpush1.msra.mxu0 0.0
        %3615 = vmatprep.subr.mxu0 0.0
        %3616 = vmatpush1.msra.mxu0 0.0
        %3617 = vmatprep.subr.mxu0 0.0
        %3618 = vmatpush1.msra.mxu0 0.0
        %3619 = vmatprep.mubr.f32.mxu0 %v3473
        %3620 = vmatmul.mubr.f32.gmra.mrb[0].mxu0 %v3349
        %v3621 = vpop.f32.mrb[0].mxu0
        %v3622 = vadd.f32 0.0, %v3621
        %v3623 = vpop.f32.mrb[0].mxu0
        %v3624 = vadd.f32 0.0, %v3623
        %3625 = vmatprep.mubr.f32.mxu0 %v3476
        %3626 = vmatmul.mubr.f32.gmra.mrb[0].mxu0 %v3355
        %v3627 = vpop.f32.mrb[0].mxu0
        %v3628 = vadd.f32 0.0, %v3627
        %v3629 = vpop.f32.mrb[0].mxu0
        %v3630 = vadd.f32 0.0, %v3629
        %3631 = vdwg.mxu0
        %v3632 = vadd.f32 %v3186, %v3545
        %v3633 = vadd.f32 %v3188, %v3547
        %v3634 = vadd.f32 %v3263, %v3622
        %v3635 = vadd.f32 %v3265, %v3624
        %v3636 = vadd.f32 %v3192, %v3551
        %v3637 = vadd.f32 %v3194, %v3553
        %v3638 = vadd.f32 %v3269, %v3628
        %v3639 = vadd.f32 %v3271, %v3630
        %v3640 = vld [vmem:[#allocation13] sm:$0xf]
        %v3642 = vlaneseq
        %v3643 = vshrl.u32 %v3642, 7
        %v3644 = vsub.s32 0, %v3643
        %v3645 = vrot.slane %v3640, %v3644
        %v3646 = vlaneseq
        %v3647 = vshrl.u32 %v3646, 7
        %v3648 = vsub.s32 1, %v3647
        %v3649 = vrot.slane %v3640, %v3648
        %v3650 = vlaneseq
        %v3651 = vshrl.u32 %v3650, 7
        %v3652 = vsub.s32 2, %v3651
        %v3653 = vrot.slane %v3640, %v3652
        %v3654 = vlaneseq
        %v3655 = vshrl.u32 %v3654, 7
        %v3656 = vsub.s32 3, %v3655
        %v3657 = vrot.slane %v3640, %v3656
        %v3662 = vadd.f32 %v3632, %v3645
        %v3663 = vadd.f32 %v3633, %v3649
        %v3664 = vadd.f32 %v3634, %v3653
        %v3665 = vadd.f32 %v3635, %v3657
        %v3666 = vadd.f32 %v3636, %v3645
        %v3667 = vadd.f32 %v3637, %v3649
        %v3668 = vadd.f32 %v3638, %v3653
        %v3669 = vadd.f32 %v3639, %v3657
        %v3670 = vmax.f32 %v3662, 0.0
        %v3671 = vmax.f32 %v3663, 0.0
        %v3672 = vmax.f32 %v3664, 0.0
        %v3673 = vmax.f32 %v3665, 0.0
        %v3674 = vmax.f32 %v3666, 0.0
        %v3675 = vmax.f32 %v3667, 0.0
        %v3676 = vmax.f32 %v3668, 0.0
        %v3677 = vmax.f32 %v3669, 0.0
        %v3678 = vld [vmem:[%s9] sm:$0x7f]
        %v3680 = vsel %vm2550, %v3678, 0
        %v3683 = vsel %vm2557, %v3674, 0
        %v3686 = vsel %vm2557, %v3675, 0
        %v3689 = vsel %vm2557, %v3676, 0
        %v3692 = vsel %vm2557, %v3677, 0
        %3694 = vmatprep.subr.mxu0 %v3671
        %3695 = vmatpush1.msra.mxu0 %v3670
        %3696 = vmatprep.subr.mxu0 %v3686
        %3697 = vmatpush1.msra.mxu0 %v3683
        %3698 = vmatprep.subr.mxu0 0.0
        %3699 = vmatpush1.msra.mxu0 0.0
        %3700 = vmatprep.subr.mxu0 0.0
        %3701 = vmatpush1.msra.mxu0 0.0
        %3702 = vmatprep.subr.mxu0 0.0
        %3703 = vmatpush1.msra.mxu0 0.0
        %3704 = vmatprep.subr.mxu0 0.0
        %3705 = vmatpush1.msra.mxu0 0.0
        %3706 = vmatprep.subr.mxu0 0.0
        %3707 = vmatpush1.msra.mxu0 0.0
        %3708 = vmatprep.subr.mxu0 0.0
        %3709 = vmatpush1.msra.mxu0 0.0
        %3710 = vmatprep.subr.mxu0 0.0
        %3711 = vmatpush1.msra.mxu0 0.0
        %3712 = vmatprep.subr.mxu0 0.0
        %3713 = vmatpush1.msra.mxu0 0.0
        %3714 = vmatprep.subr.mxu0 0.0
        %3715 = vmatpush1.msra.mxu0 0.0
        %3716 = vmatprep.subr.mxu0 0.0
        %3717 = vmatpush1.msra.mxu0 0.0
        %3718 = vmatprep.subr.mxu0 0.0
        %3719 = vmatpush1.msra.mxu0 0.0
        %3720 = vmatprep.subr.mxu0 0.0
        %3721 = vmatpush1.msra.mxu0 0.0
        %3722 = vmatprep.subr.mxu0 0.0
        %3723 = vmatpush1.msra.mxu0 0.0
        %3724 = vmatprep.subr.mxu0 0.0
        %3725 = vmatpush1.msra.mxu0 0.0
        %3726 = vmatprep.subr.mxu0 0.0
        %3727 = vmatpush1.msra.mxu0 0.0
        %3728 = vmatprep.subr.mxu0 0.0
        %3729 = vmatpush1.msra.mxu0 0.0
        %3730 = vmatprep.subr.mxu0 0.0
        %3731 = vmatpush1.msra.mxu0 0.0
        %3732 = vmatprep.subr.mxu0 0.0
        %3733 = vmatpush1.msra.mxu0 0.0
        %3734 = vmatprep.subr.mxu0 0.0
        %3735 = vmatpush1.msra.mxu0 0.0
        %3736 = vmatprep.subr.mxu0 0.0
        %3737 = vmatpush1.msra.mxu0 0.0
        %3738 = vmatprep.subr.mxu0 0.0
        %3739 = vmatpush1.msra.mxu0 0.0
        %3740 = vmatprep.subr.mxu0 0.0
        %3741 = vmatpush1.msra.mxu0 0.0
        %3742 = vmatprep.subr.mxu0 0.0
        %3743 = vmatpush1.msra.mxu0 0.0
        %3744 = vmatprep.subr.mxu0 0.0
        %3745 = vmatpush1.msra.mxu0 0.0
        %3746 = vmatprep.subr.mxu0 0.0
        %3747 = vmatpush1.msra.mxu0 0.0
        %3748 = vmatprep.subr.mxu0 0.0
        %3749 = vmatpush1.msra.mxu0 0.0
        %3750 = vmatprep.subr.mxu0 0.0
        %3751 = vmatpush1.msra.mxu0 0.0
        %3752 = vmatprep.subr.mxu0 0.0
        %3753 = vmatpush1.msra.mxu0 0.0
        %3754 = vmatprep.subr.mxu0 0.0
        %3755 = vmatpush1.msra.mxu0 0.0
        %3756 = vmatprep.subr.mxu0 0.0
        %3757 = vmatpush1.msra.mxu0 0.0
        %3758 = vmatprep.mubr.f32.mxu0 0.0
        %3759 = vmatmul.mubr.f32.gmra.mrb[0].mxu0 %v3680
        %v3760 = vpop.f32.mrb[0].mxu0
        %v3761 = vadd.f32 0.0, %v3760
        %v3762 = vpop.f32.mrb[0].mxu0
        %v3763 = vadd.f32 0.0, %v3762
        %3764 = vdwg.mxu0
        %3765 = vmatprep.subr.mxu0 %v3673
        %3766 = vmatpush1.msra.mxu0 %v3672
        %3767 = vmatprep.subr.mxu0 %v3692
        %3768 = vmatpush1.msra.mxu0 %v3689
        %3769 = vmatprep.subr.mxu0 0.0
        %3770 = vmatpush1.msra.mxu0 0.0
        %3771 = vmatprep.subr.mxu0 0.0
        %3772 = vmatpush1.msra.mxu0 0.0
        %3773 = vmatprep.subr.mxu0 0.0
        %3774 = vmatpush1.msra.mxu0 0.0
        %3775 = vmatprep.subr.mxu0 0.0
        %3776 = vmatpush1.msra.mxu0 0.0
        %3777 = vmatprep.subr.mxu0 0.0
        %3778 = vmatpush1.msra.mxu0 0.0
        %3779 = vmatprep.subr.mxu0 0.0
        %3780 = vmatpush1.msra.mxu0 0.0
        %3781 = vmatprep.subr.mxu0 0.0
        %3782 = vmatpush1.msra.mxu0 0.0
        %3783 = vmatprep.subr.mxu0 0.0
        %3784 = vmatpush1.msra.mxu0 0.0
        %3785 = vmatprep.subr.mxu0 0.0
        %3786 = vmatpush1.msra.mxu0 0.0
        %3787 = vmatprep.subr.mxu0 0.0
        %3788 = vmatpush1.msra.mxu0 0.0
        %3789 = vmatprep.subr.mxu0 0.0
        %3790 = vmatpush1.msra.mxu0 0.0
        %3791 = vmatprep.subr.mxu0 0.0
        %3792 = vmatpush1.msra.mxu0 0.0
        %3793 = vmatprep.subr.mxu0 0.0
        %3794 = vmatpush1.msra.mxu0 0.0
        %3795 = vmatprep.subr.mxu0 0.0
        %3796 = vmatpush1.msra.mxu0 0.0
        %3797 = vmatprep.subr.mxu0 0.0
        %3798 = vmatpush1.msra.mxu0 0.0
        %3799 = vmatprep.subr.mxu0 0.0
        %3800 = vmatpush1.msra.mxu0 0.0
        %3801 = vmatprep.subr.mxu0 0.0
        %3802 = vmatpush1.msra.mxu0 0.0
        %3803 = vmatprep.subr.mxu0 0.0
        %3804 = vmatpush1.msra.mxu0 0.0
        %3805 = vmatprep.subr.mxu0 0.0
        %3806 = vmatpush1.msra.mxu0 0.0
        %3807 = vmatprep.subr.mxu0 0.0
        %3808 = vmatpush1.msra.mxu0 0.0
        %3809 = vmatprep.subr.mxu0 0.0
        %3810 = vmatpush1.msra.mxu0 0.0
        %3811 = vmatprep.subr.mxu0 0.0
        %3812 = vmatpush1.msra.mxu0 0.0
        %3813 = vmatprep.subr.mxu0 0.0
        %3814 = vmatpush1.msra.mxu0 0.0
        %3815 = vmatprep.subr.mxu0 0.0
        %3816 = vmatpush1.msra.mxu0 0.0
        %3817 = vmatprep.subr.mxu0 0.0
        %3818 = vmatpush1.msra.mxu0 0.0
        %3819 = vmatprep.subr.mxu0 0.0
        %3820 = vmatpush1.msra.mxu0 0.0
        %3821 = vmatprep.subr.mxu0 0.0
        %3822 = vmatpush1.msra.mxu0 0.0
        %3823 = vmatprep.subr.mxu0 0.0
        %3824 = vmatpush1.msra.mxu0 0.0
        %3825 = vmatprep.subr.mxu0 0.0
        %3826 = vmatpush1.msra.mxu0 0.0
        %3827 = vmatprep.subr.mxu0 0.0
        %3828 = vmatpush1.msra.mxu0 0.0
        %3829 = vmatprep.mubr.f32.mxu0 0.0
        %3830 = vmatmul.mubr.f32.gmra.mrb[0].mxu0 %v3680
        %v3831 = vpop.f32.mrb[0].mxu0
        %v3832 = vadd.f32 0.0, %v3831
        %v3833 = vpop.f32.mrb[0].mxu0
        %v3834 = vadd.f32 0.0, %v3833
        %3835 = vdwg.mxu0
        %s3836 = scalar_lea.vmem %s9, 8
        %v3837 = vld [vmem:[%s3836] sm:$0x7f]
        %v3839 = vsel %vm2550, %v3837, 0
        %3841 = vmatprep.subr.mxu0 %v3671
        %3842 = vmatpush1.msra.mxu0 %v3670
        %3843 = vmatprep.subr.mxu0 %v3686
        %3844 = vmatpush1.msra.mxu0 %v3683
        %3845 = vmatprep.subr.mxu0 0.0
        %3846 = vmatpush1.msra.mxu0 0.0
        %3847 = vmatprep.subr.mxu0 0.0
        %3848 = vmatpush1.msra.mxu0 0.0
        %3849 = vmatprep.subr.mxu0 0.0
        %3850 = vmatpush1.msra.mxu0 0.0
        %3851 = vmatprep.subr.mxu0 0.0
        %3852 = vmatpush1.msra.mxu0 0.0
        %3853 = vmatprep.subr.mxu0 0.0
        %3854 = vmatpush1.msra.mxu0 0.0
        %3855 = vmatprep.subr.mxu0 0.0
        %3856 = vmatpush1.msra.mxu0 0.0
        %3857 = vmatprep.subr.mxu0 0.0
        %3858 = vmatpush1.msra.mxu0 0.0
        %3859 = vmatprep.subr.mxu0 0.0
        %3860 = vmatpush1.msra.mxu0 0.0
        %3861 = vmatprep.subr.mxu0 0.0
        %3862 = vmatpush1.msra.mxu0 0.0
        %3863 = vmatprep.subr.mxu0 0.0
        %3864 = vmatpush1.msra.mxu0 0.0
        %3865 = vmatprep.subr.mxu0 0.0
        %3866 = vmatpush1.msra.mxu0 0.0
        %3867 = vmatprep.subr.mxu0 0.0
        %3868 = vmatpush1.msra.mxu0 0.0
        %3869 = vmatprep.subr.mxu0 0.0
        %3870 = vmatpush1.msra.mxu0 0.0
        %3871 = vmatprep.subr.mxu0 0.0
        %3872 = vmatpush1.msra.mxu0 0.0
        %3873 = vmatprep.subr.mxu0 0.0
        %3874 = vmatpush1.msra.mxu0 0.0
        %3875 = vmatprep.subr.mxu0 0.0
        %3876 = vmatpush1.msra.mxu0 0.0
        %3877 = vmatprep.subr.mxu0 0.0
        %3878 = vmatpush1.msra.mxu0 0.0
        %3879 = vmatprep.subr.mxu0 0.0
        %3880 = vmatpush1.msra.mxu0 0.0
        %3881 = vmatprep.subr.mxu0 0.0
        %3882 = vmatpush1.msra.mxu0 0.0
        %3883 = vmatprep.subr.mxu0 0.0
        %3884 = vmatpush1.msra.mxu0 0.0
        %3885 = vmatprep.subr.mxu0 0.0
        %3886 = vmatpush1.msra.mxu0 0.0
        %3887 = vmatprep.subr.mxu0 0.0
        %3888 = vmatpush1.msra.mxu0 0.0
        %3889 = vmatprep.subr.mxu0 0.0
        %3890 = vmatpush1.msra.mxu0 0.0
        %3891 = vmatprep.subr.mxu0 0.0
        %3892 = vmatpush1.msra.mxu0 0.0
        %3893 = vmatprep.subr.mxu0 0.0
        %3894 = vmatpush1.msra.mxu0 0.0
        %3895 = vmatprep.subr.mxu0 0.0
        %3896 = vmatpush1.msra.mxu0 0.0
        %3897 = vmatprep.subr.mxu0 0.0
        %3898 = vmatpush1.msra.mxu0 0.0
        %3899 = vmatprep.subr.mxu0 0.0
        %3900 = vmatpush1.msra.mxu0 0.0
        %3901 = vmatprep.subr.mxu0 0.0
        %3902 = vmatpush1.msra.mxu0 0.0
        %3903 = vmatprep.subr.mxu0 0.0
        %3904 = vmatpush1.msra.mxu0 0.0
        %3905 = vmatprep.mubr.f32.mxu0 0.0
        %3906 = vmatmul.mubr.f32.gmra.mrb[0].mxu0 %v3839
        %v3907 = vpop.f32.mrb[0].mxu0
        %v3908 = vadd.f32 0.0, %v3907
        %v3909 = vpop.f32.mrb[0].mxu0
        %v3910 = vadd.f32 0.0, %v3909
        %3911 = vdwg.mxu0
        %3912 = vmatprep.subr.mxu0 %v3673
        %3913 = vmatpush1.msra.mxu0 %v3672
        %3914 = vmatprep.subr.mxu0 %v3692
        %3915 = vmatpush1.msra.mxu0 %v3689
        %3916 = vmatprep.subr.mxu0 0.0
        %3917 = vmatpush1.msra.mxu0 0.0
        %3918 = vmatprep.subr.mxu0 0.0
        %3919 = vmatpush1.msra.mxu0 0.0
        %3920 = vmatprep.subr.mxu0 0.0
        %3921 = vmatpush1.msra.mxu0 0.0
        %3922 = vmatprep.subr.mxu0 0.0
        %3923 = vmatpush1.msra.mxu0 0.0
        %3924 = vmatprep.subr.mxu0 0.0
        %3925 = vmatpush1.msra.mxu0 0.0
        %3926 = vmatprep.subr.mxu0 0.0
        %3927 = vmatpush1.msra.mxu0 0.0
        %3928 = vmatprep.subr.mxu0 0.0
        %3929 = vmatpush1.msra.mxu0 0.0
        %3930 = vmatprep.subr.mxu0 0.0
        %3931 = vmatpush1.msra.mxu0 0.0
        %3932 = vmatprep.subr.mxu0 0.0
        %3933 = vmatpush1.msra.mxu0 0.0
        %3934 = vmatprep.subr.mxu0 0.0
        %3935 = vmatpush1.msra.mxu0 0.0
        %3936 = vmatprep.subr.mxu0 0.0
        %3937 = vmatpush1.msra.mxu0 0.0
        %3938 = vmatprep.subr.mxu0 0.0
        %3939 = vmatpush1.msra.mxu0 0.0
        %3940 = vmatprep.subr.mxu0 0.0
        %3941 = vmatpush1.msra.mxu0 0.0
        %3942 = vmatprep.subr.mxu0 0.0
        %3943 = vmatpush1.msra.mxu0 0.0
        %3944 = vmatprep.subr.mxu0 0.0
        %3945 = vmatpush1.msra.mxu0 0.0
        %3946 = vmatprep.subr.mxu0 0.0
        %3947 = vmatpush1.msra.mxu0 0.0
        %3948 = vmatprep.subr.mxu0 0.0
        %3949 = vmatpush1.msra.mxu0 0.0
        %3950 = vmatprep.subr.mxu0 0.0
        %3951 = vmatpush1.msra.mxu0 0.0
        %3952 = vmatprep.subr.mxu0 0.0
        %3953 = vmatpush1.msra.mxu0 0.0
        %3954 = vmatprep.subr.mxu0 0.0
        %3955 = vmatpush1.msra.mxu0 0.0
        %3956 = vmatprep.subr.mxu0 0.0
        %3957 = vmatpush1.msra.mxu0 0.0
        %3958 = vmatprep.subr.mxu0 0.0
        %3959 = vmatpush1.msra.mxu0 0.0
        %3960 = vmatprep.subr.mxu0 0.0
        %3961 = vmatpush1.msra.mxu0 0.0
        %3962 = vmatprep.subr.mxu0 0.0
        %3963 = vmatpush1.msra.mxu0 0.0
        %3964 = vmatprep.subr.mxu0 0.0
        %3965 = vmatpush1.msra.mxu0 0.0
        %3966 = vmatprep.subr.mxu0 0.0
        %3967 = vmatpush1.msra.mxu0 0.0
        %3968 = vmatprep.subr.mxu0 0.0
        %3969 = vmatpush1.msra.mxu0 0.0
        %3970 = vmatprep.subr.mxu0 0.0
        %3971 = vmatpush1.msra.mxu0 0.0
        %3972 = vmatprep.subr.mxu0 0.0
        %3973 = vmatpush1.msra.mxu0 0.0
        %3974 = vmatprep.subr.mxu0 0.0
        %3975 = vmatpush1.msra.mxu0 0.0
        %3976 = vmatprep.mubr.f32.mxu0 0.0
        %3977 = vmatmul.mubr.f32.gmra.mrb[0].mxu0 %v3839
        %v3978 = vpop.f32.mrb[0].mxu0
        %v3979 = vadd.f32 0.0, %v3978
        %v3980 = vpop.f32.mrb[0].mxu0
        %v3981 = vadd.f32 0.0, %v3980
        %3982 = vdwg.mxu0
        %v3983 = vmax.f32 %v3761, %v3908
        %v3984 = vmax.f32 %v3763, %v3910
        %v3985 = vmax.f32 %v3832, %v3979
        %v3986 = vmax.f32 %v3834, %v3981
        %v3987 = vld [vmem:[#allocation14] sm:$0xff]
        %v3988 = vld [vmem:[#allocation14 + $0x8] sm:$0xff]
        %v3989 = vld [vmem:[#allocation14 + $0x10] sm:$0xff]
        %v3990 = vld [vmem:[#allocation14 + $0x18] sm:$0xff]
        %v3991 = vld [vmem:[#allocation14 + $0x20] sm:$0xff]
        %v3992 = vld [vmem:[#allocation14 + $0x28] sm:$0xff]
        %v3993 = vld [vmem:[#allocation14 + $0x30] sm:$0xff]
        %v3994 = vld [vmem:[#allocation14 + $0x38] sm:$0xff]
        %v3995 = vld [vmem:[#allocation14 + $0x40] sm:$0xff]
        %v3996 = vld [vmem:[#allocation14 + $0x48] sm:$0xff]
        %v3997 = vld [vmem:[#allocation14 + $0x50] sm:$0xff]
        %v3998 = vld [vmem:[#allocation14 + $0x58] sm:$0xff]
        %v3999 = vld [vmem:[#allocation14 + $0x60] sm:$0xff]
        %v4000 = vld [vmem:[#allocation14 + $0x68] sm:$0xff]
        %v4001 = vld [vmem:[#allocation14 + $0x70] sm:$0xff]
        %v4002 = vld [vmem:[#allocation14 + $0x78] sm:$0xff]
        %v4003 = vld [vmem:[#allocation14 + $0x80] sm:$0xff]
        %v4004 = vld [vmem:[#allocation14 + $0x88] sm:$0xff]
        %v4005 = vld [vmem:[#allocation14 + $0x90] sm:$0xff]
        %v4006 = vld [vmem:[#allocation14 + $0x98] sm:$0xff]
        %v4007 = vld [vmem:[#allocation14 + $0xa0] sm:$0xff]
        %v4008 = vld [vmem:[#allocation14 + $0xa8] sm:$0xff]
        %v4009 = vld [vmem:[#allocation14 + $0xb0] sm:$0xff]
        %v4010 = vld [vmem:[#allocation14 + $0xb8] sm:$0xff]
        %v4011 = vld [vmem:[#allocation14 + $0xc0] sm:$0xff]
        %v4012 = vld [vmem:[#allocation14 + $0xc8] sm:$0xff]
        %v4013 = vld [vmem:[#allocation14 + $0xd0] sm:$0xff]
        %v4014 = vld [vmem:[#allocation14 + $0xd8] sm:$0xff]
        %v4015 = vld [vmem:[#allocation14 + $0xe0] sm:$0xff]
        %v4016 = vld [vmem:[#allocation14 + $0xe8] sm:$0xff]
        %v4017 = vld [vmem:[#allocation14 + $0xf0] sm:$0xff]
        %v4018 = vld [vmem:[#allocation14 + $0xf8] sm:$0xff]
        %v4019 = vld [vmem:[#allocation14 + $0x100] sm:$0xff]
        %v4020 = vld [vmem:[#allocation14 + $0x108] sm:$0xff]
        %v4021 = vld [vmem:[#allocation14 + $0x110] sm:$0xff]
        %v4022 = vld [vmem:[#allocation14 + $0x118] sm:$0xff]
        %v4023 = vld [vmem:[#allocation14 + $0x120] sm:$0xff]
        %v4024 = vld [vmem:[#allocation14 + $0x128] sm:$0xff]
        %v4025 = vld [vmem:[#allocation14 + $0x130] sm:$0xff]
        %v4026 = vld [vmem:[#allocation14 + $0x138] sm:$0xff]
        %v4027 = vld [vmem:[#allocation14 + $0x140] sm:$0xff]
        %v4028 = vld [vmem:[#allocation14 + $0x148] sm:$0xff]
        %v4029 = vld [vmem:[#allocation14 + $0x150] sm:$0xff]
        %v4030 = vld [vmem:[#allocation14 + $0x158] sm:$0xff]
        %v4031 = vld [vmem:[#allocation14 + $0x160] sm:$0xff]
        %v4032 = vld [vmem:[#allocation14 + $0x168] sm:$0xff]
        %v4033 = vld [vmem:[#allocation14 + $0x170] sm:$0xff]
        %v4034 = vld [vmem:[#allocation14 + $0x178] sm:$0xff]
        %v4035 = vld [vmem:[#allocation14 + $0x180] sm:$0xff]
        %v4036 = vld [vmem:[#allocation14 + $0x188] sm:$0xff]
        %v4037 = vld [vmem:[#allocation14 + $0x190] sm:$0xff]
        %v4038 = vld [vmem:[#allocation14 + $0x198] sm:$0xff]
        %v4039 = vld [vmem:[#allocation14 + $0x1a0] sm:$0xff]
        %v4040 = vld [vmem:[#allocation14 + $0x1a8] sm:$0xff]
        %v4041 = vld [vmem:[#allocation14 + $0x1b0] sm:$0xff]
        %v4042 = vld [vmem:[#allocation14 + $0x1b8] sm:$0xff]
        %v4043 = vld [vmem:[#allocation14 + $0x1c0] sm:$0xff]
        %v4044 = vld [vmem:[#allocation14 + $0x1c8] sm:$0xff]
        %v4045 = vld [vmem:[#allocation14 + $0x1d0] sm:$0xff]
        %v4046 = vld [vmem:[#allocation14 + $0x1d8] sm:$0xff]
        %v4047 = vld [vmem:[#allocation14 + $0x1e0] sm:$0xff]
        %v4048 = vld [vmem:[#allocation14 + $0x1e8] sm:$0xff]
        %v4049 = vld [vmem:[#allocation14 + $0x1f0] sm:$0xff]
        %v4050 = vld [vmem:[#allocation14 + $0x1f8] sm:$0xff]
        %v4051 = vld [vmem:[#allocation14 + $0x200] sm:$0xff]
        %v4052 = vld [vmem:[#allocation14 + $0x208] sm:$0xff]
        %v4053 = vld [vmem:[#allocation14 + $0x210] sm:$0xff]
        %v4054 = vld [vmem:[#allocation14 + $0x218] sm:$0xff]
        %v4055 = vld [vmem:[#allocation14 + $0x220] sm:$0xff]
        %v4056 = vld [vmem:[#allocation14 + $0x228] sm:$0xff]
        %v4057 = vld [vmem:[#allocation14 + $0x230] sm:$0xff]
        %v4058 = vld [vmem:[#allocation14 + $0x238] sm:$0xff]
        %v4059 = vld [vmem:[#allocation14 + $0x240] sm:$0xff]
        %v4060 = vld [vmem:[#allocation14 + $0x248] sm:$0xff]
        %v4061 = vld [vmem:[#allocation14 + $0x250] sm:$0xff]
        %v4062 = vld [vmem:[#allocation14 + $0x258] sm:$0xff]
        %v4063 = vld [vmem:[#allocation14 + $0x260] sm:$0xff]
        %v4064 = vld [vmem:[#allocation14 + $0x268] sm:$0xff]
        %v4065 = vld [vmem:[#allocation14 + $0x270] sm:$0xff]
        %v4066 = vld [vmem:[#allocation14 + $0x278] sm:$0xff]
        %v4067 = vld [vmem:[#allocation14 + $0x280] sm:$0xff]
        %v4068 = vld [vmem:[#allocation14 + $0x288] sm:$0xff]
        %v4069 = vld [vmem:[#allocation14 + $0x290] sm:$0xff]
        %v4070 = vld [vmem:[#allocation14 + $0x298] sm:$0xff]
        %v4071 = vld [vmem:[#allocation14 + $0x2a0] sm:$0xff]
        %v4072 = vld [vmem:[#allocation14 + $0x2a8] sm:$0xff]
        %v4073 = vld [vmem:[#allocation14 + $0x2b0] sm:$0xff]
        %v4074 = vld [vmem:[#allocation14 + $0x2b8] sm:$0xff]
        %v4075 = vld [vmem:[#allocation14 + $0x2c0] sm:$0xff]
        %v4076 = vld [vmem:[#allocation14 + $0x2c8] sm:$0xff]
        %v4077 = vld [vmem:[#allocation14 + $0x2d0] sm:$0xff]
        %v4078 = vld [vmem:[#allocation14 + $0x2d8] sm:$0xff]
        %v4079 = vld [vmem:[#allocation14 + $0x2e0] sm:$0xff]
        %v4080 = vld [vmem:[#allocation14 + $0x2e8] sm:$0xff]
        %v4081 = vld [vmem:[#allocation14 + $0x2f0] sm:$0xff]
        %v4082 = vld [vmem:[#allocation14 + $0x2f8] sm:$0xff]
        %v4083 = vld [vmem:[#allocation14 + $0x300] sm:$0xff]
        %v4084 = vld [vmem:[#allocation14 + $0x308] sm:$0xff]
        %v4085 = vld [vmem:[#allocation14 + $0x310] sm:$0xff]
        %v4086 = vld [vmem:[#allocation14 + $0x318] sm:$0xff]
        %v4087 = vld [vmem:[#allocation14 + $0x320] sm:$0xff]
        %v4088 = vld [vmem:[#allocation14 + $0x328] sm:$0xff]
        %v4089 = vld [vmem:[#allocation14 + $0x330] sm:$0xff]
        %v4090 = vld [vmem:[#allocation14 + $0x338] sm:$0xff]
        %v4091 = vld [vmem:[#allocation14 + $0x340] sm:$0xff]
        %v4092 = vld [vmem:[#allocation14 + $0x348] sm:$0xff]
        %v4093 = vld [vmem:[#allocation14 + $0x350] sm:$0xff]
        %v4094 = vld [vmem:[#allocation14 + $0x358] sm:$0xff]
        %v4095 = vld [vmem:[#allocation14 + $0x360] sm:$0xff]
        %v4096 = vld [vmem:[#allocation14 + $0x368] sm:$0xff]
        %v4097 = vld [vmem:[#allocation14 + $0x370] sm:$0xff]
        %v4098 = vld [vmem:[#allocation14 + $0x378] sm:$0xff]
        %v4100 = vsel %vm2116, %v3986, 0
        %4102 = vmatprep.subr.mxu0 %v3988
        %4103 = vmatpush1.msra.mxu0 %v3987
        %4104 = vmatprep.subr.mxu0 %v3990
        %4105 = vmatpush1.msra.mxu0 %v3989
        %4106 = vmatprep.subr.mxu0 %v3992
        %4107 = vmatpush1.msra.mxu0 %v3991
        %4108 = vmatprep.subr.mxu0 %v3994
        %4109 = vmatpush1.msra.mxu0 %v3993
        %4110 = vmatprep.subr.mxu0 %v3996
        %4111 = vmatpush1.msra.mxu0 %v3995
        %4112 = vmatprep.subr.mxu0 %v3998
        %4113 = vmatpush1.msra.mxu0 %v3997
        %4114 = vmatprep.subr.mxu0 %v4000
        %4115 = vmatpush1.msra.mxu0 %v3999
        %4116 = vmatprep.subr.mxu0 %v4002
        %4117 = vmatpush1.msra.mxu0 %v4001
        %4118 = vmatprep.subr.mxu0 %v4004
        %4119 = vmatpush1.msra.mxu0 %v4003
        %4120 = vmatprep.subr.mxu0 %v4006
        %4121 = vmatpush1.msra.mxu0 %v4005
        %4122 = vmatprep.subr.mxu0 %v4008
        %4123 = vmatpush1.msra.mxu0 %v4007
        %4124 = vmatprep.subr.mxu0 %v4010
        %4125 = vmatpush1.msra.mxu0 %v4009
        %4126 = vmatprep.subr.mxu0 %v4012
        %4127 = vmatpush1.msra.mxu0 %v4011
        %4128 = vmatprep.subr.mxu0 %v4014
        %4129 = vmatpush1.msra.mxu0 %v4013
        %4130 = vmatprep.subr.mxu0 %v4016
        %4131 = vmatpush1.msra.mxu0 %v4015
        %4132 = vmatprep.subr.mxu0 %v4018
        %4133 = vmatpush1.msra.mxu0 %v4017
        %4134 = vmatprep.subr.mxu0 %v4020
        %4135 = vmatpush1.msra.mxu0 %v4019
        %4136 = vmatprep.subr.mxu0 %v4022
        %4137 = vmatpush1.msra.mxu0 %v4021
        %4138 = vmatprep.subr.mxu0 %v4024
        %4139 = vmatpush1.msra.mxu0 %v4023
        %4140 = vmatprep.subr.mxu0 %v4026
        %4141 = vmatpush1.msra.mxu0 %v4025
        %4142 = vmatprep.subr.mxu0 %v4028
        %4143 = vmatpush1.msra.mxu0 %v4027
        %4144 = vmatprep.subr.mxu0 %v4030
        %4145 = vmatpush1.msra.mxu0 %v4029
        %4146 = vmatprep.subr.mxu0 %v4032
        %4147 = vmatpush1.msra.mxu0 %v4031
        %4148 = vmatprep.subr.mxu0 %v4034
        %4149 = vmatpush1.msra.mxu0 %v4033
        %4150 = vmatprep.subr.mxu0 %v4036
        %4151 = vmatpush1.msra.mxu0 %v4035
        %4152 = vmatprep.subr.mxu0 %v4038
        %4153 = vmatpush1.msra.mxu0 %v4037
        %4154 = vmatprep.subr.mxu0 %v4040
        %4155 = vmatpush1.msra.mxu0 %v4039
        %4156 = vmatprep.subr.mxu0 %v4042
        %4157 = vmatpush1.msra.mxu0 %v4041
        %4158 = vmatprep.subr.mxu0 %v4044
        %4159 = vmatpush1.msra.mxu0 %v4043
        %4160 = vmatprep.subr.mxu0 %v4046
        %4161 = vmatpush1.msra.mxu0 %v4045
        %4162 = vmatprep.subr.mxu0 %v4048
        %4163 = vmatpush1.msra.mxu0 %v4047
        %4164 = vmatprep.subr.mxu0 %v4050
        %4165 = vmatpush1.msra.mxu0 %v4049
        %4166 = vmatprep.mubr.f32.mxu0 %v3984
        %4167 = vmatmul.mubr.f32.gmra.mrb[0].mxu0 %v3983
        %v4168 = vpop.f32.mrb[0].mxu0
        %v4169 = vadd.f32 0.0, %v4168
        %v4170 = vpop.f32.mrb[0].mxu0
        %v4171 = vadd.f32 0.0, %v4170
        %4172 = vdwg.mxu0
        %4173 = vmatprep.subr.mxu0 %v4052
        %4174 = vmatpush1.msra.mxu0 %v4051
        %4175 = vmatprep.subr.mxu0 %v4054
        %4176 = vmatpush1.msra.mxu0 %v4053
        %4177 = vmatprep.subr.mxu0 %v4056
        %4178 = vmatpush1.msra.mxu0 %v4055
        %4179 = vmatprep.subr.mxu0 %v4058
        %4180 = vmatpush1.msra.mxu0 %v4057
        %4181 = vmatprep.subr.mxu0 %v4060
        %4182 = vmatpush1.msra.mxu0 %v4059
        %4183 = vmatprep.subr.mxu0 %v4062
        %4184 = vmatpush1.msra.mxu0 %v4061
        %4185 = vmatprep.subr.mxu0 %v4064
        %4186 = vmatpush1.msra.mxu0 %v4063
        %4187 = vmatprep.subr.mxu0 %v4066
        %4188 = vmatpush1.msra.mxu0 %v4065
        %4189 = vmatprep.subr.mxu0 %v4068
        %4190 = vmatpush1.msra.mxu0 %v4067
        %4191 = vmatprep.subr.mxu0 %v4070
        %4192 = vmatpush1.msra.mxu0 %v4069
        %4193 = vmatprep.subr.mxu0 %v4072
        %4194 = vmatpush1.msra.mxu0 %v4071
        %4195 = vmatprep.subr.mxu0 %v4074
        %4196 = vmatpush1.msra.mxu0 %v4073
        %4197 = vmatprep.subr.mxu0 %v4076
        %4198 = vmatpush1.msra.mxu0 %v4075
        %4199 = vmatprep.subr.mxu0 %v4078
        %4200 = vmatpush1.msra.mxu0 %v4077
        %4201 = vmatprep.subr.mxu0 %v4080
        %4202 = vmatpush1.msra.mxu0 %v4079
        %4203 = vmatprep.subr.mxu0 %v4082
        %4204 = vmatpush1.msra.mxu0 %v4081
        %4205 = vmatprep.subr.mxu0 %v4084
        %4206 = vmatpush1.msra.mxu0 %v4083
        %4207 = vmatprep.subr.mxu0 %v4086
        %4208 = vmatpush1.msra.mxu0 %v4085
        %4209 = vmatprep.subr.mxu0 %v4088
        %4210 = vmatpush1.msra.mxu0 %v4087
        %4211 = vmatprep.subr.mxu0 %v4090
        %4212 = vmatpush1.msra.mxu0 %v4089
        %4213 = vmatprep.subr.mxu0 %v4092
        %4214 = vmatpush1.msra.mxu0 %v4091
        %4215 = vmatprep.subr.mxu0 %v4094
        %4216 = vmatpush1.msra.mxu0 %v4093
        %4217 = vmatprep.subr.mxu0 %v4096
        %4218 = vmatpush1.msra.mxu0 %v4095
        %4219 = vmatprep.subr.mxu0 %v4098
        %4220 = vmatpush1.msra.mxu0 %v4097
        %4221 = vmatprep.subr.mxu0 0.0
        %4222 = vmatpush1.msra.mxu0 0.0
        %4223 = vmatprep.subr.mxu0 0.0
        %4224 = vmatpush1.msra.mxu0 0.0
        %4225 = vmatprep.subr.mxu0 0.0
        %4226 = vmatpush1.msra.mxu0 0.0
        %4227 = vmatprep.subr.mxu0 0.0
        %4228 = vmatpush1.msra.mxu0 0.0
        %4229 = vmatprep.subr.mxu0 0.0
        %4230 = vmatpush1.msra.mxu0 0.0
        %4231 = vmatprep.subr.mxu0 0.0
        %4232 = vmatpush1.msra.mxu0 0.0
        %4233 = vmatprep.subr.mxu0 0.0
        %4234 = vmatpush1.msra.mxu0 0.0
        %4235 = vmatprep.subr.mxu0 0.0
        %4236 = vmatpush1.msra.mxu0 0.0
        %4237 = vmatprep.mubr.f32.mxu0 %v4100
        %4238 = vmatmul.mubr.f32.gmra.mrb[0].mxu0 %v3985
        %v4239 = vpop.f32.mrb[0].mxu0
        %v4240 = vadd.f32 %v4169, %v4239
        %v4241 = vpop.f32.mrb[0].mxu0
        %v4242 = vadd.f32 %v4171, %v4241
        %4243 = vdwg.mxu0
        %s4244 = scalar_lea.vmem [#allocation14], 896
        %v4245 = vld [vmem:[%s4244] sm:$0xff]
        %v4246 = vld [vmem:[%s4244 + $0x8] sm:$0xff]
        %v4247 = vld [vmem:[%s4244 + $0x10] sm:$0xff]
        %v4248 = vld [vmem:[%s4244 + $0x18] sm:$0xff]
        %v4249 = vld [vmem:[%s4244 + $0x20] sm:$0xff]
        %v4250 = vld [vmem:[%s4244 + $0x28] sm:$0xff]
        %v4251 = vld [vmem:[%s4244 + $0x30] sm:$0xff]
        %v4252 = vld [vmem:[%s4244 + $0x38] sm:$0xff]
        %v4253 = vld [vmem:[%s4244 + $0x40] sm:$0xff]
        %v4254 = vld [vmem:[%s4244 + $0x48] sm:$0xff]
        %v4255 = vld [vmem:[%s4244 + $0x50] sm:$0xff]
        %v4256 = vld [vmem:[%s4244 + $0x58] sm:$0xff]
        %v4257 = vld [vmem:[%s4244 + $0x60] sm:$0xff]
        %v4258 = vld [vmem:[%s4244 + $0x68] sm:$0xff]
        %v4259 = vld [vmem:[%s4244 + $0x70] sm:$0xff]
        %v4260 = vld [vmem:[%s4244 + $0x78] sm:$0xff]
        %v4261 = vld [vmem:[%s4244 + $0x80] sm:$0xff]
        %v4262 = vld [vmem:[%s4244 + $0x88] sm:$0xff]
        %v4263 = vld [vmem:[%s4244 + $0x90] sm:$0xff]
        %v4264 = vld [vmem:[%s4244 + $0x98] sm:$0xff]
        %v4265 = vld [vmem:[%s4244 + $0xa0] sm:$0xff]
        %v4266 = vld [vmem:[%s4244 + $0xa8] sm:$0xff]
        %v4267 = vld [vmem:[%s4244 + $0xb0] sm:$0xff]
        %v4268 = vld [vmem:[%s4244 + $0xb8] sm:$0xff]
        %v4269 = vld [vmem:[%s4244 + $0xc0] sm:$0xff]
        %v4270 = vld [vmem:[%s4244 + $0xc8] sm:$0xff]
        %v4271 = vld [vmem:[%s4244 + $0xd0] sm:$0xff]
        %v4272 = vld [vmem:[%s4244 + $0xd8] sm:$0xff]
        %v4273 = vld [vmem:[%s4244 + $0xe0] sm:$0xff]
        %v4274 = vld [vmem:[%s4244 + $0xe8] sm:$0xff]
        %v4275 = vld [vmem:[%s4244 + $0xf0] sm:$0xff]
        %v4276 = vld [vmem:[%s4244 + $0xf8] sm:$0xff]
        %v4277 = vld [vmem:[%s4244 + $0x100] sm:$0xff]
        %v4278 = vld [vmem:[%s4244 + $0x108] sm:$0xff]
        %v4279 = vld [vmem:[%s4244 + $0x110] sm:$0xff]
        %v4280 = vld [vmem:[%s4244 + $0x118] sm:$0xff]
        %v4281 = vld [vmem:[%s4244 + $0x120] sm:$0xff]
        %v4282 = vld [vmem:[%s4244 + $0x128] sm:$0xff]
        %v4283 = vld [vmem:[%s4244 + $0x130] sm:$0xff]
        %v4284 = vld [vmem:[%s4244 + $0x138] sm:$0xff]
        %v4285 = vld [vmem:[%s4244 + $0x140] sm:$0xff]
        %v4286 = vld [vmem:[%s4244 + $0x148] sm:$0xff]
        %v4287 = vld [vmem:[%s4244 + $0x150] sm:$0xff]
        %v4288 = vld [vmem:[%s4244 + $0x158] sm:$0xff]
        %v4289 = vld [vmem:[%s4244 + $0x160] sm:$0xff]
        %v4290 = vld [vmem:[%s4244 + $0x168] sm:$0xff]
        %v4291 = vld [vmem:[%s4244 + $0x170] sm:$0xff]
        %v4292 = vld [vmem:[%s4244 + $0x178] sm:$0xff]
        %v4293 = vld [vmem:[%s4244 + $0x180] sm:$0xff]
        %v4294 = vld [vmem:[%s4244 + $0x188] sm:$0xff]
        %v4295 = vld [vmem:[%s4244 + $0x190] sm:$0xff]
        %v4296 = vld [vmem:[%s4244 + $0x198] sm:$0xff]
        %v4297 = vld [vmem:[%s4244 + $0x1a0] sm:$0xff]
        %v4298 = vld [vmem:[%s4244 + $0x1a8] sm:$0xff]
        %v4299 = vld [vmem:[%s4244 + $0x1b0] sm:$0xff]
        %v4300 = vld [vmem:[%s4244 + $0x1b8] sm:$0xff]
        %v4301 = vld [vmem:[%s4244 + $0x1c0] sm:$0xff]
        %v4302 = vld [vmem:[%s4244 + $0x1c8] sm:$0xff]
        %v4303 = vld [vmem:[%s4244 + $0x1d0] sm:$0xff]
        %v4304 = vld [vmem:[%s4244 + $0x1d8] sm:$0xff]
        %v4305 = vld [vmem:[%s4244 + $0x1e0] sm:$0xff]
        %v4306 = vld [vmem:[%s4244 + $0x1e8] sm:$0xff]
        %v4307 = vld [vmem:[%s4244 + $0x1f0] sm:$0xff]
        %v4308 = vld [vmem:[%s4244 + $0x1f8] sm:$0xff]
        %v4309 = vld [vmem:[%s4244 + $0x200] sm:$0xff]
        %v4310 = vld [vmem:[%s4244 + $0x208] sm:$0xff]
        %v4311 = vld [vmem:[%s4244 + $0x210] sm:$0xff]
        %v4312 = vld [vmem:[%s4244 + $0x218] sm:$0xff]
        %v4313 = vld [vmem:[%s4244 + $0x220] sm:$0xff]
        %v4314 = vld [vmem:[%s4244 + $0x228] sm:$0xff]
        %v4315 = vld [vmem:[%s4244 + $0x230] sm:$0xff]
        %v4316 = vld [vmem:[%s4244 + $0x238] sm:$0xff]
        %v4317 = vld [vmem:[%s4244 + $0x240] sm:$0xff]
        %v4318 = vld [vmem:[%s4244 + $0x248] sm:$0xff]
        %v4319 = vld [vmem:[%s4244 + $0x250] sm:$0xff]
        %v4320 = vld [vmem:[%s4244 + $0x258] sm:$0xff]
        %v4321 = vld [vmem:[%s4244 + $0x260] sm:$0xff]
        %v4322 = vld [vmem:[%s4244 + $0x268] sm:$0xff]
        %v4323 = vld [vmem:[%s4244 + $0x270] sm:$0xff]
        %v4324 = vld [vmem:[%s4244 + $0x278] sm:$0xff]
        %v4325 = vld [vmem:[%s4244 + $0x280] sm:$0xff]
        %v4326 = vld [vmem:[%s4244 + $0x288] sm:$0xff]
        %v4327 = vld [vmem:[%s4244 + $0x290] sm:$0xff]
        %v4328 = vld [vmem:[%s4244 + $0x298] sm:$0xff]
        %v4329 = vld [vmem:[%s4244 + $0x2a0] sm:$0xff]
        %v4330 = vld [vmem:[%s4244 + $0x2a8] sm:$0xff]
        %v4331 = vld [vmem:[%s4244 + $0x2b0] sm:$0xff]
        %v4332 = vld [vmem:[%s4244 + $0x2b8] sm:$0xff]
        %v4333 = vld [vmem:[%s4244 + $0x2c0] sm:$0xff]
        %v4334 = vld [vmem:[%s4244 + $0x2c8] sm:$0xff]
        %v4335 = vld [vmem:[%s4244 + $0x2d0] sm:$0xff]
        %v4336 = vld [vmem:[%s4244 + $0x2d8] sm:$0xff]
        %v4337 = vld [vmem:[%s4244 + $0x2e0] sm:$0xff]
        %v4338 = vld [vmem:[%s4244 + $0x2e8] sm:$0xff]
        %v4339 = vld [vmem:[%s4244 + $0x2f0] sm:$0xff]
        %v4340 = vld [vmem:[%s4244 + $0x2f8] sm:$0xff]
        %v4341 = vld [vmem:[%s4244 + $0x300] sm:$0xff]
        %v4342 = vld [vmem:[%s4244 + $0x308] sm:$0xff]
        %v4343 = vld [vmem:[%s4244 + $0x310] sm:$0xff]
        %v4344 = vld [vmem:[%s4244 + $0x318] sm:$0xff]
        %v4345 = vld [vmem:[%s4244 + $0x320] sm:$0xff]
        %v4346 = vld [vmem:[%s4244 + $0x328] sm:$0xff]
        %v4347 = vld [vmem:[%s4244 + $0x330] sm:$0xff]
        %v4348 = vld [vmem:[%s4244 + $0x338] sm:$0xff]
        %v4349 = vld [vmem:[%s4244 + $0x340] sm:$0xff]
        %v4350 = vld [vmem:[%s4244 + $0x348] sm:$0xff]
        %v4351 = vld [vmem:[%s4244 + $0x350] sm:$0xff]
        %v4352 = vld [vmem:[%s4244 + $0x358] sm:$0xff]
        %v4353 = vld [vmem:[%s4244 + $0x360] sm:$0xff]
        %v4354 = vld [vmem:[%s4244 + $0x368] sm:$0xff]
        %v4355 = vld [vmem:[%s4244 + $0x370] sm:$0xff]
        %v4356 = vld [vmem:[%s4244 + $0x378] sm:$0xff]
        %4357 = vmatprep.subr.mxu0 %v4246
        %4358 = vmatpush1.msra.mxu0 %v4245
        %4359 = vmatprep.subr.mxu0 %v4248
        %4360 = vmatpush1.msra.mxu0 %v4247
        %4361 = vmatprep.subr.mxu0 %v4250
        %4362 = vmatpush1.msra.mxu0 %v4249
        %4363 = vmatprep.subr.mxu0 %v4252
        %4364 = vmatpush1.msra.mxu0 %v4251
        %4365 = vmatprep.subr.mxu0 %v4254
        %4366 = vmatpush1.msra.mxu0 %v4253
        %4367 = vmatprep.subr.mxu0 %v4256
        %4368 = vmatpush1.msra.mxu0 %v4255
        %4369 = vmatprep.subr.mxu0 %v4258
        %4370 = vmatpush1.msra.mxu0 %v4257
        %4371 = vmatprep.subr.mxu0 %v4260
        %4372 = vmatpush1.msra.mxu0 %v4259
        %4373 = vmatprep.subr.mxu0 %v4262
        %4374 = vmatpush1.msra.mxu0 %v4261
        %4375 = vmatprep.subr.mxu0 %v4264
        %4376 = vmatpush1.msra.mxu0 %v4263
        %4377 = vmatprep.subr.mxu0 %v4266
        %4378 = vmatpush1.msra.mxu0 %v4265
        %4379 = vmatprep.subr.mxu0 %v4268
        %4380 = vmatpush1.msra.mxu0 %v4267
        %4381 = vmatprep.subr.mxu0 %v4270
        %4382 = vmatpush1.msra.mxu0 %v4269
        %4383 = vmatprep.subr.mxu0 %v4272
        %4384 = vmatpush1.msra.mxu0 %v4271
        %4385 = vmatprep.subr.mxu0 %v4274
        %4386 = vmatpush1.msra.mxu0 %v4273
        %4387 = vmatprep.subr.mxu0 %v4276
        %4388 = vmatpush1.msra.mxu0 %v4275
        %4389 = vmatprep.subr.mxu0 %v4278
        %4390 = vmatpush1.msra.mxu0 %v4277
        %4391 = vmatprep.subr.mxu0 %v4280
        %4392 = vmatpush1.msra.mxu0 %v4279
        %4393 = vmatprep.subr.mxu0 %v4282
        %4394 = vmatpush1.msra.mxu0 %v4281
        %4395 = vmatprep.subr.mxu0 %v4284
        %4396 = vmatpush1.msra.mxu0 %v4283
        %4397 = vmatprep.subr.mxu0 %v4286
        %4398 = vmatpush1.msra.mxu0 %v4285
        %4399 = vmatprep.subr.mxu0 %v4288
        %4400 = vmatpush1.msra.mxu0 %v4287
        %4401 = vmatprep.subr.mxu0 %v4290
        %4402 = vmatpush1.msra.mxu0 %v4289
        %4403 = vmatprep.subr.mxu0 %v4292
        %4404 = vmatpush1.msra.mxu0 %v4291
        %4405 = vmatprep.subr.mxu0 %v4294
        %4406 = vmatpush1.msra.mxu0 %v4293
        %4407 = vmatprep.subr.mxu0 %v4296
        %4408 = vmatpush1.msra.mxu0 %v4295
        %4409 = vmatprep.subr.mxu0 %v4298
        %4410 = vmatpush1.msra.mxu0 %v4297
        %4411 = vmatprep.subr.mxu0 %v4300
        %4412 = vmatpush1.msra.mxu0 %v4299
        %4413 = vmatprep.subr.mxu0 %v4302
        %4414 = vmatpush1.msra.mxu0 %v4301
        %4415 = vmatprep.subr.mxu0 %v4304
        %4416 = vmatpush1.msra.mxu0 %v4303
        %4417 = vmatprep.subr.mxu0 %v4306
        %4418 = vmatpush1.msra.mxu0 %v4305
        %4419 = vmatprep.subr.mxu0 %v4308
        %4420 = vmatpush1.msra.mxu0 %v4307
        %4421 = vmatprep.mubr.f32.mxu0 %v3984
        %4422 = vmatmul.mubr.f32.gmra.mrb[0].mxu0 %v3983
        %v4423 = vpop.f32.mrb[0].mxu0
        %v4424 = vadd.f32 0.0, %v4423
        %v4425 = vpop.f32.mrb[0].mxu0
        %v4426 = vadd.f32 0.0, %v4425
        %4427 = vdwg.mxu0
        %4428 = vmatprep.subr.mxu0 %v4310
        %4429 = vmatpush1.msra.mxu0 %v4309
        %4430 = vmatprep.subr.mxu0 %v4312
        %4431 = vmatpush1.msra.mxu0 %v4311
        %4432 = vmatprep.subr.mxu0 %v4314
        %4433 = vmatpush1.msra.mxu0 %v4313
        %4434 = vmatprep.subr.mxu0 %v4316
        %4435 = vmatpush1.msra.mxu0 %v4315
        %4436 = vmatprep.subr.mxu0 %v4318
        %4437 = vmatpush1.msra.mxu0 %v4317
        %4438 = vmatprep.subr.mxu0 %v4320
        %4439 = vmatpush1.msra.mxu0 %v4319
        %4440 = vmatprep.subr.mxu0 %v4322
        %4441 = vmatpush1.msra.mxu0 %v4321
        %4442 = vmatprep.subr.mxu0 %v4324
        %4443 = vmatpush1.msra.mxu0 %v4323
        %4444 = vmatprep.subr.mxu0 %v4326
        %4445 = vmatpush1.msra.mxu0 %v4325
        %4446 = vmatprep.subr.mxu0 %v4328
        %4447 = vmatpush1.msra.mxu0 %v4327
        %4448 = vmatprep.subr.mxu0 %v4330
        %4449 = vmatpush1.msra.mxu0 %v4329
        %4450 = vmatprep.subr.mxu0 %v4332
        %4451 = vmatpush1.msra.mxu0 %v4331
        %4452 = vmatprep.subr.mxu0 %v4334
        %4453 = vmatpush1.msra.mxu0 %v4333
        %4454 = vmatprep.subr.mxu0 %v4336
        %4455 = vmatpush1.msra.mxu0 %v4335
        %4456 = vmatprep.subr.mxu0 %v4338
        %4457 = vmatpush1.msra.mxu0 %v4337
        %4458 = vmatprep.subr.mxu0 %v4340
        %4459 = vmatpush1.msra.mxu0 %v4339
        %4460 = vmatprep.subr.mxu0 %v4342
        %4461 = vmatpush1.msra.mxu0 %v4341
        %4462 = vmatprep.subr.mxu0 %v4344
        %4463 = vmatpush1.msra.mxu0 %v4343
        %4464 = vmatprep.subr.mxu0 %v4346
        %4465 = vmatpush1.msra.mxu0 %v4345
        %4466 = vmatprep.subr.mxu0 %v4348
        %4467 = vmatpush1.msra.mxu0 %v4347
        %4468 = vmatprep.subr.mxu0 %v4350
        %4469 = vmatpush1.msra.mxu0 %v4349
        %4470 = vmatprep.subr.mxu0 %v4352
        %4471 = vmatpush1.msra.mxu0 %v4351
        %4472 = vmatprep.subr.mxu0 %v4354
        %4473 = vmatpush1.msra.mxu0 %v4353
        %4474 = vmatprep.subr.mxu0 %v4356
        %4475 = vmatpush1.msra.mxu0 %v4355
        %4476 = vmatprep.subr.mxu0 0.0
        %4477 = vmatpush1.msra.mxu0 0.0
        %4478 = vmatprep.subr.mxu0 0.0
        %4479 = vmatpush1.msra.mxu0 0.0
        %4480 = vmatprep.subr.mxu0 0.0
        %4481 = vmatpush1.msra.mxu0 0.0
        %4482 = vmatprep.subr.mxu0 0.0
        %4483 = vmatpush1.msra.mxu0 0.0
        %4484 = vmatprep.subr.mxu0 0.0
        %4485 = vmatpush1.msra.mxu0 0.0
        %4486 = vmatprep.subr.mxu0 0.0
        %4487 = vmatpush1.msra.mxu0 0.0
        %4488 = vmatprep.subr.mxu0 0.0
        %4489 = vmatpush1.msra.mxu0 0.0
        %4490 = vmatprep.subr.mxu0 0.0
        %4491 = vmatpush1.msra.mxu0 0.0
        %4492 = vmatprep.mubr.f32.mxu0 %v4100
        %4493 = vmatmul.mubr.f32.gmra.mrb[0].mxu0 %v3985
        %v4494 = vpop.f32.mrb[0].mxu0
        %v4495 = vadd.f32 %v4424, %v4494
        %v4496 = vpop.f32.mrb[0].mxu0
        %v4497 = vadd.f32 %v4426, %v4496
        %4498 = vdwg.mxu0
        %v4499 = vmax.f32 %v4240, %v4495
        %v4500 = vmax.f32 %v4242, %v4497
        %v4501 = vld [vmem:[#allocation19] sm:$0x1]
        %v4502 = vld [vmem:[#allocation16] sm:$0x1]
        %vm4503 = vcmask 56320
        %v4505 = vsel %vm4503, %v4502, 0
        %vm4507 = vcmask 1046528
        %v4509 = vsel %vm4507, %v4499, 0
        %v4512 = vsel %vm4507, %v4500, 0
        %4514 = vmatprep.subr.mxu0 %v4512
        %4515 = vmatpush1.msra.mxu0 %v4509
        %4516 = vmatprep.subr.mxu0 0.0
        %4517 = vmatpush1.msra.mxu0 0.0
        %4518 = vmatprep.subr.mxu0 0.0
        %4519 = vmatpush1.msra.mxu0 0.0
        %4520 = vmatprep.subr.mxu0 0.0
        %4521 = vmatpush1.msra.mxu0 0.0
        %4522 = vmatprep.subr.mxu0 0.0
        %4523 = vmatpush1.msra.mxu0 0.0
        %4524 = vmatprep.subr.mxu0 0.0
        %4525 = vmatpush1.msra.mxu0 0.0
        %4526 = vmatprep.subr.mxu0 0.0
        %4527 = vmatpush1.msra.mxu0 0.0
        %4528 = vmatprep.subr.mxu0 0.0
        %4529 = vmatpush1.msra.mxu0 0.0
        %4530 = vmatprep.subr.mxu0 0.0
        %4531 = vmatpush1.msra.mxu0 0.0
        %4532 = vmatprep.subr.mxu0 0.0
        %4533 = vmatpush1.msra.mxu0 0.0
        %4534 = vmatprep.subr.mxu0 0.0
        %4535 = vmatpush1.msra.mxu0 0.0
        %4536 = vmatprep.subr.mxu0 0.0
        %4537 = vmatpush1.msra.mxu0 0.0
        %4538 = vmatprep.subr.mxu0 0.0
        %4539 = vmatpush1.msra.mxu0 0.0
        %4540 = vmatprep.subr.mxu0 0.0
        %4541 = vmatpush1.msra.mxu0 0.0
        %4542 = vmatprep.subr.mxu0 0.0
        %4543 = vmatpush1.msra.mxu0 0.0
        %4544 = vmatprep.subr.mxu0 0.0
        %4545 = vmatpush1.msra.mxu0 0.0
        %4546 = vmatprep.subr.mxu0 0.0
        %4547 = vmatpush1.msra.mxu0 0.0
        %4548 = vmatprep.subr.mxu0 0.0
        %4549 = vmatpush1.msra.mxu0 0.0
        %4550 = vmatprep.subr.mxu0 0.0
        %4551 = vmatpush1.msra.mxu0 0.0
        %4552 = vmatprep.subr.mxu0 0.0
        %4553 = vmatpush1.msra.mxu0 0.0
        %4554 = vmatprep.subr.mxu0 0.0
        %4555 = vmatpush1.msra.mxu0 0.0
        %4556 = vmatprep.subr.mxu0 0.0
        %4557 = vmatpush1.msra.mxu0 0.0
        %4558 = vmatprep.subr.mxu0 0.0
        %4559 = vmatpush1.msra.mxu0 0.0
        %4560 = vmatprep.subr.mxu0 0.0
        %4561 = vmatpush1.msra.mxu0 0.0
        %4562 = vmatprep.subr.mxu0 0.0
        %4563 = vmatpush1.msra.mxu0 0.0
        %4564 = vmatprep.subr.mxu0 0.0
        %4565 = vmatpush1.msra.mxu0 0.0
        %4566 = vmatprep.subr.mxu0 0.0
        %4567 = vmatpush1.msra.mxu0 0.0
        %4568 = vmatprep.subr.mxu0 0.0
        %4569 = vmatpush1.msra.mxu0 0.0
        %4570 = vmatprep.subr.mxu0 0.0
        %4571 = vmatpush1.msra.mxu0 0.0
        %4572 = vmatprep.subr.mxu0 0.0
        %4573 = vmatpush1.msra.mxu0 0.0
        %4574 = vmatprep.subr.mxu0 0.0
        %4575 = vmatpush1.msra.mxu0 0.0
        %4576 = vmatprep.subr.mxu0 0.0
        %4577 = vmatpush1.msra.mxu0 0.0
        %4578 = vmatprep.mubr.f32.mxu0 0.0
        %4579 = vmatmul.mubr.f32.gmra.mrb[0].mxu0 %v4505
        %v4580 = vpop.f32.mrb[0].mxu0
        %v4581 = vadd.f32 0.0, %v4580
        %v4582 = vpop.f32.mrb[0].mxu0
        %v4583 = vadd.f32 0.0, %v4582
        %4584 = vdwg.mxu0
        %v4585 = vld [vmem:[#allocation17] sm:$0xff]
        %v4586 = vld [vmem:[#allocation17 + $0x8] sm:$0xff]
        %v4587 = vld [vmem:[#allocation17 + $0x10] sm:$0xff]
        %v4588 = vld [vmem:[#allocation17 + $0x18] sm:$0xff]
        %v4589 = vld [vmem:[#allocation17 + $0x20] sm:$0xff]
        %v4590 = vld [vmem:[#allocation17 + $0x28] sm:$0xff]
        %v4591 = vld [vmem:[#allocation17 + $0x30] sm:$0xff]
        %v4592 = vld [vmem:[#allocation17 + $0x38] sm:$0xff]
        %v4593 = vld [vmem:[#allocation17 + $0x40] sm:$0xff]
        %v4594 = vld [vmem:[#allocation17 + $0x48] sm:$0xff]
        %v4595 = vld [vmem:[#allocation17 + $0x50] sm:$0xff]
        %v4596 = vld [vmem:[#allocation17 + $0x58] sm:$0xff]
        %v4597 = vld [vmem:[#allocation17 + $0x60] sm:$0xff]
        %v4598 = vld [vmem:[#allocation17 + $0x68] sm:$0xff]
        %v4599 = vld [vmem:[#allocation17 + $0x70] sm:$0xff]
        %v4600 = vld [vmem:[#allocation17 + $0x78] sm:$0xff]
        %v4601 = vld [vmem:[#allocation17 + $0x80] sm:$0xff]
        %v4602 = vld [vmem:[#allocation17 + $0x88] sm:$0xff]
        %v4603 = vld [vmem:[#allocation17 + $0x90] sm:$0xff]
        %v4604 = vld [vmem:[#allocation17 + $0x98] sm:$0xff]
        %v4605 = vld [vmem:[#allocation17 + $0xa0] sm:$0xff]
        %v4606 = vld [vmem:[#allocation17 + $0xa8] sm:$0xff]
        %v4607 = vld [vmem:[#allocation17 + $0xb0] sm:$0xff]
        %v4608 = vld [vmem:[#allocation17 + $0xb8] sm:$0xff]
        %v4609 = vld [vmem:[#allocation17 + $0xc0] sm:$0xff]
        %v4610 = vld [vmem:[#allocation17 + $0xc8] sm:$0xff]
        %v4611 = vld [vmem:[#allocation17 + $0xd0] sm:$0xff]
        %v4612 = vld [vmem:[#allocation17 + $0xd8] sm:$0xff]
        %v4614 = vsel %vm2952, %v4583, 0
        %4616 = vmatprep.subr.mxu0 0.0
        %4617 = vmatpush1.msra.mxu0 %v4585
        %4618 = vmatprep.subr.mxu0 0.0
        %4619 = vmatpush1.msra.mxu0 %v4586
        %4620 = vmatprep.subr.mxu0 0.0
        %4621 = vmatpush1.msra.mxu0 %v4587
        %4622 = vmatprep.subr.mxu0 0.0
        %4623 = vmatpush1.msra.mxu0 %v4588
        %4624 = vmatprep.subr.mxu0 0.0
        %4625 = vmatpush1.msra.mxu0 %v4589
        %4626 = vmatprep.subr.mxu0 0.0
        %4627 = vmatpush1.msra.mxu0 %v4590
        %4628 = vmatprep.subr.mxu0 0.0
        %4629 = vmatpush1.msra.mxu0 %v4591
        %4630 = vmatprep.subr.mxu0 0.0
        %4631 = vmatpush1.msra.mxu0 %v4592
        %4632 = vmatprep.subr.mxu0 0.0
        %4633 = vmatpush1.msra.mxu0 %v4593
        %4634 = vmatprep.subr.mxu0 0.0
        %4635 = vmatpush1.msra.mxu0 %v4594
        %4636 = vmatprep.subr.mxu0 0.0
        %4637 = vmatpush1.msra.mxu0 %v4595
        %4638 = vmatprep.subr.mxu0 0.0
        %4639 = vmatpush1.msra.mxu0 %v4596
        %4640 = vmatprep.subr.mxu0 0.0
        %4641 = vmatpush1.msra.mxu0 %v4597
        %4642 = vmatprep.subr.mxu0 0.0
        %4643 = vmatpush1.msra.mxu0 %v4598
        %4644 = vmatprep.subr.mxu0 0.0
        %4645 = vmatpush1.msra.mxu0 %v4599
        %4646 = vmatprep.subr.mxu0 0.0
        %4647 = vmatpush1.msra.mxu0 %v4600
        %4648 = vmatprep.subr.mxu0 0.0
        %4649 = vmatpush1.msra.mxu0 %v4601
        %4650 = vmatprep.subr.mxu0 0.0
        %4651 = vmatpush1.msra.mxu0 %v4602
        %4652 = vmatprep.subr.mxu0 0.0
        %4653 = vmatpush1.msra.mxu0 %v4603
        %4654 = vmatprep.subr.mxu0 0.0
        %4655 = vmatpush1.msra.mxu0 %v4604
        %4656 = vmatprep.subr.mxu0 0.0
        %4657 = vmatpush1.msra.mxu0 %v4605
        %4658 = vmatprep.subr.mxu0 0.0
        %4659 = vmatpush1.msra.mxu0 %v4606
        %4660 = vmatprep.subr.mxu0 0.0
        %4661 = vmatpush1.msra.mxu0 %v4607
        %4662 = vmatprep.subr.mxu0 0.0
        %4663 = vmatpush1.msra.mxu0 %v4608
        %4664 = vmatprep.subr.mxu0 0.0
        %4665 = vmatpush1.msra.mxu0 %v4609
        %4666 = vmatprep.subr.mxu0 0.0
        %4667 = vmatpush1.msra.mxu0 %v4610
        %4668 = vmatprep.subr.mxu0 0.0
        %4669 = vmatpush1.msra.mxu0 %v4611
        %4670 = vmatprep.subr.mxu0 0.0
        %4671 = vmatpush1.msra.mxu0 %v4612
        %4672 = vmatprep.subr.mxu0 0.0
        %4673 = vmatpush1.msra.mxu0 0.0
        %4674 = vmatprep.subr.mxu0 0.0
        %4675 = vmatpush1.msra.mxu0 0.0
        %4676 = vmatprep.subr.mxu0 0.0
        %4677 = vmatpush1.msra.mxu0 0.0
        %4678 = vmatprep.subr.mxu0 0.0
        %4679 = vmatpush1.msra.mxu0 0.0
        %4680 = vmatprep.mubr.f32.mxu0 %v4614
        %4681 = vmatmul.mubr.f32.gmra.mrb[0].mxu0 %v4581
        %v4682 = vpop.f32.mrb[0].mxu0
        %v4683 = vadd.f32 0.0, %v4682
        %v4684 = vpop.f32.mrb[0].mxu0
        %4685 = vdwg.mxu0
        %v4686 = vadd.f32 %v4501, %v4683
        %s4687 = scalar_lea.vmem [#allocation16], 1
        %v4688 = vld [vmem:[%s4687] sm:$0x1]
        %v4690 = vsel %vm4503, %v4688, 0
        %4692 = vmatprep.subr.mxu0 %v4512
        %4693 = vmatpush1.msra.mxu0 %v4509
        %4694 = vmatprep.subr.mxu0 0.0
        %4695 = vmatpush1.msra.mxu0 0.0
        %4696 = vmatprep.subr.mxu0 0.0
        %4697 = vmatpush1.msra.mxu0 0.0
        %4698 = vmatprep.subr.mxu0 0.0
        %4699 = vmatpush1.msra.mxu0 0.0
        %4700 = vmatprep.subr.mxu0 0.0
        %4701 = vmatpush1.msra.mxu0 0.0
        %4702 = vmatprep.subr.mxu0 0.0
        %4703 = vmatpush1.msra.mxu0 0.0
        %4704 = vmatprep.subr.mxu0 0.0
        %4705 = vmatpush1.msra.mxu0 0.0
        %4706 = vmatprep.subr.mxu0 0.0
        %4707 = vmatpush1.msra.mxu0 0.0
        %4708 = vmatprep.subr.mxu0 0.0
        %4709 = vmatpush1.msra.mxu0 0.0
        %4710 = vmatprep.subr.mxu0 0.0
        %4711 = vmatpush1.msra.mxu0 0.0
        %4712 = vmatprep.subr.mxu0 0.0
        %4713 = vmatpush1.msra.mxu0 0.0
        %4714 = vmatprep.subr.mxu0 0.0
        %4715 = vmatpush1.msra.mxu0 0.0
        %4716 = vmatprep.subr.mxu0 0.0
        %4717 = vmatpush1.msra.mxu0 0.0
        %4718 = vmatprep.subr.mxu0 0.0
        %4719 = vmatpush1.msra.mxu0 0.0
        %4720 = vmatprep.subr.mxu0 0.0
        %4721 = vmatpush1.msra.mxu0 0.0
        %4722 = vmatprep.subr.mxu0 0.0
        %4723 = vmatpush1.msra.mxu0 0.0
        %4724 = vmatprep.subr.mxu0 0.0
        %4725 = vmatpush1.msra.mxu0 0.0
        %4726 = vmatprep.subr.mxu0 0.0
        %4727 = vmatpush1.msra.mxu0 0.0
        %4728 = vmatprep.subr.mxu0 0.0
        %4729 = vmatpush1.msra.mxu0 0.0
        %4730 = vmatprep.subr.mxu0 0.0
        %4731 = vmatpush1.msra.mxu0 0.0
        %4732 = vmatprep.subr.mxu0 0.0
        %4733 = vmatpush1.msra.mxu0 0.0
        %4734 = vmatprep.subr.mxu0 0.0
        %4735 = vmatpush1.msra.mxu0 0.0
        %4736 = vmatprep.subr.mxu0 0.0
        %4737 = vmatpush1.msra.mxu0 0.0
        %4738 = vmatprep.subr.mxu0 0.0
        %4739 = vmatpush1.msra.mxu0 0.0
        %4740 = vmatprep.subr.mxu0 0.0
        %4741 = vmatpush1.msra.mxu0 0.0
        %4742 = vmatprep.subr.mxu0 0.0
        %4743 = vmatpush1.msra.mxu0 0.0
        %4744 = vmatprep.subr.mxu0 0.0
        %4745 = vmatpush1.msra.mxu0 0.0
        %4746 = vmatprep.subr.mxu0 0.0
        %4747 = vmatpush1.msra.mxu0 0.0
        %4748 = vmatprep.subr.mxu0 0.0
        %4749 = vmatpush1.msra.mxu0 0.0
        %4750 = vmatprep.subr.mxu0 0.0
        %4751 = vmatpush1.msra.mxu0 0.0
        %4752 = vmatprep.subr.mxu0 0.0
        %4753 = vmatpush1.msra.mxu0 0.0
        %4754 = vmatprep.subr.mxu0 0.0
        %4755 = vmatpush1.msra.mxu0 0.0
        %4756 = vmatprep.mubr.f32.mxu0 0.0
        %4757 = vmatmul.mubr.f32.gmra.mrb[0].mxu0 %v4690
        %v4758 = vpop.f32.mrb[0].mxu0
        %v4759 = vadd.f32 0.0, %v4758
        %v4760 = vpop.f32.mrb[0].mxu0
        %v4761 = vadd.f32 0.0, %v4760
        %4762 = vdwg.mxu0
        %s4763 = scalar_lea.vmem [#allocation17], 224
        %v4764 = vld [vmem:[%s4763] sm:$0xff]
        %v4765 = vld [vmem:[%s4763 + $0x8] sm:$0xff]
        %v4766 = vld [vmem:[%s4763 + $0x10] sm:$0xff]
        %v4767 = vld [vmem:[%s4763 + $0x18] sm:$0xff]
        %v4768 = vld [vmem:[%s4763 + $0x20] sm:$0xff]
        %v4769 = vld [vmem:[%s4763 + $0x28] sm:$0xff]
        %v4770 = vld [vmem:[%s4763 + $0x30] sm:$0xff]
        %v4771 = vld [vmem:[%s4763 + $0x38] sm:$0xff]
        %v4772 = vld [vmem:[%s4763 + $0x40] sm:$0xff]
        %v4773 = vld [vmem:[%s4763 + $0x48] sm:$0xff]
        %v4774 = vld [vmem:[%s4763 + $0x50] sm:$0xff]
        %v4775 = vld [vmem:[%s4763 + $0x58] sm:$0xff]
        %v4776 = vld [vmem:[%s4763 + $0x60] sm:$0xff]
        %v4777 = vld [vmem:[%s4763 + $0x68] sm:$0xff]
        %v4778 = vld [vmem:[%s4763 + $0x70] sm:$0xff]
        %v4779 = vld [vmem:[%s4763 + $0x78] sm:$0xff]
        %v4780 = vld [vmem:[%s4763 + $0x80] sm:$0xff]
        %v4781 = vld [vmem:[%s4763 + $0x88] sm:$0xff]
        %v4782 = vld [vmem:[%s4763 + $0x90] sm:$0xff]
        %v4783 = vld [vmem:[%s4763 + $0x98] sm:$0xff]
        %v4784 = vld [vmem:[%s4763 + $0xa0] sm:$0xff]
        %v4785 = vld [vmem:[%s4763 + $0xa8] sm:$0xff]
        %v4786 = vld [vmem:[%s4763 + $0xb0] sm:$0xff]
        %v4787 = vld [vmem:[%s4763 + $0xb8] sm:$0xff]
        %v4788 = vld [vmem:[%s4763 + $0xc0] sm:$0xff]
        %v4789 = vld [vmem:[%s4763 + $0xc8] sm:$0xff]
        %v4790 = vld [vmem:[%s4763 + $0xd0] sm:$0xff]
        %v4791 = vld [vmem:[%s4763 + $0xd8] sm:$0xff]
        %v4793 = vsel %vm2952, %v4761, 0
        %4795 = vmatprep.subr.mxu0 0.0
        %4796 = vmatpush1.msra.mxu0 %v4764
        %4797 = vmatprep.subr.mxu0 0.0
        %4798 = vmatpush1.msra.mxu0 %v4765
        %4799 = vmatprep.subr.mxu0 0.0
        %4800 = vmatpush1.msra.mxu0 %v4766
        %4801 = vmatprep.subr.mxu0 0.0
        %4802 = vmatpush1.msra.mxu0 %v4767
        %4803 = vmatprep.subr.mxu0 0.0
        %4804 = vmatpush1.msra.mxu0 %v4768
        %4805 = vmatprep.subr.mxu0 0.0
        %4806 = vmatpush1.msra.mxu0 %v4769
        %4807 = vmatprep.subr.mxu0 0.0
        %4808 = vmatpush1.msra.mxu0 %v4770
        %4809 = vmatprep.subr.mxu0 0.0
        %4810 = vmatpush1.msra.mxu0 %v4771
        %4811 = vmatprep.subr.mxu0 0.0
        %4812 = vmatpush1.msra.mxu0 %v4772
        %4813 = vmatprep.subr.mxu0 0.0
        %4814 = vmatpush1.msra.mxu0 %v4773
        %4815 = vmatprep.subr.mxu0 0.0
        %4816 = vmatpush1.msra.mxu0 %v4774
        %4817 = vmatprep.subr.mxu0 0.0
        %4818 = vmatpush1.msra.mxu0 %v4775
        %4819 = vmatprep.subr.mxu0 0.0
        %4820 = vmatpush1.msra.mxu0 %v4776
        %4821 = vmatprep.subr.mxu0 0.0
        %4822 = vmatpush1.msra.mxu0 %v4777
        %4823 = vmatprep.subr.mxu0 0.0
        %4824 = vmatpush1.msra.mxu0 %v4778
        %4825 = vmatprep.subr.mxu0 0.0
        %4826 = vmatpush1.msra.mxu0 %v4779
        %4827 = vmatprep.subr.mxu0 0.0
        %4828 = vmatpush1.msra.mxu0 %v4780
        %4829 = vmatprep.subr.mxu0 0.0
        %4830 = vmatpush1.msra.mxu0 %v4781
        %4831 = vmatprep.subr.mxu0 0.0
        %4832 = vmatpush1.msra.mxu0 %v4782
        %4833 = vmatprep.subr.mxu0 0.0
        %4834 = vmatpush1.msra.mxu0 %v4783
        %4835 = vmatprep.subr.mxu0 0.0
        %4836 = vmatpush1.msra.mxu0 %v4784
        %4837 = vmatprep.subr.mxu0 0.0
        %4838 = vmatpush1.msra.mxu0 %v4785
        %4839 = vmatprep.subr.mxu0 0.0
        %4840 = vmatpush1.msra.mxu0 %v4786
        %4841 = vmatprep.subr.mxu0 0.0
        %4842 = vmatpush1.msra.mxu0 %v4787
        %4843 = vmatprep.subr.mxu0 0.0
        %4844 = vmatpush1.msra.mxu0 %v4788
        %4845 = vmatprep.subr.mxu0 0.0
        %4846 = vmatpush1.msra.mxu0 %v4789
        %4847 = vmatprep.subr.mxu0 0.0
        %4848 = vmatpush1.msra.mxu0 %v4790
        %4849 = vmatprep.subr.mxu0 0.0
        %4850 = vmatpush1.msra.mxu0 %v4791
        %4851 = vmatprep.subr.mxu0 0.0
        %4852 = vmatpush1.msra.mxu0 0.0
        %4853 = vmatprep.subr.mxu0 0.0
        %4854 = vmatpush1.msra.mxu0 0.0
        %4855 = vmatprep.subr.mxu0 0.0
        %4856 = vmatpush1.msra.mxu0 0.0
        %4857 = vmatprep.subr.mxu0 0.0
        %4858 = vmatpush1.msra.mxu0 0.0
        %4859 = vmatprep.mubr.f32.mxu0 %v4793
        %4860 = vmatmul.mubr.f32.gmra.mrb[0].mxu0 %v4759
        %v4861 = vpop.f32.mrb[0].mxu0
        %v4862 = vadd.f32 0.0, %v4861
        %v4863 = vpop.f32.mrb[0].mxu0
        %4864 = vdwg.mxu0
        %v4865 = vadd.f32 %v4686, %v4862
        %s4866 = scalar_lea.vmem [#allocation16], 2
        %v4867 = vld [vmem:[%s4866] sm:$0x1]
        %v4869 = vsel %vm4503, %v4867, 0
        %4871 = vmatprep.subr.mxu0 %v4512
        %4872 = vmatpush1.msra.mxu0 %v4509
        %4873 = vmatprep.subr.mxu0 0.0
        %4874 = vmatpush1.msra.mxu0 0.0
        %4875 = vmatprep.subr.mxu0 0.0
        %4876 = vmatpush1.msra.mxu0 0.0
        %4877 = vmatprep.subr.mxu0 0.0
        %4878 = vmatpush1.msra.mxu0 0.0
        %4879 = vmatprep.subr.mxu0 0.0
        %4880 = vmatpush1.msra.mxu0 0.0
        %4881 = vmatprep.subr.mxu0 0.0
        %4882 = vmatpush1.msra.mxu0 0.0
        %4883 = vmatprep.subr.mxu0 0.0
        %4884 = vmatpush1.msra.mxu0 0.0
        %4885 = vmatprep.subr.mxu0 0.0
        %4886 = vmatpush1.msra.mxu0 0.0
        %4887 = vmatprep.subr.mxu0 0.0
        %4888 = vmatpush1.msra.mxu0 0.0
        %4889 = vmatprep.subr.mxu0 0.0
        %4890 = vmatpush1.msra.mxu0 0.0
        %4891 = vmatprep.subr.mxu0 0.0
        %4892 = vmatpush1.msra.mxu0 0.0
        %4893 = vmatprep.subr.mxu0 0.0
        %4894 = vmatpush1.msra.mxu0 0.0
        %4895 = vmatprep.subr.mxu0 0.0
        %4896 = vmatpush1.msra.mxu0 0.0
        %4897 = vmatprep.subr.mxu0 0.0
        %4898 = vmatpush1.msra.mxu0 0.0
        %4899 = vmatprep.subr.mxu0 0.0
        %4900 = vmatpush1.msra.mxu0 0.0
        %4901 = vmatprep.subr.mxu0 0.0
        %4902 = vmatpush1.msra.mxu0 0.0
        %4903 = vmatprep.subr.mxu0 0.0
        %4904 = vmatpush1.msra.mxu0 0.0
        %4905 = vmatprep.subr.mxu0 0.0
        %4906 = vmatpush1.msra.mxu0 0.0
        %4907 = vmatprep.subr.mxu0 0.0
        %4908 = vmatpush1.msra.mxu0 0.0
        %4909 = vmatprep.subr.mxu0 0.0
        %4910 = vmatpush1.msra.mxu0 0.0
        %4911 = vmatprep.subr.mxu0 0.0
        %4912 = vmatpush1.msra.mxu0 0.0
        %4913 = vmatprep.subr.mxu0 0.0
        %4914 = vmatpush1.msra.mxu0 0.0
        %4915 = vmatprep.subr.mxu0 0.0
        %4916 = vmatpush1.msra.mxu0 0.0
        %4917 = vmatprep.subr.mxu0 0.0
        %4918 = vmatpush1.msra.mxu0 0.0
        %4919 = vmatprep.subr.mxu0 0.0
        %4920 = vmatpush1.msra.mxu0 0.0
        %4921 = vmatprep.subr.mxu0 0.0
        %4922 = vmatpush1.msra.mxu0 0.0
        %4923 = vmatprep.subr.mxu0 0.0
        %4924 = vmatpush1.msra.mxu0 0.0
        %4925 = vmatprep.subr.mxu0 0.0
        %4926 = vmatpush1.msra.mxu0 0.0
        %4927 = vmatprep.subr.mxu0 0.0
        %4928 = vmatpush1.msra.mxu0 0.0
        %4929 = vmatprep.subr.mxu0 0.0
        %4930 = vmatpush1.msra.mxu0 0.0
        %4931 = vmatprep.subr.mxu0 0.0
        %4932 = vmatpush1.msra.mxu0 0.0
        %4933 = vmatprep.subr.mxu0 0.0
        %4934 = vmatpush1.msra.mxu0 0.0
        %4935 = vmatprep.mubr.f32.mxu0 0.0
        %4936 = vmatmul.mubr.f32.gmra.mrb[0].mxu0 %v4869
        %v4937 = vpop.f32.mrb[0].mxu0
        %v4938 = vadd.f32 0.0, %v4937
        %v4939 = vpop.f32.mrb[0].mxu0
        %v4940 = vadd.f32 0.0, %v4939
        %4941 = vdwg.mxu0
        %s4942 = scalar_lea.vmem [#allocation17], 448
        %v4943 = vld [vmem:[%s4942] sm:$0xff]
        %v4944 = vld [vmem:[%s4942 + $0x8] sm:$0xff]
        %v4945 = vld [vmem:[%s4942 + $0x10] sm:$0xff]
        %v4946 = vld [vmem:[%s4942 + $0x18] sm:$0xff]
        %v4947 = vld [vmem:[%s4942 + $0x20] sm:$0xff]
        %v4948 = vld [vmem:[%s4942 + $0x28] sm:$0xff]
        %v4949 = vld [vmem:[%s4942 + $0x30] sm:$0xff]
        %v4950 = vld [vmem:[%s4942 + $0x38] sm:$0xff]
        %v4951 = vld [vmem:[%s4942 + $0x40] sm:$0xff]
        %v4952 = vld [vmem:[%s4942 + $0x48] sm:$0xff]
        %v4953 = vld [vmem:[%s4942 + $0x50] sm:$0xff]
        %v4954 = vld [vmem:[%s4942 + $0x58] sm:$0xff]
        %v4955 = vld [vmem:[%s4942 + $0x60] sm:$0xff]
        %v4956 = vld [vmem:[%s4942 + $0x68] sm:$0xff]
        %v4957 = vld [vmem:[%s4942 + $0x70] sm:$0xff]
        %v4958 = vld [vmem:[%s4942 + $0x78] sm:$0xff]
        %v4959 = vld [vmem:[%s4942 + $0x80] sm:$0xff]
        %v4960 = vld [vmem:[%s4942 + $0x88] sm:$0xff]
        %v4961 = vld [vmem:[%s4942 + $0x90] sm:$0xff]
        %v4962 = vld [vmem:[%s4942 + $0x98] sm:$0xff]
        %v4963 = vld [vmem:[%s4942 + $0xa0] sm:$0xff]
        %v4964 = vld [vmem:[%s4942 + $0xa8] sm:$0xff]
        %v4965 = vld [vmem:[%s4942 + $0xb0] sm:$0xff]
        %v4966 = vld [vmem:[%s4942 + $0xb8] sm:$0xff]
        %v4967 = vld [vmem:[%s4942 + $0xc0] sm:$0xff]
        %v4968 = vld [vmem:[%s4942 + $0xc8] sm:$0xff]
        %v4969 = vld [vmem:[%s4942 + $0xd0] sm:$0xff]
        %v4970 = vld [vmem:[%s4942 + $0xd8] sm:$0xff]
        %v4972 = vsel %vm2952, %v4940, 0
        %4974 = vmatprep.subr.mxu0 0.0
        %4975 = vmatpush1.msra.mxu0 %v4943
        %4976 = vmatprep.subr.mxu0 0.0
        %4977 = vmatpush1.msra.mxu0 %v4944
        %4978 = vmatprep.subr.mxu0 0.0
        %4979 = vmatpush1.msra.mxu0 %v4945
        %4980 = vmatprep.subr.mxu0 0.0
        %4981 = vmatpush1.msra.mxu0 %v4946
        %4982 = vmatprep.subr.mxu0 0.0
        %4983 = vmatpush1.msra.mxu0 %v4947
        %4984 = vmatprep.subr.mxu0 0.0
        %4985 = vmatpush1.msra.mxu0 %v4948
        %4986 = vmatprep.subr.mxu0 0.0
        %4987 = vmatpush1.msra.mxu0 %v4949
        %4988 = vmatprep.subr.mxu0 0.0
        %4989 = vmatpush1.msra.mxu0 %v4950
        %4990 = vmatprep.subr.mxu0 0.0
        %4991 = vmatpush1.msra.mxu0 %v4951
        %4992 = vmatprep.subr.mxu0 0.0
        %4993 = vmatpush1.msra.mxu0 %v4952
        %4994 = vmatprep.subr.mxu0 0.0
        %4995 = vmatpush1.msra.mxu0 %v4953
        %4996 = vmatprep.subr.mxu0 0.0
        %4997 = vmatpush1.msra.mxu0 %v4954
        %4998 = vmatprep.subr.mxu0 0.0
        %4999 = vmatpush1.msra.mxu0 %v4955
        %5000 = vmatprep.subr.mxu0 0.0
        %5001 = vmatpush1.msra.mxu0 %v4956
        %5002 = vmatprep.subr.mxu0 0.0
        %5003 = vmatpush1.msra.mxu0 %v4957
        %5004 = vmatprep.subr.mxu0 0.0
        %5005 = vmatpush1.msra.mxu0 %v4958
        %5006 = vmatprep.subr.mxu0 0.0
        %5007 = vmatpush1.msra.mxu0 %v4959
        %5008 = vmatprep.subr.mxu0 0.0
        %5009 = vmatpush1.msra.mxu0 %v4960
        %5010 = vmatprep.subr.mxu0 0.0
        %5011 = vmatpush1.msra.mxu0 %v4961
        %5012 = vmatprep.subr.mxu0 0.0
        %5013 = vmatpush1.msra.mxu0 %v4962
        %5014 = vmatprep.subr.mxu0 0.0
        %5015 = vmatpush1.msra.mxu0 %v4963
        %5016 = vmatprep.subr.mxu0 0.0
        %5017 = vmatpush1.msra.mxu0 %v4964
        %5018 = vmatprep.subr.mxu0 0.0
        %5019 = vmatpush1.msra.mxu0 %v4965
        %5020 = vmatprep.subr.mxu0 0.0
        %5021 = vmatpush1.msra.mxu0 %v4966
        %5022 = vmatprep.subr.mxu0 0.0
        %5023 = vmatpush1.msra.mxu0 %v4967
        %5024 = vmatprep.subr.mxu0 0.0
        %5025 = vmatpush1.msra.mxu0 %v4968
        %5026 = vmatprep.subr.mxu0 0.0
        %5027 = vmatpush1.msra.mxu0 %v4969
        %5028 = vmatprep.subr.mxu0 0.0
        %5029 = vmatpush1.msra.mxu0 %v4970
        %5030 = vmatprep.subr.mxu0 0.0
        %5031 = vmatpush1.msra.mxu0 0.0
        %5032 = vmatprep.subr.mxu0 0.0
        %5033 = vmatpush1.msra.mxu0 0.0
        %5034 = vmatprep.subr.mxu0 0.0
        %5035 = vmatpush1.msra.mxu0 0.0
        %5036 = vmatprep.subr.mxu0 0.0
        %5037 = vmatpush1.msra.mxu0 0.0
        %5038 = vmatprep.mubr.f32.mxu0 %v4972
        %5039 = vmatmul.mubr.f32.gmra.mrb[0].mxu0 %v4938
        %v5040 = vpop.f32.mrb[0].mxu0
        %v5041 = vadd.f32 0.0, %v5040
        %v5042 = vpop.f32.mrb[0].mxu0
        %5043 = vdwg.mxu0
        %v5044 = vadd.f32 %v4865, %v5041
        %s5045 = scalar_lea.vmem [#allocation16], 3
        %v5046 = vld [vmem:[%s5045] sm:$0x1]
        %v5048 = vsel %vm4503, %v5046, 0
        %5050 = vmatprep.subr.mxu0 %v4512
        %5051 = vmatpush1.msra.mxu0 %v4509
        %5052 = vmatprep.subr.mxu0 0.0
        %5053 = vmatpush1.msra.mxu0 0.0
        %5054 = vmatprep.subr.mxu0 0.0
        %5055 = vmatpush1.msra.mxu0 0.0
        %5056 = vmatprep.subr.mxu0 0.0
        %5057 = vmatpush1.msra.mxu0 0.0
        %5058 = vmatprep.subr.mxu0 0.0
        %5059 = vmatpush1.msra.mxu0 0.0
        %5060 = vmatprep.subr.mxu0 0.0
        %5061 = vmatpush1.msra.mxu0 0.0
        %5062 = vmatprep.subr.mxu0 0.0
        %5063 = vmatpush1.msra.mxu0 0.0
        %5064 = vmatprep.subr.mxu0 0.0
        %5065 = vmatpush1.msra.mxu0 0.0
        %5066 = vmatprep.subr.mxu0 0.0
        %5067 = vmatpush1.msra.mxu0 0.0
        %5068 = vmatprep.subr.mxu0 0.0
        %5069 = vmatpush1.msra.mxu0 0.0
        %5070 = vmatprep.subr.mxu0 0.0
        %5071 = vmatpush1.msra.mxu0 0.0
        %5072 = vmatprep.subr.mxu0 0.0
        %5073 = vmatpush1.msra.mxu0 0.0
        %5074 = vmatprep.subr.mxu0 0.0
        %5075 = vmatpush1.msra.mxu0 0.0
        %5076 = vmatprep.subr.mxu0 0.0
        %5077 = vmatpush1.msra.mxu0 0.0
        %5078 = vmatprep.subr.mxu0 0.0
        %5079 = vmatpush1.msra.mxu0 0.0
        %5080 = vmatprep.subr.mxu0 0.0
        %5081 = vmatpush1.msra.mxu0 0.0
        %5082 = vmatprep.subr.mxu0 0.0
        %5083 = vmatpush1.msra.mxu0 0.0
        %5084 = vmatprep.subr.mxu0 0.0
        %5085 = vmatpush1.msra.mxu0 0.0
        %5086 = vmatprep.subr.mxu0 0.0
        %5087 = vmatpush1.msra.mxu0 0.0
        %5088 = vmatprep.subr.mxu0 0.0
        %5089 = vmatpush1.msra.mxu0 0.0
        %5090 = vmatprep.subr.mxu0 0.0
        %5091 = vmatpush1.msra.mxu0 0.0
        %5092 = vmatprep.subr.mxu0 0.0
        %5093 = vmatpush1.msra.mxu0 0.0
        %5094 = vmatprep.subr.mxu0 0.0
        %5095 = vmatpush1.msra.mxu0 0.0
        %5096 = vmatprep.subr.mxu0 0.0
        %5097 = vmatpush1.msra.mxu0 0.0
        %5098 = vmatprep.subr.mxu0 0.0
        %5099 = vmatpush1.msra.mxu0 0.0
        %5100 = vmatprep.subr.mxu0 0.0
        %5101 = vmatpush1.msra.mxu0 0.0
        %5102 = vmatprep.subr.mxu0 0.0
        %5103 = vmatpush1.msra.mxu0 0.0
        %5104 = vmatprep.subr.mxu0 0.0
        %5105 = vmatpush1.msra.mxu0 0.0
        %5106 = vmatprep.subr.mxu0 0.0
        %5107 = vmatpush1.msra.mxu0 0.0
        %5108 = vmatprep.subr.mxu0 0.0
        %5109 = vmatpush1.msra.mxu0 0.0
        %5110 = vmatprep.subr.mxu0 0.0
        %5111 = vmatpush1.msra.mxu0 0.0
        %5112 = vmatprep.subr.mxu0 0.0
        %5113 = vmatpush1.msra.mxu0 0.0
        %5114 = vmatprep.mubr.f32.mxu0 0.0
        %5115 = vmatmul.mubr.f32.gmra.mrb[0].mxu0 %v5048
        %v5116 = vpop.f32.mrb[0].mxu0
        %v5117 = vadd.f32 0.0, %v5116
        %v5118 = vpop.f32.mrb[0].mxu0
        %v5119 = vadd.f32 0.0, %v5118
        %5120 = vdwg.mxu0
        %s5121 = scalar_lea.vmem [#allocation17], 672
        %v5122 = vld [vmem:[%s5121] sm:$0xff]
        %v5123 = vld [vmem:[%s5121 + $0x8] sm:$0xff]
        %v5124 = vld [vmem:[%s5121 + $0x10] sm:$0xff]
        %v5125 = vld [vmem:[%s5121 + $0x18] sm:$0xff]
        %v5126 = vld [vmem:[%s5121 + $0x20] sm:$0xff]
        %v5127 = vld [vmem:[%s5121 + $0x28] sm:$0xff]
        %v5128 = vld [vmem:[%s5121 + $0x30] sm:$0xff]
        %v5129 = vld [vmem:[%s5121 + $0x38] sm:$0xff]
        %v5130 = vld [vmem:[%s5121 + $0x40] sm:$0xff]
        %v5131 = vld [vmem:[%s5121 + $0x48] sm:$0xff]
        %v5132 = vld [vmem:[%s5121 + $0x50] sm:$0xff]
        %v5133 = vld [vmem:[%s5121 + $0x58] sm:$0xff]
        %v5134 = vld [vmem:[%s5121 + $0x60] sm:$0xff]
        %v5135 = vld [vmem:[%s5121 + $0x68] sm:$0xff]
        %v5136 = vld [vmem:[%s5121 + $0x70] sm:$0xff]
        %v5137 = vld [vmem:[%s5121 + $0x78] sm:$0xff]
        %v5138 = vld [vmem:[%s5121 + $0x80] sm:$0xff]
        %v5139 = vld [vmem:[%s5121 + $0x88] sm:$0xff]
        %v5140 = vld [vmem:[%s5121 + $0x90] sm:$0xff]
        %v5141 = vld [vmem:[%s5121 + $0x98] sm:$0xff]
        %v5142 = vld [vmem:[%s5121 + $0xa0] sm:$0xff]
        %v5143 = vld [vmem:[%s5121 + $0xa8] sm:$0xff]
        %v5144 = vld [vmem:[%s5121 + $0xb0] sm:$0xff]
        %v5145 = vld [vmem:[%s5121 + $0xb8] sm:$0xff]
        %v5146 = vld [vmem:[%s5121 + $0xc0] sm:$0xff]
        %v5147 = vld [vmem:[%s5121 + $0xc8] sm:$0xff]
        %v5148 = vld [vmem:[%s5121 + $0xd0] sm:$0xff]
        %v5149 = vld [vmem:[%s5121 + $0xd8] sm:$0xff]
        %v5151 = vsel %vm2952, %v5119, 0
        %5153 = vmatprep.subr.mxu0 0.0
        %5154 = vmatpush1.msra.mxu0 %v5122
        %5155 = vmatprep.subr.mxu0 0.0
        %5156 = vmatpush1.msra.mxu0 %v5123
        %5157 = vmatprep.subr.mxu0 0.0
        %5158 = vmatpush1.msra.mxu0 %v5124
        %5159 = vmatprep.subr.mxu0 0.0
        %5160 = vmatpush1.msra.mxu0 %v5125
        %5161 = vmatprep.subr.mxu0 0.0
        %5162 = vmatpush1.msra.mxu0 %v5126
        %5163 = vmatprep.subr.mxu0 0.0
        %5164 = vmatpush1.msra.mxu0 %v5127
        %5165 = vmatprep.subr.mxu0 0.0
        %5166 = vmatpush1.msra.mxu0 %v5128
        %5167 = vmatprep.subr.mxu0 0.0
        %5168 = vmatpush1.msra.mxu0 %v5129
        %5169 = vmatprep.subr.mxu0 0.0
        %5170 = vmatpush1.msra.mxu0 %v5130
        %5171 = vmatprep.subr.mxu0 0.0
        %5172 = vmatpush1.msra.mxu0 %v5131
        %5173 = vmatprep.subr.mxu0 0.0
        %5174 = vmatpush1.msra.mxu0 %v5132
        %5175 = vmatprep.subr.mxu0 0.0
        %5176 = vmatpush1.msra.mxu0 %v5133
        %5177 = vmatprep.subr.mxu0 0.0
        %5178 = vmatpush1.msra.mxu0 %v5134
        %5179 = vmatprep.subr.mxu0 0.0
        %5180 = vmatpush1.msra.mxu0 %v5135
        %5181 = vmatprep.subr.mxu0 0.0
        %5182 = vmatpush1.msra.mxu0 %v5136
        %5183 = vmatprep.subr.mxu0 0.0
        %5184 = vmatpush1.msra.mxu0 %v5137
        %5185 = vmatprep.subr.mxu0 0.0
        %5186 = vmatpush1.msra.mxu0 %v5138
        %5187 = vmatprep.subr.mxu0 0.0
        %5188 = vmatpush1.msra.mxu0 %v5139
        %5189 = vmatprep.subr.mxu0 0.0
        %5190 = vmatpush1.msra.mxu0 %v5140
        %5191 = vmatprep.subr.mxu0 0.0
        %5192 = vmatpush1.msra.mxu0 %v5141
        %5193 = vmatprep.subr.mxu0 0.0
        %5194 = vmatpush1.msra.mxu0 %v5142
        %5195 = vmatprep.subr.mxu0 0.0
        %5196 = vmatpush1.msra.mxu0 %v5143
        %5197 = vmatprep.subr.mxu0 0.0
        %5198 = vmatpush1.msra.mxu0 %v5144
        %5199 = vmatprep.subr.mxu0 0.0
        %5200 = vmatpush1.msra.mxu0 %v5145
        %5201 = vmatprep.subr.mxu0 0.0
        %5202 = vmatpush1.msra.mxu0 %v5146
        %5203 = vmatprep.subr.mxu0 0.0
        %5204 = vmatpush1.msra.mxu0 %v5147
        %5205 = vmatprep.subr.mxu0 0.0
        %5206 = vmatpush1.msra.mxu0 %v5148
        %5207 = vmatprep.subr.mxu0 0.0
        %5208 = vmatpush1.msra.mxu0 %v5149
        %5209 = vmatprep.subr.mxu0 0.0
        %5210 = vmatpush1.msra.mxu0 0.0
        %5211 = vmatprep.subr.mxu0 0.0
        %5212 = vmatpush1.msra.mxu0 0.0
        %5213 = vmatprep.subr.mxu0 0.0
        %5214 = vmatpush1.msra.mxu0 0.0
        %5215 = vmatprep.subr.mxu0 0.0
        %5216 = vmatpush1.msra.mxu0 0.0
        %5217 = vmatprep.mubr.f32.mxu0 %v5151
        %5218 = vmatmul.mubr.f32.gmra.mrb[0].mxu0 %v5117
        %v5219 = vpop.f32.mrb[0].mxu0
        %v5220 = vadd.f32 0.0, %v5219
        %v5221 = vpop.f32.mrb[0].mxu0
        %5222 = vdwg.mxu0
        %v5223 = vadd.f32 %v5044, %v5220
        %s5224 = scalar_lea.vmem [#allocation16], 4
        %v5225 = vld [vmem:[%s5224] sm:$0x1]
        %v5227 = vsel %vm4503, %v5225, 0
        %5229 = vmatprep.subr.mxu0 %v4512
        %5230 = vmatpush1.msra.mxu0 %v4509
        %5231 = vmatprep.subr.mxu0 0.0
        %5232 = vmatpush1.msra.mxu0 0.0
        %5233 = vmatprep.subr.mxu0 0.0
        %5234 = vmatpush1.msra.mxu0 0.0
        %5235 = vmatprep.subr.mxu0 0.0
        %5236 = vmatpush1.msra.mxu0 0.0
        %5237 = vmatprep.subr.mxu0 0.0
        %5238 = vmatpush1.msra.mxu0 0.0
        %5239 = vmatprep.subr.mxu0 0.0
        %5240 = vmatpush1.msra.mxu0 0.0
        %5241 = vmatprep.subr.mxu0 0.0
        %5242 = vmatpush1.msra.mxu0 0.0
        %5243 = vmatprep.subr.mxu0 0.0
        %5244 = vmatpush1.msra.mxu0 0.0
        %5245 = vmatprep.subr.mxu0 0.0
        %5246 = vmatpush1.msra.mxu0 0.0
        %5247 = vmatprep.subr.mxu0 0.0
        %5248 = vmatpush1.msra.mxu0 0.0
        %5249 = vmatprep.subr.mxu0 0.0
        %5250 = vmatpush1.msra.mxu0 0.0
        %5251 = vmatprep.subr.mxu0 0.0
        %5252 = vmatpush1.msra.mxu0 0.0
        %5253 = vmatprep.subr.mxu0 0.0
        %5254 = vmatpush1.msra.mxu0 0.0
        %5255 = vmatprep.subr.mxu0 0.0
        %5256 = vmatpush1.msra.mxu0 0.0
        %5257 = vmatprep.subr.mxu0 0.0
        %5258 = vmatpush1.msra.mxu0 0.0
        %5259 = vmatprep.subr.mxu0 0.0
        %5260 = vmatpush1.msra.mxu0 0.0
        %5261 = vmatprep.subr.mxu0 0.0
        %5262 = vmatpush1.msra.mxu0 0.0
        %5263 = vmatprep.subr.mxu0 0.0
        %5264 = vmatpush1.msra.mxu0 0.0
        %5265 = vmatprep.subr.mxu0 0.0
        %5266 = vmatpush1.msra.mxu0 0.0
        %5267 = vmatprep.subr.mxu0 0.0
        %5268 = vmatpush1.msra.mxu0 0.0
        %5269 = vmatprep.subr.mxu0 0.0
        %5270 = vmatpush1.msra.mxu0 0.0
        %5271 = vmatprep.subr.mxu0 0.0
        %5272 = vmatpush1.msra.mxu0 0.0
        %5273 = vmatprep.subr.mxu0 0.0
        %5274 = vmatpush1.msra.mxu0 0.0
        %5275 = vmatprep.subr.mxu0 0.0
        %5276 = vmatpush1.msra.mxu0 0.0
        %5277 = vmatprep.subr.mxu0 0.0
        %5278 = vmatpush1.msra.mxu0 0.0
        %5279 = vmatprep.subr.mxu0 0.0
        %5280 = vmatpush1.msra.mxu0 0.0
        %5281 = vmatprep.subr.mxu0 0.0
        %5282 = vmatpush1.msra.mxu0 0.0
        %5283 = vmatprep.subr.mxu0 0.0
        %5284 = vmatpush1.msra.mxu0 0.0
        %5285 = vmatprep.subr.mxu0 0.0
        %5286 = vmatpush1.msra.mxu0 0.0
        %5287 = vmatprep.subr.mxu0 0.0
        %5288 = vmatpush1.msra.mxu0 0.0
        %5289 = vmatprep.subr.mxu0 0.0
        %5290 = vmatpush1.msra.mxu0 0.0
        %5291 = vmatprep.subr.mxu0 0.0
        %5292 = vmatpush1.msra.mxu0 0.0
        %5293 = vmatprep.mubr.f32.mxu0 0.0
        %5294 = vmatmul.mubr.f32.gmra.mrb[0].mxu0 %v5227
        %v5295 = vpop.f32.mrb[0].mxu0
        %v5296 = vadd.f32 0.0, %v5295
        %v5297 = vpop.f32.mrb[0].mxu0
        %v5298 = vadd.f32 0.0, %v5297
        %5299 = vdwg.mxu0
        %s5300 = scalar_lea.vmem [#allocation17], 896
        %v5301 = vld [vmem:[%s5300] sm:$0xff]
        %v5302 = vld [vmem:[%s5300 + $0x8] sm:$0xff]
        %v5303 = vld [vmem:[%s5300 + $0x10] sm:$0xff]
        %v5304 = vld [vmem:[%s5300 + $0x18] sm:$0xff]
        %v5305 = vld [vmem:[%s5300 + $0x20] sm:$0xff]
        %v5306 = vld [vmem:[%s5300 + $0x28] sm:$0xff]
        %v5307 = vld [vmem:[%s5300 + $0x30] sm:$0xff]
        %v5308 = vld [vmem:[%s5300 + $0x38] sm:$0xff]
        %v5309 = vld [vmem:[%s5300 + $0x40] sm:$0xff]
        %v5310 = vld [vmem:[%s5300 + $0x48] sm:$0xff]
        %v5311 = vld [vmem:[%s5300 + $0x50] sm:$0xff]
        %v5312 = vld [vmem:[%s5300 + $0x58] sm:$0xff]
        %v5313 = vld [vmem:[%s5300 + $0x60] sm:$0xff]
        %v5314 = vld [vmem:[%s5300 + $0x68] sm:$0xff]
        %v5315 = vld [vmem:[%s5300 + $0x70] sm:$0xff]
        %v5316 = vld [vmem:[%s5300 + $0x78] sm:$0xff]
        %v5317 = vld [vmem:[%s5300 + $0x80] sm:$0xff]
        %v5318 = vld [vmem:[%s5300 + $0x88] sm:$0xff]
        %v5319 = vld [vmem:[%s5300 + $0x90] sm:$0xff]
        %v5320 = vld [vmem:[%s5300 + $0x98] sm:$0xff]
        %v5321 = vld [vmem:[%s5300 + $0xa0] sm:$0xff]
        %v5322 = vld [vmem:[%s5300 + $0xa8] sm:$0xff]
        %v5323 = vld [vmem:[%s5300 + $0xb0] sm:$0xff]
        %v5324 = vld [vmem:[%s5300 + $0xb8] sm:$0xff]
        %v5325 = vld [vmem:[%s5300 + $0xc0] sm:$0xff]
        %v5326 = vld [vmem:[%s5300 + $0xc8] sm:$0xff]
        %v5327 = vld [vmem:[%s5300 + $0xd0] sm:$0xff]
        %v5328 = vld [vmem:[%s5300 + $0xd8] sm:$0xff]
        %v5330 = vsel %vm2952, %v5298, 0
        %5332 = vmatprep.subr.mxu0 0.0
        %5333 = vmatpush1.msra.mxu0 %v5301
        %5334 = vmatprep.subr.mxu0 0.0
        %5335 = vmatpush1.msra.mxu0 %v5302
        %5336 = vmatprep.subr.mxu0 0.0
        %5337 = vmatpush1.msra.mxu0 %v5303
        %5338 = vmatprep.subr.mxu0 0.0
        %5339 = vmatpush1.msra.mxu0 %v5304
        %5340 = vmatprep.subr.mxu0 0.0
        %5341 = vmatpush1.msra.mxu0 %v5305
        %5342 = vmatprep.subr.mxu0 0.0
        %5343 = vmatpush1.msra.mxu0 %v5306
        %5344 = vmatprep.subr.mxu0 0.0
        %5345 = vmatpush1.msra.mxu0 %v5307
        %5346 = vmatprep.subr.mxu0 0.0
        %5347 = vmatpush1.msra.mxu0 %v5308
        %5348 = vmatprep.subr.mxu0 0.0
        %5349 = vmatpush1.msra.mxu0 %v5309
        %5350 = vmatprep.subr.mxu0 0.0
        %5351 = vmatpush1.msra.mxu0 %v5310
        %5352 = vmatprep.subr.mxu0 0.0
        %5353 = vmatpush1.msra.mxu0 %v5311
        %5354 = vmatprep.subr.mxu0 0.0
        %5355 = vmatpush1.msra.mxu0 %v5312
        %5356 = vmatprep.subr.mxu0 0.0
        %5357 = vmatpush1.msra.mxu0 %v5313
        %5358 = vmatprep.subr.mxu0 0.0
        %5359 = vmatpush1.msra.mxu0 %v5314
        %5360 = vmatprep.subr.mxu0 0.0
        %5361 = vmatpush1.msra.mxu0 %v5315
        %5362 = vmatprep.subr.mxu0 0.0
        %5363 = vmatpush1.msra.mxu0 %v5316
        %5364 = vmatprep.subr.mxu0 0.0
        %5365 = vmatpush1.msra.mxu0 %v5317
        %5366 = vmatprep.subr.mxu0 0.0
        %5367 = vmatpush1.msra.mxu0 %v5318
        %5368 = vmatprep.subr.mxu0 0.0
        %5369 = vmatpush1.msra.mxu0 %v5319
        %5370 = vmatprep.subr.mxu0 0.0
        %5371 = vmatpush1.msra.mxu0 %v5320
        %5372 = vmatprep.subr.mxu0 0.0
        %5373 = vmatpush1.msra.mxu0 %v5321
        %5374 = vmatprep.subr.mxu0 0.0
        %5375 = vmatpush1.msra.mxu0 %v5322
        %5376 = vmatprep.subr.mxu0 0.0
        %5377 = vmatpush1.msra.mxu0 %v5323
        %5378 = vmatprep.subr.mxu0 0.0
        %5379 = vmatpush1.msra.mxu0 %v5324
        %5380 = vmatprep.subr.mxu0 0.0
        %5381 = vmatpush1.msra.mxu0 %v5325
        %5382 = vmatprep.subr.mxu0 0.0
        %5383 = vmatpush1.msra.mxu0 %v5326
        %5384 = vmatprep.subr.mxu0 0.0
        %5385 = vmatpush1.msra.mxu0 %v5327
        %5386 = vmatprep.subr.mxu0 0.0
        %5387 = vmatpush1.msra.mxu0 %v5328
        %5388 = vmatprep.subr.mxu0 0.0
        %5389 = vmatpush1.msra.mxu0 0.0
        %5390 = vmatprep.subr.mxu0 0.0
        %5391 = vmatpush1.msra.mxu0 0.0
        %5392 = vmatprep.subr.mxu0 0.0
        %5393 = vmatpush1.msra.mxu0 0.0
        %5394 = vmatprep.subr.mxu0 0.0
        %5395 = vmatpush1.msra.mxu0 0.0
        %5396 = vmatprep.mubr.f32.mxu0 %v5330
        %5397 = vmatmul.mubr.f32.gmra.mrb[0].mxu0 %v5296
        %v5398 = vpop.f32.mrb[0].mxu0
        %v5399 = vadd.f32 0.0, %v5398
        %v5400 = vpop.f32.mrb[0].mxu0
        %5401 = vdwg.mxu0
        %v5402 = vadd.f32 %v5223, %v5399
        %s5403 = scalar_lea.vmem [#allocation16], 5
        %v5404 = vld [vmem:[%s5403] sm:$0x1]
        %v5406 = vsel %vm4503, %v5404, 0
        %5408 = vmatprep.subr.mxu0 %v4512
        %5409 = vmatpush1.msra.mxu0 %v4509
        %5410 = vmatprep.subr.mxu0 0.0
        %5411 = vmatpush1.msra.mxu0 0.0
        %5412 = vmatprep.subr.mxu0 0.0
        %5413 = vmatpush1.msra.mxu0 0.0
        %5414 = vmatprep.subr.mxu0 0.0
        %5415 = vmatpush1.msra.mxu0 0.0
        %5416 = vmatprep.subr.mxu0 0.0
        %5417 = vmatpush1.msra.mxu0 0.0
        %5418 = vmatprep.subr.mxu0 0.0
        %5419 = vmatpush1.msra.mxu0 0.0
        %5420 = vmatprep.subr.mxu0 0.0
        %5421 = vmatpush1.msra.mxu0 0.0
        %5422 = vmatprep.subr.mxu0 0.0
        %5423 = vmatpush1.msra.mxu0 0.0
        %5424 = vmatprep.subr.mxu0 0.0
        %5425 = vmatpush1.msra.mxu0 0.0
        %5426 = vmatprep.subr.mxu0 0.0
        %5427 = vmatpush1.msra.mxu0 0.0
        %5428 = vmatprep.subr.mxu0 0.0
        %5429 = vmatpush1.msra.mxu0 0.0
        %5430 = vmatprep.subr.mxu0 0.0
        %5431 = vmatpush1.msra.mxu0 0.0
        %5432 = vmatprep.subr.mxu0 0.0
        %5433 = vmatpush1.msra.mxu0 0.0
        %5434 = vmatprep.subr.mxu0 0.0
        %5435 = vmatpush1.msra.mxu0 0.0
        %5436 = vmatprep.subr.mxu0 0.0
        %5437 = vmatpush1.msra.mxu0 0.0
        %5438 = vmatprep.subr.mxu0 0.0
        %5439 = vmatpush1.msra.mxu0 0.0
        %5440 = vmatprep.subr.mxu0 0.0
        %5441 = vmatpush1.msra.mxu0 0.0
        %5442 = vmatprep.subr.mxu0 0.0
        %5443 = vmatpush1.msra.mxu0 0.0
        %5444 = vmatprep.subr.mxu0 0.0
        %5445 = vmatpush1.msra.mxu0 0.0
        %5446 = vmatprep.subr.mxu0 0.0
        %5447 = vmatpush1.msra.mxu0 0.0
        %5448 = vmatprep.subr.mxu0 0.0
        %5449 = vmatpush1.msra.mxu0 0.0
        %5450 = vmatprep.subr.mxu0 0.0
        %5451 = vmatpush1.msra.mxu0 0.0
        %5452 = vmatprep.subr.mxu0 0.0
        %5453 = vmatpush1.msra.mxu0 0.0
        %5454 = vmatprep.subr.mxu0 0.0
        %5455 = vmatpush1.msra.mxu0 0.0
        %5456 = vmatprep.subr.mxu0 0.0
        %5457 = vmatpush1.msra.mxu0 0.0
        %5458 = vmatprep.subr.mxu0 0.0
        %5459 = vmatpush1.msra.mxu0 0.0
        %5460 = vmatprep.subr.mxu0 0.0
        %5461 = vmatpush1.msra.mxu0 0.0
        %5462 = vmatprep.subr.mxu0 0.0
        %5463 = vmatpush1.msra.mxu0 0.0
        %5464 = vmatprep.subr.mxu0 0.0
        %5465 = vmatpush1.msra.mxu0 0.0
        %5466 = vmatprep.subr.mxu0 0.0
        %5467 = vmatpush1.msra.mxu0 0.0
        %5468 = vmatprep.subr.mxu0 0.0
        %5469 = vmatpush1.msra.mxu0 0.0
        %5470 = vmatprep.subr.mxu0 0.0
        %5471 = vmatpush1.msra.mxu0 0.0
        %5472 = vmatprep.mubr.f32.mxu0 0.0
        %5473 = vmatmul.mubr.f32.gmra.mrb[0].mxu0 %v5406
        %v5474 = vpop.f32.mrb[0].mxu0
        %v5475 = vadd.f32 0.0, %v5474
        %v5476 = vpop.f32.mrb[0].mxu0
        %v5477 = vadd.f32 0.0, %v5476
        %5478 = vdwg.mxu0
        %s5479 = scalar_lea.vmem [#allocation17], 1120
        %v5480 = vld [vmem:[%s5479] sm:$0xff]
        %v5481 = vld [vmem:[%s5479 + $0x8] sm:$0xff]
        %v5482 = vld [vmem:[%s5479 + $0x10] sm:$0xff]
        %v5483 = vld [vmem:[%s5479 + $0x18] sm:$0xff]
        %v5484 = vld [vmem:[%s5479 + $0x20] sm:$0xff]
        %v5485 = vld [vmem:[%s5479 + $0x28] sm:$0xff]
        %v5486 = vld [vmem:[%s5479 + $0x30] sm:$0xff]
        %v5487 = vld [vmem:[%s5479 + $0x38] sm:$0xff]
        %v5488 = vld [vmem:[%s5479 + $0x40] sm:$0xff]
        %v5489 = vld [vmem:[%s5479 + $0x48] sm:$0xff]
        %v5490 = vld [vmem:[%s5479 + $0x50] sm:$0xff]
        %v5491 = vld [vmem:[%s5479 + $0x58] sm:$0xff]
        %v5492 = vld [vmem:[%s5479 + $0x60] sm:$0xff]
        %v5493 = vld [vmem:[%s5479 + $0x68] sm:$0xff]
        %v5494 = vld [vmem:[%s5479 + $0x70] sm:$0xff]
        %v5495 = vld [vmem:[%s5479 + $0x78] sm:$0xff]
        %v5496 = vld [vmem:[%s5479 + $0x80] sm:$0xff]
        %v5497 = vld [vmem:[%s5479 + $0x88] sm:$0xff]
        %v5498 = vld [vmem:[%s5479 + $0x90] sm:$0xff]
        %v5499 = vld [vmem:[%s5479 + $0x98] sm:$0xff]
        %v5500 = vld [vmem:[%s5479 + $0xa0] sm:$0xff]
        %v5501 = vld [vmem:[%s5479 + $0xa8] sm:$0xff]
        %v5502 = vld [vmem:[%s5479 + $0xb0] sm:$0xff]
        %v5503 = vld [vmem:[%s5479 + $0xb8] sm:$0xff]
        %v5504 = vld [vmem:[%s5479 + $0xc0] sm:$0xff]
        %v5505 = vld [vmem:[%s5479 + $0xc8] sm:$0xff]
        %v5506 = vld [vmem:[%s5479 + $0xd0] sm:$0xff]
        %v5507 = vld [vmem:[%s5479 + $0xd8] sm:$0xff]
        %v5509 = vsel %vm2952, %v5477, 0
        %5511 = vmatprep.subr.mxu0 0.0
        %5512 = vmatpush1.msra.mxu0 %v5480
        %5513 = vmatprep.subr.mxu0 0.0
        %5514 = vmatpush1.msra.mxu0 %v5481
        %5515 = vmatprep.subr.mxu0 0.0
        %5516 = vmatpush1.msra.mxu0 %v5482
        %5517 = vmatprep.subr.mxu0 0.0
        %5518 = vmatpush1.msra.mxu0 %v5483
        %5519 = vmatprep.subr.mxu0 0.0
        %5520 = vmatpush1.msra.mxu0 %v5484
        %5521 = vmatprep.subr.mxu0 0.0
        %5522 = vmatpush1.msra.mxu0 %v5485
        %5523 = vmatprep.subr.mxu0 0.0
        %5524 = vmatpush1.msra.mxu0 %v5486
        %5525 = vmatprep.subr.mxu0 0.0
        %5526 = vmatpush1.msra.mxu0 %v5487
        %5527 = vmatprep.subr.mxu0 0.0
        %5528 = vmatpush1.msra.mxu0 %v5488
        %5529 = vmatprep.subr.mxu0 0.0
        %5530 = vmatpush1.msra.mxu0 %v5489
        %5531 = vmatprep.subr.mxu0 0.0
        %5532 = vmatpush1.msra.mxu0 %v5490
        %5533 = vmatprep.subr.mxu0 0.0
        %5534 = vmatpush1.msra.mxu0 %v5491
        %5535 = vmatprep.subr.mxu0 0.0
        %5536 = vmatpush1.msra.mxu0 %v5492
        %5537 = vmatprep.subr.mxu0 0.0
        %5538 = vmatpush1.msra.mxu0 %v5493
        %5539 = vmatprep.subr.mxu0 0.0
        %5540 = vmatpush1.msra.mxu0 %v5494
        %5541 = vmatprep.subr.mxu0 0.0
        %5542 = vmatpush1.msra.mxu0 %v5495
        %5543 = vmatprep.subr.mxu0 0.0
        %5544 = vmatpush1.msra.mxu0 %v5496
        %5545 = vmatprep.subr.mxu0 0.0
        %5546 = vmatpush1.msra.mxu0 %v5497
        %5547 = vmatprep.subr.mxu0 0.0
        %5548 = vmatpush1.msra.mxu0 %v5498
        %5549 = vmatprep.subr.mxu0 0.0
        %5550 = vmatpush1.msra.mxu0 %v5499
        %5551 = vmatprep.subr.mxu0 0.0
        %5552 = vmatpush1.msra.mxu0 %v5500
        %5553 = vmatprep.subr.mxu0 0.0
        %5554 = vmatpush1.msra.mxu0 %v5501
        %5555 = vmatprep.subr.mxu0 0.0
        %5556 = vmatpush1.msra.mxu0 %v5502
        %5557 = vmatprep.subr.mxu0 0.0
        %5558 = vmatpush1.msra.mxu0 %v5503
        %5559 = vmatprep.subr.mxu0 0.0
        %5560 = vmatpush1.msra.mxu0 %v5504
        %5561 = vmatprep.subr.mxu0 0.0
        %5562 = vmatpush1.msra.mxu0 %v5505
        %5563 = vmatprep.subr.mxu0 0.0
        %5564 = vmatpush1.msra.mxu0 %v5506
        %5565 = vmatprep.subr.mxu0 0.0
        %5566 = vmatpush1.msra.mxu0 %v5507
        %5567 = vmatprep.subr.mxu0 0.0
        %5568 = vmatpush1.msra.mxu0 0.0
        %5569 = vmatprep.subr.mxu0 0.0
        %5570 = vmatpush1.msra.mxu0 0.0
        %5571 = vmatprep.subr.mxu0 0.0
        %5572 = vmatpush1.msra.mxu0 0.0
        %5573 = vmatprep.subr.mxu0 0.0
        %5574 = vmatpush1.msra.mxu0 0.0
        %5575 = vmatprep.mubr.f32.mxu0 %v5509
        %5576 = vmatmul.mubr.f32.gmra.mrb[0].mxu0 %v5475
        %v5577 = vpop.f32.mrb[0].mxu0
        %v5578 = vadd.f32 0.0, %v5577
        %v5579 = vpop.f32.mrb[0].mxu0
        %5580 = vdwg.mxu0
        %v5581 = vadd.f32 %v5402, %v5578
        %s5582 = scalar_lea.vmem [#allocation16], 6
        %v5583 = vld [vmem:[%s5582] sm:$0x1]
        %v5585 = vsel %vm4503, %v5583, 0
        %5587 = vmatprep.subr.mxu0 %v4512
        %5588 = vmatpush1.msra.mxu0 %v4509
        %5589 = vmatprep.subr.mxu0 0.0
        %5590 = vmatpush1.msra.mxu0 0.0
        %5591 = vmatprep.subr.mxu0 0.0
        %5592 = vmatpush1.msra.mxu0 0.0
        %5593 = vmatprep.subr.mxu0 0.0
        %5594 = vmatpush1.msra.mxu0 0.0
        %5595 = vmatprep.subr.mxu0 0.0
        %5596 = vmatpush1.msra.mxu0 0.0
        %5597 = vmatprep.subr.mxu0 0.0
        %5598 = vmatpush1.msra.mxu0 0.0
        %5599 = vmatprep.subr.mxu0 0.0
        %5600 = vmatpush1.msra.mxu0 0.0
        %5601 = vmatprep.subr.mxu0 0.0
        %5602 = vmatpush1.msra.mxu0 0.0
        %5603 = vmatprep.subr.mxu0 0.0
        %5604 = vmatpush1.msra.mxu0 0.0
        %5605 = vmatprep.subr.mxu0 0.0
        %5606 = vmatpush1.msra.mxu0 0.0
        %5607 = vmatprep.subr.mxu0 0.0
        %5608 = vmatpush1.msra.mxu0 0.0
        %5609 = vmatprep.subr.mxu0 0.0
        %5610 = vmatpush1.msra.mxu0 0.0
        %5611 = vmatprep.subr.mxu0 0.0
        %5612 = vmatpush1.msra.mxu0 0.0
        %5613 = vmatprep.subr.mxu0 0.0
        %5614 = vmatpush1.msra.mxu0 0.0
        %5615 = vmatprep.subr.mxu0 0.0
        %5616 = vmatpush1.msra.mxu0 0.0
        %5617 = vmatprep.subr.mxu0 0.0
        %5618 = vmatpush1.msra.mxu0 0.0
        %5619 = vmatprep.subr.mxu0 0.0
        %5620 = vmatpush1.msra.mxu0 0.0
        %5621 = vmatprep.subr.mxu0 0.0
        %5622 = vmatpush1.msra.mxu0 0.0
        %5623 = vmatprep.subr.mxu0 0.0
        %5624 = vmatpush1.msra.mxu0 0.0
        %5625 = vmatprep.subr.mxu0 0.0
        %5626 = vmatpush1.msra.mxu0 0.0
        %5627 = vmatprep.subr.mxu0 0.0
        %5628 = vmatpush1.msra.mxu0 0.0
        %5629 = vmatprep.subr.mxu0 0.0
        %5630 = vmatpush1.msra.mxu0 0.0
        %5631 = vmatprep.subr.mxu0 0.0
        %5632 = vmatpush1.msra.mxu0 0.0
        %5633 = vmatprep.subr.mxu0 0.0
        %5634 = vmatpush1.msra.mxu0 0.0
        %5635 = vmatprep.subr.mxu0 0.0
        %5636 = vmatpush1.msra.mxu0 0.0
        %5637 = vmatprep.subr.mxu0 0.0
        %5638 = vmatpush1.msra.mxu0 0.0
        %5639 = vmatprep.subr.mxu0 0.0
        %5640 = vmatpush1.msra.mxu0 0.0
        %5641 = vmatprep.subr.mxu0 0.0
        %5642 = vmatpush1.msra.mxu0 0.0
        %5643 = vmatprep.subr.mxu0 0.0
        %5644 = vmatpush1.msra.mxu0 0.0
        %5645 = vmatprep.subr.mxu0 0.0
        %5646 = vmatpush1.msra.mxu0 0.0
        %5647 = vmatprep.subr.mxu0 0.0
        %5648 = vmatpush1.msra.mxu0 0.0
        %5649 = vmatprep.subr.mxu0 0.0
        %5650 = vmatpush1.msra.mxu0 0.0
        %5651 = vmatprep.mubr.f32.mxu0 0.0
        %5652 = vmatmul.mubr.f32.gmra.mrb[0].mxu0 %v5585
        %v5653 = vpop.f32.mrb[0].mxu0
        %v5654 = vadd.f32 0.0, %v5653
        %v5655 = vpop.f32.mrb[0].mxu0
        %v5656 = vadd.f32 0.0, %v5655
        %5657 = vdwg.mxu0
        %s5658 = scalar_lea.vmem [#allocation17], 1344
        %v5659 = vld [vmem:[%s5658] sm:$0xff]
        %v5660 = vld [vmem:[%s5658 + $0x8] sm:$0xff]
        %v5661 = vld [vmem:[%s5658 + $0x10] sm:$0xff]
        %v5662 = vld [vmem:[%s5658 + $0x18] sm:$0xff]
        %v5663 = vld [vmem:[%s5658 + $0x20] sm:$0xff]
        %v5664 = vld [vmem:[%s5658 + $0x28] sm:$0xff]
        %v5665 = vld [vmem:[%s5658 + $0x30] sm:$0xff]
        %v5666 = vld [vmem:[%s5658 + $0x38] sm:$0xff]
        %v5667 = vld [vmem:[%s5658 + $0x40] sm:$0xff]
        %v5668 = vld [vmem:[%s5658 + $0x48] sm:$0xff]
        %v5669 = vld [vmem:[%s5658 + $0x50] sm:$0xff]
        %v5670 = vld [vmem:[%s5658 + $0x58] sm:$0xff]
        %v5671 = vld [vmem:[%s5658 + $0x60] sm:$0xff]
        %v5672 = vld [vmem:[%s5658 + $0x68] sm:$0xff]
        %v5673 = vld [vmem:[%s5658 + $0x70] sm:$0xff]
        %v5674 = vld [vmem:[%s5658 + $0x78] sm:$0xff]
        %v5675 = vld [vmem:[%s5658 + $0x80] sm:$0xff]
        %v5676 = vld [vmem:[%s5658 + $0x88] sm:$0xff]
        %v5677 = vld [vmem:[%s5658 + $0x90] sm:$0xff]
        %v5678 = vld [vmem:[%s5658 + $0x98] sm:$0xff]
        %v5679 = vld [vmem:[%s5658 + $0xa0] sm:$0xff]
        %v5680 = vld [vmem:[%s5658 + $0xa8] sm:$0xff]
        %v5681 = vld [vmem:[%s5658 + $0xb0] sm:$0xff]
        %v5682 = vld [vmem:[%s5658 + $0xb8] sm:$0xff]
        %v5683 = vld [vmem:[%s5658 + $0xc0] sm:$0xff]
        %v5684 = vld [vmem:[%s5658 + $0xc8] sm:$0xff]
        %v5685 = vld [vmem:[%s5658 + $0xd0] sm:$0xff]
        %v5686 = vld [vmem:[%s5658 + $0xd8] sm:$0xff]
        %v5688 = vsel %vm2952, %v5656, 0
        %5690 = vmatprep.subr.mxu0 0.0
        %5691 = vmatpush1.msra.mxu0 %v5659
        %5692 = vmatprep.subr.mxu0 0.0
        %5693 = vmatpush1.msra.mxu0 %v5660
        %5694 = vmatprep.subr.mxu0 0.0
        %5695 = vmatpush1.msra.mxu0 %v5661
        %5696 = vmatprep.subr.mxu0 0.0
        %5697 = vmatpush1.msra.mxu0 %v5662
        %5698 = vmatprep.subr.mxu0 0.0
        %5699 = vmatpush1.msra.mxu0 %v5663
        %5700 = vmatprep.subr.mxu0 0.0
        %5701 = vmatpush1.msra.mxu0 %v5664
        %5702 = vmatprep.subr.mxu0 0.0
        %5703 = vmatpush1.msra.mxu0 %v5665
        %5704 = vmatprep.subr.mxu0 0.0
        %5705 = vmatpush1.msra.mxu0 %v5666
        %5706 = vmatprep.subr.mxu0 0.0
        %5707 = vmatpush1.msra.mxu0 %v5667
        %5708 = vmatprep.subr.mxu0 0.0
        %5709 = vmatpush1.msra.mxu0 %v5668
        %5710 = vmatprep.subr.mxu0 0.0
        %5711 = vmatpush1.msra.mxu0 %v5669
        %5712 = vmatprep.subr.mxu0 0.0
        %5713 = vmatpush1.msra.mxu0 %v5670
        %5714 = vmatprep.subr.mxu0 0.0
        %5715 = vmatpush1.msra.mxu0 %v5671
        %5716 = vmatprep.subr.mxu0 0.0
        %5717 = vmatpush1.msra.mxu0 %v5672
        %5718 = vmatprep.subr.mxu0 0.0
        %5719 = vmatpush1.msra.mxu0 %v5673
        %5720 = vmatprep.subr.mxu0 0.0
        %5721 = vmatpush1.msra.mxu0 %v5674
        %5722 = vmatprep.subr.mxu0 0.0
        %5723 = vmatpush1.msra.mxu0 %v5675
        %5724 = vmatprep.subr.mxu0 0.0
        %5725 = vmatpush1.msra.mxu0 %v5676
        %5726 = vmatprep.subr.mxu0 0.0
        %5727 = vmatpush1.msra.mxu0 %v5677
        %5728 = vmatprep.subr.mxu0 0.0
        %5729 = vmatpush1.msra.mxu0 %v5678
        %5730 = vmatprep.subr.mxu0 0.0
        %5731 = vmatpush1.msra.mxu0 %v5679
        %5732 = vmatprep.subr.mxu0 0.0
        %5733 = vmatpush1.msra.mxu0 %v5680
        %5734 = vmatprep.subr.mxu0 0.0
        %5735 = vmatpush1.msra.mxu0 %v5681
        %5736 = vmatprep.subr.mxu0 0.0
        %5737 = vmatpush1.msra.mxu0 %v5682
        %5738 = vmatprep.subr.mxu0 0.0
        %5739 = vmatpush1.msra.mxu0 %v5683
        %5740 = vmatprep.subr.mxu0 0.0
        %5741 = vmatpush1.msra.mxu0 %v5684
        %5742 = vmatprep.subr.mxu0 0.0
        %5743 = vmatpush1.msra.mxu0 %v5685
        %5744 = vmatprep.subr.mxu0 0.0
        %5745 = vmatpush1.msra.mxu0 %v5686
        %5746 = vmatprep.subr.mxu0 0.0
        %5747 = vmatpush1.msra.mxu0 0.0
        %5748 = vmatprep.subr.mxu0 0.0
        %5749 = vmatpush1.msra.mxu0 0.0
        %5750 = vmatprep.subr.mxu0 0.0
        %5751 = vmatpush1.msra.mxu0 0.0
        %5752 = vmatprep.subr.mxu0 0.0
        %5753 = vmatpush1.msra.mxu0 0.0
        %5754 = vmatprep.mubr.f32.mxu0 %v5688
        %5755 = vmatmul.mubr.f32.gmra.mrb[0].mxu0 %v5654
        %v5756 = vpop.f32.mrb[0].mxu0
        %v5757 = vadd.f32 0.0, %v5756
        %v5758 = vpop.f32.mrb[0].mxu0
        %5759 = vdwg.mxu0
        %v5760 = vadd.f32 %v5581, %v5757
        %v5761 = vmax.f32 %v5760, 0.0
        %5762 = vst [vmem:[%s613] sm:$0x1] %v5761
        %s5763 = sand.u32 %s341, 1
        %s5764 = scalar_lea.sflag [#allocation4], %s5763
        %s5765 = sand.u32 %s341, 1
        %s5766 = scalar_lea.vmem [#allocation20], %s5765
        // Predicated region
        $region121: #{cnn_feature_extractor.1} parent=75 // pred_check
          %p5767 = pneg %p351
        $region122: #{cnn_feature_extractor.1} parent=75 // pred_check_branch
          %5769 = sbr.rel (%p5767) target = $region124
        $region123: #{cnn_feature_extractor.1} parent=75 // pred_region
          %s5771 = ssub.s32 16, 16
          %5772 = vsyncadd %s5764, %s5771
          %s5773 = smul.addr %s34, 16
          %s5774 = scalar_lea.hbm %s14, %s5773
          %s5776 = sshll.u32 %s5766, 4
          %s5777 = int_to_ptr.vmem [resolvable:$true] %s5776
          %5779 = dma.vmem_to_hbm [thread:$0]  %s5777, 16, %s5774, %s5764
        $region124: #{cnn_feature_extractor.1} parent=75 // pred_fallthru
          _
      $region76: #{cnn_feature_extractor.1} parent=5 // pred_fallthru
        _
      %p5780 = scmp.le.s32.totalorder 2, %s29
      // Predicated region
      $region125: #{cnn_feature_extractor.1} parent=5 // pred_check
        %p5781 = pneg %p5780
      $region126: #{cnn_feature_extractor.1} parent=5 // pred_check_branch
        %5783 = sbr.rel (%p5781) target = $region128
      $region127: #{cnn_feature_extractor.1} parent=5 // pred_region
        %s5784 = ssub.s32 %s29, 2
        // Predicated region
        $region129: #{cnn_feature_extractor.1} parent=127 // pred_check
          %p5785 = pneg %p357
        $region130: #{cnn_feature_extractor.1} parent=127 // pred_check_branch
          %5787 = sbr.rel (%p5785) target = $region132
        $region131: #{cnn_feature_extractor.1} parent=127 // pred_region
          %s5788 = sand.u32 %s342, 1
          %s5789 = scalar_lea.sflag [#allocation4], %s5788
          %s5790 = sand.u32 %s342, 1
          %s5791 = scalar_lea.vmem [#allocation20], %s5790
          %5792 = dma.done %s5789, 16
        $region132: #{cnn_feature_extractor.1} parent=127 // pred_fallthru
          _
      $region128: #{cnn_feature_extractor.1} parent=5 // pred_fallthru
        _
    $region6: #{cnn_feature_extractor.1} parent=1 // loop_footer
      %s33 = sadd.s32 1, %s29
    $region7: #{cnn_feature_extractor.1} parent=1 // loop_footer_branch
      %28 = sbr.rel target = $region3
    $region8: #{cnn_feature_extractor.1} parent=1 // loop_exit
      _
    %5793 = vsyncpa [#allocation3], 1
    %s5794 = scalar_lea.sflag [#allocation3], 1
    %5795 = vsyncpa %s5794, 1
    %5796 = vsyncpa [#allocation6], 1
    %5797 = vsyncpa [#allocation9], 1
    %5798 = vsyncpa [#allocation12], 1
    %5799 = vsyncpa [#allocation15], 1
    %5800 = vsyncpa [#allocation18], 1
    %5801 = vsyncpa [#allocation4], 1
    %s5802 = scalar_lea.sflag [#allocation4], 1
    %5803 = vsyncpa %s5802, 1

</llo_original>
